<compile_context>
chip_gen: v7x
topology: tpu7x:2x2x1
jax: 0.10.0
libtpu: 0.0.40
codegen_flags: <defaults>
</compile_context>

<pallas_src>
import jax
import jax.numpy as jnp
from jax import lax
from jax.experimental import pallas as pl
from jax.experimental.pallas import tpu as pltpu

NEG_SLOPE = 0.01                      # nn.LeakyReLU default
SLOPE2 = NEG_SLOPE * NEG_SLOPE        # LeakyReLU∘LeakyReLU == LeakyReLU with slope^2

D = H = W = 8                         # spatial volume
P = D * H * W                         # 512 flat spatial positions (lane dimension)
C1 = 32                               # hidden channels
K = 3                                 # conv kernel size


def _tap_shifts_and_masks():
    """Static per-tap (lane shift, validity mask) — shared by both conv layers."""
    p_idx = lax.broadcasted_iota(jnp.int32, (1, P), 1)
    d_idx = p_idx >> 6                # p // 64
    h_idx = (p_idx >> 3) & 7          # (p // 8) % 8
    w_idx = p_idx & 7                 # p % 8
    taps = []
    for kd in range(K):
        for kh in range(K):
            for kw in range(K):
                od, oh, ow = kd - 1, kh - 1, kw - 1
                s = od * (H * W) + oh * W + ow
                ok = ((d_idx + od >= 0) & (d_idx + od < D) &
                      (h_idx + oh >= 0) & (h_idx + oh < H) &
                      (w_idx + ow >= 0) & (w_idx + ow < W))
                taps.append((s, jnp.where(ok, 1.0, 0.0)))   # f32 mask, (1, P)
    return taps


def _shift_lanes(v, s):
    """out[:, p] = v[:, p + s] (zero fill outside).  v: (C, P)."""
    c, width = v.shape
    if s == 0:
        return v
    if s > 0:
        return jnp.concatenate([v[:, s:], jnp.zeros((c, s), v.dtype)], axis=1)
    t = -s
    return jnp.concatenate([jnp.zeros((c, t), v.dtype), v[:, :width - t]], axis=1)


def _fused_cnn_kernel(x_ref, w1t_ref, b1_ref, w2t_ref, b2_ref, o_ref):
    """One batch element.  Flat spatial (512) on lanes, channels on sublanes.

    x_ref  : (1, 1, P)    input volume, flat spatial
    w1t_ref: (C1, 27)     layer-1 weights [out_channel, tap]
    b1_ref : (C1, 1)
    w2t_ref: (1, 27*C1)   layer-2 weights [_, tap*C1 + in_channel]
    b2_ref : (1, 1)
    o_ref  : (1, 1, P)    output volume, flat spatial
    """
    taps = _tap_shifts_and_masks()

    x = x_ref[0]                      # (1, P)
    w1t = w1t_ref[...]                # (C1, 27)

    # ---- conv_layer1 (1 -> 32): 27 masked-shift broadcast FMAs (VPU) ----
    y1 = jnp.zeros((C1, P), jnp.float32)
    for k, (s, maskf) in enumerate(taps):
        xs = maskf * _shift_lanes(x, s)            # (1, P)
        y1 = y1 + w1t[:, k:k + 1] * xs             # (C1,1)*(1,P) -> (C1,P)
    y1 = y1 + b1_ref[...]
    # LeakyReLU applied twice == single LeakyReLU with slope NEG_SLOPE**2.
    y1 = jnp.where(y1 >= 0, y1, SLOPE2 * y1)       # stays entirely in VMEM

    # ---- conv_layer2 (32 -> 1): one im2col matmul, lane-dense output ----
    rows = [maskf * _shift_lanes(y1, s) for (s, maskf) in taps]   # 27 x (C1, P)
    p2t = jnp.concatenate(rows, axis=0)                           # (27*C1, P)
    y2 = jnp.dot(w2t_ref[...], p2t,
                 preferred_element_type=jnp.float32)              # (1, P)
    y2 = y2 + b2_ref[...]
    y2 = jnp.where(y2 >= 0, y2, SLOPE2 * y2)

    o_ref[0] = y2


@jax.jit
def cnn_model_forward(x_ncdhw, params):
    """CNNModel.forward.  x_ncdhw: (N, 1, D, H, W) float32 (PyTorch layout)."""
    w1, b1, w2, b2 = params                         # weights in DHWIO layout
    n = x_ncdhw.shape[0]

    # C == 1 on both input and output, so NCDHW <-> flat spatial is a pure reshape.
    x_flat = x_ncdhw.reshape(n, 1, P).astype(jnp.float32)
    w1t = w1.reshape(K * K * K, C1).T.astype(jnp.float32)          # (32, 27)
    w2t = w2.reshape(1, K * K * K * C1).astype(jnp.float32)        # (1, 864)
    b1c = b1.reshape(C1, 1).astype(jnp.float32)
    b2c = b2.reshape(1, 1).astype(jnp.float32)

    out_flat = pl.pallas_call(
        _fused_cnn_kernel,
        out_shape=jax.ShapeDtypeStruct((n, 1, P), jnp.float32),
        grid=(n,),
        in_specs=[
            pl.BlockSpec((1, 1, P), lambda i: (i, 0, 0)),
            pl.BlockSpec((C1, K * K * K), lambda i: (0, 0)),
            pl.BlockSpec((C1, 1), lambda i: (0, 0)),
            pl.BlockSpec((1, K * K * K * C1), lambda i: (0, 0)),
            pl.BlockSpec((1, 1), lambda i: (0, 0)),
        ],
        out_specs=pl.BlockSpec((1, 1, P), lambda i: (i, 0, 0)),
        compiler_params=pltpu.CompilerParams(
            dimension_semantics=("parallel",)),
    )(x_flat, w1t, b1c, w2t, b2c)

    return out_flat.reshape(n, 1, D, H, W)


def _reference_forward(x_ncdhw, params):
    """Pure-JAX reference (lax conv) for a correctness check."""
    w1, b1, w2, b2 = params
    x = jnp.transpose(x_ncdhw, (0, 2, 3, 4, 1))
    dn = ("NDHWC", "DHWIO", "NDHWC")

    def layer(v, w, b):
        y = lax.conv_general_dilated(v, w, window_strides=(1, 1, 1),
                                     padding=[(1, 1)] * 3,
                                     dimension_numbers=dn) + b
        y = jnp.where(y >= 0, y, NEG_SLOPE * y)
        y = jnp.where(y >= 0, y, NEG_SLOPE * y)
        return y

    out = layer(layer(x, w1, b1), w2, b2)
    return jnp.transpose(out, (0, 4, 1, 2, 3))


if __name__ == "__main__":
    key = jax.random.PRNGKey(0)
    kx, k1, k2, k3, k4 = jax.random.split(key, 5)

    N = 2
    x = jax.random.normal(kx, (N, 1, D, H, W), dtype=jnp.float32)

    # Deterministic synthetic parameters (DHWIO weight layout).
    w1 = 0.1 * jax.random.normal(k1, (K, K, K, 1, C1), dtype=jnp.float32)
    b1 = 0.1 * jax.random.normal(k2, (C1,), dtype=jnp.float32)
    w2 = 0.1 * jax.random.normal(k3, (K, K, K, C1, 1), dtype=jnp.float32)
    b2 = 0.1 * jax.random.normal(k4, (1,), dtype=jnp.float32)
    params = (w1, b1, w2, b2)

    out = cnn_model_forward(x, params)
    jax.block_until_ready(out)

    ref = _reference_forward(x, params)
    assert out.shape == (N, 1, D, H, W)
    assert jnp.allclose(out, ref, rtol=1e-4, atol=1e-4), "mismatch vs reference"

    print("KERNEL_OK")
</pallas_src>

<mosaic_0001>
module attributes {stable_mosaic.version = 11 : i64} {
  func.func @_fused_cnn_kernel(%arg0: i32, %arg1: memref<1x1x512xf32, #tpu.memory_space<vmem>>, %arg2: memref<32x27xf32, #tpu.memory_space<vmem>>, %arg3: memref<32x1xf32, #tpu.memory_space<vmem>>, %arg4: memref<1x864xf32, #tpu.memory_space<vmem>>, %arg5: memref<1x1xf32, #tpu.memory_space<vmem>>, %arg6: memref<1x1x512xf32, #tpu.memory_space<vmem>>) attributes {dimension_semantics = [#tpu.dimension_semantics<parallel>], iteration_bounds = array<i64: 2>, scalar_prefetch = 0 : i64, scratch_operands = 0 : i64, tpu.core_type = #tpu.core_type<tc>, window_params = [{transform_indices = @transform_0, window_bounds = array<i64: 1, 1, 512>}, {pipeline_mode = #tpu.pipeline_mode<synchronous>, transform_indices = @transform_1, window_bounds = array<i64: 32, 27>}, {pipeline_mode = #tpu.pipeline_mode<synchronous>, transform_indices = @transform_2, window_bounds = array<i64: 32, 1>}, {pipeline_mode = #tpu.pipeline_mode<synchronous>, transform_indices = @transform_3, window_bounds = array<i64: 1, 864>}, {pipeline_mode = #tpu.pipeline_mode<synchronous>, transform_indices = @transform_4, window_bounds = array<i64: 1, 1>}, {transform_indices = @transform_5, window_bounds = array<i64: 1, 1, 512>}]} {
    %0 = tpu.iota {dimensions = array<i32: 1>} : vector<1x512xi32>
    %c6_i32 = arith.constant 6 : i32
    %1 = vector.broadcast %c6_i32 : i32 to vector<1x512xi32>
    %2 = arith.shrsi %0, %1 : vector<1x512xi32>
    %c3_i32 = arith.constant 3 : i32
    %3 = vector.broadcast %c3_i32 : i32 to vector<1x512xi32>
    %4 = arith.shrsi %0, %3 : vector<1x512xi32>
    %c7_i32 = arith.constant 7 : i32
    %5 = vector.broadcast %c7_i32 : i32 to vector<1x512xi32>
    %6 = arith.andi %4, %5 : vector<1x512xi32>
    %c7_i32_0 = arith.constant 7 : i32
    %7 = vector.broadcast %c7_i32_0 : i32 to vector<1x512xi32>
    %8 = arith.andi %0, %7 : vector<1x512xi32>
    %c-1_i32 = arith.constant -1 : i32
    %9 = vector.broadcast %c-1_i32 : i32 to vector<1x512xi32>
    %10 = arith.addi %2, %9 : vector<1x512xi32>
    %c0_i32 = arith.constant 0 : i32
    %11 = vector.broadcast %c0_i32 : i32 to vector<1x512xi32>
    %12 = arith.cmpi sge, %10, %11 : vector<1x512xi32>
    %c-1_i32_1 = arith.constant -1 : i32
    %13 = vector.broadcast %c-1_i32_1 : i32 to vector<1x512xi32>
    %14 = arith.addi %2, %13 : vector<1x512xi32>
    %c8_i32 = arith.constant 8 : i32
    %15 = vector.broadcast %c8_i32 : i32 to vector<1x512xi32>
    %16 = arith.cmpi slt, %14, %15 : vector<1x512xi32>
    %17 = arith.andi %12, %16 : vector<1x512xi1>
    %c-1_i32_2 = arith.constant -1 : i32
    %18 = vector.broadcast %c-1_i32_2 : i32 to vector<1x512xi32>
    %19 = arith.addi %6, %18 : vector<1x512xi32>
    %c0_i32_3 = arith.constant 0 : i32
    %20 = vector.broadcast %c0_i32_3 : i32 to vector<1x512xi32>
    %21 = arith.cmpi sge, %19, %20 : vector<1x512xi32>
    %22 = arith.andi %17, %21 : vector<1x512xi1>
    %c-1_i32_4 = arith.constant -1 : i32
    %23 = vector.broadcast %c-1_i32_4 : i32 to vector<1x512xi32>
    %24 = arith.addi %6, %23 : vector<1x512xi32>
    %c8_i32_5 = arith.constant 8 : i32
    %25 = vector.broadcast %c8_i32_5 : i32 to vector<1x512xi32>
    %26 = arith.cmpi slt, %24, %25 : vector<1x512xi32>
    %27 = arith.andi %22, %26 : vector<1x512xi1>
    %c-1_i32_6 = arith.constant -1 : i32
    %28 = vector.broadcast %c-1_i32_6 : i32 to vector<1x512xi32>
    %29 = arith.addi %8, %28 : vector<1x512xi32>
    %c0_i32_7 = arith.constant 0 : i32
    %30 = vector.broadcast %c0_i32_7 : i32 to vector<1x512xi32>
    %31 = arith.cmpi sge, %29, %30 : vector<1x512xi32>
    %32 = arith.andi %27, %31 : vector<1x512xi1>
    %c-1_i32_8 = arith.constant -1 : i32
    %33 = vector.broadcast %c-1_i32_8 : i32 to vector<1x512xi32>
    %34 = arith.addi %8, %33 : vector<1x512xi32>
    %c8_i32_9 = arith.constant 8 : i32
    %35 = vector.broadcast %c8_i32_9 : i32 to vector<1x512xi32>
    %36 = arith.cmpi slt, %34, %35 : vector<1x512xi32>
    %37 = arith.andi %32, %36 : vector<1x512xi1>
    %cst = arith.constant 1.000000e+00 : f32
    %cst_10 = arith.constant 0.000000e+00 : f32
    %38 = vector.broadcast %cst : f32 to vector<1x512xf32>
    %39 = vector.broadcast %cst_10 : f32 to vector<1x512xf32>
    %40 = arith.select %37, %38, %39 : vector<1x512xi1>, vector<1x512xf32>
    %c-1_i32_11 = arith.constant -1 : i32
    %41 = vector.broadcast %c-1_i32_11 : i32 to vector<1x512xi32>
    %42 = arith.addi %2, %41 : vector<1x512xi32>
    %c0_i32_12 = arith.constant 0 : i32
    %43 = vector.broadcast %c0_i32_12 : i32 to vector<1x512xi32>
    %44 = arith.cmpi sge, %42, %43 : vector<1x512xi32>
    %c-1_i32_13 = arith.constant -1 : i32
    %45 = vector.broadcast %c-1_i32_13 : i32 to vector<1x512xi32>
    %46 = arith.addi %2, %45 : vector<1x512xi32>
    %c8_i32_14 = arith.constant 8 : i32
    %47 = vector.broadcast %c8_i32_14 : i32 to vector<1x512xi32>
    %48 = arith.cmpi slt, %46, %47 : vector<1x512xi32>
    %49 = arith.andi %44, %48 : vector<1x512xi1>
    %c-1_i32_15 = arith.constant -1 : i32
    %50 = vector.broadcast %c-1_i32_15 : i32 to vector<1x512xi32>
    %51 = arith.addi %6, %50 : vector<1x512xi32>
    %c0_i32_16 = arith.constant 0 : i32
    %52 = vector.broadcast %c0_i32_16 : i32 to vector<1x512xi32>
    %53 = arith.cmpi sge, %51, %52 : vector<1x512xi32>
    %54 = arith.andi %49, %53 : vector<1x512xi1>
    %c-1_i32_17 = arith.constant -1 : i32
    %55 = vector.broadcast %c-1_i32_17 : i32 to vector<1x512xi32>
    %56 = arith.addi %6, %55 : vector<1x512xi32>
    %c8_i32_18 = arith.constant 8 : i32
    %57 = vector.broadcast %c8_i32_18 : i32 to vector<1x512xi32>
    %58 = arith.cmpi slt, %56, %57 : vector<1x512xi32>
    %59 = arith.andi %54, %58 : vector<1x512xi1>
    %c0_i32_19 = arith.constant 0 : i32
    %60 = vector.broadcast %c0_i32_19 : i32 to vector<1x512xi32>
    %61 = arith.addi %8, %60 : vector<1x512xi32>
    %c0_i32_20 = arith.constant 0 : i32
    %62 = vector.broadcast %c0_i32_20 : i32 to vector<1x512xi32>
    %63 = arith.cmpi sge, %61, %62 : vector<1x512xi32>
    %64 = arith.andi %59, %63 : vector<1x512xi1>
    %c0_i32_21 = arith.constant 0 : i32
    %65 = vector.broadcast %c0_i32_21 : i32 to vector<1x512xi32>
    %66 = arith.addi %8, %65 : vector<1x512xi32>
    %c8_i32_22 = arith.constant 8 : i32
    %67 = vector.broadcast %c8_i32_22 : i32 to vector<1x512xi32>
    %68 = arith.cmpi slt, %66, %67 : vector<1x512xi32>
    %69 = arith.andi %64, %68 : vector<1x512xi1>
    %cst_23 = arith.constant 1.000000e+00 : f32
    %cst_24 = arith.constant 0.000000e+00 : f32
    %70 = vector.broadcast %cst_23 : f32 to vector<1x512xf32>
    %71 = vector.broadcast %cst_24 : f32 to vector<1x512xf32>
    %72 = arith.select %69, %70, %71 : vector<1x512xi1>, vector<1x512xf32>
    %c-1_i32_25 = arith.constant -1 : i32
    %73 = vector.broadcast %c-1_i32_25 : i32 to vector<1x512xi32>
    %74 = arith.addi %2, %73 : vector<1x512xi32>
    %c0_i32_26 = arith.constant 0 : i32
    %75 = vector.broadcast %c0_i32_26 : i32 to vector<1x512xi32>
    %76 = arith.cmpi sge, %74, %75 : vector<1x512xi32>
    %c-1_i32_27 = arith.constant -1 : i32
    %77 = vector.broadcast %c-1_i32_27 : i32 to vector<1x512xi32>
    %78 = arith.addi %2, %77 : vector<1x512xi32>
    %c8_i32_28 = arith.constant 8 : i32
    %79 = vector.broadcast %c8_i32_28 : i32 to vector<1x512xi32>
    %80 = arith.cmpi slt, %78, %79 : vector<1x512xi32>
    %81 = arith.andi %76, %80 : vector<1x512xi1>
    %c-1_i32_29 = arith.constant -1 : i32
    %82 = vector.broadcast %c-1_i32_29 : i32 to vector<1x512xi32>
    %83 = arith.addi %6, %82 : vector<1x512xi32>
    %c0_i32_30 = arith.constant 0 : i32
    %84 = vector.broadcast %c0_i32_30 : i32 to vector<1x512xi32>
    %85 = arith.cmpi sge, %83, %84 : vector<1x512xi32>
    %86 = arith.andi %81, %85 : vector<1x512xi1>
    %c-1_i32_31 = arith.constant -1 : i32
    %87 = vector.broadcast %c-1_i32_31 : i32 to vector<1x512xi32>
    %88 = arith.addi %6, %87 : vector<1x512xi32>
    %c8_i32_32 = arith.constant 8 : i32
    %89 = vector.broadcast %c8_i32_32 : i32 to vector<1x512xi32>
    %90 = arith.cmpi slt, %88, %89 : vector<1x512xi32>
    %91 = arith.andi %86, %90 : vector<1x512xi1>
    %c1_i32 = arith.constant 1 : i32
    %92 = vector.broadcast %c1_i32 : i32 to vector<1x512xi32>
    %93 = arith.addi %8, %92 : vector<1x512xi32>
    %c0_i32_33 = arith.constant 0 : i32
    %94 = vector.broadcast %c0_i32_33 : i32 to vector<1x512xi32>
    %95 = arith.cmpi sge, %93, %94 : vector<1x512xi32>
    %96 = arith.andi %91, %95 : vector<1x512xi1>
    %c1_i32_34 = arith.constant 1 : i32
    %97 = vector.broadcast %c1_i32_34 : i32 to vector<1x512xi32>
    %98 = arith.addi %8, %97 : vector<1x512xi32>
    %c8_i32_35 = arith.constant 8 : i32
    %99 = vector.broadcast %c8_i32_35 : i32 to vector<1x512xi32>
    %100 = arith.cmpi slt, %98, %99 : vector<1x512xi32>
    %101 = arith.andi %96, %100 : vector<1x512xi1>
    %cst_36 = arith.constant 1.000000e+00 : f32
    %cst_37 = arith.constant 0.000000e+00 : f32
    %102 = vector.broadcast %cst_36 : f32 to vector<1x512xf32>
    %103 = vector.broadcast %cst_37 : f32 to vector<1x512xf32>
    %104 = arith.select %101, %102, %103 : vector<1x512xi1>, vector<1x512xf32>
    %c-1_i32_38 = arith.constant -1 : i32
    %105 = vector.broadcast %c-1_i32_38 : i32 to vector<1x512xi32>
    %106 = arith.addi %2, %105 : vector<1x512xi32>
    %c0_i32_39 = arith.constant 0 : i32
    %107 = vector.broadcast %c0_i32_39 : i32 to vector<1x512xi32>
    %108 = arith.cmpi sge, %106, %107 : vector<1x512xi32>
    %c-1_i32_40 = arith.constant -1 : i32
    %109 = vector.broadcast %c-1_i32_40 : i32 to vector<1x512xi32>
    %110 = arith.addi %2, %109 : vector<1x512xi32>
    %c8_i32_41 = arith.constant 8 : i32
    %111 = vector.broadcast %c8_i32_41 : i32 to vector<1x512xi32>
    %112 = arith.cmpi slt, %110, %111 : vector<1x512xi32>
    %113 = arith.andi %108, %112 : vector<1x512xi1>
    %c0_i32_42 = arith.constant 0 : i32
    %114 = vector.broadcast %c0_i32_42 : i32 to vector<1x512xi32>
    %115 = arith.addi %6, %114 : vector<1x512xi32>
    %c0_i32_43 = arith.constant 0 : i32
    %116 = vector.broadcast %c0_i32_43 : i32 to vector<1x512xi32>
    %117 = arith.cmpi sge, %115, %116 : vector<1x512xi32>
    %118 = arith.andi %113, %117 : vector<1x512xi1>
    %c0_i32_44 = arith.constant 0 : i32
    %119 = vector.broadcast %c0_i32_44 : i32 to vector<1x512xi32>
    %120 = arith.addi %6, %119 : vector<1x512xi32>
    %c8_i32_45 = arith.constant 8 : i32
    %121 = vector.broadcast %c8_i32_45 : i32 to vector<1x512xi32>
    %122 = arith.cmpi slt, %120, %121 : vector<1x512xi32>
    %123 = arith.andi %118, %122 : vector<1x512xi1>
    %c-1_i32_46 = arith.constant -1 : i32
    %124 = vector.broadcast %c-1_i32_46 : i32 to vector<1x512xi32>
    %125 = arith.addi %8, %124 : vector<1x512xi32>
    %c0_i32_47 = arith.constant 0 : i32
    %126 = vector.broadcast %c0_i32_47 : i32 to vector<1x512xi32>
    %127 = arith.cmpi sge, %125, %126 : vector<1x512xi32>
    %128 = arith.andi %123, %127 : vector<1x512xi1>
    %c-1_i32_48 = arith.constant -1 : i32
    %129 = vector.broadcast %c-1_i32_48 : i32 to vector<1x512xi32>
    %130 = arith.addi %8, %129 : vector<1x512xi32>
    %c8_i32_49 = arith.constant 8 : i32
    %131 = vector.broadcast %c8_i32_49 : i32 to vector<1x512xi32>
    %132 = arith.cmpi slt, %130, %131 : vector<1x512xi32>
    %133 = arith.andi %128, %132 : vector<1x512xi1>
    %cst_50 = arith.constant 1.000000e+00 : f32
    %cst_51 = arith.constant 0.000000e+00 : f32
    %134 = vector.broadcast %cst_50 : f32 to vector<1x512xf32>
    %135 = vector.broadcast %cst_51 : f32 to vector<1x512xf32>
    %136 = arith.select %133, %134, %135 : vector<1x512xi1>, vector<1x512xf32>
    %c-1_i32_52 = arith.constant -1 : i32
    %137 = vector.broadcast %c-1_i32_52 : i32 to vector<1x512xi32>
    %138 = arith.addi %2, %137 : vector<1x512xi32>
    %c0_i32_53 = arith.constant 0 : i32
    %139 = vector.broadcast %c0_i32_53 : i32 to vector<1x512xi32>
    %140 = arith.cmpi sge, %138, %139 : vector<1x512xi32>
    %c-1_i32_54 = arith.constant -1 : i32
    %141 = vector.broadcast %c-1_i32_54 : i32 to vector<1x512xi32>
    %142 = arith.addi %2, %141 : vector<1x512xi32>
    %c8_i32_55 = arith.constant 8 : i32
    %143 = vector.broadcast %c8_i32_55 : i32 to vector<1x512xi32>
    %144 = arith.cmpi slt, %142, %143 : vector<1x512xi32>
    %145 = arith.andi %140, %144 : vector<1x512xi1>
    %c0_i32_56 = arith.constant 0 : i32
    %146 = vector.broadcast %c0_i32_56 : i32 to vector<1x512xi32>
    %147 = arith.addi %6, %146 : vector<1x512xi32>
    %c0_i32_57 = arith.constant 0 : i32
    %148 = vector.broadcast %c0_i32_57 : i32 to vector<1x512xi32>
    %149 = arith.cmpi sge, %147, %148 : vector<1x512xi32>
    %150 = arith.andi %145, %149 : vector<1x512xi1>
    %c0_i32_58 = arith.constant 0 : i32
    %151 = vector.broadcast %c0_i32_58 : i32 to vector<1x512xi32>
    %152 = arith.addi %6, %151 : vector<1x512xi32>
    %c8_i32_59 = arith.constant 8 : i32
    %153 = vector.broadcast %c8_i32_59 : i32 to vector<1x512xi32>
    %154 = arith.cmpi slt, %152, %153 : vector<1x512xi32>
    %155 = arith.andi %150, %154 : vector<1x512xi1>
    %c0_i32_60 = arith.constant 0 : i32
    %156 = vector.broadcast %c0_i32_60 : i32 to vector<1x512xi32>
    %157 = arith.addi %8, %156 : vector<1x512xi32>
    %c0_i32_61 = arith.constant 0 : i32
    %158 = vector.broadcast %c0_i32_61 : i32 to vector<1x512xi32>
    %159 = arith.cmpi sge, %157, %158 : vector<1x512xi32>
    %160 = arith.andi %155, %159 : vector<1x512xi1>
    %c0_i32_62 = arith.constant 0 : i32
    %161 = vector.broadcast %c0_i32_62 : i32 to vector<1x512xi32>
    %162 = arith.addi %8, %161 : vector<1x512xi32>
    %c8_i32_63 = arith.constant 8 : i32
    %163 = vector.broadcast %c8_i32_63 : i32 to vector<1x512xi32>
    %164 = arith.cmpi slt, %162, %163 : vector<1x512xi32>
    %165 = arith.andi %160, %164 : vector<1x512xi1>
    %cst_64 = arith.constant 1.000000e+00 : f32
    %cst_65 = arith.constant 0.000000e+00 : f32
    %166 = vector.broadcast %cst_64 : f32 to vector<1x512xf32>
    %167 = vector.broadcast %cst_65 : f32 to vector<1x512xf32>
    %168 = arith.select %165, %166, %167 : vector<1x512xi1>, vector<1x512xf32>
    %c-1_i32_66 = arith.constant -1 : i32
    %169 = vector.broadcast %c-1_i32_66 : i32 to vector<1x512xi32>
    %170 = arith.addi %2, %169 : vector<1x512xi32>
    %c0_i32_67 = arith.constant 0 : i32
    %171 = vector.broadcast %c0_i32_67 : i32 to vector<1x512xi32>
    %172 = arith.cmpi sge, %170, %171 : vector<1x512xi32>
    %c-1_i32_68 = arith.constant -1 : i32
    %173 = vector.broadcast %c-1_i32_68 : i32 to vector<1x512xi32>
    %174 = arith.addi %2, %173 : vector<1x512xi32>
    %c8_i32_69 = arith.constant 8 : i32
    %175 = vector.broadcast %c8_i32_69 : i32 to vector<1x512xi32>
    %176 = arith.cmpi slt, %174, %175 : vector<1x512xi32>
    %177 = arith.andi %172, %176 : vector<1x512xi1>
    %c0_i32_70 = arith.constant 0 : i32
    %178 = vector.broadcast %c0_i32_70 : i32 to vector<1x512xi32>
    %179 = arith.addi %6, %178 : vector<1x512xi32>
    %c0_i32_71 = arith.constant 0 : i32
    %180 = vector.broadcast %c0_i32_71 : i32 to vector<1x512xi32>
    %181 = arith.cmpi sge, %179, %180 : vector<1x512xi32>
    %182 = arith.andi %177, %181 : vector<1x512xi1>
    %c0_i32_72 = arith.constant 0 : i32
    %183 = vector.broadcast %c0_i32_72 : i32 to vector<1x512xi32>
    %184 = arith.addi %6, %183 : vector<1x512xi32>
    %c8_i32_73 = arith.constant 8 : i32
    %185 = vector.broadcast %c8_i32_73 : i32 to vector<1x512xi32>
    %186 = arith.cmpi slt, %184, %185 : vector<1x512xi32>
    %187 = arith.andi %182, %186 : vector<1x512xi1>
    %c1_i32_74 = arith.constant 1 : i32
    %188 = vector.broadcast %c1_i32_74 : i32 to vector<1x512xi32>
    %189 = arith.addi %8, %188 : vector<1x512xi32>
    %c0_i32_75 = arith.constant 0 : i32
    %190 = vector.broadcast %c0_i32_75 : i32 to vector<1x512xi32>
    %191 = arith.cmpi sge, %189, %190 : vector<1x512xi32>
    %192 = arith.andi %187, %191 : vector<1x512xi1>
    %c1_i32_76 = arith.constant 1 : i32
    %193 = vector.broadcast %c1_i32_76 : i32 to vector<1x512xi32>
    %194 = arith.addi %8, %193 : vector<1x512xi32>
    %c8_i32_77 = arith.constant 8 : i32
    %195 = vector.broadcast %c8_i32_77 : i32 to vector<1x512xi32>
    %196 = arith.cmpi slt, %194, %195 : vector<1x512xi32>
    %197 = arith.andi %192, %196 : vector<1x512xi1>
    %cst_78 = arith.constant 1.000000e+00 : f32
    %cst_79 = arith.constant 0.000000e+00 : f32
    %198 = vector.broadcast %cst_78 : f32 to vector<1x512xf32>
    %199 = vector.broadcast %cst_79 : f32 to vector<1x512xf32>
    %200 = arith.select %197, %198, %199 : vector<1x512xi1>, vector<1x512xf32>
    %c-1_i32_80 = arith.constant -1 : i32
    %201 = vector.broadcast %c-1_i32_80 : i32 to vector<1x512xi32>
    %202 = arith.addi %2, %201 : vector<1x512xi32>
    %c0_i32_81 = arith.constant 0 : i32
    %203 = vector.broadcast %c0_i32_81 : i32 to vector<1x512xi32>
    %204 = arith.cmpi sge, %202, %203 : vector<1x512xi32>
    %c-1_i32_82 = arith.constant -1 : i32
    %205 = vector.broadcast %c-1_i32_82 : i32 to vector<1x512xi32>
    %206 = arith.addi %2, %205 : vector<1x512xi32>
    %c8_i32_83 = arith.constant 8 : i32
    %207 = vector.broadcast %c8_i32_83 : i32 to vector<1x512xi32>
    %208 = arith.cmpi slt, %206, %207 : vector<1x512xi32>
    %209 = arith.andi %204, %208 : vector<1x512xi1>
    %c1_i32_84 = arith.constant 1 : i32
    %210 = vector.broadcast %c1_i32_84 : i32 to vector<1x512xi32>
    %211 = arith.addi %6, %210 : vector<1x512xi32>
    %c0_i32_85 = arith.constant 0 : i32
    %212 = vector.broadcast %c0_i32_85 : i32 to vector<1x512xi32>
    %213 = arith.cmpi sge, %211, %212 : vector<1x512xi32>
    %214 = arith.andi %209, %213 : vector<1x512xi1>
    %c1_i32_86 = arith.constant 1 : i32
    %215 = vector.broadcast %c1_i32_86 : i32 to vector<1x512xi32>
    %216 = arith.addi %6, %215 : vector<1x512xi32>
    %c8_i32_87 = arith.constant 8 : i32
    %217 = vector.broadcast %c8_i32_87 : i32 to vector<1x512xi32>
    %218 = arith.cmpi slt, %216, %217 : vector<1x512xi32>
    %219 = arith.andi %214, %218 : vector<1x512xi1>
    %c-1_i32_88 = arith.constant -1 : i32
    %220 = vector.broadcast %c-1_i32_88 : i32 to vector<1x512xi32>
    %221 = arith.addi %8, %220 : vector<1x512xi32>
    %c0_i32_89 = arith.constant 0 : i32
    %222 = vector.broadcast %c0_i32_89 : i32 to vector<1x512xi32>
    %223 = arith.cmpi sge, %221, %222 : vector<1x512xi32>
    %224 = arith.andi %219, %223 : vector<1x512xi1>
    %c-1_i32_90 = arith.constant -1 : i32
    %225 = vector.broadcast %c-1_i32_90 : i32 to vector<1x512xi32>
    %226 = arith.addi %8, %225 : vector<1x512xi32>
    %c8_i32_91 = arith.constant 8 : i32
    %227 = vector.broadcast %c8_i32_91 : i32 to vector<1x512xi32>
    %228 = arith.cmpi slt, %226, %227 : vector<1x512xi32>
    %229 = arith.andi %224, %228 : vector<1x512xi1>
    %cst_92 = arith.constant 1.000000e+00 : f32
    %cst_93 = arith.constant 0.000000e+00 : f32
    %230 = vector.broadcast %cst_92 : f32 to vector<1x512xf32>
    %231 = vector.broadcast %cst_93 : f32 to vector<1x512xf32>
    %232 = arith.select %229, %230, %231 : vector<1x512xi1>, vector<1x512xf32>
    %c-1_i32_94 = arith.constant -1 : i32
    %233 = vector.broadcast %c-1_i32_94 : i32 to vector<1x512xi32>
    %234 = arith.addi %2, %233 : vector<1x512xi32>
    %c0_i32_95 = arith.constant 0 : i32
    %235 = vector.broadcast %c0_i32_95 : i32 to vector<1x512xi32>
    %236 = arith.cmpi sge, %234, %235 : vector<1x512xi32>
    %c-1_i32_96 = arith.constant -1 : i32
    %237 = vector.broadcast %c-1_i32_96 : i32 to vector<1x512xi32>
    %238 = arith.addi %2, %237 : vector<1x512xi32>
    %c8_i32_97 = arith.constant 8 : i32
    %239 = vector.broadcast %c8_i32_97 : i32 to vector<1x512xi32>
    %240 = arith.cmpi slt, %238, %239 : vector<1x512xi32>
    %241 = arith.andi %236, %240 : vector<1x512xi1>
    %c1_i32_98 = arith.constant 1 : i32
    %242 = vector.broadcast %c1_i32_98 : i32 to vector<1x512xi32>
    %243 = arith.addi %6, %242 : vector<1x512xi32>
    %c0_i32_99 = arith.constant 0 : i32
    %244 = vector.broadcast %c0_i32_99 : i32 to vector<1x512xi32>
    %245 = arith.cmpi sge, %243, %244 : vector<1x512xi32>
    %246 = arith.andi %241, %245 : vector<1x512xi1>
    %c1_i32_100 = arith.constant 1 : i32
    %247 = vector.broadcast %c1_i32_100 : i32 to vector<1x512xi32>
    %248 = arith.addi %6, %247 : vector<1x512xi32>
    %c8_i32_101 = arith.constant 8 : i32
    %249 = vector.broadcast %c8_i32_101 : i32 to vector<1x512xi32>
    %250 = arith.cmpi slt, %248, %249 : vector<1x512xi32>
    %251 = arith.andi %246, %250 : vector<1x512xi1>
    %c0_i32_102 = arith.constant 0 : i32
    %252 = vector.broadcast %c0_i32_102 : i32 to vector<1x512xi32>
    %253 = arith.addi %8, %252 : vector<1x512xi32>
    %c0_i32_103 = arith.constant 0 : i32
    %254 = vector.broadcast %c0_i32_103 : i32 to vector<1x512xi32>
    %255 = arith.cmpi sge, %253, %254 : vector<1x512xi32>
    %256 = arith.andi %251, %255 : vector<1x512xi1>
    %c0_i32_104 = arith.constant 0 : i32
    %257 = vector.broadcast %c0_i32_104 : i32 to vector<1x512xi32>
    %258 = arith.addi %8, %257 : vector<1x512xi32>
    %c8_i32_105 = arith.constant 8 : i32
    %259 = vector.broadcast %c8_i32_105 : i32 to vector<1x512xi32>
    %260 = arith.cmpi slt, %258, %259 : vector<1x512xi32>
    %261 = arith.andi %256, %260 : vector<1x512xi1>
    %cst_106 = arith.constant 1.000000e+00 : f32
    %cst_107 = arith.constant 0.000000e+00 : f32
    %262 = vector.broadcast %cst_106 : f32 to vector<1x512xf32>
    %263 = vector.broadcast %cst_107 : f32 to vector<1x512xf32>
    %264 = arith.select %261, %262, %263 : vector<1x512xi1>, vector<1x512xf32>
    %c-1_i32_108 = arith.constant -1 : i32
    %265 = vector.broadcast %c-1_i32_108 : i32 to vector<1x512xi32>
    %266 = arith.addi %2, %265 : vector<1x512xi32>
    %c0_i32_109 = arith.constant 0 : i32
    %267 = vector.broadcast %c0_i32_109 : i32 to vector<1x512xi32>
    %268 = arith.cmpi sge, %266, %267 : vector<1x512xi32>
    %c-1_i32_110 = arith.constant -1 : i32
    %269 = vector.broadcast %c-1_i32_110 : i32 to vector<1x512xi32>
    %270 = arith.addi %2, %269 : vector<1x512xi32>
    %c8_i32_111 = arith.constant 8 : i32
    %271 = vector.broadcast %c8_i32_111 : i32 to vector<1x512xi32>
    %272 = arith.cmpi slt, %270, %271 : vector<1x512xi32>
    %273 = arith.andi %268, %272 : vector<1x512xi1>
    %c1_i32_112 = arith.constant 1 : i32
    %274 = vector.broadcast %c1_i32_112 : i32 to vector<1x512xi32>
    %275 = arith.addi %6, %274 : vector<1x512xi32>
    %c0_i32_113 = arith.constant 0 : i32
    %276 = vector.broadcast %c0_i32_113 : i32 to vector<1x512xi32>
    %277 = arith.cmpi sge, %275, %276 : vector<1x512xi32>
    %278 = arith.andi %273, %277 : vector<1x512xi1>
    %c1_i32_114 = arith.constant 1 : i32
    %279 = vector.broadcast %c1_i32_114 : i32 to vector<1x512xi32>
    %280 = arith.addi %6, %279 : vector<1x512xi32>
    %c8_i32_115 = arith.constant 8 : i32
    %281 = vector.broadcast %c8_i32_115 : i32 to vector<1x512xi32>
    %282 = arith.cmpi slt, %280, %281 : vector<1x512xi32>
    %283 = arith.andi %278, %282 : vector<1x512xi1>
    %c1_i32_116 = arith.constant 1 : i32
    %284 = vector.broadcast %c1_i32_116 : i32 to vector<1x512xi32>
    %285 = arith.addi %8, %284 : vector<1x512xi32>
    %c0_i32_117 = arith.constant 0 : i32
    %286 = vector.broadcast %c0_i32_117 : i32 to vector<1x512xi32>
    %287 = arith.cmpi sge, %285, %286 : vector<1x512xi32>
    %288 = arith.andi %283, %287 : vector<1x512xi1>
    %c1_i32_118 = arith.constant 1 : i32
    %289 = vector.broadcast %c1_i32_118 : i32 to vector<1x512xi32>
    %290 = arith.addi %8, %289 : vector<1x512xi32>
    %c8_i32_119 = arith.constant 8 : i32
    %291 = vector.broadcast %c8_i32_119 : i32 to vector<1x512xi32>
    %292 = arith.cmpi slt, %290, %291 : vector<1x512xi32>
    %293 = arith.andi %288, %292 : vector<1x512xi1>
    %cst_120 = arith.constant 1.000000e+00 : f32
    %cst_121 = arith.constant 0.000000e+00 : f32
    %294 = vector.broadcast %cst_120 : f32 to vector<1x512xf32>
    %295 = vector.broadcast %cst_121 : f32 to vector<1x512xf32>
    %296 = arith.select %293, %294, %295 : vector<1x512xi1>, vector<1x512xf32>
    %c0_i32_122 = arith.constant 0 : i32
    %297 = vector.broadcast %c0_i32_122 : i32 to vector<1x512xi32>
    %298 = arith.addi %2, %297 : vector<1x512xi32>
    %c0_i32_123 = arith.constant 0 : i32
    %299 = vector.broadcast %c0_i32_123 : i32 to vector<1x512xi32>
    %300 = arith.cmpi sge, %298, %299 : vector<1x512xi32>
    %c0_i32_124 = arith.constant 0 : i32
    %301 = vector.broadcast %c0_i32_124 : i32 to vector<1x512xi32>
    %302 = arith.addi %2, %301 : vector<1x512xi32>
    %c8_i32_125 = arith.constant 8 : i32
    %303 = vector.broadcast %c8_i32_125 : i32 to vector<1x512xi32>
    %304 = arith.cmpi slt, %302, %303 : vector<1x512xi32>
    %305 = arith.andi %300, %304 : vector<1x512xi1>
    %c-1_i32_126 = arith.constant -1 : i32
    %306 = vector.broadcast %c-1_i32_126 : i32 to vector<1x512xi32>
    %307 = arith.addi %6, %306 : vector<1x512xi32>
    %c0_i32_127 = arith.constant 0 : i32
    %308 = vector.broadcast %c0_i32_127 : i32 to vector<1x512xi32>
    %309 = arith.cmpi sge, %307, %308 : vector<1x512xi32>
    %310 = arith.andi %305, %309 : vector<1x512xi1>
    %c-1_i32_128 = arith.constant -1 : i32
    %311 = vector.broadcast %c-1_i32_128 : i32 to vector<1x512xi32>
    %312 = arith.addi %6, %311 : vector<1x512xi32>
    %c8_i32_129 = arith.constant 8 : i32
    %313 = vector.broadcast %c8_i32_129 : i32 to vector<1x512xi32>
    %314 = arith.cmpi slt, %312, %313 : vector<1x512xi32>
    %315 = arith.andi %310, %314 : vector<1x512xi1>
    %c-1_i32_130 = arith.constant -1 : i32
    %316 = vector.broadcast %c-1_i32_130 : i32 to vector<1x512xi32>
    %317 = arith.addi %8, %316 : vector<1x512xi32>
    %c0_i32_131 = arith.constant 0 : i32
    %318 = vector.broadcast %c0_i32_131 : i32 to vector<1x512xi32>
    %319 = arith.cmpi sge, %317, %318 : vector<1x512xi32>
    %320 = arith.andi %315, %319 : vector<1x512xi1>
    %c-1_i32_132 = arith.constant -1 : i32
    %321 = vector.broadcast %c-1_i32_132 : i32 to vector<1x512xi32>
    %322 = arith.addi %8, %321 : vector<1x512xi32>
    %c8_i32_133 = arith.constant 8 : i32
    %323 = vector.broadcast %c8_i32_133 : i32 to vector<1x512xi32>
    %324 = arith.cmpi slt, %322, %323 : vector<1x512xi32>
    %325 = arith.andi %320, %324 : vector<1x512xi1>
    %cst_134 = arith.constant 1.000000e+00 : f32
    %cst_135 = arith.constant 0.000000e+00 : f32
    %326 = vector.broadcast %cst_134 : f32 to vector<1x512xf32>
    %327 = vector.broadcast %cst_135 : f32 to vector<1x512xf32>
    %328 = arith.select %325, %326, %327 : vector<1x512xi1>, vector<1x512xf32>
    %c0_i32_136 = arith.constant 0 : i32
    %329 = vector.broadcast %c0_i32_136 : i32 to vector<1x512xi32>
    %330 = arith.addi %2, %329 : vector<1x512xi32>
    %c0_i32_137 = arith.constant 0 : i32
    %331 = vector.broadcast %c0_i32_137 : i32 to vector<1x512xi32>
    %332 = arith.cmpi sge, %330, %331 : vector<1x512xi32>
    %c0_i32_138 = arith.constant 0 : i32
    %333 = vector.broadcast %c0_i32_138 : i32 to vector<1x512xi32>
    %334 = arith.addi %2, %333 : vector<1x512xi32>
    %c8_i32_139 = arith.constant 8 : i32
    %335 = vector.broadcast %c8_i32_139 : i32 to vector<1x512xi32>
    %336 = arith.cmpi slt, %334, %335 : vector<1x512xi32>
    %337 = arith.andi %332, %336 : vector<1x512xi1>
    %c-1_i32_140 = arith.constant -1 : i32
    %338 = vector.broadcast %c-1_i32_140 : i32 to vector<1x512xi32>
    %339 = arith.addi %6, %338 : vector<1x512xi32>
    %c0_i32_141 = arith.constant 0 : i32
    %340 = vector.broadcast %c0_i32_141 : i32 to vector<1x512xi32>
    %341 = arith.cmpi sge, %339, %340 : vector<1x512xi32>
    %342 = arith.andi %337, %341 : vector<1x512xi1>
    %c-1_i32_142 = arith.constant -1 : i32
    %343 = vector.broadcast %c-1_i32_142 : i32 to vector<1x512xi32>
    %344 = arith.addi %6, %343 : vector<1x512xi32>
    %c8_i32_143 = arith.constant 8 : i32
    %345 = vector.broadcast %c8_i32_143 : i32 to vector<1x512xi32>
    %346 = arith.cmpi slt, %344, %345 : vector<1x512xi32>
    %347 = arith.andi %342, %346 : vector<1x512xi1>
    %c0_i32_144 = arith.constant 0 : i32
    %348 = vector.broadcast %c0_i32_144 : i32 to vector<1x512xi32>
    %349 = arith.addi %8, %348 : vector<1x512xi32>
    %c0_i32_145 = arith.constant 0 : i32
    %350 = vector.broadcast %c0_i32_145 : i32 to vector<1x512xi32>
    %351 = arith.cmpi sge, %349, %350 : vector<1x512xi32>
    %352 = arith.andi %347, %351 : vector<1x512xi1>
    %c0_i32_146 = arith.constant 0 : i32
    %353 = vector.broadcast %c0_i32_146 : i32 to vector<1x512xi32>
    %354 = arith.addi %8, %353 : vector<1x512xi32>
    %c8_i32_147 = arith.constant 8 : i32
    %355 = vector.broadcast %c8_i32_147 : i32 to vector<1x512xi32>
    %356 = arith.cmpi slt, %354, %355 : vector<1x512xi32>
    %357 = arith.andi %352, %356 : vector<1x512xi1>
    %cst_148 = arith.constant 1.000000e+00 : f32
    %cst_149 = arith.constant 0.000000e+00 : f32
    %358 = vector.broadcast %cst_148 : f32 to vector<1x512xf32>
    %359 = vector.broadcast %cst_149 : f32 to vector<1x512xf32>
    %360 = arith.select %357, %358, %359 : vector<1x512xi1>, vector<1x512xf32>
    %c0_i32_150 = arith.constant 0 : i32
    %361 = vector.broadcast %c0_i32_150 : i32 to vector<1x512xi32>
    %362 = arith.addi %2, %361 : vector<1x512xi32>
    %c0_i32_151 = arith.constant 0 : i32
    %363 = vector.broadcast %c0_i32_151 : i32 to vector<1x512xi32>
    %364 = arith.cmpi sge, %362, %363 : vector<1x512xi32>
    %c0_i32_152 = arith.constant 0 : i32
    %365 = vector.broadcast %c0_i32_152 : i32 to vector<1x512xi32>
    %366 = arith.addi %2, %365 : vector<1x512xi32>
    %c8_i32_153 = arith.constant 8 : i32
    %367 = vector.broadcast %c8_i32_153 : i32 to vector<1x512xi32>
    %368 = arith.cmpi slt, %366, %367 : vector<1x512xi32>
    %369 = arith.andi %364, %368 : vector<1x512xi1>
    %c-1_i32_154 = arith.constant -1 : i32
    %370 = vector.broadcast %c-1_i32_154 : i32 to vector<1x512xi32>
    %371 = arith.addi %6, %370 : vector<1x512xi32>
    %c0_i32_155 = arith.constant 0 : i32
    %372 = vector.broadcast %c0_i32_155 : i32 to vector<1x512xi32>
    %373 = arith.cmpi sge, %371, %372 : vector<1x512xi32>
    %374 = arith.andi %369, %373 : vector<1x512xi1>
    %c-1_i32_156 = arith.constant -1 : i32
    %375 = vector.broadcast %c-1_i32_156 : i32 to vector<1x512xi32>
    %376 = arith.addi %6, %375 : vector<1x512xi32>
    %c8_i32_157 = arith.constant 8 : i32
    %377 = vector.broadcast %c8_i32_157 : i32 to vector<1x512xi32>
    %378 = arith.cmpi slt, %376, %377 : vector<1x512xi32>
    %379 = arith.andi %374, %378 : vector<1x512xi1>
    %c1_i32_158 = arith.constant 1 : i32
    %380 = vector.broadcast %c1_i32_158 : i32 to vector<1x512xi32>
    %381 = arith.addi %8, %380 : vector<1x512xi32>
    %c0_i32_159 = arith.constant 0 : i32
    %382 = vector.broadcast %c0_i32_159 : i32 to vector<1x512xi32>
    %383 = arith.cmpi sge, %381, %382 : vector<1x512xi32>
    %384 = arith.andi %379, %383 : vector<1x512xi1>
    %c1_i32_160 = arith.constant 1 : i32
    %385 = vector.broadcast %c1_i32_160 : i32 to vector<1x512xi32>
    %386 = arith.addi %8, %385 : vector<1x512xi32>
    %c8_i32_161 = arith.constant 8 : i32
    %387 = vector.broadcast %c8_i32_161 : i32 to vector<1x512xi32>
    %388 = arith.cmpi slt, %386, %387 : vector<1x512xi32>
    %389 = arith.andi %384, %388 : vector<1x512xi1>
    %cst_162 = arith.constant 1.000000e+00 : f32
    %cst_163 = arith.constant 0.000000e+00 : f32
    %390 = vector.broadcast %cst_162 : f32 to vector<1x512xf32>
    %391 = vector.broadcast %cst_163 : f32 to vector<1x512xf32>
    %392 = arith.select %389, %390, %391 : vector<1x512xi1>, vector<1x512xf32>
    %c0_i32_164 = arith.constant 0 : i32
    %393 = vector.broadcast %c0_i32_164 : i32 to vector<1x512xi32>
    %394 = arith.addi %2, %393 : vector<1x512xi32>
    %c0_i32_165 = arith.constant 0 : i32
    %395 = vector.broadcast %c0_i32_165 : i32 to vector<1x512xi32>
    %396 = arith.cmpi sge, %394, %395 : vector<1x512xi32>
    %c0_i32_166 = arith.constant 0 : i32
    %397 = vector.broadcast %c0_i32_166 : i32 to vector<1x512xi32>
    %398 = arith.addi %2, %397 : vector<1x512xi32>
    %c8_i32_167 = arith.constant 8 : i32
    %399 = vector.broadcast %c8_i32_167 : i32 to vector<1x512xi32>
    %400 = arith.cmpi slt, %398, %399 : vector<1x512xi32>
    %401 = arith.andi %396, %400 : vector<1x512xi1>
    %c0_i32_168 = arith.constant 0 : i32
    %402 = vector.broadcast %c0_i32_168 : i32 to vector<1x512xi32>
    %403 = arith.addi %6, %402 : vector<1x512xi32>
    %c0_i32_169 = arith.constant 0 : i32
    %404 = vector.broadcast %c0_i32_169 : i32 to vector<1x512xi32>
    %405 = arith.cmpi sge, %403, %404 : vector<1x512xi32>
    %406 = arith.andi %401, %405 : vector<1x512xi1>
    %c0_i32_170 = arith.constant 0 : i32
    %407 = vector.broadcast %c0_i32_170 : i32 to vector<1x512xi32>
    %408 = arith.addi %6, %407 : vector<1x512xi32>
    %c8_i32_171 = arith.constant 8 : i32
    %409 = vector.broadcast %c8_i32_171 : i32 to vector<1x512xi32>
    %410 = arith.cmpi slt, %408, %409 : vector<1x512xi32>
    %411 = arith.andi %406, %410 : vector<1x512xi1>
    %c-1_i32_172 = arith.constant -1 : i32
    %412 = vector.broadcast %c-1_i32_172 : i32 to vector<1x512xi32>
    %413 = arith.addi %8, %412 : vector<1x512xi32>
    %c0_i32_173 = arith.constant 0 : i32
    %414 = vector.broadcast %c0_i32_173 : i32 to vector<1x512xi32>
    %415 = arith.cmpi sge, %413, %414 : vector<1x512xi32>
    %416 = arith.andi %411, %415 : vector<1x512xi1>
    %c-1_i32_174 = arith.constant -1 : i32
    %417 = vector.broadcast %c-1_i32_174 : i32 to vector<1x512xi32>
    %418 = arith.addi %8, %417 : vector<1x512xi32>
    %c8_i32_175 = arith.constant 8 : i32
    %419 = vector.broadcast %c8_i32_175 : i32 to vector<1x512xi32>
    %420 = arith.cmpi slt, %418, %419 : vector<1x512xi32>
    %421 = arith.andi %416, %420 : vector<1x512xi1>
    %cst_176 = arith.constant 1.000000e+00 : f32
    %cst_177 = arith.constant 0.000000e+00 : f32
    %422 = vector.broadcast %cst_176 : f32 to vector<1x512xf32>
    %423 = vector.broadcast %cst_177 : f32 to vector<1x512xf32>
    %424 = arith.select %421, %422, %423 : vector<1x512xi1>, vector<1x512xf32>
    %c0_i32_178 = arith.constant 0 : i32
    %425 = vector.broadcast %c0_i32_178 : i32 to vector<1x512xi32>
    %426 = arith.addi %2, %425 : vector<1x512xi32>
    %c0_i32_179 = arith.constant 0 : i32
    %427 = vector.broadcast %c0_i32_179 : i32 to vector<1x512xi32>
    %428 = arith.cmpi sge, %426, %427 : vector<1x512xi32>
    %c0_i32_180 = arith.constant 0 : i32
    %429 = vector.broadcast %c0_i32_180 : i32 to vector<1x512xi32>
    %430 = arith.addi %2, %429 : vector<1x512xi32>
    %c8_i32_181 = arith.constant 8 : i32
    %431 = vector.broadcast %c8_i32_181 : i32 to vector<1x512xi32>
    %432 = arith.cmpi slt, %430, %431 : vector<1x512xi32>
    %433 = arith.andi %428, %432 : vector<1x512xi1>
    %c0_i32_182 = arith.constant 0 : i32
    %434 = vector.broadcast %c0_i32_182 : i32 to vector<1x512xi32>
    %435 = arith.addi %6, %434 : vector<1x512xi32>
    %c0_i32_183 = arith.constant 0 : i32
    %436 = vector.broadcast %c0_i32_183 : i32 to vector<1x512xi32>
    %437 = arith.cmpi sge, %435, %436 : vector<1x512xi32>
    %438 = arith.andi %433, %437 : vector<1x512xi1>
    %c0_i32_184 = arith.constant 0 : i32
    %439 = vector.broadcast %c0_i32_184 : i32 to vector<1x512xi32>
    %440 = arith.addi %6, %439 : vector<1x512xi32>
    %c8_i32_185 = arith.constant 8 : i32
    %441 = vector.broadcast %c8_i32_185 : i32 to vector<1x512xi32>
    %442 = arith.cmpi slt, %440, %441 : vector<1x512xi32>
    %443 = arith.andi %438, %442 : vector<1x512xi1>
    %c0_i32_186 = arith.constant 0 : i32
    %444 = vector.broadcast %c0_i32_186 : i32 to vector<1x512xi32>
    %445 = arith.addi %8, %444 : vector<1x512xi32>
    %c0_i32_187 = arith.constant 0 : i32
    %446 = vector.broadcast %c0_i32_187 : i32 to vector<1x512xi32>
    %447 = arith.cmpi sge, %445, %446 : vector<1x512xi32>
    %448 = arith.andi %443, %447 : vector<1x512xi1>
    %c0_i32_188 = arith.constant 0 : i32
    %449 = vector.broadcast %c0_i32_188 : i32 to vector<1x512xi32>
    %450 = arith.addi %8, %449 : vector<1x512xi32>
    %c8_i32_189 = arith.constant 8 : i32
    %451 = vector.broadcast %c8_i32_189 : i32 to vector<1x512xi32>
    %452 = arith.cmpi slt, %450, %451 : vector<1x512xi32>
    %453 = arith.andi %448, %452 : vector<1x512xi1>
    %cst_190 = arith.constant 1.000000e+00 : f32
    %cst_191 = arith.constant 0.000000e+00 : f32
    %454 = vector.broadcast %cst_190 : f32 to vector<1x512xf32>
    %455 = vector.broadcast %cst_191 : f32 to vector<1x512xf32>
    %456 = arith.select %453, %454, %455 : vector<1x512xi1>, vector<1x512xf32>
    %c0_i32_192 = arith.constant 0 : i32
    %457 = vector.broadcast %c0_i32_192 : i32 to vector<1x512xi32>
    %458 = arith.addi %2, %457 : vector<1x512xi32>
    %c0_i32_193 = arith.constant 0 : i32
    %459 = vector.broadcast %c0_i32_193 : i32 to vector<1x512xi32>
    %460 = arith.cmpi sge, %458, %459 : vector<1x512xi32>
    %c0_i32_194 = arith.constant 0 : i32
    %461 = vector.broadcast %c0_i32_194 : i32 to vector<1x512xi32>
    %462 = arith.addi %2, %461 : vector<1x512xi32>
    %c8_i32_195 = arith.constant 8 : i32
    %463 = vector.broadcast %c8_i32_195 : i32 to vector<1x512xi32>
    %464 = arith.cmpi slt, %462, %463 : vector<1x512xi32>
    %465 = arith.andi %460, %464 : vector<1x512xi1>
    %c0_i32_196 = arith.constant 0 : i32
    %466 = vector.broadcast %c0_i32_196 : i32 to vector<1x512xi32>
    %467 = arith.addi %6, %466 : vector<1x512xi32>
    %c0_i32_197 = arith.constant 0 : i32
    %468 = vector.broadcast %c0_i32_197 : i32 to vector<1x512xi32>
    %469 = arith.cmpi sge, %467, %468 : vector<1x512xi32>
    %470 = arith.andi %465, %469 : vector<1x512xi1>
    %c0_i32_198 = arith.constant 0 : i32
    %471 = vector.broadcast %c0_i32_198 : i32 to vector<1x512xi32>
    %472 = arith.addi %6, %471 : vector<1x512xi32>
    %c8_i32_199 = arith.constant 8 : i32
    %473 = vector.broadcast %c8_i32_199 : i32 to vector<1x512xi32>
    %474 = arith.cmpi slt, %472, %473 : vector<1x512xi32>
    %475 = arith.andi %470, %474 : vector<1x512xi1>
    %c1_i32_200 = arith.constant 1 : i32
    %476 = vector.broadcast %c1_i32_200 : i32 to vector<1x512xi32>
    %477 = arith.addi %8, %476 : vector<1x512xi32>
    %c0_i32_201 = arith.constant 0 : i32
    %478 = vector.broadcast %c0_i32_201 : i32 to vector<1x512xi32>
    %479 = arith.cmpi sge, %477, %478 : vector<1x512xi32>
    %480 = arith.andi %475, %479 : vector<1x512xi1>
    %c1_i32_202 = arith.constant 1 : i32
    %481 = vector.broadcast %c1_i32_202 : i32 to vector<1x512xi32>
    %482 = arith.addi %8, %481 : vector<1x512xi32>
    %c8_i32_203 = arith.constant 8 : i32
    %483 = vector.broadcast %c8_i32_203 : i32 to vector<1x512xi32>
    %484 = arith.cmpi slt, %482, %483 : vector<1x512xi32>
    %485 = arith.andi %480, %484 : vector<1x512xi1>
    %cst_204 = arith.constant 1.000000e+00 : f32
    %cst_205 = arith.constant 0.000000e+00 : f32
    %486 = vector.broadcast %cst_204 : f32 to vector<1x512xf32>
    %487 = vector.broadcast %cst_205 : f32 to vector<1x512xf32>
    %488 = arith.select %485, %486, %487 : vector<1x512xi1>, vector<1x512xf32>
    %c0_i32_206 = arith.constant 0 : i32
    %489 = vector.broadcast %c0_i32_206 : i32 to vector<1x512xi32>
    %490 = arith.addi %2, %489 : vector<1x512xi32>
    %c0_i32_207 = arith.constant 0 : i32
    %491 = vector.broadcast %c0_i32_207 : i32 to vector<1x512xi32>
    %492 = arith.cmpi sge, %490, %491 : vector<1x512xi32>
    %c0_i32_208 = arith.constant 0 : i32
    %493 = vector.broadcast %c0_i32_208 : i32 to vector<1x512xi32>
    %494 = arith.addi %2, %493 : vector<1x512xi32>
    %c8_i32_209 = arith.constant 8 : i32
    %495 = vector.broadcast %c8_i32_209 : i32 to vector<1x512xi32>
    %496 = arith.cmpi slt, %494, %495 : vector<1x512xi32>
    %497 = arith.andi %492, %496 : vector<1x512xi1>
    %c1_i32_210 = arith.constant 1 : i32
    %498 = vector.broadcast %c1_i32_210 : i32 to vector<1x512xi32>
    %499 = arith.addi %6, %498 : vector<1x512xi32>
    %c0_i32_211 = arith.constant 0 : i32
    %500 = vector.broadcast %c0_i32_211 : i32 to vector<1x512xi32>
    %501 = arith.cmpi sge, %499, %500 : vector<1x512xi32>
    %502 = arith.andi %497, %501 : vector<1x512xi1>
    %c1_i32_212 = arith.constant 1 : i32
    %503 = vector.broadcast %c1_i32_212 : i32 to vector<1x512xi32>
    %504 = arith.addi %6, %503 : vector<1x512xi32>
    %c8_i32_213 = arith.constant 8 : i32
    %505 = vector.broadcast %c8_i32_213 : i32 to vector<1x512xi32>
    %506 = arith.cmpi slt, %504, %505 : vector<1x512xi32>
    %507 = arith.andi %502, %506 : vector<1x512xi1>
    %c-1_i32_214 = arith.constant -1 : i32
    %508 = vector.broadcast %c-1_i32_214 : i32 to vector<1x512xi32>
    %509 = arith.addi %8, %508 : vector<1x512xi32>
    %c0_i32_215 = arith.constant 0 : i32
    %510 = vector.broadcast %c0_i32_215 : i32 to vector<1x512xi32>
    %511 = arith.cmpi sge, %509, %510 : vector<1x512xi32>
    %512 = arith.andi %507, %511 : vector<1x512xi1>
    %c-1_i32_216 = arith.constant -1 : i32
    %513 = vector.broadcast %c-1_i32_216 : i32 to vector<1x512xi32>
    %514 = arith.addi %8, %513 : vector<1x512xi32>
    %c8_i32_217 = arith.constant 8 : i32
    %515 = vector.broadcast %c8_i32_217 : i32 to vector<1x512xi32>
    %516 = arith.cmpi slt, %514, %515 : vector<1x512xi32>
    %517 = arith.andi %512, %516 : vector<1x512xi1>
    %cst_218 = arith.constant 1.000000e+00 : f32
    %cst_219 = arith.constant 0.000000e+00 : f32
    %518 = vector.broadcast %cst_218 : f32 to vector<1x512xf32>
    %519 = vector.broadcast %cst_219 : f32 to vector<1x512xf32>
    %520 = arith.select %517, %518, %519 : vector<1x512xi1>, vector<1x512xf32>
    %c0_i32_220 = arith.constant 0 : i32
    %521 = vector.broadcast %c0_i32_220 : i32 to vector<1x512xi32>
    %522 = arith.addi %2, %521 : vector<1x512xi32>
    %c0_i32_221 = arith.constant 0 : i32
    %523 = vector.broadcast %c0_i32_221 : i32 to vector<1x512xi32>
    %524 = arith.cmpi sge, %522, %523 : vector<1x512xi32>
    %c0_i32_222 = arith.constant 0 : i32
    %525 = vector.broadcast %c0_i32_222 : i32 to vector<1x512xi32>
    %526 = arith.addi %2, %525 : vector<1x512xi32>
    %c8_i32_223 = arith.constant 8 : i32
    %527 = vector.broadcast %c8_i32_223 : i32 to vector<1x512xi32>
    %528 = arith.cmpi slt, %526, %527 : vector<1x512xi32>
    %529 = arith.andi %524, %528 : vector<1x512xi1>
    %c1_i32_224 = arith.constant 1 : i32
    %530 = vector.broadcast %c1_i32_224 : i32 to vector<1x512xi32>
    %531 = arith.addi %6, %530 : vector<1x512xi32>
    %c0_i32_225 = arith.constant 0 : i32
    %532 = vector.broadcast %c0_i32_225 : i32 to vector<1x512xi32>
    %533 = arith.cmpi sge, %531, %532 : vector<1x512xi32>
    %534 = arith.andi %529, %533 : vector<1x512xi1>
    %c1_i32_226 = arith.constant 1 : i32
    %535 = vector.broadcast %c1_i32_226 : i32 to vector<1x512xi32>
    %536 = arith.addi %6, %535 : vector<1x512xi32>
    %c8_i32_227 = arith.constant 8 : i32
    %537 = vector.broadcast %c8_i32_227 : i32 to vector<1x512xi32>
    %538 = arith.cmpi slt, %536, %537 : vector<1x512xi32>
    %539 = arith.andi %534, %538 : vector<1x512xi1>
    %c0_i32_228 = arith.constant 0 : i32
    %540 = vector.broadcast %c0_i32_228 : i32 to vector<1x512xi32>
    %541 = arith.addi %8, %540 : vector<1x512xi32>
    %c0_i32_229 = arith.constant 0 : i32
    %542 = vector.broadcast %c0_i32_229 : i32 to vector<1x512xi32>
    %543 = arith.cmpi sge, %541, %542 : vector<1x512xi32>
    %544 = arith.andi %539, %543 : vector<1x512xi1>
    %c0_i32_230 = arith.constant 0 : i32
    %545 = vector.broadcast %c0_i32_230 : i32 to vector<1x512xi32>
    %546 = arith.addi %8, %545 : vector<1x512xi32>
    %c8_i32_231 = arith.constant 8 : i32
    %547 = vector.broadcast %c8_i32_231 : i32 to vector<1x512xi32>
    %548 = arith.cmpi slt, %546, %547 : vector<1x512xi32>
    %549 = arith.andi %544, %548 : vector<1x512xi1>
    %cst_232 = arith.constant 1.000000e+00 : f32
    %cst_233 = arith.constant 0.000000e+00 : f32
    %550 = vector.broadcast %cst_232 : f32 to vector<1x512xf32>
    %551 = vector.broadcast %cst_233 : f32 to vector<1x512xf32>
    %552 = arith.select %549, %550, %551 : vector<1x512xi1>, vector<1x512xf32>
    %c0_i32_234 = arith.constant 0 : i32
    %553 = vector.broadcast %c0_i32_234 : i32 to vector<1x512xi32>
    %554 = arith.addi %2, %553 : vector<1x512xi32>
    %c0_i32_235 = arith.constant 0 : i32
    %555 = vector.broadcast %c0_i32_235 : i32 to vector<1x512xi32>
    %556 = arith.cmpi sge, %554, %555 : vector<1x512xi32>
    %c0_i32_236 = arith.constant 0 : i32
    %557 = vector.broadcast %c0_i32_236 : i32 to vector<1x512xi32>
    %558 = arith.addi %2, %557 : vector<1x512xi32>
    %c8_i32_237 = arith.constant 8 : i32
    %559 = vector.broadcast %c8_i32_237 : i32 to vector<1x512xi32>
    %560 = arith.cmpi slt, %558, %559 : vector<1x512xi32>
    %561 = arith.andi %556, %560 : vector<1x512xi1>
    %c1_i32_238 = arith.constant 1 : i32
    %562 = vector.broadcast %c1_i32_238 : i32 to vector<1x512xi32>
    %563 = arith.addi %6, %562 : vector<1x512xi32>
    %c0_i32_239 = arith.constant 0 : i32
    %564 = vector.broadcast %c0_i32_239 : i32 to vector<1x512xi32>
    %565 = arith.cmpi sge, %563, %564 : vector<1x512xi32>
    %566 = arith.andi %561, %565 : vector<1x512xi1>
    %c1_i32_240 = arith.constant 1 : i32
    %567 = vector.broadcast %c1_i32_240 : i32 to vector<1x512xi32>
    %568 = arith.addi %6, %567 : vector<1x512xi32>
    %c8_i32_241 = arith.constant 8 : i32
    %569 = vector.broadcast %c8_i32_241 : i32 to vector<1x512xi32>
    %570 = arith.cmpi slt, %568, %569 : vector<1x512xi32>
    %571 = arith.andi %566, %570 : vector<1x512xi1>
    %c1_i32_242 = arith.constant 1 : i32
    %572 = vector.broadcast %c1_i32_242 : i32 to vector<1x512xi32>
    %573 = arith.addi %8, %572 : vector<1x512xi32>
    %c0_i32_243 = arith.constant 0 : i32
    %574 = vector.broadcast %c0_i32_243 : i32 to vector<1x512xi32>
    %575 = arith.cmpi sge, %573, %574 : vector<1x512xi32>
    %576 = arith.andi %571, %575 : vector<1x512xi1>
    %c1_i32_244 = arith.constant 1 : i32
    %577 = vector.broadcast %c1_i32_244 : i32 to vector<1x512xi32>
    %578 = arith.addi %8, %577 : vector<1x512xi32>
    %c8_i32_245 = arith.constant 8 : i32
    %579 = vector.broadcast %c8_i32_245 : i32 to vector<1x512xi32>
    %580 = arith.cmpi slt, %578, %579 : vector<1x512xi32>
    %581 = arith.andi %576, %580 : vector<1x512xi1>
    %cst_246 = arith.constant 1.000000e+00 : f32
    %cst_247 = arith.constant 0.000000e+00 : f32
    %582 = vector.broadcast %cst_246 : f32 to vector<1x512xf32>
    %583 = vector.broadcast %cst_247 : f32 to vector<1x512xf32>
    %584 = arith.select %581, %582, %583 : vector<1x512xi1>, vector<1x512xf32>
    %c1_i32_248 = arith.constant 1 : i32
    %585 = vector.broadcast %c1_i32_248 : i32 to vector<1x512xi32>
    %586 = arith.addi %2, %585 : vector<1x512xi32>
    %c0_i32_249 = arith.constant 0 : i32
    %587 = vector.broadcast %c0_i32_249 : i32 to vector<1x512xi32>
    %588 = arith.cmpi sge, %586, %587 : vector<1x512xi32>
    %c1_i32_250 = arith.constant 1 : i32
    %589 = vector.broadcast %c1_i32_250 : i32 to vector<1x512xi32>
    %590 = arith.addi %2, %589 : vector<1x512xi32>
    %c8_i32_251 = arith.constant 8 : i32
    %591 = vector.broadcast %c8_i32_251 : i32 to vector<1x512xi32>
    %592 = arith.cmpi slt, %590, %591 : vector<1x512xi32>
    %593 = arith.andi %588, %592 : vector<1x512xi1>
    %c-1_i32_252 = arith.constant -1 : i32
    %594 = vector.broadcast %c-1_i32_252 : i32 to vector<1x512xi32>
    %595 = arith.addi %6, %594 : vector<1x512xi32>
    %c0_i32_253 = arith.constant 0 : i32
    %596 = vector.broadcast %c0_i32_253 : i32 to vector<1x512xi32>
    %597 = arith.cmpi sge, %595, %596 : vector<1x512xi32>
    %598 = arith.andi %593, %597 : vector<1x512xi1>
    %c-1_i32_254 = arith.constant -1 : i32
    %599 = vector.broadcast %c-1_i32_254 : i32 to vector<1x512xi32>
    %600 = arith.addi %6, %599 : vector<1x512xi32>
    %c8_i32_255 = arith.constant 8 : i32
    %601 = vector.broadcast %c8_i32_255 : i32 to vector<1x512xi32>
    %602 = arith.cmpi slt, %600, %601 : vector<1x512xi32>
    %603 = arith.andi %598, %602 : vector<1x512xi1>
    %c-1_i32_256 = arith.constant -1 : i32
    %604 = vector.broadcast %c-1_i32_256 : i32 to vector<1x512xi32>
    %605 = arith.addi %8, %604 : vector<1x512xi32>
    %c0_i32_257 = arith.constant 0 : i32
    %606 = vector.broadcast %c0_i32_257 : i32 to vector<1x512xi32>
    %607 = arith.cmpi sge, %605, %606 : vector<1x512xi32>
    %608 = arith.andi %603, %607 : vector<1x512xi1>
    %c-1_i32_258 = arith.constant -1 : i32
    %609 = vector.broadcast %c-1_i32_258 : i32 to vector<1x512xi32>
    %610 = arith.addi %8, %609 : vector<1x512xi32>
    %c8_i32_259 = arith.constant 8 : i32
    %611 = vector.broadcast %c8_i32_259 : i32 to vector<1x512xi32>
    %612 = arith.cmpi slt, %610, %611 : vector<1x512xi32>
    %613 = arith.andi %608, %612 : vector<1x512xi1>
    %cst_260 = arith.constant 1.000000e+00 : f32
    %cst_261 = arith.constant 0.000000e+00 : f32
    %614 = vector.broadcast %cst_260 : f32 to vector<1x512xf32>
    %615 = vector.broadcast %cst_261 : f32 to vector<1x512xf32>
    %616 = arith.select %613, %614, %615 : vector<1x512xi1>, vector<1x512xf32>
    %c1_i32_262 = arith.constant 1 : i32
    %617 = vector.broadcast %c1_i32_262 : i32 to vector<1x512xi32>
    %618 = arith.addi %2, %617 : vector<1x512xi32>
    %c0_i32_263 = arith.constant 0 : i32
    %619 = vector.broadcast %c0_i32_263 : i32 to vector<1x512xi32>
    %620 = arith.cmpi sge, %618, %619 : vector<1x512xi32>
    %c1_i32_264 = arith.constant 1 : i32
    %621 = vector.broadcast %c1_i32_264 : i32 to vector<1x512xi32>
    %622 = arith.addi %2, %621 : vector<1x512xi32>
    %c8_i32_265 = arith.constant 8 : i32
    %623 = vector.broadcast %c8_i32_265 : i32 to vector<1x512xi32>
    %624 = arith.cmpi slt, %622, %623 : vector<1x512xi32>
    %625 = arith.andi %620, %624 : vector<1x512xi1>
    %c-1_i32_266 = arith.constant -1 : i32
    %626 = vector.broadcast %c-1_i32_266 : i32 to vector<1x512xi32>
    %627 = arith.addi %6, %626 : vector<1x512xi32>
    %c0_i32_267 = arith.constant 0 : i32
    %628 = vector.broadcast %c0_i32_267 : i32 to vector<1x512xi32>
    %629 = arith.cmpi sge, %627, %628 : vector<1x512xi32>
    %630 = arith.andi %625, %629 : vector<1x512xi1>
    %c-1_i32_268 = arith.constant -1 : i32
    %631 = vector.broadcast %c-1_i32_268 : i32 to vector<1x512xi32>
    %632 = arith.addi %6, %631 : vector<1x512xi32>
    %c8_i32_269 = arith.constant 8 : i32
    %633 = vector.broadcast %c8_i32_269 : i32 to vector<1x512xi32>
    %634 = arith.cmpi slt, %632, %633 : vector<1x512xi32>
    %635 = arith.andi %630, %634 : vector<1x512xi1>
    %c0_i32_270 = arith.constant 0 : i32
    %636 = vector.broadcast %c0_i32_270 : i32 to vector<1x512xi32>
    %637 = arith.addi %8, %636 : vector<1x512xi32>
    %c0_i32_271 = arith.constant 0 : i32
    %638 = vector.broadcast %c0_i32_271 : i32 to vector<1x512xi32>
    %639 = arith.cmpi sge, %637, %638 : vector<1x512xi32>
    %640 = arith.andi %635, %639 : vector<1x512xi1>
    %c0_i32_272 = arith.constant 0 : i32
    %641 = vector.broadcast %c0_i32_272 : i32 to vector<1x512xi32>
    %642 = arith.addi %8, %641 : vector<1x512xi32>
    %c8_i32_273 = arith.constant 8 : i32
    %643 = vector.broadcast %c8_i32_273 : i32 to vector<1x512xi32>
    %644 = arith.cmpi slt, %642, %643 : vector<1x512xi32>
    %645 = arith.andi %640, %644 : vector<1x512xi1>
    %cst_274 = arith.constant 1.000000e+00 : f32
    %cst_275 = arith.constant 0.000000e+00 : f32
    %646 = vector.broadcast %cst_274 : f32 to vector<1x512xf32>
    %647 = vector.broadcast %cst_275 : f32 to vector<1x512xf32>
    %648 = arith.select %645, %646, %647 : vector<1x512xi1>, vector<1x512xf32>
    %c1_i32_276 = arith.constant 1 : i32
    %649 = vector.broadcast %c1_i32_276 : i32 to vector<1x512xi32>
    %650 = arith.addi %2, %649 : vector<1x512xi32>
    %c0_i32_277 = arith.constant 0 : i32
    %651 = vector.broadcast %c0_i32_277 : i32 to vector<1x512xi32>
    %652 = arith.cmpi sge, %650, %651 : vector<1x512xi32>
    %c1_i32_278 = arith.constant 1 : i32
    %653 = vector.broadcast %c1_i32_278 : i32 to vector<1x512xi32>
    %654 = arith.addi %2, %653 : vector<1x512xi32>
    %c8_i32_279 = arith.constant 8 : i32
    %655 = vector.broadcast %c8_i32_279 : i32 to vector<1x512xi32>
    %656 = arith.cmpi slt, %654, %655 : vector<1x512xi32>
    %657 = arith.andi %652, %656 : vector<1x512xi1>
    %c-1_i32_280 = arith.constant -1 : i32
    %658 = vector.broadcast %c-1_i32_280 : i32 to vector<1x512xi32>
    %659 = arith.addi %6, %658 : vector<1x512xi32>
    %c0_i32_281 = arith.constant 0 : i32
    %660 = vector.broadcast %c0_i32_281 : i32 to vector<1x512xi32>
    %661 = arith.cmpi sge, %659, %660 : vector<1x512xi32>
    %662 = arith.andi %657, %661 : vector<1x512xi1>
    %c-1_i32_282 = arith.constant -1 : i32
    %663 = vector.broadcast %c-1_i32_282 : i32 to vector<1x512xi32>
    %664 = arith.addi %6, %663 : vector<1x512xi32>
    %c8_i32_283 = arith.constant 8 : i32
    %665 = vector.broadcast %c8_i32_283 : i32 to vector<1x512xi32>
    %666 = arith.cmpi slt, %664, %665 : vector<1x512xi32>
    %667 = arith.andi %662, %666 : vector<1x512xi1>
    %c1_i32_284 = arith.constant 1 : i32
    %668 = vector.broadcast %c1_i32_284 : i32 to vector<1x512xi32>
    %669 = arith.addi %8, %668 : vector<1x512xi32>
    %c0_i32_285 = arith.constant 0 : i32
    %670 = vector.broadcast %c0_i32_285 : i32 to vector<1x512xi32>
    %671 = arith.cmpi sge, %669, %670 : vector<1x512xi32>
    %672 = arith.andi %667, %671 : vector<1x512xi1>
    %c1_i32_286 = arith.constant 1 : i32
    %673 = vector.broadcast %c1_i32_286 : i32 to vector<1x512xi32>
    %674 = arith.addi %8, %673 : vector<1x512xi32>
    %c8_i32_287 = arith.constant 8 : i32
    %675 = vector.broadcast %c8_i32_287 : i32 to vector<1x512xi32>
    %676 = arith.cmpi slt, %674, %675 : vector<1x512xi32>
    %677 = arith.andi %672, %676 : vector<1x512xi1>
    %cst_288 = arith.constant 1.000000e+00 : f32
    %cst_289 = arith.constant 0.000000e+00 : f32
    %678 = vector.broadcast %cst_288 : f32 to vector<1x512xf32>
    %679 = vector.broadcast %cst_289 : f32 to vector<1x512xf32>
    %680 = arith.select %677, %678, %679 : vector<1x512xi1>, vector<1x512xf32>
    %c1_i32_290 = arith.constant 1 : i32
    %681 = vector.broadcast %c1_i32_290 : i32 to vector<1x512xi32>
    %682 = arith.addi %2, %681 : vector<1x512xi32>
    %c0_i32_291 = arith.constant 0 : i32
    %683 = vector.broadcast %c0_i32_291 : i32 to vector<1x512xi32>
    %684 = arith.cmpi sge, %682, %683 : vector<1x512xi32>
    %c1_i32_292 = arith.constant 1 : i32
    %685 = vector.broadcast %c1_i32_292 : i32 to vector<1x512xi32>
    %686 = arith.addi %2, %685 : vector<1x512xi32>
    %c8_i32_293 = arith.constant 8 : i32
    %687 = vector.broadcast %c8_i32_293 : i32 to vector<1x512xi32>
    %688 = arith.cmpi slt, %686, %687 : vector<1x512xi32>
    %689 = arith.andi %684, %688 : vector<1x512xi1>
    %c0_i32_294 = arith.constant 0 : i32
    %690 = vector.broadcast %c0_i32_294 : i32 to vector<1x512xi32>
    %691 = arith.addi %6, %690 : vector<1x512xi32>
    %c0_i32_295 = arith.constant 0 : i32
    %692 = vector.broadcast %c0_i32_295 : i32 to vector<1x512xi32>
    %693 = arith.cmpi sge, %691, %692 : vector<1x512xi32>
    %694 = arith.andi %689, %693 : vector<1x512xi1>
    %c0_i32_296 = arith.constant 0 : i32
    %695 = vector.broadcast %c0_i32_296 : i32 to vector<1x512xi32>
    %696 = arith.addi %6, %695 : vector<1x512xi32>
    %c8_i32_297 = arith.constant 8 : i32
    %697 = vector.broadcast %c8_i32_297 : i32 to vector<1x512xi32>
    %698 = arith.cmpi slt, %696, %697 : vector<1x512xi32>
    %699 = arith.andi %694, %698 : vector<1x512xi1>
    %c-1_i32_298 = arith.constant -1 : i32
    %700 = vector.broadcast %c-1_i32_298 : i32 to vector<1x512xi32>
    %701 = arith.addi %8, %700 : vector<1x512xi32>
    %c0_i32_299 = arith.constant 0 : i32
    %702 = vector.broadcast %c0_i32_299 : i32 to vector<1x512xi32>
    %703 = arith.cmpi sge, %701, %702 : vector<1x512xi32>
    %704 = arith.andi %699, %703 : vector<1x512xi1>
    %c-1_i32_300 = arith.constant -1 : i32
    %705 = vector.broadcast %c-1_i32_300 : i32 to vector<1x512xi32>
    %706 = arith.addi %8, %705 : vector<1x512xi32>
    %c8_i32_301 = arith.constant 8 : i32
    %707 = vector.broadcast %c8_i32_301 : i32 to vector<1x512xi32>
    %708 = arith.cmpi slt, %706, %707 : vector<1x512xi32>
    %709 = arith.andi %704, %708 : vector<1x512xi1>
    %cst_302 = arith.constant 1.000000e+00 : f32
    %cst_303 = arith.constant 0.000000e+00 : f32
    %710 = vector.broadcast %cst_302 : f32 to vector<1x512xf32>
    %711 = vector.broadcast %cst_303 : f32 to vector<1x512xf32>
    %712 = arith.select %709, %710, %711 : vector<1x512xi1>, vector<1x512xf32>
    %c1_i32_304 = arith.constant 1 : i32
    %713 = vector.broadcast %c1_i32_304 : i32 to vector<1x512xi32>
    %714 = arith.addi %2, %713 : vector<1x512xi32>
    %c0_i32_305 = arith.constant 0 : i32
    %715 = vector.broadcast %c0_i32_305 : i32 to vector<1x512xi32>
    %716 = arith.cmpi sge, %714, %715 : vector<1x512xi32>
    %c1_i32_306 = arith.constant 1 : i32
    %717 = vector.broadcast %c1_i32_306 : i32 to vector<1x512xi32>
    %718 = arith.addi %2, %717 : vector<1x512xi32>
    %c8_i32_307 = arith.constant 8 : i32
    %719 = vector.broadcast %c8_i32_307 : i32 to vector<1x512xi32>
    %720 = arith.cmpi slt, %718, %719 : vector<1x512xi32>
    %721 = arith.andi %716, %720 : vector<1x512xi1>
    %c0_i32_308 = arith.constant 0 : i32
    %722 = vector.broadcast %c0_i32_308 : i32 to vector<1x512xi32>
    %723 = arith.addi %6, %722 : vector<1x512xi32>
    %c0_i32_309 = arith.constant 0 : i32
    %724 = vector.broadcast %c0_i32_309 : i32 to vector<1x512xi32>
    %725 = arith.cmpi sge, %723, %724 : vector<1x512xi32>
    %726 = arith.andi %721, %725 : vector<1x512xi1>
    %c0_i32_310 = arith.constant 0 : i32
    %727 = vector.broadcast %c0_i32_310 : i32 to vector<1x512xi32>
    %728 = arith.addi %6, %727 : vector<1x512xi32>
    %c8_i32_311 = arith.constant 8 : i32
    %729 = vector.broadcast %c8_i32_311 : i32 to vector<1x512xi32>
    %730 = arith.cmpi slt, %728, %729 : vector<1x512xi32>
    %731 = arith.andi %726, %730 : vector<1x512xi1>
    %c0_i32_312 = arith.constant 0 : i32
    %732 = vector.broadcast %c0_i32_312 : i32 to vector<1x512xi32>
    %733 = arith.addi %8, %732 : vector<1x512xi32>
    %c0_i32_313 = arith.constant 0 : i32
    %734 = vector.broadcast %c0_i32_313 : i32 to vector<1x512xi32>
    %735 = arith.cmpi sge, %733, %734 : vector<1x512xi32>
    %736 = arith.andi %731, %735 : vector<1x512xi1>
    %c0_i32_314 = arith.constant 0 : i32
    %737 = vector.broadcast %c0_i32_314 : i32 to vector<1x512xi32>
    %738 = arith.addi %8, %737 : vector<1x512xi32>
    %c8_i32_315 = arith.constant 8 : i32
    %739 = vector.broadcast %c8_i32_315 : i32 to vector<1x512xi32>
    %740 = arith.cmpi slt, %738, %739 : vector<1x512xi32>
    %741 = arith.andi %736, %740 : vector<1x512xi1>
    %cst_316 = arith.constant 1.000000e+00 : f32
    %cst_317 = arith.constant 0.000000e+00 : f32
    %742 = vector.broadcast %cst_316 : f32 to vector<1x512xf32>
    %743 = vector.broadcast %cst_317 : f32 to vector<1x512xf32>
    %744 = arith.select %741, %742, %743 : vector<1x512xi1>, vector<1x512xf32>
    %c1_i32_318 = arith.constant 1 : i32
    %745 = vector.broadcast %c1_i32_318 : i32 to vector<1x512xi32>
    %746 = arith.addi %2, %745 : vector<1x512xi32>
    %c0_i32_319 = arith.constant 0 : i32
    %747 = vector.broadcast %c0_i32_319 : i32 to vector<1x512xi32>
    %748 = arith.cmpi sge, %746, %747 : vector<1x512xi32>
    %c1_i32_320 = arith.constant 1 : i32
    %749 = vector.broadcast %c1_i32_320 : i32 to vector<1x512xi32>
    %750 = arith.addi %2, %749 : vector<1x512xi32>
    %c8_i32_321 = arith.constant 8 : i32
    %751 = vector.broadcast %c8_i32_321 : i32 to vector<1x512xi32>
    %752 = arith.cmpi slt, %750, %751 : vector<1x512xi32>
    %753 = arith.andi %748, %752 : vector<1x512xi1>
    %c0_i32_322 = arith.constant 0 : i32
    %754 = vector.broadcast %c0_i32_322 : i32 to vector<1x512xi32>
    %755 = arith.addi %6, %754 : vector<1x512xi32>
    %c0_i32_323 = arith.constant 0 : i32
    %756 = vector.broadcast %c0_i32_323 : i32 to vector<1x512xi32>
    %757 = arith.cmpi sge, %755, %756 : vector<1x512xi32>
    %758 = arith.andi %753, %757 : vector<1x512xi1>
    %c0_i32_324 = arith.constant 0 : i32
    %759 = vector.broadcast %c0_i32_324 : i32 to vector<1x512xi32>
    %760 = arith.addi %6, %759 : vector<1x512xi32>
    %c8_i32_325 = arith.constant 8 : i32
    %761 = vector.broadcast %c8_i32_325 : i32 to vector<1x512xi32>
    %762 = arith.cmpi slt, %760, %761 : vector<1x512xi32>
    %763 = arith.andi %758, %762 : vector<1x512xi1>
    %c1_i32_326 = arith.constant 1 : i32
    %764 = vector.broadcast %c1_i32_326 : i32 to vector<1x512xi32>
    %765 = arith.addi %8, %764 : vector<1x512xi32>
    %c0_i32_327 = arith.constant 0 : i32
    %766 = vector.broadcast %c0_i32_327 : i32 to vector<1x512xi32>
    %767 = arith.cmpi sge, %765, %766 : vector<1x512xi32>
    %768 = arith.andi %763, %767 : vector<1x512xi1>
    %c1_i32_328 = arith.constant 1 : i32
    %769 = vector.broadcast %c1_i32_328 : i32 to vector<1x512xi32>
    %770 = arith.addi %8, %769 : vector<1x512xi32>
    %c8_i32_329 = arith.constant 8 : i32
    %771 = vector.broadcast %c8_i32_329 : i32 to vector<1x512xi32>
    %772 = arith.cmpi slt, %770, %771 : vector<1x512xi32>
    %773 = arith.andi %768, %772 : vector<1x512xi1>
    %cst_330 = arith.constant 1.000000e+00 : f32
    %cst_331 = arith.constant 0.000000e+00 : f32
    %774 = vector.broadcast %cst_330 : f32 to vector<1x512xf32>
    %775 = vector.broadcast %cst_331 : f32 to vector<1x512xf32>
    %776 = arith.select %773, %774, %775 : vector<1x512xi1>, vector<1x512xf32>
    %c1_i32_332 = arith.constant 1 : i32
    %777 = vector.broadcast %c1_i32_332 : i32 to vector<1x512xi32>
    %778 = arith.addi %2, %777 : vector<1x512xi32>
    %c0_i32_333 = arith.constant 0 : i32
    %779 = vector.broadcast %c0_i32_333 : i32 to vector<1x512xi32>
    %780 = arith.cmpi sge, %778, %779 : vector<1x512xi32>
    %c1_i32_334 = arith.constant 1 : i32
    %781 = vector.broadcast %c1_i32_334 : i32 to vector<1x512xi32>
    %782 = arith.addi %2, %781 : vector<1x512xi32>
    %c8_i32_335 = arith.constant 8 : i32
    %783 = vector.broadcast %c8_i32_335 : i32 to vector<1x512xi32>
    %784 = arith.cmpi slt, %782, %783 : vector<1x512xi32>
    %785 = arith.andi %780, %784 : vector<1x512xi1>
    %c1_i32_336 = arith.constant 1 : i32
    %786 = vector.broadcast %c1_i32_336 : i32 to vector<1x512xi32>
    %787 = arith.addi %6, %786 : vector<1x512xi32>
    %c0_i32_337 = arith.constant 0 : i32
    %788 = vector.broadcast %c0_i32_337 : i32 to vector<1x512xi32>
    %789 = arith.cmpi sge, %787, %788 : vector<1x512xi32>
    %790 = arith.andi %785, %789 : vector<1x512xi1>
    %c1_i32_338 = arith.constant 1 : i32
    %791 = vector.broadcast %c1_i32_338 : i32 to vector<1x512xi32>
    %792 = arith.addi %6, %791 : vector<1x512xi32>
    %c8_i32_339 = arith.constant 8 : i32
    %793 = vector.broadcast %c8_i32_339 : i32 to vector<1x512xi32>
    %794 = arith.cmpi slt, %792, %793 : vector<1x512xi32>
    %795 = arith.andi %790, %794 : vector<1x512xi1>
    %c-1_i32_340 = arith.constant -1 : i32
    %796 = vector.broadcast %c-1_i32_340 : i32 to vector<1x512xi32>
    %797 = arith.addi %8, %796 : vector<1x512xi32>
    %c0_i32_341 = arith.constant 0 : i32
    %798 = vector.broadcast %c0_i32_341 : i32 to vector<1x512xi32>
    %799 = arith.cmpi sge, %797, %798 : vector<1x512xi32>
    %800 = arith.andi %795, %799 : vector<1x512xi1>
    %c-1_i32_342 = arith.constant -1 : i32
    %801 = vector.broadcast %c-1_i32_342 : i32 to vector<1x512xi32>
    %802 = arith.addi %8, %801 : vector<1x512xi32>
    %c8_i32_343 = arith.constant 8 : i32
    %803 = vector.broadcast %c8_i32_343 : i32 to vector<1x512xi32>
    %804 = arith.cmpi slt, %802, %803 : vector<1x512xi32>
    %805 = arith.andi %800, %804 : vector<1x512xi1>
    %cst_344 = arith.constant 1.000000e+00 : f32
    %cst_345 = arith.constant 0.000000e+00 : f32
    %806 = vector.broadcast %cst_344 : f32 to vector<1x512xf32>
    %807 = vector.broadcast %cst_345 : f32 to vector<1x512xf32>
    %808 = arith.select %805, %806, %807 : vector<1x512xi1>, vector<1x512xf32>
    %c1_i32_346 = arith.constant 1 : i32
    %809 = vector.broadcast %c1_i32_346 : i32 to vector<1x512xi32>
    %810 = arith.addi %2, %809 : vector<1x512xi32>
    %c0_i32_347 = arith.constant 0 : i32
    %811 = vector.broadcast %c0_i32_347 : i32 to vector<1x512xi32>
    %812 = arith.cmpi sge, %810, %811 : vector<1x512xi32>
    %c1_i32_348 = arith.constant 1 : i32
    %813 = vector.broadcast %c1_i32_348 : i32 to vector<1x512xi32>
    %814 = arith.addi %2, %813 : vector<1x512xi32>
    %c8_i32_349 = arith.constant 8 : i32
    %815 = vector.broadcast %c8_i32_349 : i32 to vector<1x512xi32>
    %816 = arith.cmpi slt, %814, %815 : vector<1x512xi32>
    %817 = arith.andi %812, %816 : vector<1x512xi1>
    %c1_i32_350 = arith.constant 1 : i32
    %818 = vector.broadcast %c1_i32_350 : i32 to vector<1x512xi32>
    %819 = arith.addi %6, %818 : vector<1x512xi32>
    %c0_i32_351 = arith.constant 0 : i32
    %820 = vector.broadcast %c0_i32_351 : i32 to vector<1x512xi32>
    %821 = arith.cmpi sge, %819, %820 : vector<1x512xi32>
    %822 = arith.andi %817, %821 : vector<1x512xi1>
    %c1_i32_352 = arith.constant 1 : i32
    %823 = vector.broadcast %c1_i32_352 : i32 to vector<1x512xi32>
    %824 = arith.addi %6, %823 : vector<1x512xi32>
    %c8_i32_353 = arith.constant 8 : i32
    %825 = vector.broadcast %c8_i32_353 : i32 to vector<1x512xi32>
    %826 = arith.cmpi slt, %824, %825 : vector<1x512xi32>
    %827 = arith.andi %822, %826 : vector<1x512xi1>
    %c0_i32_354 = arith.constant 0 : i32
    %828 = vector.broadcast %c0_i32_354 : i32 to vector<1x512xi32>
    %829 = arith.addi %8, %828 : vector<1x512xi32>
    %c0_i32_355 = arith.constant 0 : i32
    %830 = vector.broadcast %c0_i32_355 : i32 to vector<1x512xi32>
    %831 = arith.cmpi sge, %829, %830 : vector<1x512xi32>
    %832 = arith.andi %827, %831 : vector<1x512xi1>
    %c0_i32_356 = arith.constant 0 : i32
    %833 = vector.broadcast %c0_i32_356 : i32 to vector<1x512xi32>
    %834 = arith.addi %8, %833 : vector<1x512xi32>
    %c8_i32_357 = arith.constant 8 : i32
    %835 = vector.broadcast %c8_i32_357 : i32 to vector<1x512xi32>
    %836 = arith.cmpi slt, %834, %835 : vector<1x512xi32>
    %837 = arith.andi %832, %836 : vector<1x512xi1>
    %cst_358 = arith.constant 1.000000e+00 : f32
    %cst_359 = arith.constant 0.000000e+00 : f32
    %838 = vector.broadcast %cst_358 : f32 to vector<1x512xf32>
    %839 = vector.broadcast %cst_359 : f32 to vector<1x512xf32>
    %840 = arith.select %837, %838, %839 : vector<1x512xi1>, vector<1x512xf32>
    %c1_i32_360 = arith.constant 1 : i32
    %841 = vector.broadcast %c1_i32_360 : i32 to vector<1x512xi32>
    %842 = arith.addi %2, %841 : vector<1x512xi32>
    %c0_i32_361 = arith.constant 0 : i32
    %843 = vector.broadcast %c0_i32_361 : i32 to vector<1x512xi32>
    %844 = arith.cmpi sge, %842, %843 : vector<1x512xi32>
    %c1_i32_362 = arith.constant 1 : i32
    %845 = vector.broadcast %c1_i32_362 : i32 to vector<1x512xi32>
    %846 = arith.addi %2, %845 : vector<1x512xi32>
    %c8_i32_363 = arith.constant 8 : i32
    %847 = vector.broadcast %c8_i32_363 : i32 to vector<1x512xi32>
    %848 = arith.cmpi slt, %846, %847 : vector<1x512xi32>
    %849 = arith.andi %844, %848 : vector<1x512xi1>
    %c1_i32_364 = arith.constant 1 : i32
    %850 = vector.broadcast %c1_i32_364 : i32 to vector<1x512xi32>
    %851 = arith.addi %6, %850 : vector<1x512xi32>
    %c0_i32_365 = arith.constant 0 : i32
    %852 = vector.broadcast %c0_i32_365 : i32 to vector<1x512xi32>
    %853 = arith.cmpi sge, %851, %852 : vector<1x512xi32>
    %854 = arith.andi %849, %853 : vector<1x512xi1>
    %c1_i32_366 = arith.constant 1 : i32
    %855 = vector.broadcast %c1_i32_366 : i32 to vector<1x512xi32>
    %856 = arith.addi %6, %855 : vector<1x512xi32>
    %c8_i32_367 = arith.constant 8 : i32
    %857 = vector.broadcast %c8_i32_367 : i32 to vector<1x512xi32>
    %858 = arith.cmpi slt, %856, %857 : vector<1x512xi32>
    %859 = arith.andi %854, %858 : vector<1x512xi1>
    %c1_i32_368 = arith.constant 1 : i32
    %860 = vector.broadcast %c1_i32_368 : i32 to vector<1x512xi32>
    %861 = arith.addi %8, %860 : vector<1x512xi32>
    %c0_i32_369 = arith.constant 0 : i32
    %862 = vector.broadcast %c0_i32_369 : i32 to vector<1x512xi32>
    %863 = arith.cmpi sge, %861, %862 : vector<1x512xi32>
    %864 = arith.andi %859, %863 : vector<1x512xi1>
    %c1_i32_370 = arith.constant 1 : i32
    %865 = vector.broadcast %c1_i32_370 : i32 to vector<1x512xi32>
    %866 = arith.addi %8, %865 : vector<1x512xi32>
    %c8_i32_371 = arith.constant 8 : i32
    %867 = vector.broadcast %c8_i32_371 : i32 to vector<1x512xi32>
    %868 = arith.cmpi slt, %866, %867 : vector<1x512xi32>
    %869 = arith.andi %864, %868 : vector<1x512xi1>
    %cst_372 = arith.constant 1.000000e+00 : f32
    %cst_373 = arith.constant 0.000000e+00 : f32
    %870 = vector.broadcast %cst_372 : f32 to vector<1x512xf32>
    %871 = vector.broadcast %cst_373 : f32 to vector<1x512xf32>
    %872 = arith.select %869, %870, %871 : vector<1x512xi1>, vector<1x512xf32>
    %c0 = arith.constant 0 : index
    %c0_374 = arith.constant 0 : index
    %c0_375 = arith.constant 0 : index
    %873 = vector.load %arg1[%c0, %c0_374, %c0_375] : memref<1x1x512xf32, #tpu.memory_space<vmem>>, vector<1x1x512xf32>
    %874 = vector.shape_cast %873 : vector<1x1x512xf32> to vector<1x512xf32>
    %c0_376 = arith.constant 0 : index
    %c0_377 = arith.constant 0 : index
    %875 = vector.load %arg2[%c0_376, %c0_377] : memref<32x27xf32, #tpu.memory_space<vmem>>, vector<32x27xf32>
    %cst_378 = arith.constant 0.000000e+00 : f32
    %876 = vector.broadcast %cst_378 : f32 to vector<32x512xf32>
    %cst_379 = arith.constant 0.000000e+00 : f32
    %877 = vector.broadcast %cst_379 : f32 to vector<1x73xf32>
    %878 = vector.extract_strided_slice %874 {offsets = [0, 0], sizes = [1, 439], strides = [1, 1]} : vector<1x512xf32> to vector<1x439xf32>
    %879 = tpu.concatenate %877, %878 in 1 : vector<1x73xf32>, vector<1x439xf32> -> vector<1x512xf32>
    %880 = arith.mulf %40, %879 : vector<1x512xf32>
    %881 = vector.extract_strided_slice %875 {offsets = [0, 0], sizes = [32, 1], strides = [1, 1]} : vector<32x27xf32> to vector<32x1xf32>
    %882 = vector.broadcast %881 : vector<32x1xf32> to vector<32x512xf32>
    %883 = vector.broadcast %880 : vector<1x512xf32> to vector<32x512xf32>
    %884 = arith.mulf %882, %883 : vector<32x512xf32>
    %885 = arith.addf %876, %884 : vector<32x512xf32>
    %cst_380 = arith.constant 0.000000e+00 : f32
    %886 = vector.broadcast %cst_380 : f32 to vector<1x72xf32>
    %887 = vector.extract_strided_slice %874 {offsets = [0, 0], sizes = [1, 440], strides = [1, 1]} : vector<1x512xf32> to vector<1x440xf32>
    %888 = tpu.concatenate %886, %887 in 1 : vector<1x72xf32>, vector<1x440xf32> -> vector<1x512xf32>
    %889 = arith.mulf %72, %888 : vector<1x512xf32>
    %890 = vector.extract_strided_slice %875 {offsets = [0, 1], sizes = [32, 1], strides = [1, 1]} : vector<32x27xf32> to vector<32x1xf32>
    %891 = vector.broadcast %890 : vector<32x1xf32> to vector<32x512xf32>
    %892 = vector.broadcast %889 : vector<1x512xf32> to vector<32x512xf32>
    %893 = arith.mulf %891, %892 : vector<32x512xf32>
    %894 = arith.addf %885, %893 : vector<32x512xf32>
    %cst_381 = arith.constant 0.000000e+00 : f32
    %895 = vector.broadcast %cst_381 : f32 to vector<1x71xf32>
    %896 = vector.extract_strided_slice %874 {offsets = [0, 0], sizes = [1, 441], strides = [1, 1]} : vector<1x512xf32> to vector<1x441xf32>
    %897 = tpu.concatenate %895, %896 in 1 : vector<1x71xf32>, vector<1x441xf32> -> vector<1x512xf32>
    %898 = arith.mulf %104, %897 : vector<1x512xf32>
    %899 = vector.extract_strided_slice %875 {offsets = [0, 2], sizes = [32, 1], strides = [1, 1]} : vector<32x27xf32> to vector<32x1xf32>
    %900 = vector.broadcast %899 : vector<32x1xf32> to vector<32x512xf32>
    %901 = vector.broadcast %898 : vector<1x512xf32> to vector<32x512xf32>
    %902 = arith.mulf %900, %901 : vector<32x512xf32>
    %903 = arith.addf %894, %902 : vector<32x512xf32>
    %cst_382 = arith.constant 0.000000e+00 : f32
    %904 = vector.broadcast %cst_382 : f32 to vector<1x65xf32>
    %905 = vector.extract_strided_slice %874 {offsets = [0, 0], sizes = [1, 447], strides = [1, 1]} : vector<1x512xf32> to vector<1x447xf32>
    %906 = tpu.concatenate %904, %905 in 1 : vector<1x65xf32>, vector<1x447xf32> -> vector<1x512xf32>
    %907 = arith.mulf %136, %906 : vector<1x512xf32>
    %908 = vector.extract_strided_slice %875 {offsets = [0, 3], sizes = [32, 1], strides = [1, 1]} : vector<32x27xf32> to vector<32x1xf32>
    %909 = vector.broadcast %908 : vector<32x1xf32> to vector<32x512xf32>
    %910 = vector.broadcast %907 : vector<1x512xf32> to vector<32x512xf32>
    %911 = arith.mulf %909, %910 : vector<32x512xf32>
    %912 = arith.addf %903, %911 : vector<32x512xf32>
    %cst_383 = arith.constant 0.000000e+00 : f32
    %913 = vector.broadcast %cst_383 : f32 to vector<1x64xf32>
    %914 = vector.extract_strided_slice %874 {offsets = [0, 0], sizes = [1, 448], strides = [1, 1]} : vector<1x512xf32> to vector<1x448xf32>
    %915 = tpu.concatenate %913, %914 in 1 : vector<1x64xf32>, vector<1x448xf32> -> vector<1x512xf32>
    %916 = arith.mulf %168, %915 : vector<1x512xf32>
    %917 = vector.extract_strided_slice %875 {offsets = [0, 4], sizes = [32, 1], strides = [1, 1]} : vector<32x27xf32> to vector<32x1xf32>
    %918 = vector.broadcast %917 : vector<32x1xf32> to vector<32x512xf32>
    %919 = vector.broadcast %916 : vector<1x512xf32> to vector<32x512xf32>
    %920 = arith.mulf %918, %919 : vector<32x512xf32>
    %921 = arith.addf %912, %920 : vector<32x512xf32>
    %cst_384 = arith.constant 0.000000e+00 : f32
    %922 = vector.broadcast %cst_384 : f32 to vector<1x63xf32>
    %923 = vector.extract_strided_slice %874 {offsets = [0, 0], sizes = [1, 449], strides = [1, 1]} : vector<1x512xf32> to vector<1x449xf32>
    %924 = tpu.concatenate %922, %923 in 1 : vector<1x63xf32>, vector<1x449xf32> -> vector<1x512xf32>
    %925 = arith.mulf %200, %924 : vector<1x512xf32>
    %926 = vector.extract_strided_slice %875 {offsets = [0, 5], sizes = [32, 1], strides = [1, 1]} : vector<32x27xf32> to vector<32x1xf32>
    %927 = vector.broadcast %926 : vector<32x1xf32> to vector<32x512xf32>
    %928 = vector.broadcast %925 : vector<1x512xf32> to vector<32x512xf32>
    %929 = arith.mulf %927, %928 : vector<32x512xf32>
    %930 = arith.addf %921, %929 : vector<32x512xf32>
    %cst_385 = arith.constant 0.000000e+00 : f32
    %931 = vector.broadcast %cst_385 : f32 to vector<1x57xf32>
    %932 = vector.extract_strided_slice %874 {offsets = [0, 0], sizes = [1, 455], strides = [1, 1]} : vector<1x512xf32> to vector<1x455xf32>
    %933 = tpu.concatenate %931, %932 in 1 : vector<1x57xf32>, vector<1x455xf32> -> vector<1x512xf32>
    %934 = arith.mulf %232, %933 : vector<1x512xf32>
    %935 = vector.extract_strided_slice %875 {offsets = [0, 6], sizes = [32, 1], strides = [1, 1]} : vector<32x27xf32> to vector<32x1xf32>
    %936 = vector.broadcast %935 : vector<32x1xf32> to vector<32x512xf32>
    %937 = vector.broadcast %934 : vector<1x512xf32> to vector<32x512xf32>
    %938 = arith.mulf %936, %937 : vector<32x512xf32>
    %939 = arith.addf %930, %938 : vector<32x512xf32>
    %cst_386 = arith.constant 0.000000e+00 : f32
    %940 = vector.broadcast %cst_386 : f32 to vector<1x56xf32>
    %941 = vector.extract_strided_slice %874 {offsets = [0, 0], sizes = [1, 456], strides = [1, 1]} : vector<1x512xf32> to vector<1x456xf32>
    %942 = tpu.concatenate %940, %941 in 1 : vector<1x56xf32>, vector<1x456xf32> -> vector<1x512xf32>
    %943 = arith.mulf %264, %942 : vector<1x512xf32>
    %944 = vector.extract_strided_slice %875 {offsets = [0, 7], sizes = [32, 1], strides = [1, 1]} : vector<32x27xf32> to vector<32x1xf32>
    %945 = vector.broadcast %944 : vector<32x1xf32> to vector<32x512xf32>
    %946 = vector.broadcast %943 : vector<1x512xf32> to vector<32x512xf32>
    %947 = arith.mulf %945, %946 : vector<32x512xf32>
    %948 = arith.addf %939, %947 : vector<32x512xf32>
    %cst_387 = arith.constant 0.000000e+00 : f32
    %949 = vector.broadcast %cst_387 : f32 to vector<1x55xf32>
    %950 = vector.extract_strided_slice %874 {offsets = [0, 0], sizes = [1, 457], strides = [1, 1]} : vector<1x512xf32> to vector<1x457xf32>
    %951 = tpu.concatenate %949, %950 in 1 : vector<1x55xf32>, vector<1x457xf32> -> vector<1x512xf32>
    %952 = arith.mulf %296, %951 : vector<1x512xf32>
    %953 = vector.extract_strided_slice %875 {offsets = [0, 8], sizes = [32, 1], strides = [1, 1]} : vector<32x27xf32> to vector<32x1xf32>
    %954 = vector.broadcast %953 : vector<32x1xf32> to vector<32x512xf32>
    %955 = vector.broadcast %952 : vector<1x512xf32> to vector<32x512xf32>
    %956 = arith.mulf %954, %955 : vector<32x512xf32>
    %957 = arith.addf %948, %956 : vector<32x512xf32>
    %cst_388 = arith.constant 0.000000e+00 : f32
    %958 = vector.broadcast %cst_388 : f32 to vector<1x9xf32>
    %959 = vector.extract_strided_slice %874 {offsets = [0, 0], sizes = [1, 503], strides = [1, 1]} : vector<1x512xf32> to vector<1x503xf32>
    %960 = tpu.concatenate %958, %959 in 1 : vector<1x9xf32>, vector<1x503xf32> -> vector<1x512xf32>
    %961 = arith.mulf %328, %960 : vector<1x512xf32>
    %962 = vector.extract_strided_slice %875 {offsets = [0, 9], sizes = [32, 1], strides = [1, 1]} : vector<32x27xf32> to vector<32x1xf32>
    %963 = vector.broadcast %962 : vector<32x1xf32> to vector<32x512xf32>
    %964 = vector.broadcast %961 : vector<1x512xf32> to vector<32x512xf32>
    %965 = arith.mulf %963, %964 : vector<32x512xf32>
    %966 = arith.addf %957, %965 : vector<32x512xf32>
    %cst_389 = arith.constant 0.000000e+00 : f32
    %967 = vector.broadcast %cst_389 : f32 to vector<1x8xf32>
    %968 = vector.extract_strided_slice %874 {offsets = [0, 0], sizes = [1, 504], strides = [1, 1]} : vector<1x512xf32> to vector<1x504xf32>
    %969 = tpu.concatenate %967, %968 in 1 : vector<1x8xf32>, vector<1x504xf32> -> vector<1x512xf32>
    %970 = arith.mulf %360, %969 : vector<1x512xf32>
    %971 = vector.extract_strided_slice %875 {offsets = [0, 10], sizes = [32, 1], strides = [1, 1]} : vector<32x27xf32> to vector<32x1xf32>
    %972 = vector.broadcast %971 : vector<32x1xf32> to vector<32x512xf32>
    %973 = vector.broadcast %970 : vector<1x512xf32> to vector<32x512xf32>
    %974 = arith.mulf %972, %973 : vector<32x512xf32>
    %975 = arith.addf %966, %974 : vector<32x512xf32>
    %cst_390 = arith.constant 0.000000e+00 : f32
    %976 = vector.broadcast %cst_390 : f32 to vector<1x7xf32>
    %977 = vector.extract_strided_slice %874 {offsets = [0, 0], sizes = [1, 505], strides = [1, 1]} : vector<1x512xf32> to vector<1x505xf32>
    %978 = tpu.concatenate %976, %977 in 1 : vector<1x7xf32>, vector<1x505xf32> -> vector<1x512xf32>
    %979 = arith.mulf %392, %978 : vector<1x512xf32>
    %980 = vector.extract_strided_slice %875 {offsets = [0, 11], sizes = [32, 1], strides = [1, 1]} : vector<32x27xf32> to vector<32x1xf32>
    %981 = vector.broadcast %980 : vector<32x1xf32> to vector<32x512xf32>
    %982 = vector.broadcast %979 : vector<1x512xf32> to vector<32x512xf32>
    %983 = arith.mulf %981, %982 : vector<32x512xf32>
    %984 = arith.addf %975, %983 : vector<32x512xf32>
    %cst_391 = arith.constant 0.000000e+00 : f32
    %985 = vector.broadcast %cst_391 : f32 to vector<1x1xf32>
    %986 = vector.extract_strided_slice %874 {offsets = [0, 0], sizes = [1, 511], strides = [1, 1]} : vector<1x512xf32> to vector<1x511xf32>
    %987 = tpu.concatenate %985, %986 in 1 : vector<1x1xf32>, vector<1x511xf32> -> vector<1x512xf32>
    %988 = arith.mulf %424, %987 : vector<1x512xf32>
    %989 = vector.extract_strided_slice %875 {offsets = [0, 12], sizes = [32, 1], strides = [1, 1]} : vector<32x27xf32> to vector<32x1xf32>
    %990 = vector.broadcast %989 : vector<32x1xf32> to vector<32x512xf32>
    %991 = vector.broadcast %988 : vector<1x512xf32> to vector<32x512xf32>
    %992 = arith.mulf %990, %991 : vector<32x512xf32>
    %993 = arith.addf %984, %992 : vector<32x512xf32>
    %994 = arith.mulf %456, %874 : vector<1x512xf32>
    %995 = vector.extract_strided_slice %875 {offsets = [0, 13], sizes = [32, 1], strides = [1, 1]} : vector<32x27xf32> to vector<32x1xf32>
    %996 = vector.broadcast %995 : vector<32x1xf32> to vector<32x512xf32>
    %997 = vector.broadcast %994 : vector<1x512xf32> to vector<32x512xf32>
    %998 = arith.mulf %996, %997 : vector<32x512xf32>
    %999 = arith.addf %993, %998 : vector<32x512xf32>
    %1000 = vector.extract_strided_slice %874 {offsets = [0, 1], sizes = [1, 511], strides = [1, 1]} : vector<1x512xf32> to vector<1x511xf32>
    %cst_392 = arith.constant 0.000000e+00 : f32
    %1001 = vector.broadcast %cst_392 : f32 to vector<1x1xf32>
    %1002 = tpu.concatenate %1000, %1001 in 1 : vector<1x511xf32>, vector<1x1xf32> -> vector<1x512xf32>
    %1003 = arith.mulf %488, %1002 : vector<1x512xf32>
    %1004 = vector.extract_strided_slice %875 {offsets = [0, 14], sizes = [32, 1], strides = [1, 1]} : vector<32x27xf32> to vector<32x1xf32>
    %1005 = vector.broadcast %1004 : vector<32x1xf32> to vector<32x512xf32>
    %1006 = vector.broadcast %1003 : vector<1x512xf32> to vector<32x512xf32>
    %1007 = arith.mulf %1005, %1006 : vector<32x512xf32>
    %1008 = arith.addf %999, %1007 : vector<32x512xf32>
    %1009 = vector.extract_strided_slice %874 {offsets = [0, 7], sizes = [1, 505], strides = [1, 1]} : vector<1x512xf32> to vector<1x505xf32>
    %cst_393 = arith.constant 0.000000e+00 : f32
    %1010 = vector.broadcast %cst_393 : f32 to vector<1x7xf32>
    %1011 = tpu.concatenate %1009, %1010 in 1 : vector<1x505xf32>, vector<1x7xf32> -> vector<1x512xf32>
    %1012 = arith.mulf %520, %1011 : vector<1x512xf32>
    %1013 = vector.extract_strided_slice %875 {offsets = [0, 15], sizes = [32, 1], strides = [1, 1]} : vector<32x27xf32> to vector<32x1xf32>
    %1014 = vector.broadcast %1013 : vector<32x1xf32> to vector<32x512xf32>
    %1015 = vector.broadcast %1012 : vector<1x512xf32> to vector<32x512xf32>
    %1016 = arith.mulf %1014, %1015 : vector<32x512xf32>
    %1017 = arith.addf %1008, %1016 : vector<32x512xf32>
    %1018 = vector.extract_strided_slice %874 {offsets = [0, 8], sizes = [1, 504], strides = [1, 1]} : vector<1x512xf32> to vector<1x504xf32>
    %cst_394 = arith.constant 0.000000e+00 : f32
    %1019 = vector.broadcast %cst_394 : f32 to vector<1x8xf32>
    %1020 = tpu.concatenate %1018, %1019 in 1 : vector<1x504xf32>, vector<1x8xf32> -> vector<1x512xf32>
    %1021 = arith.mulf %552, %1020 : vector<1x512xf32>
    %1022 = vector.extract_strided_slice %875 {offsets = [0, 16], sizes = [32, 1], strides = [1, 1]} : vector<32x27xf32> to vector<32x1xf32>
    %1023 = vector.broadcast %1022 : vector<32x1xf32> to vector<32x512xf32>
    %1024 = vector.broadcast %1021 : vector<1x512xf32> to vector<32x512xf32>
    %1025 = arith.mulf %1023, %1024 : vector<32x512xf32>
    %1026 = arith.addf %1017, %1025 : vector<32x512xf32>
    %1027 = vector.extract_strided_slice %874 {offsets = [0, 9], sizes = [1, 503], strides = [1, 1]} : vector<1x512xf32> to vector<1x503xf32>
    %cst_395 = arith.constant 0.000000e+00 : f32
    %1028 = vector.broadcast %cst_395 : f32 to vector<1x9xf32>
    %1029 = tpu.concatenate %1027, %1028 in 1 : vector<1x503xf32>, vector<1x9xf32> -> vector<1x512xf32>
    %1030 = arith.mulf %584, %1029 : vector<1x512xf32>
    %1031 = vector.extract_strided_slice %875 {offsets = [0, 17], sizes = [32, 1], strides = [1, 1]} : vector<32x27xf32> to vector<32x1xf32>
    %1032 = vector.broadcast %1031 : vector<32x1xf32> to vector<32x512xf32>
    %1033 = vector.broadcast %1030 : vector<1x512xf32> to vector<32x512xf32>
    %1034 = arith.mulf %1032, %1033 : vector<32x512xf32>
    %1035 = arith.addf %1026, %1034 : vector<32x512xf32>
    %1036 = vector.extract_strided_slice %874 {offsets = [0, 55], sizes = [1, 457], strides = [1, 1]} : vector<1x512xf32> to vector<1x457xf32>
    %cst_396 = arith.constant 0.000000e+00 : f32
    %1037 = vector.broadcast %cst_396 : f32 to vector<1x55xf32>
    %1038 = tpu.concatenate %1036, %1037 in 1 : vector<1x457xf32>, vector<1x55xf32> -> vector<1x512xf32>
    %1039 = arith.mulf %616, %1038 : vector<1x512xf32>
    %1040 = vector.extract_strided_slice %875 {offsets = [0, 18], sizes = [32, 1], strides = [1, 1]} : vector<32x27xf32> to vector<32x1xf32>
    %1041 = vector.broadcast %1040 : vector<32x1xf32> to vector<32x512xf32>
    %1042 = vector.broadcast %1039 : vector<1x512xf32> to vector<32x512xf32>
    %1043 = arith.mulf %1041, %1042 : vector<32x512xf32>
    %1044 = arith.addf %1035, %1043 : vector<32x512xf32>
    %1045 = vector.extract_strided_slice %874 {offsets = [0, 56], sizes = [1, 456], strides = [1, 1]} : vector<1x512xf32> to vector<1x456xf32>
    %cst_397 = arith.constant 0.000000e+00 : f32
    %1046 = vector.broadcast %cst_397 : f32 to vector<1x56xf32>
    %1047 = tpu.concatenate %1045, %1046 in 1 : vector<1x456xf32>, vector<1x56xf32> -> vector<1x512xf32>
    %1048 = arith.mulf %648, %1047 : vector<1x512xf32>
    %1049 = vector.extract_strided_slice %875 {offsets = [0, 19], sizes = [32, 1], strides = [1, 1]} : vector<32x27xf32> to vector<32x1xf32>
    %1050 = vector.broadcast %1049 : vector<32x1xf32> to vector<32x512xf32>
    %1051 = vector.broadcast %1048 : vector<1x512xf32> to vector<32x512xf32>
    %1052 = arith.mulf %1050, %1051 : vector<32x512xf32>
    %1053 = arith.addf %1044, %1052 : vector<32x512xf32>
    %1054 = vector.extract_strided_slice %874 {offsets = [0, 57], sizes = [1, 455], strides = [1, 1]} : vector<1x512xf32> to vector<1x455xf32>
    %cst_398 = arith.constant 0.000000e+00 : f32
    %1055 = vector.broadcast %cst_398 : f32 to vector<1x57xf32>
    %1056 = tpu.concatenate %1054, %1055 in 1 : vector<1x455xf32>, vector<1x57xf32> -> vector<1x512xf32>
    %1057 = arith.mulf %680, %1056 : vector<1x512xf32>
    %1058 = vector.extract_strided_slice %875 {offsets = [0, 20], sizes = [32, 1], strides = [1, 1]} : vector<32x27xf32> to vector<32x1xf32>
    %1059 = vector.broadcast %1058 : vector<32x1xf32> to vector<32x512xf32>
    %1060 = vector.broadcast %1057 : vector<1x512xf32> to vector<32x512xf32>
    %1061 = arith.mulf %1059, %1060 : vector<32x512xf32>
    %1062 = arith.addf %1053, %1061 : vector<32x512xf32>
    %1063 = vector.extract_strided_slice %874 {offsets = [0, 63], sizes = [1, 449], strides = [1, 1]} : vector<1x512xf32> to vector<1x449xf32>
    %cst_399 = arith.constant 0.000000e+00 : f32
    %1064 = vector.broadcast %cst_399 : f32 to vector<1x63xf32>
    %1065 = tpu.concatenate %1063, %1064 in 1 : vector<1x449xf32>, vector<1x63xf32> -> vector<1x512xf32>
    %1066 = arith.mulf %712, %1065 : vector<1x512xf32>
    %1067 = vector.extract_strided_slice %875 {offsets = [0, 21], sizes = [32, 1], strides = [1, 1]} : vector<32x27xf32> to vector<32x1xf32>
    %1068 = vector.broadcast %1067 : vector<32x1xf32> to vector<32x512xf32>
    %1069 = vector.broadcast %1066 : vector<1x512xf32> to vector<32x512xf32>
    %1070 = arith.mulf %1068, %1069 : vector<32x512xf32>
    %1071 = arith.addf %1062, %1070 : vector<32x512xf32>
    %1072 = vector.extract_strided_slice %874 {offsets = [0, 64], sizes = [1, 448], strides = [1, 1]} : vector<1x512xf32> to vector<1x448xf32>
    %cst_400 = arith.constant 0.000000e+00 : f32
    %1073 = vector.broadcast %cst_400 : f32 to vector<1x64xf32>
    %1074 = tpu.concatenate %1072, %1073 in 1 : vector<1x448xf32>, vector<1x64xf32> -> vector<1x512xf32>
    %1075 = arith.mulf %744, %1074 : vector<1x512xf32>
    %1076 = vector.extract_strided_slice %875 {offsets = [0, 22], sizes = [32, 1], strides = [1, 1]} : vector<32x27xf32> to vector<32x1xf32>
    %1077 = vector.broadcast %1076 : vector<32x1xf32> to vector<32x512xf32>
    %1078 = vector.broadcast %1075 : vector<1x512xf32> to vector<32x512xf32>
    %1079 = arith.mulf %1077, %1078 : vector<32x512xf32>
    %1080 = arith.addf %1071, %1079 : vector<32x512xf32>
    %1081 = vector.extract_strided_slice %874 {offsets = [0, 65], sizes = [1, 447], strides = [1, 1]} : vector<1x512xf32> to vector<1x447xf32>
    %cst_401 = arith.constant 0.000000e+00 : f32
    %1082 = vector.broadcast %cst_401 : f32 to vector<1x65xf32>
    %1083 = tpu.concatenate %1081, %1082 in 1 : vector<1x447xf32>, vector<1x65xf32> -> vector<1x512xf32>
    %1084 = arith.mulf %776, %1083 : vector<1x512xf32>
    %1085 = vector.extract_strided_slice %875 {offsets = [0, 23], sizes = [32, 1], strides = [1, 1]} : vector<32x27xf32> to vector<32x1xf32>
    %1086 = vector.broadcast %1085 : vector<32x1xf32> to vector<32x512xf32>
    %1087 = vector.broadcast %1084 : vector<1x512xf32> to vector<32x512xf32>
    %1088 = arith.mulf %1086, %1087 : vector<32x512xf32>
    %1089 = arith.addf %1080, %1088 : vector<32x512xf32>
    %1090 = vector.extract_strided_slice %874 {offsets = [0, 71], sizes = [1, 441], strides = [1, 1]} : vector<1x512xf32> to vector<1x441xf32>
    %cst_402 = arith.constant 0.000000e+00 : f32
    %1091 = vector.broadcast %cst_402 : f32 to vector<1x71xf32>
    %1092 = tpu.concatenate %1090, %1091 in 1 : vector<1x441xf32>, vector<1x71xf32> -> vector<1x512xf32>
    %1093 = arith.mulf %808, %1092 : vector<1x512xf32>
    %1094 = vector.extract_strided_slice %875 {offsets = [0, 24], sizes = [32, 1], strides = [1, 1]} : vector<32x27xf32> to vector<32x1xf32>
    %1095 = vector.broadcast %1094 : vector<32x1xf32> to vector<32x512xf32>
    %1096 = vector.broadcast %1093 : vector<1x512xf32> to vector<32x512xf32>
    %1097 = arith.mulf %1095, %1096 : vector<32x512xf32>
    %1098 = arith.addf %1089, %1097 : vector<32x512xf32>
    %1099 = vector.extract_strided_slice %874 {offsets = [0, 72], sizes = [1, 440], strides = [1, 1]} : vector<1x512xf32> to vector<1x440xf32>
    %cst_403 = arith.constant 0.000000e+00 : f32
    %1100 = vector.broadcast %cst_403 : f32 to vector<1x72xf32>
    %1101 = tpu.concatenate %1099, %1100 in 1 : vector<1x440xf32>, vector<1x72xf32> -> vector<1x512xf32>
    %1102 = arith.mulf %840, %1101 : vector<1x512xf32>
    %1103 = vector.extract_strided_slice %875 {offsets = [0, 25], sizes = [32, 1], strides = [1, 1]} : vector<32x27xf32> to vector<32x1xf32>
    %1104 = vector.broadcast %1103 : vector<32x1xf32> to vector<32x512xf32>
    %1105 = vector.broadcast %1102 : vector<1x512xf32> to vector<32x512xf32>
    %1106 = arith.mulf %1104, %1105 : vector<32x512xf32>
    %1107 = arith.addf %1098, %1106 : vector<32x512xf32>
    %1108 = vector.extract_strided_slice %874 {offsets = [0, 73], sizes = [1, 439], strides = [1, 1]} : vector<1x512xf32> to vector<1x439xf32>
    %cst_404 = arith.constant 0.000000e+00 : f32
    %1109 = vector.broadcast %cst_404 : f32 to vector<1x73xf32>
    %1110 = tpu.concatenate %1108, %1109 in 1 : vector<1x439xf32>, vector<1x73xf32> -> vector<1x512xf32>
    %1111 = arith.mulf %872, %1110 : vector<1x512xf32>
    %1112 = vector.extract_strided_slice %875 {offsets = [0, 26], sizes = [32, 1], strides = [1, 1]} : vector<32x27xf32> to vector<32x1xf32>
    %1113 = vector.broadcast %1112 : vector<32x1xf32> to vector<32x512xf32>
    %1114 = vector.broadcast %1111 : vector<1x512xf32> to vector<32x512xf32>
    %1115 = arith.mulf %1113, %1114 : vector<32x512xf32>
    %1116 = arith.addf %1107, %1115 : vector<32x512xf32>
    %c0_405 = arith.constant 0 : index
    %c0_406 = arith.constant 0 : index
    %1117 = vector.load %arg3[%c0_405, %c0_406] : memref<32x1xf32, #tpu.memory_space<vmem>>, vector<32x1xf32>
    %1118 = vector.broadcast %1117 : vector<32x1xf32> to vector<32x512xf32>
    %1119 = arith.addf %1116, %1118 : vector<32x512xf32>
    %cst_407 = arith.constant 0.000000e+00 : f32
    %1120 = vector.broadcast %cst_407 : f32 to vector<32x512xf32>
    %1121 = arith.cmpf oge, %1119, %1120 : vector<32x512xf32>
    %cst_408 = arith.constant 9.99999974E-5 : f32
    %1122 = vector.broadcast %cst_408 : f32 to vector<32x512xf32>
    %1123 = arith.mulf %1122, %1119 : vector<32x512xf32>
    %1124 = arith.select %1121, %1119, %1123 : vector<32x512xi1>, vector<32x512xf32>
    %cst_409 = arith.constant 0.000000e+00 : f32
    %1125 = vector.broadcast %cst_409 : f32 to vector<32x73xf32>
    %1126 = vector.extract_strided_slice %1124 {offsets = [0, 0], sizes = [32, 439], strides = [1, 1]} : vector<32x512xf32> to vector<32x439xf32>
    %1127 = tpu.concatenate %1125, %1126 in 1 : vector<32x73xf32>, vector<32x439xf32> -> vector<32x512xf32>
    %1128 = vector.broadcast %40 : vector<1x512xf32> to vector<32x512xf32>
    %1129 = arith.mulf %1128, %1127 : vector<32x512xf32>
    %cst_410 = arith.constant 0.000000e+00 : f32
    %1130 = vector.broadcast %cst_410 : f32 to vector<32x72xf32>
    %1131 = vector.extract_strided_slice %1124 {offsets = [0, 0], sizes = [32, 440], strides = [1, 1]} : vector<32x512xf32> to vector<32x440xf32>
    %1132 = tpu.concatenate %1130, %1131 in 1 : vector<32x72xf32>, vector<32x440xf32> -> vector<32x512xf32>
    %1133 = vector.broadcast %72 : vector<1x512xf32> to vector<32x512xf32>
    %1134 = arith.mulf %1133, %1132 : vector<32x512xf32>
    %cst_411 = arith.constant 0.000000e+00 : f32
    %1135 = vector.broadcast %cst_411 : f32 to vector<32x71xf32>
    %1136 = vector.extract_strided_slice %1124 {offsets = [0, 0], sizes = [32, 441], strides = [1, 1]} : vector<32x512xf32> to vector<32x441xf32>
    %1137 = tpu.concatenate %1135, %1136 in 1 : vector<32x71xf32>, vector<32x441xf32> -> vector<32x512xf32>
    %1138 = vector.broadcast %104 : vector<1x512xf32> to vector<32x512xf32>
    %1139 = arith.mulf %1138, %1137 : vector<32x512xf32>
    %cst_412 = arith.constant 0.000000e+00 : f32
    %1140 = vector.broadcast %cst_412 : f32 to vector<32x65xf32>
    %1141 = vector.extract_strided_slice %1124 {offsets = [0, 0], sizes = [32, 447], strides = [1, 1]} : vector<32x512xf32> to vector<32x447xf32>
    %1142 = tpu.concatenate %1140, %1141 in 1 : vector<32x65xf32>, vector<32x447xf32> -> vector<32x512xf32>
    %1143 = vector.broadcast %136 : vector<1x512xf32> to vector<32x512xf32>
    %1144 = arith.mulf %1143, %1142 : vector<32x512xf32>
    %cst_413 = arith.constant 0.000000e+00 : f32
    %1145 = vector.broadcast %cst_413 : f32 to vector<32x64xf32>
    %1146 = vector.extract_strided_slice %1124 {offsets = [0, 0], sizes = [32, 448], strides = [1, 1]} : vector<32x512xf32> to vector<32x448xf32>
    %1147 = tpu.concatenate %1145, %1146 in 1 : vector<32x64xf32>, vector<32x448xf32> -> vector<32x512xf32>
    %1148 = vector.broadcast %168 : vector<1x512xf32> to vector<32x512xf32>
    %1149 = arith.mulf %1148, %1147 : vector<32x512xf32>
    %cst_414 = arith.constant 0.000000e+00 : f32
    %1150 = vector.broadcast %cst_414 : f32 to vector<32x63xf32>
    %1151 = vector.extract_strided_slice %1124 {offsets = [0, 0], sizes = [32, 449], strides = [1, 1]} : vector<32x512xf32> to vector<32x449xf32>
    %1152 = tpu.concatenate %1150, %1151 in 1 : vector<32x63xf32>, vector<32x449xf32> -> vector<32x512xf32>
    %1153 = vector.broadcast %200 : vector<1x512xf32> to vector<32x512xf32>
    %1154 = arith.mulf %1153, %1152 : vector<32x512xf32>
    %cst_415 = arith.constant 0.000000e+00 : f32
    %1155 = vector.broadcast %cst_415 : f32 to vector<32x57xf32>
    %1156 = vector.extract_strided_slice %1124 {offsets = [0, 0], sizes = [32, 455], strides = [1, 1]} : vector<32x512xf32> to vector<32x455xf32>
    %1157 = tpu.concatenate %1155, %1156 in 1 : vector<32x57xf32>, vector<32x455xf32> -> vector<32x512xf32>
    %1158 = vector.broadcast %232 : vector<1x512xf32> to vector<32x512xf32>
    %1159 = arith.mulf %1158, %1157 : vector<32x512xf32>
    %cst_416 = arith.constant 0.000000e+00 : f32
    %1160 = vector.broadcast %cst_416 : f32 to vector<32x56xf32>
    %1161 = vector.extract_strided_slice %1124 {offsets = [0, 0], sizes = [32, 456], strides = [1, 1]} : vector<32x512xf32> to vector<32x456xf32>
    %1162 = tpu.concatenate %1160, %1161 in 1 : vector<32x56xf32>, vector<32x456xf32> -> vector<32x512xf32>
    %1163 = vector.broadcast %264 : vector<1x512xf32> to vector<32x512xf32>
    %1164 = arith.mulf %1163, %1162 : vector<32x512xf32>
    %cst_417 = arith.constant 0.000000e+00 : f32
    %1165 = vector.broadcast %cst_417 : f32 to vector<32x55xf32>
    %1166 = vector.extract_strided_slice %1124 {offsets = [0, 0], sizes = [32, 457], strides = [1, 1]} : vector<32x512xf32> to vector<32x457xf32>
    %1167 = tpu.concatenate %1165, %1166 in 1 : vector<32x55xf32>, vector<32x457xf32> -> vector<32x512xf32>
    %1168 = vector.broadcast %296 : vector<1x512xf32> to vector<32x512xf32>
    %1169 = arith.mulf %1168, %1167 : vector<32x512xf32>
    %cst_418 = arith.constant 0.000000e+00 : f32
    %1170 = vector.broadcast %cst_418 : f32 to vector<32x9xf32>
    %1171 = vector.extract_strided_slice %1124 {offsets = [0, 0], sizes = [32, 503], strides = [1, 1]} : vector<32x512xf32> to vector<32x503xf32>
    %1172 = tpu.concatenate %1170, %1171 in 1 : vector<32x9xf32>, vector<32x503xf32> -> vector<32x512xf32>
    %1173 = vector.broadcast %328 : vector<1x512xf32> to vector<32x512xf32>
    %1174 = arith.mulf %1173, %1172 : vector<32x512xf32>
    %cst_419 = arith.constant 0.000000e+00 : f32
    %1175 = vector.broadcast %cst_419 : f32 to vector<32x8xf32>
    %1176 = vector.extract_strided_slice %1124 {offsets = [0, 0], sizes = [32, 504], strides = [1, 1]} : vector<32x512xf32> to vector<32x504xf32>
    %1177 = tpu.concatenate %1175, %1176 in 1 : vector<32x8xf32>, vector<32x504xf32> -> vector<32x512xf32>
    %1178 = vector.broadcast %360 : vector<1x512xf32> to vector<32x512xf32>
    %1179 = arith.mulf %1178, %1177 : vector<32x512xf32>
    %cst_420 = arith.constant 0.000000e+00 : f32
    %1180 = vector.broadcast %cst_420 : f32 to vector<32x7xf32>
    %1181 = vector.extract_strided_slice %1124 {offsets = [0, 0], sizes = [32, 505], strides = [1, 1]} : vector<32x512xf32> to vector<32x505xf32>
    %1182 = tpu.concatenate %1180, %1181 in 1 : vector<32x7xf32>, vector<32x505xf32> -> vector<32x512xf32>
    %1183 = vector.broadcast %392 : vector<1x512xf32> to vector<32x512xf32>
    %1184 = arith.mulf %1183, %1182 : vector<32x512xf32>
    %cst_421 = arith.constant 0.000000e+00 : f32
    %1185 = vector.broadcast %cst_421 : f32 to vector<32x1xf32>
    %1186 = vector.extract_strided_slice %1124 {offsets = [0, 0], sizes = [32, 511], strides = [1, 1]} : vector<32x512xf32> to vector<32x511xf32>
    %1187 = tpu.concatenate %1185, %1186 in 1 : vector<32x1xf32>, vector<32x511xf32> -> vector<32x512xf32>
    %1188 = vector.broadcast %424 : vector<1x512xf32> to vector<32x512xf32>
    %1189 = arith.mulf %1188, %1187 : vector<32x512xf32>
    %1190 = vector.broadcast %456 : vector<1x512xf32> to vector<32x512xf32>
    %1191 = arith.mulf %1190, %1124 : vector<32x512xf32>
    %1192 = vector.extract_strided_slice %1124 {offsets = [0, 1], sizes = [32, 511], strides = [1, 1]} : vector<32x512xf32> to vector<32x511xf32>
    %cst_422 = arith.constant 0.000000e+00 : f32
    %1193 = vector.broadcast %cst_422 : f32 to vector<32x1xf32>
    %1194 = tpu.concatenate %1192, %1193 in 1 : vector<32x511xf32>, vector<32x1xf32> -> vector<32x512xf32>
    %1195 = vector.broadcast %488 : vector<1x512xf32> to vector<32x512xf32>
    %1196 = arith.mulf %1195, %1194 : vector<32x512xf32>
    %1197 = vector.extract_strided_slice %1124 {offsets = [0, 7], sizes = [32, 505], strides = [1, 1]} : vector<32x512xf32> to vector<32x505xf32>
    %cst_423 = arith.constant 0.000000e+00 : f32
    %1198 = vector.broadcast %cst_423 : f32 to vector<32x7xf32>
    %1199 = tpu.concatenate %1197, %1198 in 1 : vector<32x505xf32>, vector<32x7xf32> -> vector<32x512xf32>
    %1200 = vector.broadcast %520 : vector<1x512xf32> to vector<32x512xf32>
    %1201 = arith.mulf %1200, %1199 : vector<32x512xf32>
    %1202 = vector.extract_strided_slice %1124 {offsets = [0, 8], sizes = [32, 504], strides = [1, 1]} : vector<32x512xf32> to vector<32x504xf32>
    %cst_424 = arith.constant 0.000000e+00 : f32
    %1203 = vector.broadcast %cst_424 : f32 to vector<32x8xf32>
    %1204 = tpu.concatenate %1202, %1203 in 1 : vector<32x504xf32>, vector<32x8xf32> -> vector<32x512xf32>
    %1205 = vector.broadcast %552 : vector<1x512xf32> to vector<32x512xf32>
    %1206 = arith.mulf %1205, %1204 : vector<32x512xf32>
    %1207 = vector.extract_strided_slice %1124 {offsets = [0, 9], sizes = [32, 503], strides = [1, 1]} : vector<32x512xf32> to vector<32x503xf32>
    %cst_425 = arith.constant 0.000000e+00 : f32
    %1208 = vector.broadcast %cst_425 : f32 to vector<32x9xf32>
    %1209 = tpu.concatenate %1207, %1208 in 1 : vector<32x503xf32>, vector<32x9xf32> -> vector<32x512xf32>
    %1210 = vector.broadcast %584 : vector<1x512xf32> to vector<32x512xf32>
    %1211 = arith.mulf %1210, %1209 : vector<32x512xf32>
    %1212 = vector.extract_strided_slice %1124 {offsets = [0, 55], sizes = [32, 457], strides = [1, 1]} : vector<32x512xf32> to vector<32x457xf32>
    %cst_426 = arith.constant 0.000000e+00 : f32
    %1213 = vector.broadcast %cst_426 : f32 to vector<32x55xf32>
    %1214 = tpu.concatenate %1212, %1213 in 1 : vector<32x457xf32>, vector<32x55xf32> -> vector<32x512xf32>
    %1215 = vector.broadcast %616 : vector<1x512xf32> to vector<32x512xf32>
    %1216 = arith.mulf %1215, %1214 : vector<32x512xf32>
    %1217 = vector.extract_strided_slice %1124 {offsets = [0, 56], sizes = [32, 456], strides = [1, 1]} : vector<32x512xf32> to vector<32x456xf32>
    %cst_427 = arith.constant 0.000000e+00 : f32
    %1218 = vector.broadcast %cst_427 : f32 to vector<32x56xf32>
    %1219 = tpu.concatenate %1217, %1218 in 1 : vector<32x456xf32>, vector<32x56xf32> -> vector<32x512xf32>
    %1220 = vector.broadcast %648 : vector<1x512xf32> to vector<32x512xf32>
    %1221 = arith.mulf %1220, %1219 : vector<32x512xf32>
    %1222 = vector.extract_strided_slice %1124 {offsets = [0, 57], sizes = [32, 455], strides = [1, 1]} : vector<32x512xf32> to vector<32x455xf32>
    %cst_428 = arith.constant 0.000000e+00 : f32
    %1223 = vector.broadcast %cst_428 : f32 to vector<32x57xf32>
    %1224 = tpu.concatenate %1222, %1223 in 1 : vector<32x455xf32>, vector<32x57xf32> -> vector<32x512xf32>
    %1225 = vector.broadcast %680 : vector<1x512xf32> to vector<32x512xf32>
    %1226 = arith.mulf %1225, %1224 : vector<32x512xf32>
    %1227 = vector.extract_strided_slice %1124 {offsets = [0, 63], sizes = [32, 449], strides = [1, 1]} : vector<32x512xf32> to vector<32x449xf32>
    %cst_429 = arith.constant 0.000000e+00 : f32
    %1228 = vector.broadcast %cst_429 : f32 to vector<32x63xf32>
    %1229 = tpu.concatenate %1227, %1228 in 1 : vector<32x449xf32>, vector<32x63xf32> -> vector<32x512xf32>
    %1230 = vector.broadcast %712 : vector<1x512xf32> to vector<32x512xf32>
    %1231 = arith.mulf %1230, %1229 : vector<32x512xf32>
    %1232 = vector.extract_strided_slice %1124 {offsets = [0, 64], sizes = [32, 448], strides = [1, 1]} : vector<32x512xf32> to vector<32x448xf32>
    %cst_430 = arith.constant 0.000000e+00 : f32
    %1233 = vector.broadcast %cst_430 : f32 to vector<32x64xf32>
    %1234 = tpu.concatenate %1232, %1233 in 1 : vector<32x448xf32>, vector<32x64xf32> -> vector<32x512xf32>
    %1235 = vector.broadcast %744 : vector<1x512xf32> to vector<32x512xf32>
    %1236 = arith.mulf %1235, %1234 : vector<32x512xf32>
    %1237 = vector.extract_strided_slice %1124 {offsets = [0, 65], sizes = [32, 447], strides = [1, 1]} : vector<32x512xf32> to vector<32x447xf32>
    %cst_431 = arith.constant 0.000000e+00 : f32
    %1238 = vector.broadcast %cst_431 : f32 to vector<32x65xf32>
    %1239 = tpu.concatenate %1237, %1238 in 1 : vector<32x447xf32>, vector<32x65xf32> -> vector<32x512xf32>
    %1240 = vector.broadcast %776 : vector<1x512xf32> to vector<32x512xf32>
    %1241 = arith.mulf %1240, %1239 : vector<32x512xf32>
    %1242 = vector.extract_strided_slice %1124 {offsets = [0, 71], sizes = [32, 441], strides = [1, 1]} : vector<32x512xf32> to vector<32x441xf32>
    %cst_432 = arith.constant 0.000000e+00 : f32
    %1243 = vector.broadcast %cst_432 : f32 to vector<32x71xf32>
    %1244 = tpu.concatenate %1242, %1243 in 1 : vector<32x441xf32>, vector<32x71xf32> -> vector<32x512xf32>
    %1245 = vector.broadcast %808 : vector<1x512xf32> to vector<32x512xf32>
    %1246 = arith.mulf %1245, %1244 : vector<32x512xf32>
    %1247 = vector.extract_strided_slice %1124 {offsets = [0, 72], sizes = [32, 440], strides = [1, 1]} : vector<32x512xf32> to vector<32x440xf32>
    %cst_433 = arith.constant 0.000000e+00 : f32
    %1248 = vector.broadcast %cst_433 : f32 to vector<32x72xf32>
    %1249 = tpu.concatenate %1247, %1248 in 1 : vector<32x440xf32>, vector<32x72xf32> -> vector<32x512xf32>
    %1250 = vector.broadcast %840 : vector<1x512xf32> to vector<32x512xf32>
    %1251 = arith.mulf %1250, %1249 : vector<32x512xf32>
    %1252 = vector.extract_strided_slice %1124 {offsets = [0, 73], sizes = [32, 439], strides = [1, 1]} : vector<32x512xf32> to vector<32x439xf32>
    %cst_434 = arith.constant 0.000000e+00 : f32
    %1253 = vector.broadcast %cst_434 : f32 to vector<32x73xf32>
    %1254 = tpu.concatenate %1252, %1253 in 1 : vector<32x439xf32>, vector<32x73xf32> -> vector<32x512xf32>
    %1255 = vector.broadcast %872 : vector<1x512xf32> to vector<32x512xf32>
    %1256 = arith.mulf %1255, %1254 : vector<32x512xf32>
    %1257 = tpu.concatenate %1129, %1134, %1139, %1144, %1149, %1154, %1159, %1164, %1169, %1174, %1179, %1184, %1189, %1191, %1196, %1201 in 0 : vector<32x512xf32>, vector<32x512xf32>, vector<32x512xf32>, vector<32x512xf32>, vector<32x512xf32>, vector<32x512xf32>, vector<32x512xf32>, vector<32x512xf32>, vector<32x512xf32>, vector<32x512xf32>, vector<32x512xf32>, vector<32x512xf32>, vector<32x512xf32>, vector<32x512xf32>, vector<32x512xf32>, vector<32x512xf32> -> vector<512x512xf32>
    %1258 = tpu.concatenate %1206, %1211, %1216, %1221, %1226, %1231, %1236, %1241, %1246, %1251, %1256 in 0 : vector<32x512xf32>, vector<32x512xf32>, vector<32x512xf32>, vector<32x512xf32>, vector<32x512xf32>, vector<32x512xf32>, vector<32x512xf32>, vector<32x512xf32>, vector<32x512xf32>, vector<32x512xf32>, vector<32x512xf32> -> vector<352x512xf32>
    %1259 = tpu.concatenate %1257, %1258 in 0 : vector<512x512xf32>, vector<352x512xf32> -> vector<864x512xf32>
    %c0_435 = arith.constant 0 : index
    %c0_436 = arith.constant 0 : index
    %1260 = vector.load %arg4[%c0_435, %c0_436] : memref<1x864xf32, #tpu.memory_space<vmem>>, vector<1x864xf32>
    %cst_437 = arith.constant dense<0.000000e+00> : vector<1x512xf32>
    %1261 = tpu.matmul %1260, %1259, %cst_437 {dimension_numbers = #tpu.dot_dimension_numbers<[1], [0], [0], [1], [0, 0, 1, 1], [], []>} : vector<1x864xf32>, vector<864x512xf32>, vector<1x512xf32> -> vector<1x512xf32>
    %c0_438 = arith.constant 0 : index
    %c0_439 = arith.constant 0 : index
    %1262 = vector.load %arg5[%c0_438, %c0_439] : memref<1x1xf32, #tpu.memory_space<vmem>>, vector<1x1xf32>
    %1263 = vector.broadcast %1262 : vector<1x1xf32> to vector<1x512xf32>
    %1264 = arith.addf %1261, %1263 : vector<1x512xf32>
    %cst_440 = arith.constant 0.000000e+00 : f32
    %1265 = vector.broadcast %cst_440 : f32 to vector<1x512xf32>
    %1266 = arith.cmpf oge, %1264, %1265 : vector<1x512xf32>
    %cst_441 = arith.constant 9.99999974E-5 : f32
    %1267 = vector.broadcast %cst_441 : f32 to vector<1x512xf32>
    %1268 = arith.mulf %1267, %1264 : vector<1x512xf32>
    %1269 = arith.select %1266, %1264, %1268 : vector<1x512xi1>, vector<1x512xf32>
    %c0_442 = arith.constant 0 : index
    %c0_443 = arith.constant 0 : index
    %c0_444 = arith.constant 0 : index
    %1270 = vector.load %arg6[%c0_442, %c0_443, %c0_444] : memref<1x1x512xf32, #tpu.memory_space<vmem>>, vector<1x1x512xf32>
    %1271 = vector.shape_cast %1270 : vector<1x1x512xf32> to vector<1x512xf32>
    %1272 = vector.shape_cast %1269 : vector<1x512xf32> to vector<1x1x512xf32>
    tpu.vector_store %arg6[%c0_442, %c0_443, %c0_444], %1272 {strides = array<i32>} : memref<1x1x512xf32, #tpu.memory_space<vmem>>, vector<1x1x512xf32>,
    return
  }
  func.func @transform_0(%arg0: i32) -> (i32, i32, i32) {
    %c0_i32 = arith.constant 0 : i32
    %c0_i32_0 = arith.constant 0 : i32
    %c0_i32_1 = arith.constant 0 : i32
    return %arg0, %c0_i32, %c0_i32_0 : i32, i32, i32
  }
  func.func @transform_1(%arg0: i32) -> (i32, i32) {
    %c0_i32 = arith.constant 0 : i32
    %c0_i32_0 = arith.constant 0 : i32
    %c0_i32_1 = arith.constant 0 : i32
    return %c0_i32, %c0_i32_0 : i32, i32
  }
  func.func @transform_2(%arg0: i32) -> (i32, i32) {
    %c0_i32 = arith.constant 0 : i32
    %c0_i32_0 = arith.constant 0 : i32
    %c0_i32_1 = arith.constant 0 : i32
    return %c0_i32, %c0_i32_0 : i32, i32
  }
  func.func @transform_3(%arg0: i32) -> (i32, i32) {
    %c0_i32 = arith.constant 0 : i32
    %c0_i32_0 = arith.constant 0 : i32
    %c0_i32_1 = arith.constant 0 : i32
    return %c0_i32, %c0_i32_0 : i32, i32
  }
  func.func @transform_4(%arg0: i32) -> (i32, i32) {
    %c0_i32 = arith.constant 0 : i32
    %c0_i32_0 = arith.constant 0 : i32
    %c0_i32_1 = arith.constant 0 : i32
    return %c0_i32, %c0_i32_0 : i32, i32
  }
  func.func @transform_5(%arg0: i32) -> (i32, i32, i32) {
    %c0_i32 = arith.constant 0 : i32
    %c0_i32_0 = arith.constant 0 : i32
    %c0_i32_1 = arith.constant 0 : i32
    return %arg0, %c0_i32, %c0_i32_0 : i32, i32, i32
  }
}

</mosaic_0001>

<llo_original>
// kernel: cnn_model_forward.1
$region0: #{cnn_model_forward.1}
  #allocation0 [shape = 'u32[]', space=smem, size = 0x4, offset = 0x4, fixed_abs, tag = 'smem constant byte address 0x4 - core index']
  #allocation1 [shape = 'u32[144,128]{1,0:T(1,128)}', space=vmem, size = 0x12000, scoped, tag = 'internal scratch']
  #allocation2 [shape = 'f32[1,1]{1,0:T(1,128)S(1)}', space=vmem, size = 0x200, scoped, tag = 'scoped memory for cnn_model_forward.1']
  %s0 = inlined_call_operand.vmem [shape: f32[2,1,512], index: 0, kind: input, shape index: {}]
  %s1 = inlined_call_operand.vmem [shape: f32[32,27], index: 1, kind: input, shape index: {}]
  %s2 = inlined_call_operand.vmem [shape: f32[32,1], index: 2, kind: input, shape index: {}]
  %s3 = inlined_call_operand.vmem [shape: f32[1,864], index: 3, kind: input, shape index: {}]
  %s4 = inlined_call_operand.<no memory space> [shape: f32[1,1], index: 4, kind: input, shape index: {}]
  %s5 = inlined_call_operand.vmem [shape: f32[2,1,512], index: 5, kind: output, shape index: {}]
  %s6 = sld [smem:[#allocation0]]
  $region53: #{cnn_model_forward.1} parent=0
    _
  %s8 = ssub.s32 1, %s6
  %s9 = scalar_select 0, %s8, %s6
  %v10 = vstv %s4
  %11 = vst [vmem:[#allocation2] sm:$0x1] %v10
  loop: start=0, step=1, limit=4
  $region2: #{cnn_model_forward.1} parent=0 // loop_pre_header
    _
  $region3: #{cnn_model_forward.1} parent=0 // loop_header
    %s13 = sphi 0, %s17
    %p14 = scmp.ge.s32.totalorder %s13, 4
    %s23 = sphi 0, %s25
    %s26 = sphi 0, %s23
    %s27 = sphi 0, %s26
    %s43 = sphi 0, %s27
    %s47 = sphi 0, %s47
    %s49 = sphi 0, %s47
    %s50 = sphi 0, %s49
    %s64 = sphi 0, %s50
    %s68 = sphi 0, %s68
    %s70 = sphi 0, %s68
    %s71 = sphi 0, %s70
    %s85 = sphi 0, %s71
    %s89 = sphi 0, %s89
    %s91 = sphi 0, %s89
    %s92 = sphi 0, %s91
    %s106 = sphi 0, %s92
    %s110 = sphi 0, %s110
    %s112 = sphi 0, %s110
    %s113 = sphi 0, %s112
    %s127 = sphi 0, %s113
    %s133 = sphi 0, %s135
    %s136 = sphi 0, %s133
    %s137 = sphi 0, %s136
    %s153 = sphi 0, %s137
  $region4: #{cnn_model_forward.1} parent=0 // loop_header_branch
    %16 = sbr.rel (%p14) target = $region8
  $region5: #{cnn_model_forward.1} parent=0 // loop_body
    %s18 = ssub.s32 %s13, 1
    %s19 = ssub.s32 %s13, 2
    %s20 = sadd.s32 %s13, 1
    %s21 = ssub.s32 %s13, %s20
    %p22 = scmp.eq.s32.totalorder %s21, 0
    %s24 = sadd.s32 %s23, 1
    %s25 = scalar_select %p22, %s23, %s24
    %p28 = pneg %p22
    %p29 = scmp.eq.s32.totalorder %s13, 1
    %p30 = por %p28, %p29
    %p31 = scmp.ne.s32.totalorder %s23, %s26
    %p32 = scmp.eq.s32.totalorder %s13, 0
    %p33 = por %p31, %p32
    %p34 = scmp.ne.s32.totalorder %s23, %s26
    %p35 = scmp.eq.s32.totalorder %s18, 1
    %p36 = por %p34, %p35
    %p37 = scmp.ne.s32.totalorder %s26, %s27
    %p38 = scmp.eq.s32.totalorder %s18, 0
    %p39 = por %p37, %p38
    %p40 = scmp.ne.s32.totalorder %s26, %s27
    %p41 = scmp.eq.s32.totalorder %s19, 1
    %p42 = por %p40, %p41
    %p44 = scmp.ne.s32.totalorder %s27, %s43
    %p45 = scmp.eq.s32.totalorder %s19, 0
    %p46 = por %p44, %p45
    %s48 = sadd.s32 %s47, 1
    %p51 = scmp.eq.s32.totalorder %s13, 1
    %p52 = scmp.ne.s32.totalorder %s47, %s49
    %p53 = scmp.eq.s32.totalorder %s13, 0
    %p54 = por %p52, %p53
    %p55 = scmp.ne.s32.totalorder %s47, %s49
    %p56 = scmp.eq.s32.totalorder %s18, 1
    %p57 = por %p55, %p56
    %p58 = scmp.ne.s32.totalorder %s49, %s50
    %p59 = scmp.eq.s32.totalorder %s18, 0
    %p60 = por %p58, %p59
    %p61 = scmp.ne.s32.totalorder %s49, %s50
    %p62 = scmp.eq.s32.totalorder %s19, 1
    %p63 = por %p61, %p62
    %p65 = scmp.ne.s32.totalorder %s50, %s64
    %p66 = scmp.eq.s32.totalorder %s19, 0
    %p67 = por %p65, %p66
    %s69 = sadd.s32 %s68, 1
    %p72 = scmp.eq.s32.totalorder %s13, 1
    %p73 = scmp.ne.s32.totalorder %s68, %s70
    %p74 = scmp.eq.s32.totalorder %s13, 0
    %p75 = por %p73, %p74
    %p76 = scmp.ne.s32.totalorder %s68, %s70
    %p77 = scmp.eq.s32.totalorder %s18, 1
    %p78 = por %p76, %p77
    %p79 = scmp.ne.s32.totalorder %s70, %s71
    %p80 = scmp.eq.s32.totalorder %s18, 0
    %p81 = por %p79, %p80
    %p82 = scmp.ne.s32.totalorder %s70, %s71
    %p83 = scmp.eq.s32.totalorder %s19, 1
    %p84 = por %p82, %p83
    %p86 = scmp.ne.s32.totalorder %s71, %s85
    %p87 = scmp.eq.s32.totalorder %s19, 0
    %p88 = por %p86, %p87
    %s90 = sadd.s32 %s89, 1
    %p93 = scmp.eq.s32.totalorder %s13, 1
    %p94 = scmp.ne.s32.totalorder %s89, %s91
    %p95 = scmp.eq.s32.totalorder %s13, 0
    %p96 = por %p94, %p95
    %p97 = scmp.ne.s32.totalorder %s89, %s91
    %p98 = scmp.eq.s32.totalorder %s18, 1
    %p99 = por %p97, %p98
    %p100 = scmp.ne.s32.totalorder %s91, %s92
    %p101 = scmp.eq.s32.totalorder %s18, 0
    %p102 = por %p100, %p101
    %p103 = scmp.ne.s32.totalorder %s91, %s92
    %p104 = scmp.eq.s32.totalorder %s19, 1
    %p105 = por %p103, %p104
    %p107 = scmp.ne.s32.totalorder %s92, %s106
    %p108 = scmp.eq.s32.totalorder %s19, 0
    %p109 = por %p107, %p108
    %s111 = sadd.s32 %s110, 1
    %p114 = scmp.eq.s32.totalorder %s13, 1
    %p115 = scmp.ne.s32.totalorder %s110, %s112
    %p116 = scmp.eq.s32.totalorder %s13, 0
    %p117 = por %p115, %p116
    %p118 = scmp.ne.s32.totalorder %s110, %s112
    %p119 = scmp.eq.s32.totalorder %s18, 1
    %p120 = por %p118, %p119
    %p121 = scmp.ne.s32.totalorder %s112, %s113
    %p122 = scmp.eq.s32.totalorder %s18, 0
    %p123 = por %p121, %p122
    %p124 = scmp.ne.s32.totalorder %s112, %s113
    %p125 = scmp.eq.s32.totalorder %s19, 1
    %p126 = por %p124, %p125
    %p128 = scmp.ne.s32.totalorder %s113, %s127
    %p129 = scmp.eq.s32.totalorder %s19, 0
    %p130 = por %p128, %p129
    %s131 = ssub.s32 %s13, %s20
    %p132 = scmp.eq.s32.totalorder %s131, 0
    %s134 = sadd.s32 %s133, 1
    %s135 = scalar_select %p132, %s133, %s134
    %p138 = pneg %p132
    %p139 = scmp.eq.s32.totalorder %s13, 1
    %p140 = por %p138, %p139
    %p141 = scmp.ne.s32.totalorder %s133, %s136
    %p142 = scmp.eq.s32.totalorder %s13, 0
    %p143 = por %p141, %p142
    %p144 = scmp.ne.s32.totalorder %s133, %s136
    %p145 = scmp.eq.s32.totalorder %s18, 1
    %p146 = por %p144, %p145
    %p147 = scmp.ne.s32.totalorder %s136, %s137
    %p148 = scmp.eq.s32.totalorder %s18, 0
    %p149 = por %p147, %p148
    %p150 = scmp.ne.s32.totalorder %s136, %s137
    %p151 = scmp.eq.s32.totalorder %s19, 1
    %p152 = por %p150, %p151
    %p154 = scmp.ne.s32.totalorder %s137, %s153
    %p155 = scmp.eq.s32.totalorder %s19, 0
    %p156 = por %p154, %p155
    %p157 = scmp.le.s32.totalorder 1, %s13
    %p158 = scmp.lt.s32.totalorder %s13, 3
    %p159 = pnand %p157, %p158
    %p160 = pneg %p159
    // Predicated region
    $region9: #{cnn_model_forward.1} parent=5 // pred_check
      _
    $region10: #{cnn_model_forward.1} parent=5 // pred_check_branch
      %162 = sbr.rel (%p159) target = $region12
    $region11: #{cnn_model_forward.1} parent=5 // pred_region
      %s163 = ssub.s32 %s13, 1
      // Predicated region
      $region13: #{cnn_model_forward.1} parent=11 // pred_check
        %p164 = pneg %p60
      $region14: #{cnn_model_forward.1} parent=11 // pred_check_branch
        %166 = sbr.rel (%p164) target = $region16
      $region15: #{cnn_model_forward.1} parent=11 // pred_region
        _
      $region16: #{cnn_model_forward.1} parent=11 // pred_fallthru
        _
      // Predicated region
      $region17: #{cnn_model_forward.1} parent=11 // pred_check
        %p167 = pneg %p81
      $region18: #{cnn_model_forward.1} parent=11 // pred_check_branch
        %169 = sbr.rel (%p167) target = $region20
      $region19: #{cnn_model_forward.1} parent=11 // pred_region
        _
      $region20: #{cnn_model_forward.1} parent=11 // pred_fallthru
        _
      // Predicated region
      $region21: #{cnn_model_forward.1} parent=11 // pred_check
        %p170 = pneg %p102
      $region22: #{cnn_model_forward.1} parent=11 // pred_check_branch
        %172 = sbr.rel (%p170) target = $region24
      $region23: #{cnn_model_forward.1} parent=11 // pred_region
        _
      $region24: #{cnn_model_forward.1} parent=11 // pred_fallthru
        _
      // Predicated region
      $region25: #{cnn_model_forward.1} parent=11 // pred_check
        %p173 = pneg %p123
      $region26: #{cnn_model_forward.1} parent=11 // pred_check_branch
        %175 = sbr.rel (%p173) target = $region28
      $region27: #{cnn_model_forward.1} parent=11 // pred_region
        _
      $region28: #{cnn_model_forward.1} parent=11 // pred_fallthru
        _
    $region12: #{cnn_model_forward.1} parent=5 // pred_fallthru
      _
    %p176 = scmp.lt.s32.totalorder %s13, 2
    // Predicated region
    $region29: #{cnn_model_forward.1} parent=5 // pred_check
      %p177 = pneg %p176
    $region30: #{cnn_model_forward.1} parent=5 // pred_check_branch
      %179 = sbr.rel (%p177) target = $region32
    $region31: #{cnn_model_forward.1} parent=5 // pred_region
      // Predicated region
      $region33: #{cnn_model_forward.1} parent=31 // pred_check
        %p180 = pneg %p33
      $region34: #{cnn_model_forward.1} parent=31 // pred_check_branch
        %182 = sbr.rel (%p180) target = $region36
      $region35: #{cnn_model_forward.1} parent=31 // pred_region
        %p183 = scmp.lt.s32.totalorder %s13, 1
        %s184 = scalar_select %p183, %s13, 1
        %s185 = smul.addr %s184, 4
        %s186 = scalar_lea.vmem %s0, %s185
      $region36: #{cnn_model_forward.1} parent=31 // pred_fallthru
        _
    $region32: #{cnn_model_forward.1} parent=5 // pred_fallthru
      _
    %p187 = scmp.le.s32.totalorder 1, %s13
    %p188 = scmp.lt.s32.totalorder %s13, 3
    %p189 = pnand %p187, %p188
    %p190 = pneg %p189
    // Predicated region
    $region37: #{cnn_model_forward.1} parent=5 // pred_check
      _
    $region38: #{cnn_model_forward.1} parent=5 // pred_check_branch
      %192 = sbr.rel (%p189) target = $region40
    $region39: #{cnn_model_forward.1} parent=5 // pred_region
      %s193 = ssub.s32 %s13, 1
      %p194 = scmp.lt.s32.totalorder %s18, 1
      %s195 = scalar_select %p194, %s18, 1
      %s196 = smul.addr %s195, 4
      %s197 = scalar_lea.vmem %s0, %s196
      %p198 = pneg %p39
      %p199 = pneg %p36
      %p200 = pneg %p60
      %p201 = pneg %p57
      %p202 = pneg %p81
      %p203 = pneg %p78
      %p204 = pneg %p102
      %p205 = pneg %p99
      %p206 = pneg %p123
      %p207 = pneg %p120
      %p208 = pneg %p149
      %p209 = pneg %p146
      %p210 = scmp.lt.s32.totalorder %s18, 1
      %s211 = scalar_select %p210, %s18, 1
      %s212 = smul.addr %s211, 4
      %s213 = scalar_lea.vmem %s5, %s212
      %p214 = scmp.lt.s32.totalorder %s18, 1
      %s215 = scalar_select %p214, %s18, 1
      %s216 = smul.addr %s215, 4
      %s217 = scalar_lea.vmem %s0, %s216
      %p218 = scmp.lt.s32.totalorder %s18, 1
      %s219 = scalar_select %p218, %s18, 1
      %s220 = smul.addr %s219, 4
      %s221 = scalar_lea.vmem %s5, %s220
      %v222 = vlaneseq
      %v223 = vand.u32 %v222, 127
      %v224 = vadd.s32 %v223, 128
      %v225 = vadd.s32 %v223, 256
      %v226 = vadd.s32 %v223, 384
      %v227 = vshra.s32 %v223, 6
      %v228 = vshra.s32 %v224, 6
      %v229 = vshra.s32 %v225, 6
      %v230 = vshra.s32 %v226, 6
      %v231 = vshra.s32 %v223, 3
      %v232 = vshra.s32 %v224, 3
      %v233 = vshra.s32 %v225, 3
      %v234 = vshra.s32 %v226, 3
      %v235 = vand.u32 %v231, 7
      %v236 = vand.u32 %v232, 7
      %v237 = vand.u32 %v233, 7
      %v238 = vand.u32 %v234, 7
      %v239 = vand.u32 %v223, 7
      %v240 = vand.u32 %v224, 7
      %v241 = vand.u32 %v225, 7
      %v242 = vand.u32 %v226, 7
      %v243 = vadd.s32 %v227, 4294967295
      %v244 = vadd.s32 %v228, 4294967295
      %v245 = vadd.s32 %v229, 4294967295
      %v246 = vadd.s32 %v230, 4294967295
      %vm247 = vcmp.ge.s32.totalorder %v243, 0
      %vm248 = vcmp.ge.s32.totalorder %v244, 0
      %vm249 = vcmp.ge.s32.totalorder %v245, 0
      %vm250 = vcmp.ge.s32.totalorder %v246, 0
      %vm251 = vcmp.lt.s32.totalorder %v243, 8
      %vm252 = vcmp.lt.s32.totalorder %v244, 8
      %vm253 = vcmp.lt.s32.totalorder %v245, 8
      %vm254 = vcmp.lt.s32.totalorder %v246, 8
      %vm255 = vmand %vm247, %vm251
      %vm256 = vmand %vm248, %vm252
      %vm257 = vmand %vm249, %vm253
      %vm258 = vmand %vm250, %vm254
      %v259 = vadd.s32 %v235, 4294967295
      %v260 = vadd.s32 %v236, 4294967295
      %v261 = vadd.s32 %v237, 4294967295
      %v262 = vadd.s32 %v238, 4294967295
      %vm263 = vcmp.ge.s32.totalorder %v259, 0
      %vm264 = vcmp.ge.s32.totalorder %v260, 0
      %vm265 = vcmp.ge.s32.totalorder %v261, 0
      %vm266 = vcmp.ge.s32.totalorder %v262, 0
      %vm267 = vmand %vm255, %vm263
      %vm268 = vmand %vm256, %vm264
      %vm269 = vmand %vm257, %vm265
      %vm270 = vmand %vm258, %vm266
      %vm271 = vcmp.lt.s32.totalorder %v259, 8
      %vm272 = vcmp.lt.s32.totalorder %v260, 8
      %vm273 = vcmp.lt.s32.totalorder %v261, 8
      %vm274 = vcmp.lt.s32.totalorder %v262, 8
      %vm275 = vmand %vm267, %vm271
      %vm276 = vmand %vm268, %vm272
      %vm277 = vmand %vm269, %vm273
      %vm278 = vmand %vm270, %vm274
      %v279 = vadd.s32 %v239, 4294967295
      %v280 = vadd.s32 %v240, 4294967295
      %v281 = vadd.s32 %v241, 4294967295
      %v282 = vadd.s32 %v242, 4294967295
      %vm283 = vcmp.ge.s32.totalorder %v279, 0
      %vm284 = vcmp.ge.s32.totalorder %v280, 0
      %vm285 = vcmp.ge.s32.totalorder %v281, 0
      %vm286 = vcmp.ge.s32.totalorder %v282, 0
      %vm287 = vmand %vm275, %vm283
      %vm288 = vmand %vm276, %vm284
      %vm289 = vmand %vm277, %vm285
      %vm290 = vmand %vm278, %vm286
      %vm291 = vcmp.lt.s32.totalorder %v279, 8
      %vm292 = vcmp.lt.s32.totalorder %v280, 8
      %vm293 = vcmp.lt.s32.totalorder %v281, 8
      %vm294 = vcmp.lt.s32.totalorder %v282, 8
      %vm295 = vmand %vm287, %vm291
      %vm296 = vmand %vm288, %vm292
      %vm297 = vmand %vm289, %vm293
      %vm298 = vmand %vm290, %vm294
      %v299 = vsel %vm295, 1.0, 0.0
      %v300 = vsel %vm296, 1.0, 0.0
      %v301 = vsel %vm297, 1.0, 0.0
      %v302 = vsel %vm298, 1.0, 0.0
      %vm303 = vcmp.ge.s32.totalorder %v239, 0
      %vm304 = vcmp.ge.s32.totalorder %v240, 0
      %vm305 = vcmp.ge.s32.totalorder %v241, 0
      %vm306 = vcmp.ge.s32.totalorder %v242, 0
      %vm307 = vmand %vm275, %vm303
      %vm308 = vmand %vm276, %vm304
      %vm309 = vmand %vm277, %vm305
      %vm310 = vmand %vm278, %vm306
      %vm311 = vcmp.lt.s32.totalorder %v239, 8
      %vm312 = vcmp.lt.s32.totalorder %v240, 8
      %vm313 = vcmp.lt.s32.totalorder %v241, 8
      %vm314 = vcmp.lt.s32.totalorder %v242, 8
      %vm315 = vmand %vm307, %vm311
      %vm316 = vmand %vm308, %vm312
      %vm317 = vmand %vm309, %vm313
      %vm318 = vmand %vm310, %vm314
      %v319 = vsel %vm315, 1.0, 0.0
      %v320 = vsel %vm316, 1.0, 0.0
      %v321 = vsel %vm317, 1.0, 0.0
      %v322 = vsel %vm318, 1.0, 0.0
      %v323 = vadd.s32 %v239, 1
      %v324 = vadd.s32 %v240, 1
      %v325 = vadd.s32 %v241, 1
      %v326 = vadd.s32 %v242, 1
      %vm327 = vcmp.ge.s32.totalorder %v323, 0
      %vm328 = vcmp.ge.s32.totalorder %v324, 0
      %vm329 = vcmp.ge.s32.totalorder %v325, 0
      %vm330 = vcmp.ge.s32.totalorder %v326, 0
      %vm331 = vmand %vm275, %vm327
      %vm332 = vmand %vm276, %vm328
      %vm333 = vmand %vm277, %vm329
      %vm334 = vmand %vm278, %vm330
      %vm335 = vcmp.lt.s32.totalorder %v323, 8
      %vm336 = vcmp.lt.s32.totalorder %v324, 8
      %vm337 = vcmp.lt.s32.totalorder %v325, 8
      %vm338 = vcmp.lt.s32.totalorder %v326, 8
      %vm339 = vmand %vm331, %vm335
      %vm340 = vmand %vm332, %vm336
      %vm341 = vmand %vm333, %vm337
      %vm342 = vmand %vm334, %vm338
      %v343 = vsel %vm339, 1.0, 0.0
      %v344 = vsel %vm340, 1.0, 0.0
      %v345 = vsel %vm341, 1.0, 0.0
      %v346 = vsel %vm342, 1.0, 0.0
      %vm347 = vcmp.ge.s32.totalorder %v235, 0
      %vm348 = vcmp.ge.s32.totalorder %v236, 0
      %vm349 = vcmp.ge.s32.totalorder %v237, 0
      %vm350 = vcmp.ge.s32.totalorder %v238, 0
      %vm351 = vmand %vm255, %vm347
      %vm352 = vmand %vm256, %vm348
      %vm353 = vmand %vm257, %vm349
      %vm354 = vmand %vm258, %vm350
      %vm355 = vcmp.lt.s32.totalorder %v235, 8
      %vm356 = vcmp.lt.s32.totalorder %v236, 8
      %vm357 = vcmp.lt.s32.totalorder %v237, 8
      %vm358 = vcmp.lt.s32.totalorder %v238, 8
      %vm359 = vmand %vm351, %vm355
      %vm360 = vmand %vm352, %vm356
      %vm361 = vmand %vm353, %vm357
      %vm362 = vmand %vm354, %vm358
      %vm363 = vmand %vm359, %vm283
      %vm364 = vmand %vm360, %vm284
      %vm365 = vmand %vm361, %vm285
      %vm366 = vmand %vm362, %vm286
      %vm367 = vmand %vm363, %vm291
      %vm368 = vmand %vm364, %vm292
      %vm369 = vmand %vm365, %vm293
      %vm370 = vmand %vm366, %vm294
      %v371 = vsel %vm367, 1.0, 0.0
      %v372 = vsel %vm368, 1.0, 0.0
      %v373 = vsel %vm369, 1.0, 0.0
      %v374 = vsel %vm370, 1.0, 0.0
      %vm375 = vmand %vm359, %vm303
      %vm376 = vmand %vm360, %vm304
      %vm377 = vmand %vm361, %vm305
      %vm378 = vmand %vm362, %vm306
      %vm379 = vmand %vm375, %vm311
      %vm380 = vmand %vm376, %vm312
      %vm381 = vmand %vm377, %vm313
      %vm382 = vmand %vm378, %vm314
      %v383 = vsel %vm379, 1.0, 0.0
      %v384 = vsel %vm380, 1.0, 0.0
      %v385 = vsel %vm381, 1.0, 0.0
      %v386 = vsel %vm382, 1.0, 0.0
      %vm387 = vmand %vm359, %vm327
      %vm388 = vmand %vm360, %vm328
      %vm389 = vmand %vm361, %vm329
      %vm390 = vmand %vm362, %vm330
      %vm391 = vmand %vm387, %vm335
      %vm392 = vmand %vm388, %vm336
      %vm393 = vmand %vm389, %vm337
      %vm394 = vmand %vm390, %vm338
      %v395 = vsel %vm391, 1.0, 0.0
      %v396 = vsel %vm392, 1.0, 0.0
      %v397 = vsel %vm393, 1.0, 0.0
      %v398 = vsel %vm394, 1.0, 0.0
      %v399 = vadd.s32 %v235, 1
      %v400 = vadd.s32 %v236, 1
      %v401 = vadd.s32 %v237, 1
      %v402 = vadd.s32 %v238, 1
      %vm403 = vcmp.ge.s32.totalorder %v399, 0
      %vm404 = vcmp.ge.s32.totalorder %v400, 0
      %vm405 = vcmp.ge.s32.totalorder %v401, 0
      %vm406 = vcmp.ge.s32.totalorder %v402, 0
      %vm407 = vmand %vm255, %vm403
      %vm408 = vmand %vm256, %vm404
      %vm409 = vmand %vm257, %vm405
      %vm410 = vmand %vm258, %vm406
      %vm411 = vcmp.lt.s32.totalorder %v399, 8
      %vm412 = vcmp.lt.s32.totalorder %v400, 8
      %vm413 = vcmp.lt.s32.totalorder %v401, 8
      %vm414 = vcmp.lt.s32.totalorder %v402, 8
      %vm415 = vmand %vm407, %vm411
      %vm416 = vmand %vm408, %vm412
      %vm417 = vmand %vm409, %vm413
      %vm418 = vmand %vm410, %vm414
      %vm419 = vmand %vm415, %vm283
      %vm420 = vmand %vm416, %vm284
      %vm421 = vmand %vm417, %vm285
      %vm422 = vmand %vm418, %vm286
      %vm423 = vmand %vm419, %vm291
      %vm424 = vmand %vm420, %vm292
      %vm425 = vmand %vm421, %vm293
      %vm426 = vmand %vm422, %vm294
      %v427 = vsel %vm423, 1.0, 0.0
      %v428 = vsel %vm424, 1.0, 0.0
      %v429 = vsel %vm425, 1.0, 0.0
      %v430 = vsel %vm426, 1.0, 0.0
      %vm431 = vmand %vm415, %vm303
      %vm432 = vmand %vm416, %vm304
      %vm433 = vmand %vm417, %vm305
      %vm434 = vmand %vm418, %vm306
      %vm435 = vmand %vm431, %vm311
      %vm436 = vmand %vm432, %vm312
      %vm437 = vmand %vm433, %vm313
      %vm438 = vmand %vm434, %vm314
      %v439 = vsel %vm435, 1.0, 0.0
      %v440 = vsel %vm436, 1.0, 0.0
      %v441 = vsel %vm437, 1.0, 0.0
      %v442 = vsel %vm438, 1.0, 0.0
      %vm443 = vmand %vm415, %vm327
      %vm444 = vmand %vm416, %vm328
      %vm445 = vmand %vm417, %vm329
      %vm446 = vmand %vm418, %vm330
      %vm447 = vmand %vm443, %vm335
      %vm448 = vmand %vm444, %vm336
      %vm449 = vmand %vm445, %vm337
      %vm450 = vmand %vm446, %vm338
      %v451 = vsel %vm447, 1.0, 0.0
      %v452 = vsel %vm448, 1.0, 0.0
      %v453 = vsel %vm449, 1.0, 0.0
      %v454 = vsel %vm450, 1.0, 0.0
      %vm455 = vcmp.ge.s32.totalorder %v227, 0
      %vm456 = vcmp.ge.s32.totalorder %v228, 0
      %vm457 = vcmp.ge.s32.totalorder %v229, 0
      %vm458 = vcmp.ge.s32.totalorder %v230, 0
      %vm459 = vcmp.lt.s32.totalorder %v227, 8
      %vm460 = vcmp.lt.s32.totalorder %v228, 8
      %vm461 = vcmp.lt.s32.totalorder %v229, 8
      %vm462 = vcmp.lt.s32.totalorder %v230, 8
      %vm463 = vmand %vm455, %vm459
      %vm464 = vmand %vm456, %vm460
      %vm465 = vmand %vm457, %vm461
      %vm466 = vmand %vm458, %vm462
      %vm467 = vmand %vm463, %vm263
      %vm468 = vmand %vm464, %vm264
      %vm469 = vmand %vm465, %vm265
      %vm470 = vmand %vm466, %vm266
      %vm471 = vmand %vm467, %vm271
      %vm472 = vmand %vm468, %vm272
      %vm473 = vmand %vm469, %vm273
      %vm474 = vmand %vm470, %vm274
      %vm475 = vmand %vm471, %vm283
      %vm476 = vmand %vm472, %vm284
      %vm477 = vmand %vm473, %vm285
      %vm478 = vmand %vm474, %vm286
      %vm479 = vmand %vm475, %vm291
      %vm480 = vmand %vm476, %vm292
      %vm481 = vmand %vm477, %vm293
      %vm482 = vmand %vm478, %vm294
      %v483 = vsel %vm479, 1.0, 0.0
      %v484 = vsel %vm480, 1.0, 0.0
      %v485 = vsel %vm481, 1.0, 0.0
      %v486 = vsel %vm482, 1.0, 0.0
      %vm487 = vmand %vm471, %vm303
      %vm488 = vmand %vm472, %vm304
      %vm489 = vmand %vm473, %vm305
      %vm490 = vmand %vm474, %vm306
      %vm491 = vmand %vm487, %vm311
      %vm492 = vmand %vm488, %vm312
      %vm493 = vmand %vm489, %vm313
      %vm494 = vmand %vm490, %vm314
      %v495 = vsel %vm491, 1.0, 0.0
      %v496 = vsel %vm492, 1.0, 0.0
      %v497 = vsel %vm493, 1.0, 0.0
      %v498 = vsel %vm494, 1.0, 0.0
      %vm499 = vmand %vm471, %vm327
      %vm500 = vmand %vm472, %vm328
      %vm501 = vmand %vm473, %vm329
      %vm502 = vmand %vm474, %vm330
      %vm503 = vmand %vm499, %vm335
      %vm504 = vmand %vm500, %vm336
      %vm505 = vmand %vm501, %vm337
      %vm506 = vmand %vm502, %vm338
      %v507 = vsel %vm503, 1.0, 0.0
      %v508 = vsel %vm504, 1.0, 0.0
      %v509 = vsel %vm505, 1.0, 0.0
      %v510 = vsel %vm506, 1.0, 0.0
      %vm511 = vmand %vm463, %vm347
      %vm512 = vmand %vm464, %vm348
      %vm513 = vmand %vm465, %vm349
      %vm514 = vmand %vm466, %vm350
      %vm515 = vmand %vm511, %vm355
      %vm516 = vmand %vm512, %vm356
      %vm517 = vmand %vm513, %vm357
      %vm518 = vmand %vm514, %vm358
      %vm519 = vmand %vm515, %vm283
      %vm520 = vmand %vm516, %vm284
      %vm521 = vmand %vm517, %vm285
      %vm522 = vmand %vm518, %vm286
      %vm523 = vmand %vm519, %vm291
      %vm524 = vmand %vm520, %vm292
      %vm525 = vmand %vm521, %vm293
      %vm526 = vmand %vm522, %vm294
      %v527 = vsel %vm523, 1.0, 0.0
      %v528 = vsel %vm524, 1.0, 0.0
      %v529 = vsel %vm525, 1.0, 0.0
      %v530 = vsel %vm526, 1.0, 0.0
      %vm531 = vmand %vm515, %vm303
      %vm532 = vmand %vm516, %vm304
      %vm533 = vmand %vm517, %vm305
      %vm534 = vmand %vm518, %vm306
      %vm535 = vmand %vm531, %vm311
      %vm536 = vmand %vm532, %vm312
      %vm537 = vmand %vm533, %vm313
      %vm538 = vmand %vm534, %vm314
      %v539 = vsel %vm535, 1.0, 0.0
      %v540 = vsel %vm536, 1.0, 0.0
      %v541 = vsel %vm537, 1.0, 0.0
      %v542 = vsel %vm538, 1.0, 0.0
      %vm543 = vmand %vm515, %vm327
      %vm544 = vmand %vm516, %vm328
      %vm545 = vmand %vm517, %vm329
      %vm546 = vmand %vm518, %vm330
      %vm547 = vmand %vm543, %vm335
      %vm548 = vmand %vm544, %vm336
      %vm549 = vmand %vm545, %vm337
      %vm550 = vmand %vm546, %vm338
      %v551 = vsel %vm547, 1.0, 0.0
      %v552 = vsel %vm548, 1.0, 0.0
      %v553 = vsel %vm549, 1.0, 0.0
      %v554 = vsel %vm550, 1.0, 0.0
      %vm555 = vmand %vm463, %vm403
      %vm556 = vmand %vm464, %vm404
      %vm557 = vmand %vm465, %vm405
      %vm558 = vmand %vm466, %vm406
      %vm559 = vmand %vm555, %vm411
      %vm560 = vmand %vm556, %vm412
      %vm561 = vmand %vm557, %vm413
      %vm562 = vmand %vm558, %vm414
      %vm563 = vmand %vm559, %vm283
      %vm564 = vmand %vm560, %vm284
      %vm565 = vmand %vm561, %vm285
      %vm566 = vmand %vm562, %vm286
      %vm567 = vmand %vm563, %vm291
      %vm568 = vmand %vm564, %vm292
      %vm569 = vmand %vm565, %vm293
      %vm570 = vmand %vm566, %vm294
      %v571 = vsel %vm567, 1.0, 0.0
      %v572 = vsel %vm568, 1.0, 0.0
      %v573 = vsel %vm569, 1.0, 0.0
      %v574 = vsel %vm570, 1.0, 0.0
      %vm575 = vmand %vm559, %vm303
      %vm576 = vmand %vm560, %vm304
      %vm577 = vmand %vm561, %vm305
      %vm578 = vmand %vm562, %vm306
      %vm579 = vmand %vm575, %vm311
      %vm580 = vmand %vm576, %vm312
      %vm581 = vmand %vm577, %vm313
      %vm582 = vmand %vm578, %vm314
      %v583 = vsel %vm579, 1.0, 0.0
      %v584 = vsel %vm580, 1.0, 0.0
      %v585 = vsel %vm581, 1.0, 0.0
      %v586 = vsel %vm582, 1.0, 0.0
      %vm587 = vmand %vm559, %vm327
      %vm588 = vmand %vm560, %vm328
      %vm589 = vmand %vm561, %vm329
      %vm590 = vmand %vm562, %vm330
      %vm591 = vmand %vm587, %vm335
      %vm592 = vmand %vm588, %vm336
      %vm593 = vmand %vm589, %vm337
      %vm594 = vmand %vm590, %vm338
      %v595 = vsel %vm591, 1.0, 0.0
      %v596 = vsel %vm592, 1.0, 0.0
      %v597 = vsel %vm593, 1.0, 0.0
      %v598 = vsel %vm594, 1.0, 0.0
      %v599 = vadd.s32 %v227, 1
      %v600 = vadd.s32 %v228, 1
      %v601 = vadd.s32 %v229, 1
      %v602 = vadd.s32 %v230, 1
      %vm603 = vcmp.ge.s32.totalorder %v599, 0
      %vm604 = vcmp.ge.s32.totalorder %v600, 0
      %vm605 = vcmp.ge.s32.totalorder %v601, 0
      %vm606 = vcmp.ge.s32.totalorder %v602, 0
      %vm607 = vcmp.lt.s32.totalorder %v599, 8
      %vm608 = vcmp.lt.s32.totalorder %v600, 8
      %vm609 = vcmp.lt.s32.totalorder %v601, 8
      %vm610 = vcmp.lt.s32.totalorder %v602, 8
      %vm611 = vmand %vm603, %vm607
      %vm612 = vmand %vm604, %vm608
      %vm613 = vmand %vm605, %vm609
      %vm614 = vmand %vm606, %vm610
      %vm615 = vmand %vm611, %vm263
      %vm616 = vmand %vm612, %vm264
      %vm617 = vmand %vm613, %vm265
      %vm618 = vmand %vm614, %vm266
      %vm619 = vmand %vm615, %vm271
      %vm620 = vmand %vm616, %vm272
      %vm621 = vmand %vm617, %vm273
      %vm622 = vmand %vm618, %vm274
      %vm623 = vmand %vm619, %vm283
      %vm624 = vmand %vm620, %vm284
      %vm625 = vmand %vm621, %vm285
      %vm626 = vmand %vm622, %vm286
      %vm627 = vmand %vm623, %vm291
      %vm628 = vmand %vm624, %vm292
      %vm629 = vmand %vm625, %vm293
      %vm630 = vmand %vm626, %vm294
      %v631 = vsel %vm627, 1.0, 0.0
      %v632 = vsel %vm628, 1.0, 0.0
      %v633 = vsel %vm629, 1.0, 0.0
      %v634 = vsel %vm630, 1.0, 0.0
      %vm635 = vmand %vm619, %vm303
      %vm636 = vmand %vm620, %vm304
      %vm637 = vmand %vm621, %vm305
      %vm638 = vmand %vm622, %vm306
      %vm639 = vmand %vm635, %vm311
      %vm640 = vmand %vm636, %vm312
      %vm641 = vmand %vm637, %vm313
      %vm642 = vmand %vm638, %vm314
      %v643 = vsel %vm639, 1.0, 0.0
      %v644 = vsel %vm640, 1.0, 0.0
      %v645 = vsel %vm641, 1.0, 0.0
      %v646 = vsel %vm642, 1.0, 0.0
      %vm647 = vmand %vm619, %vm327
      %vm648 = vmand %vm620, %vm328
      %vm649 = vmand %vm621, %vm329
      %vm650 = vmand %vm622, %vm330
      %vm651 = vmand %vm647, %vm335
      %vm652 = vmand %vm648, %vm336
      %vm653 = vmand %vm649, %vm337
      %vm654 = vmand %vm650, %vm338
      %v655 = vsel %vm651, 1.0, 0.0
      %v656 = vsel %vm652, 1.0, 0.0
      %v657 = vsel %vm653, 1.0, 0.0
      %v658 = vsel %vm654, 1.0, 0.0
      %vm659 = vmand %vm611, %vm347
      %vm660 = vmand %vm612, %vm348
      %vm661 = vmand %vm613, %vm349
      %vm662 = vmand %vm614, %vm350
      %vm663 = vmand %vm659, %vm355
      %vm664 = vmand %vm660, %vm356
      %vm665 = vmand %vm661, %vm357
      %vm666 = vmand %vm662, %vm358
      %vm667 = vmand %vm663, %vm283
      %vm668 = vmand %vm664, %vm284
      %vm669 = vmand %vm665, %vm285
      %vm670 = vmand %vm666, %vm286
      %vm671 = vmand %vm667, %vm291
      %vm672 = vmand %vm668, %vm292
      %vm673 = vmand %vm669, %vm293
      %vm674 = vmand %vm670, %vm294
      %v675 = vsel %vm671, 1.0, 0.0
      %v676 = vsel %vm672, 1.0, 0.0
      %v677 = vsel %vm673, 1.0, 0.0
      %v678 = vsel %vm674, 1.0, 0.0
      %vm679 = vmand %vm663, %vm303
      %vm680 = vmand %vm664, %vm304
      %vm681 = vmand %vm665, %vm305
      %vm682 = vmand %vm666, %vm306
      %vm683 = vmand %vm679, %vm311
      %vm684 = vmand %vm680, %vm312
      %vm685 = vmand %vm681, %vm313
      %vm686 = vmand %vm682, %vm314
      %v687 = vsel %vm683, 1.0, 0.0
      %v688 = vsel %vm684, 1.0, 0.0
      %v689 = vsel %vm685, 1.0, 0.0
      %v690 = vsel %vm686, 1.0, 0.0
      %vm691 = vmand %vm663, %vm327
      %vm692 = vmand %vm664, %vm328
      %vm693 = vmand %vm665, %vm329
      %vm694 = vmand %vm666, %vm330
      %vm695 = vmand %vm691, %vm335
      %vm696 = vmand %vm692, %vm336
      %vm697 = vmand %vm693, %vm337
      %vm698 = vmand %vm694, %vm338
      %v699 = vsel %vm695, 1.0, 0.0
      %v700 = vsel %vm696, 1.0, 0.0
      %v701 = vsel %vm697, 1.0, 0.0
      %v702 = vsel %vm698, 1.0, 0.0
      %vm703 = vmand %vm611, %vm403
      %vm704 = vmand %vm612, %vm404
      %vm705 = vmand %vm613, %vm405
      %vm706 = vmand %vm614, %vm406
      %vm707 = vmand %vm703, %vm411
      %vm708 = vmand %vm704, %vm412
      %vm709 = vmand %vm705, %vm413
      %vm710 = vmand %vm706, %vm414
      %vm711 = vmand %vm707, %vm283
      %vm712 = vmand %vm708, %vm284
      %vm713 = vmand %vm709, %vm285
      %vm714 = vmand %vm710, %vm286
      %vm715 = vmand %vm711, %vm291
      %vm716 = vmand %vm712, %vm292
      %vm717 = vmand %vm713, %vm293
      %vm718 = vmand %vm714, %vm294
      %v719 = vsel %vm715, 1.0, 0.0
      %v720 = vsel %vm716, 1.0, 0.0
      %v721 = vsel %vm717, 1.0, 0.0
      %v722 = vsel %vm718, 1.0, 0.0
      %vm723 = vmand %vm707, %vm303
      %vm724 = vmand %vm708, %vm304
      %vm725 = vmand %vm709, %vm305
      %vm726 = vmand %vm710, %vm306
      %vm727 = vmand %vm723, %vm311
      %vm728 = vmand %vm724, %vm312
      %vm729 = vmand %vm725, %vm313
      %vm730 = vmand %vm726, %vm314
      %v731 = vsel %vm727, 1.0, 0.0
      %v732 = vsel %vm728, 1.0, 0.0
      %v733 = vsel %vm729, 1.0, 0.0
      %v734 = vsel %vm730, 1.0, 0.0
      %vm735 = vmand %vm707, %vm327
      %vm736 = vmand %vm708, %vm328
      %vm737 = vmand %vm709, %vm329
      %vm738 = vmand %vm710, %vm330
      %vm739 = vmand %vm735, %vm335
      %vm740 = vmand %vm736, %vm336
      %vm741 = vmand %vm737, %vm337
      %vm742 = vmand %vm738, %vm338
      %v743 = vsel %vm739, 1.0, 0.0
      %v744 = vsel %vm740, 1.0, 0.0
      %v745 = vsel %vm741, 1.0, 0.0
      %v746 = vsel %vm742, 1.0, 0.0
      %v747 = vld [vmem:[%s217] sm:$0xf]
      %v748 = vld [vmem:[%s1] sm:$0xff]
      %v749 = vld [vmem:[%s1 + $0x8] sm:$0xff]
      %v750 = vld [vmem:[%s1 + $0x10] sm:$0xff]
      %v751 = vld [vmem:[%s1 + $0x18] sm:$0xff]
      %v753 = vlaneseq
      %v754 = vshrl.u32 %v753, 7
      %v755 = vsub.s32 0, %v754
      %v756 = vrot.slane %v747, %v755
      %v757 = vlaneseq
      %v758 = vshrl.u32 %v757, 7
      %v759 = vsub.s32 1, %v758
      %v760 = vrot.slane %v747, %v759
      %v761 = vlaneseq
      %v762 = vshrl.u32 %v761, 7
      %v763 = vsub.s32 2, %v762
      %v764 = vrot.slane %v747, %v763
      %v765 = vlaneseq
      %v766 = vshrl.u32 %v765, 7
      %v767 = vsub.s32 3, %v766
      %v768 = vrot.slane %v747, %v767
      %769 = vrot.lane.b32.xlu0 %v756, 73
      %v770 = vpop.permute.xlu0 %769
      %771 = vrot.lane.b32.xlu0 %v760, 73
      %v772 = vpop.permute.xlu0 %771
      %773 = vrot.lane.b32.xlu0 %v764, 73
      %v774 = vpop.permute.xlu0 %773
      %775 = vrot.lane.b32.xlu0 %v768, 73
      %v776 = vpop.permute.xlu0 %775
      %vm777 = vcmask 596992
      %v778 = vsel %vm777, %v770, %v772
      %v779 = vsel %vm777, %v772, %v774
      %v780 = vsel %vm777, %v774, %v776
      %v785 = vsel %vm777, 0.0, %v770
      %v786 = vmul.f32 %v299, %v785
      %v787 = vmul.f32 %v300, %v778
      %v788 = vmul.f32 %v301, %v779
      %v789 = vmul.f32 %v302, %v780
      %791 = vset.pattern.permute.xlu0 0
      %792 = vperm.xlu0 %791, %v748
      %v793 = vpop.permute.xlu0 %792
      %796 = vset.pattern.permute.xlu0 0
      %797 = vperm.xlu0 %796, %v749
      %v798 = vpop.permute.xlu0 %797
      %801 = vset.pattern.permute.xlu0 0
      %802 = vperm.xlu0 %801, %v750
      %v803 = vpop.permute.xlu0 %802
      %806 = vset.pattern.permute.xlu0 0
      %807 = vperm.xlu0 %806, %v751
      %v808 = vpop.permute.xlu0 %807
      %v810 = vlaneseq
      %v811 = vshrl.u32 %v810, 7
      %v812 = vsub.s32 0, %v811
      %v813 = vrot.slane %v786, %v812
      %v814 = vlaneseq
      %v815 = vshrl.u32 %v814, 7
      %v816 = vsub.s32 0, %v815
      %v817 = vrot.slane %v787, %v816
      %v818 = vlaneseq
      %v819 = vshrl.u32 %v818, 7
      %v820 = vsub.s32 0, %v819
      %v821 = vrot.slane %v788, %v820
      %v822 = vlaneseq
      %v823 = vshrl.u32 %v822, 7
      %v824 = vsub.s32 0, %v823
      %v825 = vrot.slane %v789, %v824
      %v826 = vmul.f32 %v793, %v813
      %v827 = vmul.f32 %v793, %v817
      %v828 = vmul.f32 %v793, %v821
      %v829 = vmul.f32 %v793, %v825
      %v830 = vmul.f32 %v798, %v813
      %v831 = vmul.f32 %v798, %v817
      %v832 = vmul.f32 %v798, %v821
      %v833 = vmul.f32 %v798, %v825
      %v834 = vmul.f32 %v803, %v813
      %v835 = vmul.f32 %v803, %v817
      %v836 = vmul.f32 %v803, %v821
      %v837 = vmul.f32 %v803, %v825
      %v838 = vmul.f32 %v808, %v813
      %v839 = vmul.f32 %v808, %v817
      %v840 = vmul.f32 %v808, %v821
      %v841 = vmul.f32 %v808, %v825
      %v842 = vadd.f32 %v826, 0.0
      %v843 = vadd.f32 %v827, 0.0
      %v844 = vadd.f32 %v828, 0.0
      %v845 = vadd.f32 %v829, 0.0
      %v846 = vadd.f32 %v830, 0.0
      %v847 = vadd.f32 %v831, 0.0
      %v848 = vadd.f32 %v832, 0.0
      %v849 = vadd.f32 %v833, 0.0
      %v850 = vadd.f32 %v834, 0.0
      %v851 = vadd.f32 %v835, 0.0
      %v852 = vadd.f32 %v836, 0.0
      %v853 = vadd.f32 %v837, 0.0
      %v854 = vadd.f32 %v838, 0.0
      %v855 = vadd.f32 %v839, 0.0
      %v856 = vadd.f32 %v840, 0.0
      %v857 = vadd.f32 %v841, 0.0
      %858 = vrot.lane.b32.xlu0 %v756, 72
      %v859 = vpop.permute.xlu0 %858
      %860 = vrot.lane.b32.xlu0 %v760, 72
      %v861 = vpop.permute.xlu0 %860
      %862 = vrot.lane.b32.xlu0 %v764, 72
      %v863 = vpop.permute.xlu0 %862
      %864 = vrot.lane.b32.xlu0 %v768, 72
      %v865 = vpop.permute.xlu0 %864
      %vm866 = vcmask 588800
      %v867 = vsel %vm866, %v859, %v861
      %v868 = vsel %vm866, %v861, %v863
      %v869 = vsel %vm866, %v863, %v865
      %v874 = vsel %vm866, 0.0, %v859
      %v875 = vmul.f32 %v319, %v874
      %v876 = vmul.f32 %v320, %v867
      %v877 = vmul.f32 %v321, %v868
      %v878 = vmul.f32 %v322, %v869
      %879 = vset.pattern.permute.xlu0 1
      %880 = vperm.xlu0 %879, %v748
      %v881 = vpop.permute.xlu0 %880
      %883 = vset.pattern.permute.xlu0 1
      %884 = vperm.xlu0 %883, %v749
      %v885 = vpop.permute.xlu0 %884
      %887 = vset.pattern.permute.xlu0 1
      %888 = vperm.xlu0 %887, %v750
      %v889 = vpop.permute.xlu0 %888
      %891 = vset.pattern.permute.xlu0 1
      %892 = vperm.xlu0 %891, %v751
      %v893 = vpop.permute.xlu0 %892
      %v895 = vlaneseq
      %v896 = vshrl.u32 %v895, 7
      %v897 = vsub.s32 0, %v896
      %v898 = vrot.slane %v875, %v897
      %v899 = vlaneseq
      %v900 = vshrl.u32 %v899, 7
      %v901 = vsub.s32 0, %v900
      %v902 = vrot.slane %v876, %v901
      %v903 = vlaneseq
      %v904 = vshrl.u32 %v903, 7
      %v905 = vsub.s32 0, %v904
      %v906 = vrot.slane %v877, %v905
      %v907 = vlaneseq
      %v908 = vshrl.u32 %v907, 7
      %v909 = vsub.s32 0, %v908
      %v910 = vrot.slane %v878, %v909
      %v911 = vmul.f32 %v881, %v898
      %v912 = vmul.f32 %v881, %v902
      %v913 = vmul.f32 %v881, %v906
      %v914 = vmul.f32 %v881, %v910
      %v915 = vmul.f32 %v885, %v898
      %v916 = vmul.f32 %v885, %v902
      %v917 = vmul.f32 %v885, %v906
      %v918 = vmul.f32 %v885, %v910
      %v919 = vmul.f32 %v889, %v898
      %v920 = vmul.f32 %v889, %v902
      %v921 = vmul.f32 %v889, %v906
      %v922 = vmul.f32 %v889, %v910
      %v923 = vmul.f32 %v893, %v898
      %v924 = vmul.f32 %v893, %v902
      %v925 = vmul.f32 %v893, %v906
      %v926 = vmul.f32 %v893, %v910
      %v927 = vadd.f32 %v842, %v911
      %v928 = vadd.f32 %v843, %v912
      %v929 = vadd.f32 %v844, %v913
      %v930 = vadd.f32 %v845, %v914
      %v931 = vadd.f32 %v846, %v915
      %v932 = vadd.f32 %v847, %v916
      %v933 = vadd.f32 %v848, %v917
      %v934 = vadd.f32 %v849, %v918
      %v935 = vadd.f32 %v850, %v919
      %v936 = vadd.f32 %v851, %v920
      %v937 = vadd.f32 %v852, %v921
      %v938 = vadd.f32 %v853, %v922
      %v939 = vadd.f32 %v854, %v923
      %v940 = vadd.f32 %v855, %v924
      %v941 = vadd.f32 %v856, %v925
      %v942 = vadd.f32 %v857, %v926
      %943 = vrot.lane.b32.xlu0 %v756, 71
      %v944 = vpop.permute.xlu0 %943
      %945 = vrot.lane.b32.xlu0 %v760, 71
      %v946 = vpop.permute.xlu0 %945
      %947 = vrot.lane.b32.xlu0 %v764, 71
      %v948 = vpop.permute.xlu0 %947
      %949 = vrot.lane.b32.xlu0 %v768, 71
      %v950 = vpop.permute.xlu0 %949
      %vm951 = vcmask 580608
      %v952 = vsel %vm951, %v944, %v946
      %v953 = vsel %vm951, %v946, %v948
      %v954 = vsel %vm951, %v948, %v950
      %v959 = vsel %vm951, 0.0, %v944
      %v960 = vmul.f32 %v343, %v959
      %v961 = vmul.f32 %v344, %v952
      %v962 = vmul.f32 %v345, %v953
      %v963 = vmul.f32 %v346, %v954
      %964 = vset.pattern.permute.xlu0 2
      %965 = vperm.xlu0 %964, %v748
      %v966 = vpop.permute.xlu0 %965
      %968 = vset.pattern.permute.xlu0 2
      %969 = vperm.xlu0 %968, %v749
      %v970 = vpop.permute.xlu0 %969
      %972 = vset.pattern.permute.xlu0 2
      %973 = vperm.xlu0 %972, %v750
      %v974 = vpop.permute.xlu0 %973
      %976 = vset.pattern.permute.xlu0 2
      %977 = vperm.xlu0 %976, %v751
      %v978 = vpop.permute.xlu0 %977
      %v980 = vlaneseq
      %v981 = vshrl.u32 %v980, 7
      %v982 = vsub.s32 0, %v981
      %v983 = vrot.slane %v960, %v982
      %v984 = vlaneseq
      %v985 = vshrl.u32 %v984, 7
      %v986 = vsub.s32 0, %v985
      %v987 = vrot.slane %v961, %v986
      %v988 = vlaneseq
      %v989 = vshrl.u32 %v988, 7
      %v990 = vsub.s32 0, %v989
      %v991 = vrot.slane %v962, %v990
      %v992 = vlaneseq
      %v993 = vshrl.u32 %v992, 7
      %v994 = vsub.s32 0, %v993
      %v995 = vrot.slane %v963, %v994
      %v996 = vmul.f32 %v966, %v983
      %v997 = vmul.f32 %v966, %v987
      %v998 = vmul.f32 %v966, %v991
      %v999 = vmul.f32 %v966, %v995
      %v1000 = vmul.f32 %v970, %v983
      %v1001 = vmul.f32 %v970, %v987
      %v1002 = vmul.f32 %v970, %v991
      %v1003 = vmul.f32 %v970, %v995
      %v1004 = vmul.f32 %v974, %v983
      %v1005 = vmul.f32 %v974, %v987
      %v1006 = vmul.f32 %v974, %v991
      %v1007 = vmul.f32 %v974, %v995
      %v1008 = vmul.f32 %v978, %v983
      %v1009 = vmul.f32 %v978, %v987
      %v1010 = vmul.f32 %v978, %v991
      %v1011 = vmul.f32 %v978, %v995
      %v1012 = vadd.f32 %v927, %v996
      %v1013 = vadd.f32 %v928, %v997
      %v1014 = vadd.f32 %v929, %v998
      %v1015 = vadd.f32 %v930, %v999
      %v1016 = vadd.f32 %v931, %v1000
      %v1017 = vadd.f32 %v932, %v1001
      %v1018 = vadd.f32 %v933, %v1002
      %v1019 = vadd.f32 %v934, %v1003
      %v1020 = vadd.f32 %v935, %v1004
      %v1021 = vadd.f32 %v936, %v1005
      %v1022 = vadd.f32 %v937, %v1006
      %v1023 = vadd.f32 %v938, %v1007
      %v1024 = vadd.f32 %v939, %v1008
      %v1025 = vadd.f32 %v940, %v1009
      %v1026 = vadd.f32 %v941, %v1010
      %v1027 = vadd.f32 %v942, %v1011
      %1028 = vrot.lane.b32.xlu0 %v756, 65
      %v1029 = vpop.permute.xlu0 %1028
      %1030 = vrot.lane.b32.xlu0 %v760, 65
      %v1031 = vpop.permute.xlu0 %1030
      %1032 = vrot.lane.b32.xlu0 %v764, 65
      %v1033 = vpop.permute.xlu0 %1032
      %1034 = vrot.lane.b32.xlu0 %v768, 65
      %v1035 = vpop.permute.xlu0 %1034
      %vm1036 = vcmask 531456
      %v1037 = vsel %vm1036, %v1029, %v1031
      %v1038 = vsel %vm1036, %v1031, %v1033
      %v1039 = vsel %vm1036, %v1033, %v1035
      %v1044 = vsel %vm1036, 0.0, %v1029
      %v1045 = vmul.f32 %v371, %v1044
      %v1046 = vmul.f32 %v372, %v1037
      %v1047 = vmul.f32 %v373, %v1038
      %v1048 = vmul.f32 %v374, %v1039
      %1049 = vset.pattern.permute.xlu0 3
      %1050 = vperm.xlu0 %1049, %v748
      %v1051 = vpop.permute.xlu0 %1050
      %1053 = vset.pattern.permute.xlu0 3
      %1054 = vperm.xlu0 %1053, %v749
      %v1055 = vpop.permute.xlu0 %1054
      %1057 = vset.pattern.permute.xlu0 3
      %1058 = vperm.xlu0 %1057, %v750
      %v1059 = vpop.permute.xlu0 %1058
      %1061 = vset.pattern.permute.xlu0 3
      %1062 = vperm.xlu0 %1061, %v751
      %v1063 = vpop.permute.xlu0 %1062
      %v1065 = vlaneseq
      %v1066 = vshrl.u32 %v1065, 7
      %v1067 = vsub.s32 0, %v1066
      %v1068 = vrot.slane %v1045, %v1067
      %v1069 = vlaneseq
      %v1070 = vshrl.u32 %v1069, 7
      %v1071 = vsub.s32 0, %v1070
      %v1072 = vrot.slane %v1046, %v1071
      %v1073 = vlaneseq
      %v1074 = vshrl.u32 %v1073, 7
      %v1075 = vsub.s32 0, %v1074
      %v1076 = vrot.slane %v1047, %v1075
      %v1077 = vlaneseq
      %v1078 = vshrl.u32 %v1077, 7
      %v1079 = vsub.s32 0, %v1078
      %v1080 = vrot.slane %v1048, %v1079
      %v1081 = vmul.f32 %v1051, %v1068
      %v1082 = vmul.f32 %v1051, %v1072
      %v1083 = vmul.f32 %v1051, %v1076
      %v1084 = vmul.f32 %v1051, %v1080
      %v1085 = vmul.f32 %v1055, %v1068
      %v1086 = vmul.f32 %v1055, %v1072
      %v1087 = vmul.f32 %v1055, %v1076
      %v1088 = vmul.f32 %v1055, %v1080
      %v1089 = vmul.f32 %v1059, %v1068
      %v1090 = vmul.f32 %v1059, %v1072
      %v1091 = vmul.f32 %v1059, %v1076
      %v1092 = vmul.f32 %v1059, %v1080
      %v1093 = vmul.f32 %v1063, %v1068
      %v1094 = vmul.f32 %v1063, %v1072
      %v1095 = vmul.f32 %v1063, %v1076
      %v1096 = vmul.f32 %v1063, %v1080
      %v1097 = vadd.f32 %v1012, %v1081
      %v1098 = vadd.f32 %v1013, %v1082
      %v1099 = vadd.f32 %v1014, %v1083
      %v1100 = vadd.f32 %v1015, %v1084
      %v1101 = vadd.f32 %v1016, %v1085
      %v1102 = vadd.f32 %v1017, %v1086
      %v1103 = vadd.f32 %v1018, %v1087
      %v1104 = vadd.f32 %v1019, %v1088
      %v1105 = vadd.f32 %v1020, %v1089
      %v1106 = vadd.f32 %v1021, %v1090
      %v1107 = vadd.f32 %v1022, %v1091
      %v1108 = vadd.f32 %v1023, %v1092
      %v1109 = vadd.f32 %v1024, %v1093
      %v1110 = vadd.f32 %v1025, %v1094
      %v1111 = vadd.f32 %v1026, %v1095
      %v1112 = vadd.f32 %v1027, %v1096
      %1113 = vrot.lane.b32.xlu0 %v756, 64
      %v1114 = vpop.permute.xlu0 %1113
      %1115 = vrot.lane.b32.xlu0 %v760, 64
      %v1116 = vpop.permute.xlu0 %1115
      %1117 = vrot.lane.b32.xlu0 %v764, 64
      %v1118 = vpop.permute.xlu0 %1117
      %1119 = vrot.lane.b32.xlu0 %v768, 64
      %v1120 = vpop.permute.xlu0 %1119
      %vm1121 = vcmask 523264
      %v1122 = vsel %vm1121, %v1114, %v1116
      %v1123 = vsel %vm1121, %v1116, %v1118
      %v1124 = vsel %vm1121, %v1118, %v1120
      %v1129 = vsel %vm1121, 0.0, %v1114
      %v1130 = vmul.f32 %v383, %v1129
      %v1131 = vmul.f32 %v384, %v1122
      %v1132 = vmul.f32 %v385, %v1123
      %v1133 = vmul.f32 %v386, %v1124
      %1134 = vset.pattern.permute.xlu0 4
      %1135 = vperm.xlu0 %1134, %v748
      %v1136 = vpop.permute.xlu0 %1135
      %1138 = vset.pattern.permute.xlu0 4
      %1139 = vperm.xlu0 %1138, %v749
      %v1140 = vpop.permute.xlu0 %1139
      %1142 = vset.pattern.permute.xlu0 4
      %1143 = vperm.xlu0 %1142, %v750
      %v1144 = vpop.permute.xlu0 %1143
      %1146 = vset.pattern.permute.xlu0 4
      %1147 = vperm.xlu0 %1146, %v751
      %v1148 = vpop.permute.xlu0 %1147
      %v1150 = vlaneseq
      %v1151 = vshrl.u32 %v1150, 7
      %v1152 = vsub.s32 0, %v1151
      %v1153 = vrot.slane %v1130, %v1152
      %v1154 = vlaneseq
      %v1155 = vshrl.u32 %v1154, 7
      %v1156 = vsub.s32 0, %v1155
      %v1157 = vrot.slane %v1131, %v1156
      %v1158 = vlaneseq
      %v1159 = vshrl.u32 %v1158, 7
      %v1160 = vsub.s32 0, %v1159
      %v1161 = vrot.slane %v1132, %v1160
      %v1162 = vlaneseq
      %v1163 = vshrl.u32 %v1162, 7
      %v1164 = vsub.s32 0, %v1163
      %v1165 = vrot.slane %v1133, %v1164
      %v1166 = vmul.f32 %v1136, %v1153
      %v1167 = vmul.f32 %v1136, %v1157
      %v1168 = vmul.f32 %v1136, %v1161
      %v1169 = vmul.f32 %v1136, %v1165
      %v1170 = vmul.f32 %v1140, %v1153
      %v1171 = vmul.f32 %v1140, %v1157
      %v1172 = vmul.f32 %v1140, %v1161
      %v1173 = vmul.f32 %v1140, %v1165
      %v1174 = vmul.f32 %v1144, %v1153
      %v1175 = vmul.f32 %v1144, %v1157
      %v1176 = vmul.f32 %v1144, %v1161
      %v1177 = vmul.f32 %v1144, %v1165
      %v1178 = vmul.f32 %v1148, %v1153
      %v1179 = vmul.f32 %v1148, %v1157
      %v1180 = vmul.f32 %v1148, %v1161
      %v1181 = vmul.f32 %v1148, %v1165
      %v1182 = vadd.f32 %v1097, %v1166
      %v1183 = vadd.f32 %v1098, %v1167
      %v1184 = vadd.f32 %v1099, %v1168
      %v1185 = vadd.f32 %v1100, %v1169
      %v1186 = vadd.f32 %v1101, %v1170
      %v1187 = vadd.f32 %v1102, %v1171
      %v1188 = vadd.f32 %v1103, %v1172
      %v1189 = vadd.f32 %v1104, %v1173
      %v1190 = vadd.f32 %v1105, %v1174
      %v1191 = vadd.f32 %v1106, %v1175
      %v1192 = vadd.f32 %v1107, %v1176
      %v1193 = vadd.f32 %v1108, %v1177
      %v1194 = vadd.f32 %v1109, %v1178
      %v1195 = vadd.f32 %v1110, %v1179
      %v1196 = vadd.f32 %v1111, %v1180
      %v1197 = vadd.f32 %v1112, %v1181
      %1198 = vrot.lane.b32.xlu0 %v756, 63
      %v1199 = vpop.permute.xlu0 %1198
      %1200 = vrot.lane.b32.xlu0 %v760, 63
      %v1201 = vpop.permute.xlu0 %1200
      %1202 = vrot.lane.b32.xlu0 %v764, 63
      %v1203 = vpop.permute.xlu0 %1202
      %1204 = vrot.lane.b32.xlu0 %v768, 63
      %v1205 = vpop.permute.xlu0 %1204
      %vm1206 = vcmask 515072
      %v1207 = vsel %vm1206, %v1199, %v1201
      %v1208 = vsel %vm1206, %v1201, %v1203
      %v1209 = vsel %vm1206, %v1203, %v1205
      %v1214 = vsel %vm1206, 0.0, %v1199
      %v1215 = vmul.f32 %v395, %v1214
      %v1216 = vmul.f32 %v396, %v1207
      %v1217 = vmul.f32 %v397, %v1208
      %v1218 = vmul.f32 %v398, %v1209
      %1219 = vset.pattern.permute.xlu0 5
      %1220 = vperm.xlu0 %1219, %v748
      %v1221 = vpop.permute.xlu0 %1220
      %1223 = vset.pattern.permute.xlu0 5
      %1224 = vperm.xlu0 %1223, %v749
      %v1225 = vpop.permute.xlu0 %1224
      %1227 = vset.pattern.permute.xlu0 5
      %1228 = vperm.xlu0 %1227, %v750
      %v1229 = vpop.permute.xlu0 %1228
      %1231 = vset.pattern.permute.xlu0 5
      %1232 = vperm.xlu0 %1231, %v751
      %v1233 = vpop.permute.xlu0 %1232
      %v1235 = vlaneseq
      %v1236 = vshrl.u32 %v1235, 7
      %v1237 = vsub.s32 0, %v1236
      %v1238 = vrot.slane %v1215, %v1237
      %v1239 = vlaneseq
      %v1240 = vshrl.u32 %v1239, 7
      %v1241 = vsub.s32 0, %v1240
      %v1242 = vrot.slane %v1216, %v1241
      %v1243 = vlaneseq
      %v1244 = vshrl.u32 %v1243, 7
      %v1245 = vsub.s32 0, %v1244
      %v1246 = vrot.slane %v1217, %v1245
      %v1247 = vlaneseq
      %v1248 = vshrl.u32 %v1247, 7
      %v1249 = vsub.s32 0, %v1248
      %v1250 = vrot.slane %v1218, %v1249
      %v1251 = vmul.f32 %v1221, %v1238
      %v1252 = vmul.f32 %v1221, %v1242
      %v1253 = vmul.f32 %v1221, %v1246
      %v1254 = vmul.f32 %v1221, %v1250
      %v1255 = vmul.f32 %v1225, %v1238
      %v1256 = vmul.f32 %v1225, %v1242
      %v1257 = vmul.f32 %v1225, %v1246
      %v1258 = vmul.f32 %v1225, %v1250
      %v1259 = vmul.f32 %v1229, %v1238
      %v1260 = vmul.f32 %v1229, %v1242
      %v1261 = vmul.f32 %v1229, %v1246
      %v1262 = vmul.f32 %v1229, %v1250
      %v1263 = vmul.f32 %v1233, %v1238
      %v1264 = vmul.f32 %v1233, %v1242
      %v1265 = vmul.f32 %v1233, %v1246
      %v1266 = vmul.f32 %v1233, %v1250
      %v1267 = vadd.f32 %v1182, %v1251
      %v1268 = vadd.f32 %v1183, %v1252
      %v1269 = vadd.f32 %v1184, %v1253
      %v1270 = vadd.f32 %v1185, %v1254
      %v1271 = vadd.f32 %v1186, %v1255
      %v1272 = vadd.f32 %v1187, %v1256
      %v1273 = vadd.f32 %v1188, %v1257
      %v1274 = vadd.f32 %v1189, %v1258
      %v1275 = vadd.f32 %v1190, %v1259
      %v1276 = vadd.f32 %v1191, %v1260
      %v1277 = vadd.f32 %v1192, %v1261
      %v1278 = vadd.f32 %v1193, %v1262
      %v1279 = vadd.f32 %v1194, %v1263
      %v1280 = vadd.f32 %v1195, %v1264
      %v1281 = vadd.f32 %v1196, %v1265
      %v1282 = vadd.f32 %v1197, %v1266
      %1283 = vrot.lane.b32.xlu0 %v756, 57
      %v1284 = vpop.permute.xlu0 %1283
      %1285 = vrot.lane.b32.xlu0 %v760, 57
      %v1286 = vpop.permute.xlu0 %1285
      %1287 = vrot.lane.b32.xlu0 %v764, 57
      %v1288 = vpop.permute.xlu0 %1287
      %1289 = vrot.lane.b32.xlu0 %v768, 57
      %v1290 = vpop.permute.xlu0 %1289
      %vm1291 = vcmask 465920
      %v1292 = vsel %vm1291, %v1284, %v1286
      %v1293 = vsel %vm1291, %v1286, %v1288
      %v1294 = vsel %vm1291, %v1288, %v1290
      %v1299 = vsel %vm1291, 0.0, %v1284
      %v1300 = vmul.f32 %v427, %v1299
      %v1301 = vmul.f32 %v428, %v1292
      %v1302 = vmul.f32 %v429, %v1293
      %v1303 = vmul.f32 %v430, %v1294
      %1304 = vset.pattern.permute.xlu0 6
      %1305 = vperm.xlu0 %1304, %v748
      %v1306 = vpop.permute.xlu0 %1305
      %1308 = vset.pattern.permute.xlu0 6
      %1309 = vperm.xlu0 %1308, %v749
      %v1310 = vpop.permute.xlu0 %1309
      %1312 = vset.pattern.permute.xlu0 6
      %1313 = vperm.xlu0 %1312, %v750
      %v1314 = vpop.permute.xlu0 %1313
      %1316 = vset.pattern.permute.xlu0 6
      %1317 = vperm.xlu0 %1316, %v751
      %v1318 = vpop.permute.xlu0 %1317
      %v1320 = vlaneseq
      %v1321 = vshrl.u32 %v1320, 7
      %v1322 = vsub.s32 0, %v1321
      %v1323 = vrot.slane %v1300, %v1322
      %v1324 = vlaneseq
      %v1325 = vshrl.u32 %v1324, 7
      %v1326 = vsub.s32 0, %v1325
      %v1327 = vrot.slane %v1301, %v1326
      %v1328 = vlaneseq
      %v1329 = vshrl.u32 %v1328, 7
      %v1330 = vsub.s32 0, %v1329
      %v1331 = vrot.slane %v1302, %v1330
      %v1332 = vlaneseq
      %v1333 = vshrl.u32 %v1332, 7
      %v1334 = vsub.s32 0, %v1333
      %v1335 = vrot.slane %v1303, %v1334
      %v1336 = vmul.f32 %v1306, %v1323
      %v1337 = vmul.f32 %v1306, %v1327
      %v1338 = vmul.f32 %v1306, %v1331
      %v1339 = vmul.f32 %v1306, %v1335
      %v1340 = vmul.f32 %v1310, %v1323
      %v1341 = vmul.f32 %v1310, %v1327
      %v1342 = vmul.f32 %v1310, %v1331
      %v1343 = vmul.f32 %v1310, %v1335
      %v1344 = vmul.f32 %v1314, %v1323
      %v1345 = vmul.f32 %v1314, %v1327
      %v1346 = vmul.f32 %v1314, %v1331
      %v1347 = vmul.f32 %v1314, %v1335
      %v1348 = vmul.f32 %v1318, %v1323
      %v1349 = vmul.f32 %v1318, %v1327
      %v1350 = vmul.f32 %v1318, %v1331
      %v1351 = vmul.f32 %v1318, %v1335
      %v1352 = vadd.f32 %v1267, %v1336
      %v1353 = vadd.f32 %v1268, %v1337
      %v1354 = vadd.f32 %v1269, %v1338
      %v1355 = vadd.f32 %v1270, %v1339
      %v1356 = vadd.f32 %v1271, %v1340
      %v1357 = vadd.f32 %v1272, %v1341
      %v1358 = vadd.f32 %v1273, %v1342
      %v1359 = vadd.f32 %v1274, %v1343
      %v1360 = vadd.f32 %v1275, %v1344
      %v1361 = vadd.f32 %v1276, %v1345
      %v1362 = vadd.f32 %v1277, %v1346
      %v1363 = vadd.f32 %v1278, %v1347
      %v1364 = vadd.f32 %v1279, %v1348
      %v1365 = vadd.f32 %v1280, %v1349
      %v1366 = vadd.f32 %v1281, %v1350
      %v1367 = vadd.f32 %v1282, %v1351
      %1368 = vrot.lane.b32.xlu0 %v756, 56
      %v1369 = vpop.permute.xlu0 %1368
      %1370 = vrot.lane.b32.xlu0 %v760, 56
      %v1371 = vpop.permute.xlu0 %1370
      %1372 = vrot.lane.b32.xlu0 %v764, 56
      %v1373 = vpop.permute.xlu0 %1372
      %1374 = vrot.lane.b32.xlu0 %v768, 56
      %v1375 = vpop.permute.xlu0 %1374
      %vm1376 = vcmask 457728
      %v1377 = vsel %vm1376, %v1369, %v1371
      %v1378 = vsel %vm1376, %v1371, %v1373
      %v1379 = vsel %vm1376, %v1373, %v1375
      %v1384 = vsel %vm1376, 0.0, %v1369
      %v1385 = vmul.f32 %v439, %v1384
      %v1386 = vmul.f32 %v440, %v1377
      %v1387 = vmul.f32 %v441, %v1378
      %v1388 = vmul.f32 %v442, %v1379
      %1389 = vset.pattern.permute.xlu0 7
      %1390 = vperm.xlu0 %1389, %v748
      %v1391 = vpop.permute.xlu0 %1390
      %1393 = vset.pattern.permute.xlu0 7
      %1394 = vperm.xlu0 %1393, %v749
      %v1395 = vpop.permute.xlu0 %1394
      %1397 = vset.pattern.permute.xlu0 7
      %1398 = vperm.xlu0 %1397, %v750
      %v1399 = vpop.permute.xlu0 %1398
      %1401 = vset.pattern.permute.xlu0 7
      %1402 = vperm.xlu0 %1401, %v751
      %v1403 = vpop.permute.xlu0 %1402
      %v1405 = vlaneseq
      %v1406 = vshrl.u32 %v1405, 7
      %v1407 = vsub.s32 0, %v1406
      %v1408 = vrot.slane %v1385, %v1407
      %v1409 = vlaneseq
      %v1410 = vshrl.u32 %v1409, 7
      %v1411 = vsub.s32 0, %v1410
      %v1412 = vrot.slane %v1386, %v1411
      %v1413 = vlaneseq
      %v1414 = vshrl.u32 %v1413, 7
      %v1415 = vsub.s32 0, %v1414
      %v1416 = vrot.slane %v1387, %v1415
      %v1417 = vlaneseq
      %v1418 = vshrl.u32 %v1417, 7
      %v1419 = vsub.s32 0, %v1418
      %v1420 = vrot.slane %v1388, %v1419
      %v1421 = vmul.f32 %v1391, %v1408
      %v1422 = vmul.f32 %v1391, %v1412
      %v1423 = vmul.f32 %v1391, %v1416
      %v1424 = vmul.f32 %v1391, %v1420
      %v1425 = vmul.f32 %v1395, %v1408
      %v1426 = vmul.f32 %v1395, %v1412
      %v1427 = vmul.f32 %v1395, %v1416
      %v1428 = vmul.f32 %v1395, %v1420
      %v1429 = vmul.f32 %v1399, %v1408
      %v1430 = vmul.f32 %v1399, %v1412
      %v1431 = vmul.f32 %v1399, %v1416
      %v1432 = vmul.f32 %v1399, %v1420
      %v1433 = vmul.f32 %v1403, %v1408
      %v1434 = vmul.f32 %v1403, %v1412
      %v1435 = vmul.f32 %v1403, %v1416
      %v1436 = vmul.f32 %v1403, %v1420
      %v1437 = vadd.f32 %v1352, %v1421
      %v1438 = vadd.f32 %v1353, %v1422
      %v1439 = vadd.f32 %v1354, %v1423
      %v1440 = vadd.f32 %v1355, %v1424
      %v1441 = vadd.f32 %v1356, %v1425
      %v1442 = vadd.f32 %v1357, %v1426
      %v1443 = vadd.f32 %v1358, %v1427
      %v1444 = vadd.f32 %v1359, %v1428
      %v1445 = vadd.f32 %v1360, %v1429
      %v1446 = vadd.f32 %v1361, %v1430
      %v1447 = vadd.f32 %v1362, %v1431
      %v1448 = vadd.f32 %v1363, %v1432
      %v1449 = vadd.f32 %v1364, %v1433
      %v1450 = vadd.f32 %v1365, %v1434
      %v1451 = vadd.f32 %v1366, %v1435
      %v1452 = vadd.f32 %v1367, %v1436
      %1453 = vrot.lane.b32.xlu0 %v756, 55
      %v1454 = vpop.permute.xlu0 %1453
      %1455 = vrot.lane.b32.xlu0 %v760, 55
      %v1456 = vpop.permute.xlu0 %1455
      %1457 = vrot.lane.b32.xlu0 %v764, 55
      %v1458 = vpop.permute.xlu0 %1457
      %1459 = vrot.lane.b32.xlu0 %v768, 55
      %v1460 = vpop.permute.xlu0 %1459
      %vm1461 = vcmask 449536
      %v1462 = vsel %vm1461, %v1454, %v1456
      %v1463 = vsel %vm1461, %v1456, %v1458
      %v1464 = vsel %vm1461, %v1458, %v1460
      %v1469 = vsel %vm1461, 0.0, %v1454
      %v1470 = vmul.f32 %v451, %v1469
      %v1471 = vmul.f32 %v452, %v1462
      %v1472 = vmul.f32 %v453, %v1463
      %v1473 = vmul.f32 %v454, %v1464
      %1474 = vset.pattern.permute.xlu0 8
      %1475 = vperm.xlu0 %1474, %v748
      %v1476 = vpop.permute.xlu0 %1475
      %1478 = vset.pattern.permute.xlu0 8
      %1479 = vperm.xlu0 %1478, %v749
      %v1480 = vpop.permute.xlu0 %1479
      %1482 = vset.pattern.permute.xlu0 8
      %1483 = vperm.xlu0 %1482, %v750
      %v1484 = vpop.permute.xlu0 %1483
      %1486 = vset.pattern.permute.xlu0 8
      %1487 = vperm.xlu0 %1486, %v751
      %v1488 = vpop.permute.xlu0 %1487
      %v1490 = vlaneseq
      %v1491 = vshrl.u32 %v1490, 7
      %v1492 = vsub.s32 0, %v1491
      %v1493 = vrot.slane %v1470, %v1492
      %v1494 = vlaneseq
      %v1495 = vshrl.u32 %v1494, 7
      %v1496 = vsub.s32 0, %v1495
      %v1497 = vrot.slane %v1471, %v1496
      %v1498 = vlaneseq
      %v1499 = vshrl.u32 %v1498, 7
      %v1500 = vsub.s32 0, %v1499
      %v1501 = vrot.slane %v1472, %v1500
      %v1502 = vlaneseq
      %v1503 = vshrl.u32 %v1502, 7
      %v1504 = vsub.s32 0, %v1503
      %v1505 = vrot.slane %v1473, %v1504
      %v1506 = vmul.f32 %v1476, %v1493
      %v1507 = vmul.f32 %v1476, %v1497
      %v1508 = vmul.f32 %v1476, %v1501
      %v1509 = vmul.f32 %v1476, %v1505
      %v1510 = vmul.f32 %v1480, %v1493
      %v1511 = vmul.f32 %v1480, %v1497
      %v1512 = vmul.f32 %v1480, %v1501
      %v1513 = vmul.f32 %v1480, %v1505
      %v1514 = vmul.f32 %v1484, %v1493
      %v1515 = vmul.f32 %v1484, %v1497
      %v1516 = vmul.f32 %v1484, %v1501
      %v1517 = vmul.f32 %v1484, %v1505
      %v1518 = vmul.f32 %v1488, %v1493
      %v1519 = vmul.f32 %v1488, %v1497
      %v1520 = vmul.f32 %v1488, %v1501
      %v1521 = vmul.f32 %v1488, %v1505
      %v1522 = vadd.f32 %v1437, %v1506
      %v1523 = vadd.f32 %v1438, %v1507
      %v1524 = vadd.f32 %v1439, %v1508
      %v1525 = vadd.f32 %v1440, %v1509
      %v1526 = vadd.f32 %v1441, %v1510
      %v1527 = vadd.f32 %v1442, %v1511
      %v1528 = vadd.f32 %v1443, %v1512
      %v1529 = vadd.f32 %v1444, %v1513
      %v1530 = vadd.f32 %v1445, %v1514
      %v1531 = vadd.f32 %v1446, %v1515
      %v1532 = vadd.f32 %v1447, %v1516
      %v1533 = vadd.f32 %v1448, %v1517
      %v1534 = vadd.f32 %v1449, %v1518
      %v1535 = vadd.f32 %v1450, %v1519
      %v1536 = vadd.f32 %v1451, %v1520
      %v1537 = vadd.f32 %v1452, %v1521
      %1538 = vrot.lane.b32.xlu0 %v756, 9
      %v1539 = vpop.permute.xlu0 %1538
      %1540 = vrot.lane.b32.xlu0 %v760, 9
      %v1541 = vpop.permute.xlu0 %1540
      %1542 = vrot.lane.b32.xlu0 %v764, 9
      %v1543 = vpop.permute.xlu0 %1542
      %1544 = vrot.lane.b32.xlu0 %v768, 9
      %v1545 = vpop.permute.xlu0 %1544
      %vm1546 = vcmask 72704
      %v1547 = vsel %vm1546, %v1539, %v1541
      %v1548 = vsel %vm1546, %v1541, %v1543
      %v1549 = vsel %vm1546, %v1543, %v1545
      %v1554 = vsel %vm1546, 0.0, %v1539
      %v1555 = vmul.f32 %v483, %v1554
      %v1556 = vmul.f32 %v484, %v1547
      %v1557 = vmul.f32 %v485, %v1548
      %v1558 = vmul.f32 %v486, %v1549
      %1559 = vset.pattern.permute.xlu0 9
      %1560 = vperm.xlu0 %1559, %v748
      %v1561 = vpop.permute.xlu0 %1560
      %1563 = vset.pattern.permute.xlu0 9
      %1564 = vperm.xlu0 %1563, %v749
      %v1565 = vpop.permute.xlu0 %1564
      %1567 = vset.pattern.permute.xlu0 9
      %1568 = vperm.xlu0 %1567, %v750
      %v1569 = vpop.permute.xlu0 %1568
      %1571 = vset.pattern.permute.xlu0 9
      %1572 = vperm.xlu0 %1571, %v751
      %v1573 = vpop.permute.xlu0 %1572
      %v1575 = vlaneseq
      %v1576 = vshrl.u32 %v1575, 7
      %v1577 = vsub.s32 0, %v1576
      %v1578 = vrot.slane %v1555, %v1577
      %v1579 = vlaneseq
      %v1580 = vshrl.u32 %v1579, 7
      %v1581 = vsub.s32 0, %v1580
      %v1582 = vrot.slane %v1556, %v1581
      %v1583 = vlaneseq
      %v1584 = vshrl.u32 %v1583, 7
      %v1585 = vsub.s32 0, %v1584
      %v1586 = vrot.slane %v1557, %v1585
      %v1587 = vlaneseq
      %v1588 = vshrl.u32 %v1587, 7
      %v1589 = vsub.s32 0, %v1588
      %v1590 = vrot.slane %v1558, %v1589
      %v1591 = vmul.f32 %v1561, %v1578
      %v1592 = vmul.f32 %v1561, %v1582
      %v1593 = vmul.f32 %v1561, %v1586
      %v1594 = vmul.f32 %v1561, %v1590
      %v1595 = vmul.f32 %v1565, %v1578
      %v1596 = vmul.f32 %v1565, %v1582
      %v1597 = vmul.f32 %v1565, %v1586
      %v1598 = vmul.f32 %v1565, %v1590
      %v1599 = vmul.f32 %v1569, %v1578
      %v1600 = vmul.f32 %v1569, %v1582
      %v1601 = vmul.f32 %v1569, %v1586
      %v1602 = vmul.f32 %v1569, %v1590
      %v1603 = vmul.f32 %v1573, %v1578
      %v1604 = vmul.f32 %v1573, %v1582
      %v1605 = vmul.f32 %v1573, %v1586
      %v1606 = vmul.f32 %v1573, %v1590
      %v1607 = vadd.f32 %v1522, %v1591
      %v1608 = vadd.f32 %v1523, %v1592
      %v1609 = vadd.f32 %v1524, %v1593
      %v1610 = vadd.f32 %v1525, %v1594
      %v1611 = vadd.f32 %v1526, %v1595
      %v1612 = vadd.f32 %v1527, %v1596
      %v1613 = vadd.f32 %v1528, %v1597
      %v1614 = vadd.f32 %v1529, %v1598
      %v1615 = vadd.f32 %v1530, %v1599
      %v1616 = vadd.f32 %v1531, %v1600
      %v1617 = vadd.f32 %v1532, %v1601
      %v1618 = vadd.f32 %v1533, %v1602
      %v1619 = vadd.f32 %v1534, %v1603
      %v1620 = vadd.f32 %v1535, %v1604
      %v1621 = vadd.f32 %v1536, %v1605
      %v1622 = vadd.f32 %v1537, %v1606
      %1623 = vrot.lane.b32.xlu0 %v756, 8
      %v1624 = vpop.permute.xlu0 %1623
      %1625 = vrot.lane.b32.xlu0 %v760, 8
      %v1626 = vpop.permute.xlu0 %1625
      %1627 = vrot.lane.b32.xlu0 %v764, 8
      %v1628 = vpop.permute.xlu0 %1627
      %1629 = vrot.lane.b32.xlu0 %v768, 8
      %v1630 = vpop.permute.xlu0 %1629
      %vm1631 = vcmask 64512
      %v1632 = vsel %vm1631, %v1624, %v1626
      %v1633 = vsel %vm1631, %v1626, %v1628
      %v1634 = vsel %vm1631, %v1628, %v1630
      %v1639 = vsel %vm1631, 0.0, %v1624
      %v1640 = vmul.f32 %v495, %v1639
      %v1641 = vmul.f32 %v496, %v1632
      %v1642 = vmul.f32 %v497, %v1633
      %v1643 = vmul.f32 %v498, %v1634
      %1644 = vset.pattern.permute.xlu0 10
      %1645 = vperm.xlu0 %1644, %v748
      %v1646 = vpop.permute.xlu0 %1645
      %1648 = vset.pattern.permute.xlu0 10
      %1649 = vperm.xlu0 %1648, %v749
      %v1650 = vpop.permute.xlu0 %1649
      %1652 = vset.pattern.permute.xlu0 10
      %1653 = vperm.xlu0 %1652, %v750
      %v1654 = vpop.permute.xlu0 %1653
      %1656 = vset.pattern.permute.xlu0 10
      %1657 = vperm.xlu0 %1656, %v751
      %v1658 = vpop.permute.xlu0 %1657
      %v1660 = vlaneseq
      %v1661 = vshrl.u32 %v1660, 7
      %v1662 = vsub.s32 0, %v1661
      %v1663 = vrot.slane %v1640, %v1662
      %v1664 = vlaneseq
      %v1665 = vshrl.u32 %v1664, 7
      %v1666 = vsub.s32 0, %v1665
      %v1667 = vrot.slane %v1641, %v1666
      %v1668 = vlaneseq
      %v1669 = vshrl.u32 %v1668, 7
      %v1670 = vsub.s32 0, %v1669
      %v1671 = vrot.slane %v1642, %v1670
      %v1672 = vlaneseq
      %v1673 = vshrl.u32 %v1672, 7
      %v1674 = vsub.s32 0, %v1673
      %v1675 = vrot.slane %v1643, %v1674
      %v1676 = vmul.f32 %v1646, %v1663
      %v1677 = vmul.f32 %v1646, %v1667
      %v1678 = vmul.f32 %v1646, %v1671
      %v1679 = vmul.f32 %v1646, %v1675
      %v1680 = vmul.f32 %v1650, %v1663
      %v1681 = vmul.f32 %v1650, %v1667
      %v1682 = vmul.f32 %v1650, %v1671
      %v1683 = vmul.f32 %v1650, %v1675
      %v1684 = vmul.f32 %v1654, %v1663
      %v1685 = vmul.f32 %v1654, %v1667
      %v1686 = vmul.f32 %v1654, %v1671
      %v1687 = vmul.f32 %v1654, %v1675
      %v1688 = vmul.f32 %v1658, %v1663
      %v1689 = vmul.f32 %v1658, %v1667
      %v1690 = vmul.f32 %v1658, %v1671
      %v1691 = vmul.f32 %v1658, %v1675
      %v1692 = vadd.f32 %v1607, %v1676
      %v1693 = vadd.f32 %v1608, %v1677
      %v1694 = vadd.f32 %v1609, %v1678
      %v1695 = vadd.f32 %v1610, %v1679
      %v1696 = vadd.f32 %v1611, %v1680
      %v1697 = vadd.f32 %v1612, %v1681
      %v1698 = vadd.f32 %v1613, %v1682
      %v1699 = vadd.f32 %v1614, %v1683
      %v1700 = vadd.f32 %v1615, %v1684
      %v1701 = vadd.f32 %v1616, %v1685
      %v1702 = vadd.f32 %v1617, %v1686
      %v1703 = vadd.f32 %v1618, %v1687
      %v1704 = vadd.f32 %v1619, %v1688
      %v1705 = vadd.f32 %v1620, %v1689
      %v1706 = vadd.f32 %v1621, %v1690
      %v1707 = vadd.f32 %v1622, %v1691
      %1708 = vrot.lane.b32.xlu0 %v756, 7
      %v1709 = vpop.permute.xlu0 %1708
      %1710 = vrot.lane.b32.xlu0 %v760, 7
      %v1711 = vpop.permute.xlu0 %1710
      %1712 = vrot.lane.b32.xlu0 %v764, 7
      %v1713 = vpop.permute.xlu0 %1712
      %1714 = vrot.lane.b32.xlu0 %v768, 7
      %v1715 = vpop.permute.xlu0 %1714
      %vm1716 = vcmask 56320
      %v1717 = vsel %vm1716, %v1709, %v1711
      %v1718 = vsel %vm1716, %v1711, %v1713
      %v1719 = vsel %vm1716, %v1713, %v1715
      %v1724 = vsel %vm1716, 0.0, %v1709
      %v1725 = vmul.f32 %v507, %v1724
      %v1726 = vmul.f32 %v508, %v1717
      %v1727 = vmul.f32 %v509, %v1718
      %v1728 = vmul.f32 %v510, %v1719
      %1729 = vset.pattern.permute.xlu0 11
      %1730 = vperm.xlu0 %1729, %v748
      %v1731 = vpop.permute.xlu0 %1730
      %1733 = vset.pattern.permute.xlu0 11
      %1734 = vperm.xlu0 %1733, %v749
      %v1735 = vpop.permute.xlu0 %1734
      %1737 = vset.pattern.permute.xlu0 11
      %1738 = vperm.xlu0 %1737, %v750
      %v1739 = vpop.permute.xlu0 %1738
      %1741 = vset.pattern.permute.xlu0 11
      %1742 = vperm.xlu0 %1741, %v751
      %v1743 = vpop.permute.xlu0 %1742
      %v1745 = vlaneseq
      %v1746 = vshrl.u32 %v1745, 7
      %v1747 = vsub.s32 0, %v1746
      %v1748 = vrot.slane %v1725, %v1747
      %v1749 = vlaneseq
      %v1750 = vshrl.u32 %v1749, 7
      %v1751 = vsub.s32 0, %v1750
      %v1752 = vrot.slane %v1726, %v1751
      %v1753 = vlaneseq
      %v1754 = vshrl.u32 %v1753, 7
      %v1755 = vsub.s32 0, %v1754
      %v1756 = vrot.slane %v1727, %v1755
      %v1757 = vlaneseq
      %v1758 = vshrl.u32 %v1757, 7
      %v1759 = vsub.s32 0, %v1758
      %v1760 = vrot.slane %v1728, %v1759
      %v1761 = vmul.f32 %v1731, %v1748
      %v1762 = vmul.f32 %v1731, %v1752
      %v1763 = vmul.f32 %v1731, %v1756
      %v1764 = vmul.f32 %v1731, %v1760
      %v1765 = vmul.f32 %v1735, %v1748
      %v1766 = vmul.f32 %v1735, %v1752
      %v1767 = vmul.f32 %v1735, %v1756
      %v1768 = vmul.f32 %v1735, %v1760
      %v1769 = vmul.f32 %v1739, %v1748
      %v1770 = vmul.f32 %v1739, %v1752
      %v1771 = vmul.f32 %v1739, %v1756
      %v1772 = vmul.f32 %v1739, %v1760
      %v1773 = vmul.f32 %v1743, %v1748
      %v1774 = vmul.f32 %v1743, %v1752
      %v1775 = vmul.f32 %v1743, %v1756
      %v1776 = vmul.f32 %v1743, %v1760
      %v1777 = vadd.f32 %v1692, %v1761
      %v1778 = vadd.f32 %v1693, %v1762
      %v1779 = vadd.f32 %v1694, %v1763
      %v1780 = vadd.f32 %v1695, %v1764
      %v1781 = vadd.f32 %v1696, %v1765
      %v1782 = vadd.f32 %v1697, %v1766
      %v1783 = vadd.f32 %v1698, %v1767
      %v1784 = vadd.f32 %v1699, %v1768
      %v1785 = vadd.f32 %v1700, %v1769
      %v1786 = vadd.f32 %v1701, %v1770
      %v1787 = vadd.f32 %v1702, %v1771
      %v1788 = vadd.f32 %v1703, %v1772
      %v1789 = vadd.f32 %v1704, %v1773
      %v1790 = vadd.f32 %v1705, %v1774
      %v1791 = vadd.f32 %v1706, %v1775
      %v1792 = vadd.f32 %v1707, %v1776
      %1793 = vrot.lane.b32.xlu0 %v756, 1
      %v1794 = vpop.permute.xlu0 %1793
      %1795 = vrot.lane.b32.xlu0 %v760, 1
      %v1796 = vpop.permute.xlu0 %1795
      %1797 = vrot.lane.b32.xlu0 %v764, 1
      %v1798 = vpop.permute.xlu0 %1797
      %1799 = vrot.lane.b32.xlu0 %v768, 1
      %v1800 = vpop.permute.xlu0 %1799
      %vm1801 = vcmask 7168
      %v1802 = vsel %vm1801, %v1794, %v1796
      %v1803 = vsel %vm1801, %v1796, %v1798
      %v1804 = vsel %vm1801, %v1798, %v1800
      %v1809 = vsel %vm1801, 0.0, %v1794
      %v1810 = vmul.f32 %v527, %v1809
      %v1811 = vmul.f32 %v528, %v1802
      %v1812 = vmul.f32 %v529, %v1803
      %v1813 = vmul.f32 %v530, %v1804
      %1814 = vset.pattern.permute.xlu0 12
      %1815 = vperm.xlu0 %1814, %v748
      %v1816 = vpop.permute.xlu0 %1815
      %1818 = vset.pattern.permute.xlu0 12
      %1819 = vperm.xlu0 %1818, %v749
      %v1820 = vpop.permute.xlu0 %1819
      %1822 = vset.pattern.permute.xlu0 12
      %1823 = vperm.xlu0 %1822, %v750
      %v1824 = vpop.permute.xlu0 %1823
      %1826 = vset.pattern.permute.xlu0 12
      %1827 = vperm.xlu0 %1826, %v751
      %v1828 = vpop.permute.xlu0 %1827
      %v1830 = vlaneseq
      %v1831 = vshrl.u32 %v1830, 7
      %v1832 = vsub.s32 0, %v1831
      %v1833 = vrot.slane %v1810, %v1832
      %v1834 = vlaneseq
      %v1835 = vshrl.u32 %v1834, 7
      %v1836 = vsub.s32 0, %v1835
      %v1837 = vrot.slane %v1811, %v1836
      %v1838 = vlaneseq
      %v1839 = vshrl.u32 %v1838, 7
      %v1840 = vsub.s32 0, %v1839
      %v1841 = vrot.slane %v1812, %v1840
      %v1842 = vlaneseq
      %v1843 = vshrl.u32 %v1842, 7
      %v1844 = vsub.s32 0, %v1843
      %v1845 = vrot.slane %v1813, %v1844
      %v1846 = vmul.f32 %v1816, %v1833
      %v1847 = vmul.f32 %v1816, %v1837
      %v1848 = vmul.f32 %v1816, %v1841
      %v1849 = vmul.f32 %v1816, %v1845
      %v1850 = vmul.f32 %v1820, %v1833
      %v1851 = vmul.f32 %v1820, %v1837
      %v1852 = vmul.f32 %v1820, %v1841
      %v1853 = vmul.f32 %v1820, %v1845
      %v1854 = vmul.f32 %v1824, %v1833
      %v1855 = vmul.f32 %v1824, %v1837
      %v1856 = vmul.f32 %v1824, %v1841
      %v1857 = vmul.f32 %v1824, %v1845
      %v1858 = vmul.f32 %v1828, %v1833
      %v1859 = vmul.f32 %v1828, %v1837
      %v1860 = vmul.f32 %v1828, %v1841
      %v1861 = vmul.f32 %v1828, %v1845
      %v1862 = vadd.f32 %v1777, %v1846
      %v1863 = vadd.f32 %v1778, %v1847
      %v1864 = vadd.f32 %v1779, %v1848
      %v1865 = vadd.f32 %v1780, %v1849
      %v1866 = vadd.f32 %v1781, %v1850
      %v1867 = vadd.f32 %v1782, %v1851
      %v1868 = vadd.f32 %v1783, %v1852
      %v1869 = vadd.f32 %v1784, %v1853
      %v1870 = vadd.f32 %v1785, %v1854
      %v1871 = vadd.f32 %v1786, %v1855
      %v1872 = vadd.f32 %v1787, %v1856
      %v1873 = vadd.f32 %v1788, %v1857
      %v1874 = vadd.f32 %v1789, %v1858
      %v1875 = vadd.f32 %v1790, %v1859
      %v1876 = vadd.f32 %v1791, %v1860
      %v1877 = vadd.f32 %v1792, %v1861
      %v1882 = vmul.f32 %v539, %v756
      %v1883 = vmul.f32 %v540, %v760
      %v1884 = vmul.f32 %v541, %v764
      %v1885 = vmul.f32 %v542, %v768
      %1886 = vset.pattern.permute.xlu0 13
      %1887 = vperm.xlu0 %1886, %v748
      %v1888 = vpop.permute.xlu0 %1887
      %1890 = vset.pattern.permute.xlu0 13
      %1891 = vperm.xlu0 %1890, %v749
      %v1892 = vpop.permute.xlu0 %1891
      %1894 = vset.pattern.permute.xlu0 13
      %1895 = vperm.xlu0 %1894, %v750
      %v1896 = vpop.permute.xlu0 %1895
      %1898 = vset.pattern.permute.xlu0 13
      %1899 = vperm.xlu0 %1898, %v751
      %v1900 = vpop.permute.xlu0 %1899
      %v1902 = vlaneseq
      %v1903 = vshrl.u32 %v1902, 7
      %v1904 = vsub.s32 0, %v1903
      %v1905 = vrot.slane %v1882, %v1904
      %v1906 = vlaneseq
      %v1907 = vshrl.u32 %v1906, 7
      %v1908 = vsub.s32 0, %v1907
      %v1909 = vrot.slane %v1883, %v1908
      %v1910 = vlaneseq
      %v1911 = vshrl.u32 %v1910, 7
      %v1912 = vsub.s32 0, %v1911
      %v1913 = vrot.slane %v1884, %v1912
      %v1914 = vlaneseq
      %v1915 = vshrl.u32 %v1914, 7
      %v1916 = vsub.s32 0, %v1915
      %v1917 = vrot.slane %v1885, %v1916
      %v1918 = vmul.f32 %v1888, %v1905
      %v1919 = vmul.f32 %v1888, %v1909
      %v1920 = vmul.f32 %v1888, %v1913
      %v1921 = vmul.f32 %v1888, %v1917
      %v1922 = vmul.f32 %v1892, %v1905
      %v1923 = vmul.f32 %v1892, %v1909
      %v1924 = vmul.f32 %v1892, %v1913
      %v1925 = vmul.f32 %v1892, %v1917
      %v1926 = vmul.f32 %v1896, %v1905
      %v1927 = vmul.f32 %v1896, %v1909
      %v1928 = vmul.f32 %v1896, %v1913
      %v1929 = vmul.f32 %v1896, %v1917
      %v1930 = vmul.f32 %v1900, %v1905
      %v1931 = vmul.f32 %v1900, %v1909
      %v1932 = vmul.f32 %v1900, %v1913
      %v1933 = vmul.f32 %v1900, %v1917
      %v1934 = vadd.f32 %v1862, %v1918
      %v1935 = vadd.f32 %v1863, %v1919
      %v1936 = vadd.f32 %v1864, %v1920
      %v1937 = vadd.f32 %v1865, %v1921
      %v1938 = vadd.f32 %v1866, %v1922
      %v1939 = vadd.f32 %v1867, %v1923
      %v1940 = vadd.f32 %v1868, %v1924
      %v1941 = vadd.f32 %v1869, %v1925
      %v1942 = vadd.f32 %v1870, %v1926
      %v1943 = vadd.f32 %v1871, %v1927
      %v1944 = vadd.f32 %v1872, %v1928
      %v1945 = vadd.f32 %v1873, %v1929
      %v1946 = vadd.f32 %v1874, %v1930
      %v1947 = vadd.f32 %v1875, %v1931
      %v1948 = vadd.f32 %v1876, %v1932
      %v1949 = vadd.f32 %v1877, %v1933
      %1950 = vrot.lane.b32.xlu0 %v756, 127
      %v1951 = vpop.permute.xlu0 %1950
      %1952 = vrot.lane.b32.xlu0 %v760, 127
      %v1953 = vpop.permute.xlu0 %1952
      %1954 = vrot.lane.b32.xlu0 %v764, 127
      %v1955 = vpop.permute.xlu0 %1954
      %1956 = vrot.lane.b32.xlu0 %v768, 127
      %v1957 = vpop.permute.xlu0 %1956
      %vm1958 = vcmask 1039360
      %v1959 = vsel %vm1958, %v1951, %v1953
      %v1960 = vsel %vm1958, %v1953, %v1955
      %v1961 = vsel %vm1958, %v1955, %v1957
      %v1966 = vsel %vm1958, %v1957, 0.0
      %v1967 = vmul.f32 %v551, %v1959
      %v1968 = vmul.f32 %v552, %v1960
      %v1969 = vmul.f32 %v553, %v1961
      %v1970 = vmul.f32 %v554, %v1966
      %1971 = vset.pattern.permute.xlu0 14
      %1972 = vperm.xlu0 %1971, %v748
      %v1973 = vpop.permute.xlu0 %1972
      %1975 = vset.pattern.permute.xlu0 14
      %1976 = vperm.xlu0 %1975, %v749
      %v1977 = vpop.permute.xlu0 %1976
      %1979 = vset.pattern.permute.xlu0 14
      %1980 = vperm.xlu0 %1979, %v750
      %v1981 = vpop.permute.xlu0 %1980
      %1983 = vset.pattern.permute.xlu0 14
      %1984 = vperm.xlu0 %1983, %v751
      %v1985 = vpop.permute.xlu0 %1984
      %v1987 = vlaneseq
      %v1988 = vshrl.u32 %v1987, 7
      %v1989 = vsub.s32 0, %v1988
      %v1990 = vrot.slane %v1967, %v1989
      %v1991 = vlaneseq
      %v1992 = vshrl.u32 %v1991, 7
      %v1993 = vsub.s32 0, %v1992
      %v1994 = vrot.slane %v1968, %v1993
      %v1995 = vlaneseq
      %v1996 = vshrl.u32 %v1995, 7
      %v1997 = vsub.s32 0, %v1996
      %v1998 = vrot.slane %v1969, %v1997
      %v1999 = vlaneseq
      %v2000 = vshrl.u32 %v1999, 7
      %v2001 = vsub.s32 0, %v2000
      %v2002 = vrot.slane %v1970, %v2001
      %v2003 = vmul.f32 %v1973, %v1990
      %v2004 = vmul.f32 %v1973, %v1994
      %v2005 = vmul.f32 %v1973, %v1998
      %v2006 = vmul.f32 %v1973, %v2002
      %v2007 = vmul.f32 %v1977, %v1990
      %v2008 = vmul.f32 %v1977, %v1994
      %v2009 = vmul.f32 %v1977, %v1998
      %v2010 = vmul.f32 %v1977, %v2002
      %v2011 = vmul.f32 %v1981, %v1990
      %v2012 = vmul.f32 %v1981, %v1994
      %v2013 = vmul.f32 %v1981, %v1998
      %v2014 = vmul.f32 %v1981, %v2002
      %v2015 = vmul.f32 %v1985, %v1990
      %v2016 = vmul.f32 %v1985, %v1994
      %v2017 = vmul.f32 %v1985, %v1998
      %v2018 = vmul.f32 %v1985, %v2002
      %v2019 = vadd.f32 %v1934, %v2003
      %v2020 = vadd.f32 %v1935, %v2004
      %v2021 = vadd.f32 %v1936, %v2005
      %v2022 = vadd.f32 %v1937, %v2006
      %v2023 = vadd.f32 %v1938, %v2007
      %v2024 = vadd.f32 %v1939, %v2008
      %v2025 = vadd.f32 %v1940, %v2009
      %v2026 = vadd.f32 %v1941, %v2010
      %v2027 = vadd.f32 %v1942, %v2011
      %v2028 = vadd.f32 %v1943, %v2012
      %v2029 = vadd.f32 %v1944, %v2013
      %v2030 = vadd.f32 %v1945, %v2014
      %v2031 = vadd.f32 %v1946, %v2015
      %v2032 = vadd.f32 %v1947, %v2016
      %v2033 = vadd.f32 %v1948, %v2017
      %v2034 = vadd.f32 %v1949, %v2018
      %2035 = vrot.lane.b32.xlu0 %v756, 121
      %v2036 = vpop.permute.xlu0 %2035
      %2037 = vrot.lane.b32.xlu0 %v760, 121
      %v2038 = vpop.permute.xlu0 %2037
      %2039 = vrot.lane.b32.xlu0 %v764, 121
      %v2040 = vpop.permute.xlu0 %2039
      %2041 = vrot.lane.b32.xlu0 %v768, 121
      %v2042 = vpop.permute.xlu0 %2041
      %vm2043 = vcmask 990208
      %v2044 = vsel %vm2043, %v2036, %v2038
      %v2045 = vsel %vm2043, %v2038, %v2040
      %v2046 = vsel %vm2043, %v2040, %v2042
      %v2051 = vsel %vm2043, %v2042, 0.0
      %v2052 = vmul.f32 %v571, %v2044
      %v2053 = vmul.f32 %v572, %v2045
      %v2054 = vmul.f32 %v573, %v2046
      %v2055 = vmul.f32 %v574, %v2051
      %2056 = vset.pattern.permute.xlu0 15
      %2057 = vperm.xlu0 %2056, %v748
      %v2058 = vpop.permute.xlu0 %2057
      %2060 = vset.pattern.permute.xlu0 15
      %2061 = vperm.xlu0 %2060, %v749
      %v2062 = vpop.permute.xlu0 %2061
      %2064 = vset.pattern.permute.xlu0 15
      %2065 = vperm.xlu0 %2064, %v750
      %v2066 = vpop.permute.xlu0 %2065
      %2068 = vset.pattern.permute.xlu0 15
      %2069 = vperm.xlu0 %2068, %v751
      %v2070 = vpop.permute.xlu0 %2069
      %v2072 = vlaneseq
      %v2073 = vshrl.u32 %v2072, 7
      %v2074 = vsub.s32 0, %v2073
      %v2075 = vrot.slane %v2052, %v2074
      %v2076 = vlaneseq
      %v2077 = vshrl.u32 %v2076, 7
      %v2078 = vsub.s32 0, %v2077
      %v2079 = vrot.slane %v2053, %v2078
      %v2080 = vlaneseq
      %v2081 = vshrl.u32 %v2080, 7
      %v2082 = vsub.s32 0, %v2081
      %v2083 = vrot.slane %v2054, %v2082
      %v2084 = vlaneseq
      %v2085 = vshrl.u32 %v2084, 7
      %v2086 = vsub.s32 0, %v2085
      %v2087 = vrot.slane %v2055, %v2086
      %v2088 = vmul.f32 %v2058, %v2075
      %v2089 = vmul.f32 %v2058, %v2079
      %v2090 = vmul.f32 %v2058, %v2083
      %v2091 = vmul.f32 %v2058, %v2087
      %v2092 = vmul.f32 %v2062, %v2075
      %v2093 = vmul.f32 %v2062, %v2079
      %v2094 = vmul.f32 %v2062, %v2083
      %v2095 = vmul.f32 %v2062, %v2087
      %v2096 = vmul.f32 %v2066, %v2075
      %v2097 = vmul.f32 %v2066, %v2079
      %v2098 = vmul.f32 %v2066, %v2083
      %v2099 = vmul.f32 %v2066, %v2087
      %v2100 = vmul.f32 %v2070, %v2075
      %v2101 = vmul.f32 %v2070, %v2079
      %v2102 = vmul.f32 %v2070, %v2083
      %v2103 = vmul.f32 %v2070, %v2087
      %v2104 = vadd.f32 %v2019, %v2088
      %v2105 = vadd.f32 %v2020, %v2089
      %v2106 = vadd.f32 %v2021, %v2090
      %v2107 = vadd.f32 %v2022, %v2091
      %v2108 = vadd.f32 %v2023, %v2092
      %v2109 = vadd.f32 %v2024, %v2093
      %v2110 = vadd.f32 %v2025, %v2094
      %v2111 = vadd.f32 %v2026, %v2095
      %v2112 = vadd.f32 %v2027, %v2096
      %v2113 = vadd.f32 %v2028, %v2097
      %v2114 = vadd.f32 %v2029, %v2098
      %v2115 = vadd.f32 %v2030, %v2099
      %v2116 = vadd.f32 %v2031, %v2100
      %v2117 = vadd.f32 %v2032, %v2101
      %v2118 = vadd.f32 %v2033, %v2102
      %v2119 = vadd.f32 %v2034, %v2103
      %2120 = vrot.lane.b32.xlu0 %v756, 120
      %v2121 = vpop.permute.xlu0 %2120
      %2122 = vrot.lane.b32.xlu0 %v760, 120
      %v2123 = vpop.permute.xlu0 %2122
      %2124 = vrot.lane.b32.xlu0 %v764, 120
      %v2125 = vpop.permute.xlu0 %2124
      %2126 = vrot.lane.b32.xlu0 %v768, 120
      %v2127 = vpop.permute.xlu0 %2126
      %vm2128 = vcmask 982016
      %v2129 = vsel %vm2128, %v2121, %v2123
      %v2130 = vsel %vm2128, %v2123, %v2125
      %v2131 = vsel %vm2128, %v2125, %v2127
      %v2136 = vsel %vm2128, %v2127, 0.0
      %v2137 = vmul.f32 %v583, %v2129
      %v2138 = vmul.f32 %v584, %v2130
      %v2139 = vmul.f32 %v585, %v2131
      %v2140 = vmul.f32 %v586, %v2136
      %2141 = vset.pattern.permute.xlu0 16
      %2142 = vperm.xlu0 %2141, %v748
      %v2143 = vpop.permute.xlu0 %2142
      %2145 = vset.pattern.permute.xlu0 16
      %2146 = vperm.xlu0 %2145, %v749
      %v2147 = vpop.permute.xlu0 %2146
      %2149 = vset.pattern.permute.xlu0 16
      %2150 = vperm.xlu0 %2149, %v750
      %v2151 = vpop.permute.xlu0 %2150
      %2153 = vset.pattern.permute.xlu0 16
      %2154 = vperm.xlu0 %2153, %v751
      %v2155 = vpop.permute.xlu0 %2154
      %v2157 = vlaneseq
      %v2158 = vshrl.u32 %v2157, 7
      %v2159 = vsub.s32 0, %v2158
      %v2160 = vrot.slane %v2137, %v2159
      %v2161 = vlaneseq
      %v2162 = vshrl.u32 %v2161, 7
      %v2163 = vsub.s32 0, %v2162
      %v2164 = vrot.slane %v2138, %v2163
      %v2165 = vlaneseq
      %v2166 = vshrl.u32 %v2165, 7
      %v2167 = vsub.s32 0, %v2166
      %v2168 = vrot.slane %v2139, %v2167
      %v2169 = vlaneseq
      %v2170 = vshrl.u32 %v2169, 7
      %v2171 = vsub.s32 0, %v2170
      %v2172 = vrot.slane %v2140, %v2171
      %v2173 = vmul.f32 %v2143, %v2160
      %v2174 = vmul.f32 %v2143, %v2164
      %v2175 = vmul.f32 %v2143, %v2168
      %v2176 = vmul.f32 %v2143, %v2172
      %v2177 = vmul.f32 %v2147, %v2160
      %v2178 = vmul.f32 %v2147, %v2164
      %v2179 = vmul.f32 %v2147, %v2168
      %v2180 = vmul.f32 %v2147, %v2172
      %v2181 = vmul.f32 %v2151, %v2160
      %v2182 = vmul.f32 %v2151, %v2164
      %v2183 = vmul.f32 %v2151, %v2168
      %v2184 = vmul.f32 %v2151, %v2172
      %v2185 = vmul.f32 %v2155, %v2160
      %v2186 = vmul.f32 %v2155, %v2164
      %v2187 = vmul.f32 %v2155, %v2168
      %v2188 = vmul.f32 %v2155, %v2172
      %v2189 = vadd.f32 %v2104, %v2173
      %v2190 = vadd.f32 %v2105, %v2174
      %v2191 = vadd.f32 %v2106, %v2175
      %v2192 = vadd.f32 %v2107, %v2176
      %v2193 = vadd.f32 %v2108, %v2177
      %v2194 = vadd.f32 %v2109, %v2178
      %v2195 = vadd.f32 %v2110, %v2179
      %v2196 = vadd.f32 %v2111, %v2180
      %v2197 = vadd.f32 %v2112, %v2181
      %v2198 = vadd.f32 %v2113, %v2182
      %v2199 = vadd.f32 %v2114, %v2183
      %v2200 = vadd.f32 %v2115, %v2184
      %v2201 = vadd.f32 %v2116, %v2185
      %v2202 = vadd.f32 %v2117, %v2186
      %v2203 = vadd.f32 %v2118, %v2187
      %v2204 = vadd.f32 %v2119, %v2188
      %2205 = vrot.lane.b32.xlu0 %v756, 119
      %v2206 = vpop.permute.xlu0 %2205
      %2207 = vrot.lane.b32.xlu0 %v760, 119
      %v2208 = vpop.permute.xlu0 %2207
      %2209 = vrot.lane.b32.xlu0 %v764, 119
      %v2210 = vpop.permute.xlu0 %2209
      %2211 = vrot.lane.b32.xlu0 %v768, 119
      %v2212 = vpop.permute.xlu0 %2211
      %vm2213 = vcmask 973824
      %v2214 = vsel %vm2213, %v2206, %v2208
      %v2215 = vsel %vm2213, %v2208, %v2210
      %v2216 = vsel %vm2213, %v2210, %v2212
      %v2221 = vsel %vm2213, %v2212, 0.0
      %v2222 = vmul.f32 %v595, %v2214
      %v2223 = vmul.f32 %v596, %v2215
      %v2224 = vmul.f32 %v597, %v2216
      %v2225 = vmul.f32 %v598, %v2221
      %2226 = vset.pattern.permute.xlu0 17
      %2227 = vperm.xlu0 %2226, %v748
      %v2228 = vpop.permute.xlu0 %2227
      %2230 = vset.pattern.permute.xlu0 17
      %2231 = vperm.xlu0 %2230, %v749
      %v2232 = vpop.permute.xlu0 %2231
      %2234 = vset.pattern.permute.xlu0 17
      %2235 = vperm.xlu0 %2234, %v750
      %v2236 = vpop.permute.xlu0 %2235
      %2238 = vset.pattern.permute.xlu0 17
      %2239 = vperm.xlu0 %2238, %v751
      %v2240 = vpop.permute.xlu0 %2239
      %v2242 = vlaneseq
      %v2243 = vshrl.u32 %v2242, 7
      %v2244 = vsub.s32 0, %v2243
      %v2245 = vrot.slane %v2222, %v2244
      %v2246 = vlaneseq
      %v2247 = vshrl.u32 %v2246, 7
      %v2248 = vsub.s32 0, %v2247
      %v2249 = vrot.slane %v2223, %v2248
      %v2250 = vlaneseq
      %v2251 = vshrl.u32 %v2250, 7
      %v2252 = vsub.s32 0, %v2251
      %v2253 = vrot.slane %v2224, %v2252
      %v2254 = vlaneseq
      %v2255 = vshrl.u32 %v2254, 7
      %v2256 = vsub.s32 0, %v2255
      %v2257 = vrot.slane %v2225, %v2256
      %v2258 = vmul.f32 %v2228, %v2245
      %v2259 = vmul.f32 %v2228, %v2249
      %v2260 = vmul.f32 %v2228, %v2253
      %v2261 = vmul.f32 %v2228, %v2257
      %v2262 = vmul.f32 %v2232, %v2245
      %v2263 = vmul.f32 %v2232, %v2249
      %v2264 = vmul.f32 %v2232, %v2253
      %v2265 = vmul.f32 %v2232, %v2257
      %v2266 = vmul.f32 %v2236, %v2245
      %v2267 = vmul.f32 %v2236, %v2249
      %v2268 = vmul.f32 %v2236, %v2253
      %v2269 = vmul.f32 %v2236, %v2257
      %v2270 = vmul.f32 %v2240, %v2245
      %v2271 = vmul.f32 %v2240, %v2249
      %v2272 = vmul.f32 %v2240, %v2253
      %v2273 = vmul.f32 %v2240, %v2257
      %v2274 = vadd.f32 %v2189, %v2258
      %v2275 = vadd.f32 %v2190, %v2259
      %v2276 = vadd.f32 %v2191, %v2260
      %v2277 = vadd.f32 %v2192, %v2261
      %v2278 = vadd.f32 %v2193, %v2262
      %v2279 = vadd.f32 %v2194, %v2263
      %v2280 = vadd.f32 %v2195, %v2264
      %v2281 = vadd.f32 %v2196, %v2265
      %v2282 = vadd.f32 %v2197, %v2266
      %v2283 = vadd.f32 %v2198, %v2267
      %v2284 = vadd.f32 %v2199, %v2268
      %v2285 = vadd.f32 %v2200, %v2269
      %v2286 = vadd.f32 %v2201, %v2270
      %v2287 = vadd.f32 %v2202, %v2271
      %v2288 = vadd.f32 %v2203, %v2272
      %v2289 = vadd.f32 %v2204, %v2273
      %v2291 = vsel %vm777, %v776, 0.0
      %v2292 = vmul.f32 %v631, %v778
      %v2293 = vmul.f32 %v632, %v779
      %v2294 = vmul.f32 %v633, %v780
      %v2295 = vmul.f32 %v634, %v2291
      %2296 = vset.pattern.permute.xlu0 18
      %2297 = vperm.xlu0 %2296, %v748
      %v2298 = vpop.permute.xlu0 %2297
      %2300 = vset.pattern.permute.xlu0 18
      %2301 = vperm.xlu0 %2300, %v749
      %v2302 = vpop.permute.xlu0 %2301
      %2304 = vset.pattern.permute.xlu0 18
      %2305 = vperm.xlu0 %2304, %v750
      %v2306 = vpop.permute.xlu0 %2305
      %2308 = vset.pattern.permute.xlu0 18
      %2309 = vperm.xlu0 %2308, %v751
      %v2310 = vpop.permute.xlu0 %2309
      %v2312 = vlaneseq
      %v2313 = vshrl.u32 %v2312, 7
      %v2314 = vsub.s32 0, %v2313
      %v2315 = vrot.slane %v2292, %v2314
      %v2316 = vlaneseq
      %v2317 = vshrl.u32 %v2316, 7
      %v2318 = vsub.s32 0, %v2317
      %v2319 = vrot.slane %v2293, %v2318
      %v2320 = vlaneseq
      %v2321 = vshrl.u32 %v2320, 7
      %v2322 = vsub.s32 0, %v2321
      %v2323 = vrot.slane %v2294, %v2322
      %v2324 = vlaneseq
      %v2325 = vshrl.u32 %v2324, 7
      %v2326 = vsub.s32 0, %v2325
      %v2327 = vrot.slane %v2295, %v2326
      %v2328 = vmul.f32 %v2298, %v2315
      %v2329 = vmul.f32 %v2298, %v2319
      %v2330 = vmul.f32 %v2298, %v2323
      %v2331 = vmul.f32 %v2298, %v2327
      %v2332 = vmul.f32 %v2302, %v2315
      %v2333 = vmul.f32 %v2302, %v2319
      %v2334 = vmul.f32 %v2302, %v2323
      %v2335 = vmul.f32 %v2302, %v2327
      %v2336 = vmul.f32 %v2306, %v2315
      %v2337 = vmul.f32 %v2306, %v2319
      %v2338 = vmul.f32 %v2306, %v2323
      %v2339 = vmul.f32 %v2306, %v2327
      %v2340 = vmul.f32 %v2310, %v2315
      %v2341 = vmul.f32 %v2310, %v2319
      %v2342 = vmul.f32 %v2310, %v2323
      %v2343 = vmul.f32 %v2310, %v2327
      %v2344 = vadd.f32 %v2274, %v2328
      %v2345 = vadd.f32 %v2275, %v2329
      %v2346 = vadd.f32 %v2276, %v2330
      %v2347 = vadd.f32 %v2277, %v2331
      %v2348 = vadd.f32 %v2278, %v2332
      %v2349 = vadd.f32 %v2279, %v2333
      %v2350 = vadd.f32 %v2280, %v2334
      %v2351 = vadd.f32 %v2281, %v2335
      %v2352 = vadd.f32 %v2282, %v2336
      %v2353 = vadd.f32 %v2283, %v2337
      %v2354 = vadd.f32 %v2284, %v2338
      %v2355 = vadd.f32 %v2285, %v2339
      %v2356 = vadd.f32 %v2286, %v2340
      %v2357 = vadd.f32 %v2287, %v2341
      %v2358 = vadd.f32 %v2288, %v2342
      %v2359 = vadd.f32 %v2289, %v2343
      %v2361 = vsel %vm866, %v865, 0.0
      %v2362 = vmul.f32 %v643, %v867
      %v2363 = vmul.f32 %v644, %v868
      %v2364 = vmul.f32 %v645, %v869
      %v2365 = vmul.f32 %v646, %v2361
      %2366 = vset.pattern.permute.xlu0 19
      %2367 = vperm.xlu0 %2366, %v748
      %v2368 = vpop.permute.xlu0 %2367
      %2370 = vset.pattern.permute.xlu0 19
      %2371 = vperm.xlu0 %2370, %v749
      %v2372 = vpop.permute.xlu0 %2371
      %2374 = vset.pattern.permute.xlu0 19
      %2375 = vperm.xlu0 %2374, %v750
      %v2376 = vpop.permute.xlu0 %2375
      %2378 = vset.pattern.permute.xlu0 19
      %2379 = vperm.xlu0 %2378, %v751
      %v2380 = vpop.permute.xlu0 %2379
      %v2382 = vlaneseq
      %v2383 = vshrl.u32 %v2382, 7
      %v2384 = vsub.s32 0, %v2383
      %v2385 = vrot.slane %v2362, %v2384
      %v2386 = vlaneseq
      %v2387 = vshrl.u32 %v2386, 7
      %v2388 = vsub.s32 0, %v2387
      %v2389 = vrot.slane %v2363, %v2388
      %v2390 = vlaneseq
      %v2391 = vshrl.u32 %v2390, 7
      %v2392 = vsub.s32 0, %v2391
      %v2393 = vrot.slane %v2364, %v2392
      %v2394 = vlaneseq
      %v2395 = vshrl.u32 %v2394, 7
      %v2396 = vsub.s32 0, %v2395
      %v2397 = vrot.slane %v2365, %v2396
      %v2398 = vmul.f32 %v2368, %v2385
      %v2399 = vmul.f32 %v2368, %v2389
      %v2400 = vmul.f32 %v2368, %v2393
      %v2401 = vmul.f32 %v2368, %v2397
      %v2402 = vmul.f32 %v2372, %v2385
      %v2403 = vmul.f32 %v2372, %v2389
      %v2404 = vmul.f32 %v2372, %v2393
      %v2405 = vmul.f32 %v2372, %v2397
      %v2406 = vmul.f32 %v2376, %v2385
      %v2407 = vmul.f32 %v2376, %v2389
      %v2408 = vmul.f32 %v2376, %v2393
      %v2409 = vmul.f32 %v2376, %v2397
      %v2410 = vmul.f32 %v2380, %v2385
      %v2411 = vmul.f32 %v2380, %v2389
      %v2412 = vmul.f32 %v2380, %v2393
      %v2413 = vmul.f32 %v2380, %v2397
      %v2414 = vadd.f32 %v2344, %v2398
      %v2415 = vadd.f32 %v2345, %v2399
      %v2416 = vadd.f32 %v2346, %v2400
      %v2417 = vadd.f32 %v2347, %v2401
      %v2418 = vadd.f32 %v2348, %v2402
      %v2419 = vadd.f32 %v2349, %v2403
      %v2420 = vadd.f32 %v2350, %v2404
      %v2421 = vadd.f32 %v2351, %v2405
      %v2422 = vadd.f32 %v2352, %v2406
      %v2423 = vadd.f32 %v2353, %v2407
      %v2424 = vadd.f32 %v2354, %v2408
      %v2425 = vadd.f32 %v2355, %v2409
      %v2426 = vadd.f32 %v2356, %v2410
      %v2427 = vadd.f32 %v2357, %v2411
      %v2428 = vadd.f32 %v2358, %v2412
      %v2429 = vadd.f32 %v2359, %v2413
      %v2431 = vsel %vm951, %v950, 0.0
      %v2432 = vmul.f32 %v655, %v952
      %v2433 = vmul.f32 %v656, %v953
      %v2434 = vmul.f32 %v657, %v954
      %v2435 = vmul.f32 %v658, %v2431
      %2436 = vset.pattern.permute.xlu0 20
      %2437 = vperm.xlu0 %2436, %v748
      %v2438 = vpop.permute.xlu0 %2437
      %2440 = vset.pattern.permute.xlu0 20
      %2441 = vperm.xlu0 %2440, %v749
      %v2442 = vpop.permute.xlu0 %2441
      %2444 = vset.pattern.permute.xlu0 20
      %2445 = vperm.xlu0 %2444, %v750
      %v2446 = vpop.permute.xlu0 %2445
      %2448 = vset.pattern.permute.xlu0 20
      %2449 = vperm.xlu0 %2448, %v751
      %v2450 = vpop.permute.xlu0 %2449
      %v2452 = vlaneseq
      %v2453 = vshrl.u32 %v2452, 7
      %v2454 = vsub.s32 0, %v2453
      %v2455 = vrot.slane %v2432, %v2454
      %v2456 = vlaneseq
      %v2457 = vshrl.u32 %v2456, 7
      %v2458 = vsub.s32 0, %v2457
      %v2459 = vrot.slane %v2433, %v2458
      %v2460 = vlaneseq
      %v2461 = vshrl.u32 %v2460, 7
      %v2462 = vsub.s32 0, %v2461
      %v2463 = vrot.slane %v2434, %v2462
      %v2464 = vlaneseq
      %v2465 = vshrl.u32 %v2464, 7
      %v2466 = vsub.s32 0, %v2465
      %v2467 = vrot.slane %v2435, %v2466
      %v2468 = vmul.f32 %v2438, %v2455
      %v2469 = vmul.f32 %v2438, %v2459
      %v2470 = vmul.f32 %v2438, %v2463
      %v2471 = vmul.f32 %v2438, %v2467
      %v2472 = vmul.f32 %v2442, %v2455
      %v2473 = vmul.f32 %v2442, %v2459
      %v2474 = vmul.f32 %v2442, %v2463
      %v2475 = vmul.f32 %v2442, %v2467
      %v2476 = vmul.f32 %v2446, %v2455
      %v2477 = vmul.f32 %v2446, %v2459
      %v2478 = vmul.f32 %v2446, %v2463
      %v2479 = vmul.f32 %v2446, %v2467
      %v2480 = vmul.f32 %v2450, %v2455
      %v2481 = vmul.f32 %v2450, %v2459
      %v2482 = vmul.f32 %v2450, %v2463
      %v2483 = vmul.f32 %v2450, %v2467
      %v2484 = vadd.f32 %v2414, %v2468
      %v2485 = vadd.f32 %v2415, %v2469
      %v2486 = vadd.f32 %v2416, %v2470
      %v2487 = vadd.f32 %v2417, %v2471
      %v2488 = vadd.f32 %v2418, %v2472
      %v2489 = vadd.f32 %v2419, %v2473
      %v2490 = vadd.f32 %v2420, %v2474
      %v2491 = vadd.f32 %v2421, %v2475
      %v2492 = vadd.f32 %v2422, %v2476
      %v2493 = vadd.f32 %v2423, %v2477
      %v2494 = vadd.f32 %v2424, %v2478
      %v2495 = vadd.f32 %v2425, %v2479
      %v2496 = vadd.f32 %v2426, %v2480
      %v2497 = vadd.f32 %v2427, %v2481
      %v2498 = vadd.f32 %v2428, %v2482
      %v2499 = vadd.f32 %v2429, %v2483
      %v2501 = vsel %vm1036, %v1035, 0.0
      %v2502 = vmul.f32 %v675, %v1037
      %v2503 = vmul.f32 %v676, %v1038
      %v2504 = vmul.f32 %v677, %v1039
      %v2505 = vmul.f32 %v678, %v2501
      %2506 = vset.pattern.permute.xlu0 21
      %2507 = vperm.xlu0 %2506, %v748
      %v2508 = vpop.permute.xlu0 %2507
      %2510 = vset.pattern.permute.xlu0 21
      %2511 = vperm.xlu0 %2510, %v749
      %v2512 = vpop.permute.xlu0 %2511
      %2514 = vset.pattern.permute.xlu0 21
      %2515 = vperm.xlu0 %2514, %v750
      %v2516 = vpop.permute.xlu0 %2515
      %2518 = vset.pattern.permute.xlu0 21
      %2519 = vperm.xlu0 %2518, %v751
      %v2520 = vpop.permute.xlu0 %2519
      %v2522 = vlaneseq
      %v2523 = vshrl.u32 %v2522, 7
      %v2524 = vsub.s32 0, %v2523
      %v2525 = vrot.slane %v2502, %v2524
      %v2526 = vlaneseq
      %v2527 = vshrl.u32 %v2526, 7
      %v2528 = vsub.s32 0, %v2527
      %v2529 = vrot.slane %v2503, %v2528
      %v2530 = vlaneseq
      %v2531 = vshrl.u32 %v2530, 7
      %v2532 = vsub.s32 0, %v2531
      %v2533 = vrot.slane %v2504, %v2532
      %v2534 = vlaneseq
      %v2535 = vshrl.u32 %v2534, 7
      %v2536 = vsub.s32 0, %v2535
      %v2537 = vrot.slane %v2505, %v2536
      %v2538 = vmul.f32 %v2508, %v2525
      %v2539 = vmul.f32 %v2508, %v2529
      %v2540 = vmul.f32 %v2508, %v2533
      %v2541 = vmul.f32 %v2508, %v2537
      %v2542 = vmul.f32 %v2512, %v2525
      %v2543 = vmul.f32 %v2512, %v2529
      %v2544 = vmul.f32 %v2512, %v2533
      %v2545 = vmul.f32 %v2512, %v2537
      %v2546 = vmul.f32 %v2516, %v2525
      %v2547 = vmul.f32 %v2516, %v2529
      %v2548 = vmul.f32 %v2516, %v2533
      %v2549 = vmul.f32 %v2516, %v2537
      %v2550 = vmul.f32 %v2520, %v2525
      %v2551 = vmul.f32 %v2520, %v2529
      %v2552 = vmul.f32 %v2520, %v2533
      %v2553 = vmul.f32 %v2520, %v2537
      %v2554 = vadd.f32 %v2484, %v2538
      %v2555 = vadd.f32 %v2485, %v2539
      %v2556 = vadd.f32 %v2486, %v2540
      %v2557 = vadd.f32 %v2487, %v2541
      %v2558 = vadd.f32 %v2488, %v2542
      %v2559 = vadd.f32 %v2489, %v2543
      %v2560 = vadd.f32 %v2490, %v2544
      %v2561 = vadd.f32 %v2491, %v2545
      %v2562 = vadd.f32 %v2492, %v2546
      %v2563 = vadd.f32 %v2493, %v2547
      %v2564 = vadd.f32 %v2494, %v2548
      %v2565 = vadd.f32 %v2495, %v2549
      %v2566 = vadd.f32 %v2496, %v2550
      %v2567 = vadd.f32 %v2497, %v2551
      %v2568 = vadd.f32 %v2498, %v2552
      %v2569 = vadd.f32 %v2499, %v2553
      %v2571 = vsel %vm1121, %v1120, 0.0
      %v2572 = vmul.f32 %v687, %v1122
      %v2573 = vmul.f32 %v688, %v1123
      %v2574 = vmul.f32 %v689, %v1124
      %v2575 = vmul.f32 %v690, %v2571
      %2576 = vset.pattern.permute.xlu0 22
      %2577 = vperm.xlu0 %2576, %v748
      %v2578 = vpop.permute.xlu0 %2577
      %2580 = vset.pattern.permute.xlu0 22
      %2581 = vperm.xlu0 %2580, %v749
      %v2582 = vpop.permute.xlu0 %2581
      %2584 = vset.pattern.permute.xlu0 22
      %2585 = vperm.xlu0 %2584, %v750
      %v2586 = vpop.permute.xlu0 %2585
      %2588 = vset.pattern.permute.xlu0 22
      %2589 = vperm.xlu0 %2588, %v751
      %v2590 = vpop.permute.xlu0 %2589
      %v2592 = vlaneseq
      %v2593 = vshrl.u32 %v2592, 7
      %v2594 = vsub.s32 0, %v2593
      %v2595 = vrot.slane %v2572, %v2594
      %v2596 = vlaneseq
      %v2597 = vshrl.u32 %v2596, 7
      %v2598 = vsub.s32 0, %v2597
      %v2599 = vrot.slane %v2573, %v2598
      %v2600 = vlaneseq
      %v2601 = vshrl.u32 %v2600, 7
      %v2602 = vsub.s32 0, %v2601
      %v2603 = vrot.slane %v2574, %v2602
      %v2604 = vlaneseq
      %v2605 = vshrl.u32 %v2604, 7
      %v2606 = vsub.s32 0, %v2605
      %v2607 = vrot.slane %v2575, %v2606
      %v2608 = vmul.f32 %v2578, %v2595
      %v2609 = vmul.f32 %v2578, %v2599
      %v2610 = vmul.f32 %v2578, %v2603
      %v2611 = vmul.f32 %v2578, %v2607
      %v2612 = vmul.f32 %v2582, %v2595
      %v2613 = vmul.f32 %v2582, %v2599
      %v2614 = vmul.f32 %v2582, %v2603
      %v2615 = vmul.f32 %v2582, %v2607
      %v2616 = vmul.f32 %v2586, %v2595
      %v2617 = vmul.f32 %v2586, %v2599
      %v2618 = vmul.f32 %v2586, %v2603
      %v2619 = vmul.f32 %v2586, %v2607
      %v2620 = vmul.f32 %v2590, %v2595
      %v2621 = vmul.f32 %v2590, %v2599
      %v2622 = vmul.f32 %v2590, %v2603
      %v2623 = vmul.f32 %v2590, %v2607
      %v2624 = vadd.f32 %v2554, %v2608
      %v2625 = vadd.f32 %v2555, %v2609
      %v2626 = vadd.f32 %v2556, %v2610
      %v2627 = vadd.f32 %v2557, %v2611
      %v2628 = vadd.f32 %v2558, %v2612
      %v2629 = vadd.f32 %v2559, %v2613
      %v2630 = vadd.f32 %v2560, %v2614
      %v2631 = vadd.f32 %v2561, %v2615
      %v2632 = vadd.f32 %v2562, %v2616
      %v2633 = vadd.f32 %v2563, %v2617
      %v2634 = vadd.f32 %v2564, %v2618
      %v2635 = vadd.f32 %v2565, %v2619
      %v2636 = vadd.f32 %v2566, %v2620
      %v2637 = vadd.f32 %v2567, %v2621
      %v2638 = vadd.f32 %v2568, %v2622
      %v2639 = vadd.f32 %v2569, %v2623
      %v2641 = vsel %vm1206, %v1205, 0.0
      %v2642 = vmul.f32 %v699, %v1207
      %v2643 = vmul.f32 %v700, %v1208
      %v2644 = vmul.f32 %v701, %v1209
      %v2645 = vmul.f32 %v702, %v2641
      %2646 = vset.pattern.permute.xlu0 23
      %2647 = vperm.xlu0 %2646, %v748
      %v2648 = vpop.permute.xlu0 %2647
      %2650 = vset.pattern.permute.xlu0 23
      %2651 = vperm.xlu0 %2650, %v749
      %v2652 = vpop.permute.xlu0 %2651
      %2654 = vset.pattern.permute.xlu0 23
      %2655 = vperm.xlu0 %2654, %v750
      %v2656 = vpop.permute.xlu0 %2655
      %2658 = vset.pattern.permute.xlu0 23
      %2659 = vperm.xlu0 %2658, %v751
      %v2660 = vpop.permute.xlu0 %2659
      %v2662 = vlaneseq
      %v2663 = vshrl.u32 %v2662, 7
      %v2664 = vsub.s32 0, %v2663
      %v2665 = vrot.slane %v2642, %v2664
      %v2666 = vlaneseq
      %v2667 = vshrl.u32 %v2666, 7
      %v2668 = vsub.s32 0, %v2667
      %v2669 = vrot.slane %v2643, %v2668
      %v2670 = vlaneseq
      %v2671 = vshrl.u32 %v2670, 7
      %v2672 = vsub.s32 0, %v2671
      %v2673 = vrot.slane %v2644, %v2672
      %v2674 = vlaneseq
      %v2675 = vshrl.u32 %v2674, 7
      %v2676 = vsub.s32 0, %v2675
      %v2677 = vrot.slane %v2645, %v2676
      %v2678 = vmul.f32 %v2648, %v2665
      %v2679 = vmul.f32 %v2648, %v2669
      %v2680 = vmul.f32 %v2648, %v2673
      %v2681 = vmul.f32 %v2648, %v2677
      %v2682 = vmul.f32 %v2652, %v2665
      %v2683 = vmul.f32 %v2652, %v2669
      %v2684 = vmul.f32 %v2652, %v2673
      %v2685 = vmul.f32 %v2652, %v2677
      %v2686 = vmul.f32 %v2656, %v2665
      %v2687 = vmul.f32 %v2656, %v2669
      %v2688 = vmul.f32 %v2656, %v2673
      %v2689 = vmul.f32 %v2656, %v2677
      %v2690 = vmul.f32 %v2660, %v2665
      %v2691 = vmul.f32 %v2660, %v2669
      %v2692 = vmul.f32 %v2660, %v2673
      %v2693 = vmul.f32 %v2660, %v2677
      %v2694 = vadd.f32 %v2624, %v2678
      %v2695 = vadd.f32 %v2625, %v2679
      %v2696 = vadd.f32 %v2626, %v2680
      %v2697 = vadd.f32 %v2627, %v2681
      %v2698 = vadd.f32 %v2628, %v2682
      %v2699 = vadd.f32 %v2629, %v2683
      %v2700 = vadd.f32 %v2630, %v2684
      %v2701 = vadd.f32 %v2631, %v2685
      %v2702 = vadd.f32 %v2632, %v2686
      %v2703 = vadd.f32 %v2633, %v2687
      %v2704 = vadd.f32 %v2634, %v2688
      %v2705 = vadd.f32 %v2635, %v2689
      %v2706 = vadd.f32 %v2636, %v2690
      %v2707 = vadd.f32 %v2637, %v2691
      %v2708 = vadd.f32 %v2638, %v2692
      %v2709 = vadd.f32 %v2639, %v2693
      %v2711 = vsel %vm1291, %v1290, 0.0
      %v2712 = vmul.f32 %v719, %v1292
      %v2713 = vmul.f32 %v720, %v1293
      %v2714 = vmul.f32 %v721, %v1294
      %v2715 = vmul.f32 %v722, %v2711
      %2716 = vset.pattern.permute.xlu0 24
      %2717 = vperm.xlu0 %2716, %v748
      %v2718 = vpop.permute.xlu0 %2717
      %2720 = vset.pattern.permute.xlu0 24
      %2721 = vperm.xlu0 %2720, %v749
      %v2722 = vpop.permute.xlu0 %2721
      %2724 = vset.pattern.permute.xlu0 24
      %2725 = vperm.xlu0 %2724, %v750
      %v2726 = vpop.permute.xlu0 %2725
      %2728 = vset.pattern.permute.xlu0 24
      %2729 = vperm.xlu0 %2728, %v751
      %v2730 = vpop.permute.xlu0 %2729
      %v2732 = vlaneseq
      %v2733 = vshrl.u32 %v2732, 7
      %v2734 = vsub.s32 0, %v2733
      %v2735 = vrot.slane %v2712, %v2734
      %v2736 = vlaneseq
      %v2737 = vshrl.u32 %v2736, 7
      %v2738 = vsub.s32 0, %v2737
      %v2739 = vrot.slane %v2713, %v2738
      %v2740 = vlaneseq
      %v2741 = vshrl.u32 %v2740, 7
      %v2742 = vsub.s32 0, %v2741
      %v2743 = vrot.slane %v2714, %v2742
      %v2744 = vlaneseq
      %v2745 = vshrl.u32 %v2744, 7
      %v2746 = vsub.s32 0, %v2745
      %v2747 = vrot.slane %v2715, %v2746
      %v2748 = vmul.f32 %v2718, %v2735
      %v2749 = vmul.f32 %v2718, %v2739
      %v2750 = vmul.f32 %v2718, %v2743
      %v2751 = vmul.f32 %v2718, %v2747
      %v2752 = vmul.f32 %v2722, %v2735
      %v2753 = vmul.f32 %v2722, %v2739
      %v2754 = vmul.f32 %v2722, %v2743
      %v2755 = vmul.f32 %v2722, %v2747
      %v2756 = vmul.f32 %v2726, %v2735
      %v2757 = vmul.f32 %v2726, %v2739
      %v2758 = vmul.f32 %v2726, %v2743
      %v2759 = vmul.f32 %v2726, %v2747
      %v2760 = vmul.f32 %v2730, %v2735
      %v2761 = vmul.f32 %v2730, %v2739
      %v2762 = vmul.f32 %v2730, %v2743
      %v2763 = vmul.f32 %v2730, %v2747
      %v2764 = vadd.f32 %v2694, %v2748
      %v2765 = vadd.f32 %v2695, %v2749
      %v2766 = vadd.f32 %v2696, %v2750
      %v2767 = vadd.f32 %v2697, %v2751
      %v2768 = vadd.f32 %v2698, %v2752
      %v2769 = vadd.f32 %v2699, %v2753
      %v2770 = vadd.f32 %v2700, %v2754
      %v2771 = vadd.f32 %v2701, %v2755
      %v2772 = vadd.f32 %v2702, %v2756
      %v2773 = vadd.f32 %v2703, %v2757
      %v2774 = vadd.f32 %v2704, %v2758
      %v2775 = vadd.f32 %v2705, %v2759
      %v2776 = vadd.f32 %v2706, %v2760
      %v2777 = vadd.f32 %v2707, %v2761
      %v2778 = vadd.f32 %v2708, %v2762
      %v2779 = vadd.f32 %v2709, %v2763
      %v2781 = vsel %vm1376, %v1375, 0.0
      %v2782 = vmul.f32 %v731, %v1377
      %v2783 = vmul.f32 %v732, %v1378
      %v2784 = vmul.f32 %v733, %v1379
      %v2785 = vmul.f32 %v734, %v2781
      %2786 = vset.pattern.permute.xlu0 25
      %2787 = vperm.xlu0 %2786, %v748
      %v2788 = vpop.permute.xlu0 %2787
      %2790 = vset.pattern.permute.xlu0 25
      %2791 = vperm.xlu0 %2790, %v749
      %v2792 = vpop.permute.xlu0 %2791
      %2794 = vset.pattern.permute.xlu0 25
      %2795 = vperm.xlu0 %2794, %v750
      %v2796 = vpop.permute.xlu0 %2795
      %2798 = vset.pattern.permute.xlu0 25
      %2799 = vperm.xlu0 %2798, %v751
      %v2800 = vpop.permute.xlu0 %2799
      %v2802 = vlaneseq
      %v2803 = vshrl.u32 %v2802, 7
      %v2804 = vsub.s32 0, %v2803
      %v2805 = vrot.slane %v2782, %v2804
      %v2806 = vlaneseq
      %v2807 = vshrl.u32 %v2806, 7
      %v2808 = vsub.s32 0, %v2807
      %v2809 = vrot.slane %v2783, %v2808
      %v2810 = vlaneseq
      %v2811 = vshrl.u32 %v2810, 7
      %v2812 = vsub.s32 0, %v2811
      %v2813 = vrot.slane %v2784, %v2812
      %v2814 = vlaneseq
      %v2815 = vshrl.u32 %v2814, 7
      %v2816 = vsub.s32 0, %v2815
      %v2817 = vrot.slane %v2785, %v2816
      %v2818 = vmul.f32 %v2788, %v2805
      %v2819 = vmul.f32 %v2788, %v2809
      %v2820 = vmul.f32 %v2788, %v2813
      %v2821 = vmul.f32 %v2788, %v2817
      %v2822 = vmul.f32 %v2792, %v2805
      %v2823 = vmul.f32 %v2792, %v2809
      %v2824 = vmul.f32 %v2792, %v2813
      %v2825 = vmul.f32 %v2792, %v2817
      %v2826 = vmul.f32 %v2796, %v2805
      %v2827 = vmul.f32 %v2796, %v2809
      %v2828 = vmul.f32 %v2796, %v2813
      %v2829 = vmul.f32 %v2796, %v2817
      %v2830 = vmul.f32 %v2800, %v2805
      %v2831 = vmul.f32 %v2800, %v2809
      %v2832 = vmul.f32 %v2800, %v2813
      %v2833 = vmul.f32 %v2800, %v2817
      %v2834 = vadd.f32 %v2764, %v2818
      %v2835 = vadd.f32 %v2765, %v2819
      %v2836 = vadd.f32 %v2766, %v2820
      %v2837 = vadd.f32 %v2767, %v2821
      %v2838 = vadd.f32 %v2768, %v2822
      %v2839 = vadd.f32 %v2769, %v2823
      %v2840 = vadd.f32 %v2770, %v2824
      %v2841 = vadd.f32 %v2771, %v2825
      %v2842 = vadd.f32 %v2772, %v2826
      %v2843 = vadd.f32 %v2773, %v2827
      %v2844 = vadd.f32 %v2774, %v2828
      %v2845 = vadd.f32 %v2775, %v2829
      %v2846 = vadd.f32 %v2776, %v2830
      %v2847 = vadd.f32 %v2777, %v2831
      %v2848 = vadd.f32 %v2778, %v2832
      %v2849 = vadd.f32 %v2779, %v2833
      %v2851 = vsel %vm1461, %v1460, 0.0
      %v2852 = vmul.f32 %v743, %v1462
      %v2853 = vmul.f32 %v744, %v1463
      %v2854 = vmul.f32 %v745, %v1464
      %v2855 = vmul.f32 %v746, %v2851
      %2856 = vset.pattern.permute.xlu0 26
      %2857 = vperm.xlu0 %2856, %v748
      %v2858 = vpop.permute.xlu0 %2857
      %2860 = vset.pattern.permute.xlu0 26
      %2861 = vperm.xlu0 %2860, %v749
      %v2862 = vpop.permute.xlu0 %2861
      %2864 = vset.pattern.permute.xlu0 26
      %2865 = vperm.xlu0 %2864, %v750
      %v2866 = vpop.permute.xlu0 %2865
      %2868 = vset.pattern.permute.xlu0 26
      %2869 = vperm.xlu0 %2868, %v751
      %v2870 = vpop.permute.xlu0 %2869
      %v2872 = vlaneseq
      %v2873 = vshrl.u32 %v2872, 7
      %v2874 = vsub.s32 0, %v2873
      %v2875 = vrot.slane %v2852, %v2874
      %v2876 = vlaneseq
      %v2877 = vshrl.u32 %v2876, 7
      %v2878 = vsub.s32 0, %v2877
      %v2879 = vrot.slane %v2853, %v2878
      %v2880 = vlaneseq
      %v2881 = vshrl.u32 %v2880, 7
      %v2882 = vsub.s32 0, %v2881
      %v2883 = vrot.slane %v2854, %v2882
      %v2884 = vlaneseq
      %v2885 = vshrl.u32 %v2884, 7
      %v2886 = vsub.s32 0, %v2885
      %v2887 = vrot.slane %v2855, %v2886
      %v2888 = vmul.f32 %v2858, %v2875
      %v2889 = vmul.f32 %v2858, %v2879
      %v2890 = vmul.f32 %v2858, %v2883
      %v2891 = vmul.f32 %v2858, %v2887
      %v2892 = vmul.f32 %v2862, %v2875
      %v2893 = vmul.f32 %v2862, %v2879
      %v2894 = vmul.f32 %v2862, %v2883
      %v2895 = vmul.f32 %v2862, %v2887
      %v2896 = vmul.f32 %v2866, %v2875
      %v2897 = vmul.f32 %v2866, %v2879
      %v2898 = vmul.f32 %v2866, %v2883
      %v2899 = vmul.f32 %v2866, %v2887
      %v2900 = vmul.f32 %v2870, %v2875
      %v2901 = vmul.f32 %v2870, %v2879
      %v2902 = vmul.f32 %v2870, %v2883
      %v2903 = vmul.f32 %v2870, %v2887
      %v2904 = vadd.f32 %v2834, %v2888
      %v2905 = vadd.f32 %v2835, %v2889
      %v2906 = vadd.f32 %v2836, %v2890
      %v2907 = vadd.f32 %v2837, %v2891
      %v2908 = vadd.f32 %v2838, %v2892
      %v2909 = vadd.f32 %v2839, %v2893
      %v2910 = vadd.f32 %v2840, %v2894
      %v2911 = vadd.f32 %v2841, %v2895
      %v2912 = vadd.f32 %v2842, %v2896
      %v2913 = vadd.f32 %v2843, %v2897
      %v2914 = vadd.f32 %v2844, %v2898
      %v2915 = vadd.f32 %v2845, %v2899
      %v2916 = vadd.f32 %v2846, %v2900
      %v2917 = vadd.f32 %v2847, %v2901
      %v2918 = vadd.f32 %v2848, %v2902
      %v2919 = vadd.f32 %v2849, %v2903
      %v2920 = vld [vmem:[%s2] sm:$0xff]
      %v2921 = vld [vmem:[%s2 + $0x8] sm:$0xff]
      %v2922 = vld [vmem:[%s2 + $0x10] sm:$0xff]
      %v2923 = vld [vmem:[%s2 + $0x18] sm:$0xff]
      %2925 = vset.pattern.permute.xlu0 0
      %2926 = vperm.xlu0 %2925, %v2920
      %v2927 = vpop.permute.xlu0 %2926
      %2930 = vset.pattern.permute.xlu0 0
      %2931 = vperm.xlu0 %2930, %v2921
      %v2932 = vpop.permute.xlu0 %2931
      %2935 = vset.pattern.permute.xlu0 0
      %2936 = vperm.xlu0 %2935, %v2922
      %v2937 = vpop.permute.xlu0 %2936
      %2940 = vset.pattern.permute.xlu0 0
      %2941 = vperm.xlu0 %2940, %v2923
      %v2942 = vpop.permute.xlu0 %2941
      %v2944 = vadd.f32 %v2904, %v2927
      %v2945 = vadd.f32 %v2905, %v2927
      %v2946 = vadd.f32 %v2906, %v2927
      %v2947 = vadd.f32 %v2907, %v2927
      %v2948 = vadd.f32 %v2908, %v2932
      %v2949 = vadd.f32 %v2909, %v2932
      %v2950 = vadd.f32 %v2910, %v2932
      %v2951 = vadd.f32 %v2911, %v2932
      %v2952 = vadd.f32 %v2912, %v2937
      %v2953 = vadd.f32 %v2913, %v2937
      %v2954 = vadd.f32 %v2914, %v2937
      %v2955 = vadd.f32 %v2915, %v2937
      %v2956 = vadd.f32 %v2916, %v2942
      %v2957 = vadd.f32 %v2917, %v2942
      %v2958 = vadd.f32 %v2918, %v2942
      %v2959 = vadd.f32 %v2919, %v2942
      %vm2960 = vcmp.ge.f32.partialorder %v2944, 0.0
      %vm2961 = vcmp.ge.f32.partialorder %v2945, 0.0
      %vm2962 = vcmp.ge.f32.partialorder %v2946, 0.0
      %vm2963 = vcmp.ge.f32.partialorder %v2947, 0.0
      %vm2964 = vcmp.ge.f32.partialorder %v2948, 0.0
      %vm2965 = vcmp.ge.f32.partialorder %v2949, 0.0
      %vm2966 = vcmp.ge.f32.partialorder %v2950, 0.0
      %vm2967 = vcmp.ge.f32.partialorder %v2951, 0.0
      %vm2968 = vcmp.ge.f32.partialorder %v2952, 0.0
      %vm2969 = vcmp.ge.f32.partialorder %v2953, 0.0
      %vm2970 = vcmp.ge.f32.partialorder %v2954, 0.0
      %vm2971 = vcmp.ge.f32.partialorder %v2955, 0.0
      %vm2972 = vcmp.ge.f32.partialorder %v2956, 0.0
      %vm2973 = vcmp.ge.f32.partialorder %v2957, 0.0
      %vm2974 = vcmp.ge.f32.partialorder %v2958, 0.0
      %vm2975 = vcmp.ge.f32.partialorder %v2959, 0.0
      %v2976 = vmul.f32 %v2944, 0.0001
      %v2977 = vmul.f32 %v2945, 0.0001
      %v2978 = vmul.f32 %v2946, 0.0001
      %v2979 = vmul.f32 %v2947, 0.0001
      %v2980 = vmul.f32 %v2948, 0.0001
      %v2981 = vmul.f32 %v2949, 0.0001
      %v2982 = vmul.f32 %v2950, 0.0001
      %v2983 = vmul.f32 %v2951, 0.0001
      %v2984 = vmul.f32 %v2952, 0.0001
      %v2985 = vmul.f32 %v2953, 0.0001
      %v2986 = vmul.f32 %v2954, 0.0001
      %v2987 = vmul.f32 %v2955, 0.0001
      %v2988 = vmul.f32 %v2956, 0.0001
      %v2989 = vmul.f32 %v2957, 0.0001
      %v2990 = vmul.f32 %v2958, 0.0001
      %v2991 = vmul.f32 %v2959, 0.0001
      %v2992 = vsel %vm2960, %v2944, %v2976
      %v2993 = vsel %vm2961, %v2945, %v2977
      %v2994 = vsel %vm2962, %v2946, %v2978
      %v2995 = vsel %vm2963, %v2947, %v2979
      %v2996 = vsel %vm2964, %v2948, %v2980
      %v2997 = vsel %vm2965, %v2949, %v2981
      %v2998 = vsel %vm2966, %v2950, %v2982
      %v2999 = vsel %vm2967, %v2951, %v2983
      %v3000 = vsel %vm2968, %v2952, %v2984
      %v3001 = vsel %vm2969, %v2953, %v2985
      %v3002 = vsel %vm2970, %v2954, %v2986
      %v3003 = vsel %vm2971, %v2955, %v2987
      %v3004 = vsel %vm2972, %v2956, %v2988
      %v3005 = vsel %vm2973, %v2957, %v2989
      %v3006 = vsel %vm2974, %v2958, %v2990
      %v3007 = vsel %vm2975, %v2959, %v2991
      %3024 = vrot.lane.b32.xlu0 %v2992, 73
      %v3025 = vpop.permute.xlu0 %3024
      %3026 = vrot.lane.b32.xlu0 %v2993, 73
      %v3027 = vpop.permute.xlu0 %3026
      %3028 = vrot.lane.b32.xlu0 %v2994, 73
      %v3029 = vpop.permute.xlu0 %3028
      %3030 = vrot.lane.b32.xlu0 %v2995, 73
      %v3031 = vpop.permute.xlu0 %3030
      %3032 = vrot.lane.b32.xlu0 %v2996, 73
      %v3033 = vpop.permute.xlu0 %3032
      %3034 = vrot.lane.b32.xlu0 %v2997, 73
      %v3035 = vpop.permute.xlu0 %3034
      %3036 = vrot.lane.b32.xlu0 %v2998, 73
      %v3037 = vpop.permute.xlu0 %3036
      %3038 = vrot.lane.b32.xlu0 %v2999, 73
      %v3039 = vpop.permute.xlu0 %3038
      %3040 = vrot.lane.b32.xlu0 %v3000, 73
      %v3041 = vpop.permute.xlu0 %3040
      %3042 = vrot.lane.b32.xlu0 %v3001, 73
      %v3043 = vpop.permute.xlu0 %3042
      %3044 = vrot.lane.b32.xlu0 %v3002, 73
      %v3045 = vpop.permute.xlu0 %3044
      %3046 = vrot.lane.b32.xlu0 %v3003, 73
      %v3047 = vpop.permute.xlu0 %3046
      %3048 = vrot.lane.b32.xlu0 %v3004, 73
      %v3049 = vpop.permute.xlu0 %3048
      %3050 = vrot.lane.b32.xlu0 %v3005, 73
      %v3051 = vpop.permute.xlu0 %3050
      %3052 = vrot.lane.b32.xlu0 %v3006, 73
      %v3053 = vpop.permute.xlu0 %3052
      %3054 = vrot.lane.b32.xlu0 %v3007, 73
      %v3055 = vpop.permute.xlu0 %3054
      %v3056 = vsel %vm777, %v3025, %v3027
      %v3057 = vsel %vm777, %v3027, %v3029
      %v3058 = vsel %vm777, %v3029, %v3031
      %v3059 = vsel %vm777, %v3033, %v3035
      %v3060 = vsel %vm777, %v3035, %v3037
      %v3061 = vsel %vm777, %v3037, %v3039
      %v3062 = vsel %vm777, %v3041, %v3043
      %v3063 = vsel %vm777, %v3043, %v3045
      %v3064 = vsel %vm777, %v3045, %v3047
      %v3065 = vsel %vm777, %v3049, %v3051
      %v3066 = vsel %vm777, %v3051, %v3053
      %v3067 = vsel %vm777, %v3053, %v3055
      %v3084 = vsel %vm777, 0.0, %v3025
      %v3085 = vsel %vm777, 0.0, %v3033
      %v3086 = vsel %vm777, 0.0, %v3041
      %v3087 = vsel %vm777, 0.0, %v3049
      %v3088 = vmul.f32 %v299, %v3084
      %v3089 = vmul.f32 %v300, %v3056
      %v3090 = vmul.f32 %v301, %v3057
      %v3091 = vmul.f32 %v302, %v3058
      %v3092 = vmul.f32 %v299, %v3085
      %v3093 = vmul.f32 %v300, %v3059
      %v3094 = vmul.f32 %v301, %v3060
      %v3095 = vmul.f32 %v302, %v3061
      %v3096 = vmul.f32 %v299, %v3086
      %v3097 = vmul.f32 %v300, %v3062
      %v3098 = vmul.f32 %v301, %v3063
      %v3099 = vmul.f32 %v302, %v3064
      %v3100 = vmul.f32 %v299, %v3087
      %v3101 = vmul.f32 %v300, %v3065
      %v3102 = vmul.f32 %v301, %v3066
      %v3103 = vmul.f32 %v302, %v3067
      %3104 = vrot.lane.b32.xlu0 %v2992, 72
      %v3105 = vpop.permute.xlu0 %3104
      %3106 = vrot.lane.b32.xlu0 %v2993, 72
      %v3107 = vpop.permute.xlu0 %3106
      %3108 = vrot.lane.b32.xlu0 %v2994, 72
      %v3109 = vpop.permute.xlu0 %3108
      %3110 = vrot.lane.b32.xlu0 %v2995, 72
      %v3111 = vpop.permute.xlu0 %3110
      %3112 = vrot.lane.b32.xlu0 %v2996, 72
      %v3113 = vpop.permute.xlu0 %3112
      %3114 = vrot.lane.b32.xlu0 %v2997, 72
      %v3115 = vpop.permute.xlu0 %3114
      %3116 = vrot.lane.b32.xlu0 %v2998, 72
      %v3117 = vpop.permute.xlu0 %3116
      %3118 = vrot.lane.b32.xlu0 %v2999, 72
      %v3119 = vpop.permute.xlu0 %3118
      %3120 = vrot.lane.b32.xlu0 %v3000, 72
      %v3121 = vpop.permute.xlu0 %3120
      %3122 = vrot.lane.b32.xlu0 %v3001, 72
      %v3123 = vpop.permute.xlu0 %3122
      %3124 = vrot.lane.b32.xlu0 %v3002, 72
      %v3125 = vpop.permute.xlu0 %3124
      %3126 = vrot.lane.b32.xlu0 %v3003, 72
      %v3127 = vpop.permute.xlu0 %3126
      %3128 = vrot.lane.b32.xlu0 %v3004, 72
      %v3129 = vpop.permute.xlu0 %3128
      %3130 = vrot.lane.b32.xlu0 %v3005, 72
      %v3131 = vpop.permute.xlu0 %3130
      %3132 = vrot.lane.b32.xlu0 %v3006, 72
      %v3133 = vpop.permute.xlu0 %3132
      %3134 = vrot.lane.b32.xlu0 %v3007, 72
      %v3135 = vpop.permute.xlu0 %3134
      %v3136 = vsel %vm866, %v3105, %v3107
      %v3137 = vsel %vm866, %v3107, %v3109
      %v3138 = vsel %vm866, %v3109, %v3111
      %v3139 = vsel %vm866, %v3113, %v3115
      %v3140 = vsel %vm866, %v3115, %v3117
      %v3141 = vsel %vm866, %v3117, %v3119
      %v3142 = vsel %vm866, %v3121, %v3123
      %v3143 = vsel %vm866, %v3123, %v3125
      %v3144 = vsel %vm866, %v3125, %v3127
      %v3145 = vsel %vm866, %v3129, %v3131
      %v3146 = vsel %vm866, %v3131, %v3133
      %v3147 = vsel %vm866, %v3133, %v3135
      %v3164 = vsel %vm866, 0.0, %v3105
      %v3165 = vsel %vm866, 0.0, %v3113
      %v3166 = vsel %vm866, 0.0, %v3121
      %v3167 = vsel %vm866, 0.0, %v3129
      %v3168 = vmul.f32 %v319, %v3164
      %v3169 = vmul.f32 %v320, %v3136
      %v3170 = vmul.f32 %v321, %v3137
      %v3171 = vmul.f32 %v322, %v3138
      %v3172 = vmul.f32 %v319, %v3165
      %v3173 = vmul.f32 %v320, %v3139
      %v3174 = vmul.f32 %v321, %v3140
      %v3175 = vmul.f32 %v322, %v3141
      %v3176 = vmul.f32 %v319, %v3166
      %v3177 = vmul.f32 %v320, %v3142
      %v3178 = vmul.f32 %v321, %v3143
      %v3179 = vmul.f32 %v322, %v3144
      %v3180 = vmul.f32 %v319, %v3167
      %v3181 = vmul.f32 %v320, %v3145
      %v3182 = vmul.f32 %v321, %v3146
      %v3183 = vmul.f32 %v322, %v3147
      %3184 = vrot.lane.b32.xlu0 %v2992, 71
      %v3185 = vpop.permute.xlu0 %3184
      %3186 = vrot.lane.b32.xlu0 %v2993, 71
      %v3187 = vpop.permute.xlu0 %3186
      %3188 = vrot.lane.b32.xlu0 %v2994, 71
      %v3189 = vpop.permute.xlu0 %3188
      %3190 = vrot.lane.b32.xlu0 %v2995, 71
      %v3191 = vpop.permute.xlu0 %3190
      %3192 = vrot.lane.b32.xlu0 %v2996, 71
      %v3193 = vpop.permute.xlu0 %3192
      %3194 = vrot.lane.b32.xlu0 %v2997, 71
      %v3195 = vpop.permute.xlu0 %3194
      %3196 = vrot.lane.b32.xlu0 %v2998, 71
      %v3197 = vpop.permute.xlu0 %3196
      %3198 = vrot.lane.b32.xlu0 %v2999, 71
      %v3199 = vpop.permute.xlu0 %3198
      %3200 = vrot.lane.b32.xlu0 %v3000, 71
      %v3201 = vpop.permute.xlu0 %3200
      %3202 = vrot.lane.b32.xlu0 %v3001, 71
      %v3203 = vpop.permute.xlu0 %3202
      %3204 = vrot.lane.b32.xlu0 %v3002, 71
      %v3205 = vpop.permute.xlu0 %3204
      %3206 = vrot.lane.b32.xlu0 %v3003, 71
      %v3207 = vpop.permute.xlu0 %3206
      %3208 = vrot.lane.b32.xlu0 %v3004, 71
      %v3209 = vpop.permute.xlu0 %3208
      %3210 = vrot.lane.b32.xlu0 %v3005, 71
      %v3211 = vpop.permute.xlu0 %3210
      %3212 = vrot.lane.b32.xlu0 %v3006, 71
      %v3213 = vpop.permute.xlu0 %3212
      %3214 = vrot.lane.b32.xlu0 %v3007, 71
      %v3215 = vpop.permute.xlu0 %3214
      %v3216 = vsel %vm951, %v3185, %v3187
      %v3217 = vsel %vm951, %v3187, %v3189
      %v3218 = vsel %vm951, %v3189, %v3191
      %v3219 = vsel %vm951, %v3193, %v3195
      %v3220 = vsel %vm951, %v3195, %v3197
      %v3221 = vsel %vm951, %v3197, %v3199
      %v3222 = vsel %vm951, %v3201, %v3203
      %v3223 = vsel %vm951, %v3203, %v3205
      %v3224 = vsel %vm951, %v3205, %v3207
      %v3225 = vsel %vm951, %v3209, %v3211
      %v3226 = vsel %vm951, %v3211, %v3213
      %v3227 = vsel %vm951, %v3213, %v3215
      %v3244 = vsel %vm951, 0.0, %v3185
      %v3245 = vsel %vm951, 0.0, %v3193
      %v3246 = vsel %vm951, 0.0, %v3201
      %v3247 = vsel %vm951, 0.0, %v3209
      %v3248 = vmul.f32 %v343, %v3244
      %v3249 = vmul.f32 %v344, %v3216
      %v3250 = vmul.f32 %v345, %v3217
      %v3251 = vmul.f32 %v346, %v3218
      %v3252 = vmul.f32 %v343, %v3245
      %v3253 = vmul.f32 %v344, %v3219
      %v3254 = vmul.f32 %v345, %v3220
      %v3255 = vmul.f32 %v346, %v3221
      %v3256 = vmul.f32 %v343, %v3246
      %v3257 = vmul.f32 %v344, %v3222
      %v3258 = vmul.f32 %v345, %v3223
      %v3259 = vmul.f32 %v346, %v3224
      %v3260 = vmul.f32 %v343, %v3247
      %v3261 = vmul.f32 %v344, %v3225
      %v3262 = vmul.f32 %v345, %v3226
      %v3263 = vmul.f32 %v346, %v3227
      %3264 = vrot.lane.b32.xlu0 %v2992, 65
      %v3265 = vpop.permute.xlu0 %3264
      %3266 = vrot.lane.b32.xlu0 %v2993, 65
      %v3267 = vpop.permute.xlu0 %3266
      %3268 = vrot.lane.b32.xlu0 %v2994, 65
      %v3269 = vpop.permute.xlu0 %3268
      %3270 = vrot.lane.b32.xlu0 %v2995, 65
      %v3271 = vpop.permute.xlu0 %3270
      %3272 = vrot.lane.b32.xlu0 %v2996, 65
      %v3273 = vpop.permute.xlu0 %3272
      %3274 = vrot.lane.b32.xlu0 %v2997, 65
      %v3275 = vpop.permute.xlu0 %3274
      %3276 = vrot.lane.b32.xlu0 %v2998, 65
      %v3277 = vpop.permute.xlu0 %3276
      %3278 = vrot.lane.b32.xlu0 %v2999, 65
      %v3279 = vpop.permute.xlu0 %3278
      %3280 = vrot.lane.b32.xlu0 %v3000, 65
      %v3281 = vpop.permute.xlu0 %3280
      %3282 = vrot.lane.b32.xlu0 %v3001, 65
      %v3283 = vpop.permute.xlu0 %3282
      %3284 = vrot.lane.b32.xlu0 %v3002, 65
      %v3285 = vpop.permute.xlu0 %3284
      %3286 = vrot.lane.b32.xlu0 %v3003, 65
      %v3287 = vpop.permute.xlu0 %3286
      %3288 = vrot.lane.b32.xlu0 %v3004, 65
      %v3289 = vpop.permute.xlu0 %3288
      %3290 = vrot.lane.b32.xlu0 %v3005, 65
      %v3291 = vpop.permute.xlu0 %3290
      %3292 = vrot.lane.b32.xlu0 %v3006, 65
      %v3293 = vpop.permute.xlu0 %3292
      %3294 = vrot.lane.b32.xlu0 %v3007, 65
      %v3295 = vpop.permute.xlu0 %3294
      %v3296 = vsel %vm1036, %v3265, %v3267
      %v3297 = vsel %vm1036, %v3267, %v3269
      %v3298 = vsel %vm1036, %v3269, %v3271
      %v3299 = vsel %vm1036, %v3273, %v3275
      %v3300 = vsel %vm1036, %v3275, %v3277
      %v3301 = vsel %vm1036, %v3277, %v3279
      %v3302 = vsel %vm1036, %v3281, %v3283
      %v3303 = vsel %vm1036, %v3283, %v3285
      %v3304 = vsel %vm1036, %v3285, %v3287
      %v3305 = vsel %vm1036, %v3289, %v3291
      %v3306 = vsel %vm1036, %v3291, %v3293
      %v3307 = vsel %vm1036, %v3293, %v3295
      %v3324 = vsel %vm1036, 0.0, %v3265
      %v3325 = vsel %vm1036, 0.0, %v3273
      %v3326 = vsel %vm1036, 0.0, %v3281
      %v3327 = vsel %vm1036, 0.0, %v3289
      %v3328 = vmul.f32 %v371, %v3324
      %v3329 = vmul.f32 %v372, %v3296
      %v3330 = vmul.f32 %v373, %v3297
      %v3331 = vmul.f32 %v374, %v3298
      %v3332 = vmul.f32 %v371, %v3325
      %v3333 = vmul.f32 %v372, %v3299
      %v3334 = vmul.f32 %v373, %v3300
      %v3335 = vmul.f32 %v374, %v3301
      %v3336 = vmul.f32 %v371, %v3326
      %v3337 = vmul.f32 %v372, %v3302
      %v3338 = vmul.f32 %v373, %v3303
      %v3339 = vmul.f32 %v374, %v3304
      %v3340 = vmul.f32 %v371, %v3327
      %v3341 = vmul.f32 %v372, %v3305
      %v3342 = vmul.f32 %v373, %v3306
      %v3343 = vmul.f32 %v374, %v3307
      %3344 = vrot.lane.b32.xlu0 %v2992, 64
      %v3345 = vpop.permute.xlu0 %3344
      %3346 = vrot.lane.b32.xlu0 %v2993, 64
      %v3347 = vpop.permute.xlu0 %3346
      %3348 = vrot.lane.b32.xlu0 %v2994, 64
      %v3349 = vpop.permute.xlu0 %3348
      %3350 = vrot.lane.b32.xlu0 %v2995, 64
      %v3351 = vpop.permute.xlu0 %3350
      %3352 = vrot.lane.b32.xlu0 %v2996, 64
      %v3353 = vpop.permute.xlu0 %3352
      %3354 = vrot.lane.b32.xlu0 %v2997, 64
      %v3355 = vpop.permute.xlu0 %3354
      %3356 = vrot.lane.b32.xlu0 %v2998, 64
      %v3357 = vpop.permute.xlu0 %3356
      %3358 = vrot.lane.b32.xlu0 %v2999, 64
      %v3359 = vpop.permute.xlu0 %3358
      %3360 = vrot.lane.b32.xlu0 %v3000, 64
      %v3361 = vpop.permute.xlu0 %3360
      %3362 = vrot.lane.b32.xlu0 %v3001, 64
      %v3363 = vpop.permute.xlu0 %3362
      %3364 = vrot.lane.b32.xlu0 %v3002, 64
      %v3365 = vpop.permute.xlu0 %3364
      %3366 = vrot.lane.b32.xlu0 %v3003, 64
      %v3367 = vpop.permute.xlu0 %3366
      %3368 = vrot.lane.b32.xlu0 %v3004, 64
      %v3369 = vpop.permute.xlu0 %3368
      %3370 = vrot.lane.b32.xlu0 %v3005, 64
      %v3371 = vpop.permute.xlu0 %3370
      %3372 = vrot.lane.b32.xlu0 %v3006, 64
      %v3373 = vpop.permute.xlu0 %3372
      %3374 = vrot.lane.b32.xlu0 %v3007, 64
      %v3375 = vpop.permute.xlu0 %3374
      %v3376 = vsel %vm1121, %v3345, %v3347
      %v3377 = vsel %vm1121, %v3347, %v3349
      %v3378 = vsel %vm1121, %v3349, %v3351
      %v3379 = vsel %vm1121, %v3353, %v3355
      %v3380 = vsel %vm1121, %v3355, %v3357
      %v3381 = vsel %vm1121, %v3357, %v3359
      %v3382 = vsel %vm1121, %v3361, %v3363
      %v3383 = vsel %vm1121, %v3363, %v3365
      %v3384 = vsel %vm1121, %v3365, %v3367
      %v3385 = vsel %vm1121, %v3369, %v3371
      %v3386 = vsel %vm1121, %v3371, %v3373
      %v3387 = vsel %vm1121, %v3373, %v3375
      %v3404 = vsel %vm1121, 0.0, %v3345
      %v3405 = vsel %vm1121, 0.0, %v3353
      %v3406 = vsel %vm1121, 0.0, %v3361
      %v3407 = vsel %vm1121, 0.0, %v3369
      %v3408 = vmul.f32 %v383, %v3404
      %v3409 = vmul.f32 %v384, %v3376
      %v3410 = vmul.f32 %v385, %v3377
      %v3411 = vmul.f32 %v386, %v3378
      %v3412 = vmul.f32 %v383, %v3405
      %v3413 = vmul.f32 %v384, %v3379
      %v3414 = vmul.f32 %v385, %v3380
      %v3415 = vmul.f32 %v386, %v3381
      %v3416 = vmul.f32 %v383, %v3406
      %v3417 = vmul.f32 %v384, %v3382
      %v3418 = vmul.f32 %v385, %v3383
      %v3419 = vmul.f32 %v386, %v3384
      %v3420 = vmul.f32 %v383, %v3407
      %v3421 = vmul.f32 %v384, %v3385
      %v3422 = vmul.f32 %v385, %v3386
      %v3423 = vmul.f32 %v386, %v3387
      %3424 = vrot.lane.b32.xlu0 %v2992, 63
      %v3425 = vpop.permute.xlu0 %3424
      %3426 = vrot.lane.b32.xlu0 %v2993, 63
      %v3427 = vpop.permute.xlu0 %3426
      %3428 = vrot.lane.b32.xlu0 %v2994, 63
      %v3429 = vpop.permute.xlu0 %3428
      %3430 = vrot.lane.b32.xlu0 %v2995, 63
      %v3431 = vpop.permute.xlu0 %3430
      %3432 = vrot.lane.b32.xlu0 %v2996, 63
      %v3433 = vpop.permute.xlu0 %3432
      %3434 = vrot.lane.b32.xlu0 %v2997, 63
      %v3435 = vpop.permute.xlu0 %3434
      %3436 = vrot.lane.b32.xlu0 %v2998, 63
      %v3437 = vpop.permute.xlu0 %3436
      %3438 = vrot.lane.b32.xlu0 %v2999, 63
      %v3439 = vpop.permute.xlu0 %3438
      %3440 = vrot.lane.b32.xlu0 %v3000, 63
      %v3441 = vpop.permute.xlu0 %3440
      %3442 = vrot.lane.b32.xlu0 %v3001, 63
      %v3443 = vpop.permute.xlu0 %3442
      %3444 = vrot.lane.b32.xlu0 %v3002, 63
      %v3445 = vpop.permute.xlu0 %3444
      %3446 = vrot.lane.b32.xlu0 %v3003, 63
      %v3447 = vpop.permute.xlu0 %3446
      %3448 = vrot.lane.b32.xlu0 %v3004, 63
      %v3449 = vpop.permute.xlu0 %3448
      %3450 = vrot.lane.b32.xlu0 %v3005, 63
      %v3451 = vpop.permute.xlu0 %3450
      %3452 = vrot.lane.b32.xlu0 %v3006, 63
      %v3453 = vpop.permute.xlu0 %3452
      %3454 = vrot.lane.b32.xlu0 %v3007, 63
      %v3455 = vpop.permute.xlu0 %3454
      %v3456 = vsel %vm1206, %v3425, %v3427
      %v3457 = vsel %vm1206, %v3427, %v3429
      %v3458 = vsel %vm1206, %v3429, %v3431
      %v3459 = vsel %vm1206, %v3433, %v3435
      %v3460 = vsel %vm1206, %v3435, %v3437
      %v3461 = vsel %vm1206, %v3437, %v3439
      %v3462 = vsel %vm1206, %v3441, %v3443
      %v3463 = vsel %vm1206, %v3443, %v3445
      %v3464 = vsel %vm1206, %v3445, %v3447
      %v3465 = vsel %vm1206, %v3449, %v3451
      %v3466 = vsel %vm1206, %v3451, %v3453
      %v3467 = vsel %vm1206, %v3453, %v3455
      %v3484 = vsel %vm1206, 0.0, %v3425
      %v3485 = vsel %vm1206, 0.0, %v3433
      %v3486 = vsel %vm1206, 0.0, %v3441
      %v3487 = vsel %vm1206, 0.0, %v3449
      %v3488 = vmul.f32 %v395, %v3484
      %v3489 = vmul.f32 %v396, %v3456
      %v3490 = vmul.f32 %v397, %v3457
      %v3491 = vmul.f32 %v398, %v3458
      %v3492 = vmul.f32 %v395, %v3485
      %v3493 = vmul.f32 %v396, %v3459
      %v3494 = vmul.f32 %v397, %v3460
      %v3495 = vmul.f32 %v398, %v3461
      %v3496 = vmul.f32 %v395, %v3486
      %v3497 = vmul.f32 %v396, %v3462
      %v3498 = vmul.f32 %v397, %v3463
      %v3499 = vmul.f32 %v398, %v3464
      %v3500 = vmul.f32 %v395, %v3487
      %v3501 = vmul.f32 %v396, %v3465
      %v3502 = vmul.f32 %v397, %v3466
      %v3503 = vmul.f32 %v398, %v3467
      %3504 = vrot.lane.b32.xlu0 %v2992, 57
      %v3505 = vpop.permute.xlu0 %3504
      %3506 = vrot.lane.b32.xlu0 %v2993, 57
      %v3507 = vpop.permute.xlu0 %3506
      %3508 = vrot.lane.b32.xlu0 %v2994, 57
      %v3509 = vpop.permute.xlu0 %3508
      %3510 = vrot.lane.b32.xlu0 %v2995, 57
      %v3511 = vpop.permute.xlu0 %3510
      %3512 = vrot.lane.b32.xlu0 %v2996, 57
      %v3513 = vpop.permute.xlu0 %3512
      %3514 = vrot.lane.b32.xlu0 %v2997, 57
      %v3515 = vpop.permute.xlu0 %3514
      %3516 = vrot.lane.b32.xlu0 %v2998, 57
      %v3517 = vpop.permute.xlu0 %3516
      %3518 = vrot.lane.b32.xlu0 %v2999, 57
      %v3519 = vpop.permute.xlu0 %3518
      %3520 = vrot.lane.b32.xlu0 %v3000, 57
      %v3521 = vpop.permute.xlu0 %3520
      %3522 = vrot.lane.b32.xlu0 %v3001, 57
      %v3523 = vpop.permute.xlu0 %3522
      %3524 = vrot.lane.b32.xlu0 %v3002, 57
      %v3525 = vpop.permute.xlu0 %3524
      %3526 = vrot.lane.b32.xlu0 %v3003, 57
      %v3527 = vpop.permute.xlu0 %3526
      %3528 = vrot.lane.b32.xlu0 %v3004, 57
      %v3529 = vpop.permute.xlu0 %3528
      %3530 = vrot.lane.b32.xlu0 %v3005, 57
      %v3531 = vpop.permute.xlu0 %3530
      %3532 = vrot.lane.b32.xlu0 %v3006, 57
      %v3533 = vpop.permute.xlu0 %3532
      %3534 = vrot.lane.b32.xlu0 %v3007, 57
      %v3535 = vpop.permute.xlu0 %3534
      %v3536 = vsel %vm1291, %v3505, %v3507
      %v3537 = vsel %vm1291, %v3507, %v3509
      %v3538 = vsel %vm1291, %v3509, %v3511
      %v3539 = vsel %vm1291, %v3513, %v3515
      %v3540 = vsel %vm1291, %v3515, %v3517
      %v3541 = vsel %vm1291, %v3517, %v3519
      %v3542 = vsel %vm1291, %v3521, %v3523
      %v3543 = vsel %vm1291, %v3523, %v3525
      %v3544 = vsel %vm1291, %v3525, %v3527
      %v3545 = vsel %vm1291, %v3529, %v3531
      %v3546 = vsel %vm1291, %v3531, %v3533
      %v3547 = vsel %vm1291, %v3533, %v3535
      %v3564 = vsel %vm1291, 0.0, %v3505
      %v3565 = vsel %vm1291, 0.0, %v3513
      %v3566 = vsel %vm1291, 0.0, %v3521
      %v3567 = vsel %vm1291, 0.0, %v3529
      %v3568 = vmul.f32 %v427, %v3564
      %v3569 = vmul.f32 %v428, %v3536
      %v3570 = vmul.f32 %v429, %v3537
      %v3571 = vmul.f32 %v430, %v3538
      %v3572 = vmul.f32 %v427, %v3565
      %v3573 = vmul.f32 %v428, %v3539
      %v3574 = vmul.f32 %v429, %v3540
      %v3575 = vmul.f32 %v430, %v3541
      %v3576 = vmul.f32 %v427, %v3566
      %v3577 = vmul.f32 %v428, %v3542
      %v3578 = vmul.f32 %v429, %v3543
      %v3579 = vmul.f32 %v430, %v3544
      %v3580 = vmul.f32 %v427, %v3567
      %v3581 = vmul.f32 %v428, %v3545
      %v3582 = vmul.f32 %v429, %v3546
      %v3583 = vmul.f32 %v430, %v3547
      %3584 = vrot.lane.b32.xlu0 %v2992, 56
      %v3585 = vpop.permute.xlu0 %3584
      %3586 = vrot.lane.b32.xlu0 %v2993, 56
      %v3587 = vpop.permute.xlu0 %3586
      %3588 = vrot.lane.b32.xlu0 %v2994, 56
      %v3589 = vpop.permute.xlu0 %3588
      %3590 = vrot.lane.b32.xlu0 %v2995, 56
      %v3591 = vpop.permute.xlu0 %3590
      %3592 = vrot.lane.b32.xlu0 %v2996, 56
      %v3593 = vpop.permute.xlu0 %3592
      %3594 = vrot.lane.b32.xlu0 %v2997, 56
      %v3595 = vpop.permute.xlu0 %3594
      %3596 = vrot.lane.b32.xlu0 %v2998, 56
      %v3597 = vpop.permute.xlu0 %3596
      %3598 = vrot.lane.b32.xlu0 %v2999, 56
      %v3599 = vpop.permute.xlu0 %3598
      %3600 = vrot.lane.b32.xlu0 %v3000, 56
      %v3601 = vpop.permute.xlu0 %3600
      %3602 = vrot.lane.b32.xlu0 %v3001, 56
      %v3603 = vpop.permute.xlu0 %3602
      %3604 = vrot.lane.b32.xlu0 %v3002, 56
      %v3605 = vpop.permute.xlu0 %3604
      %3606 = vrot.lane.b32.xlu0 %v3003, 56
      %v3607 = vpop.permute.xlu0 %3606
      %3608 = vrot.lane.b32.xlu0 %v3004, 56
      %v3609 = vpop.permute.xlu0 %3608
      %3610 = vrot.lane.b32.xlu0 %v3005, 56
      %v3611 = vpop.permute.xlu0 %3610
      %3612 = vrot.lane.b32.xlu0 %v3006, 56
      %v3613 = vpop.permute.xlu0 %3612
      %3614 = vrot.lane.b32.xlu0 %v3007, 56
      %v3615 = vpop.permute.xlu0 %3614
      %v3616 = vsel %vm1376, %v3585, %v3587
      %v3617 = vsel %vm1376, %v3587, %v3589
      %v3618 = vsel %vm1376, %v3589, %v3591
      %v3619 = vsel %vm1376, %v3593, %v3595
      %v3620 = vsel %vm1376, %v3595, %v3597
      %v3621 = vsel %vm1376, %v3597, %v3599
      %v3622 = vsel %vm1376, %v3601, %v3603
      %v3623 = vsel %vm1376, %v3603, %v3605
      %v3624 = vsel %vm1376, %v3605, %v3607
      %v3625 = vsel %vm1376, %v3609, %v3611
      %v3626 = vsel %vm1376, %v3611, %v3613
      %v3627 = vsel %vm1376, %v3613, %v3615
      %v3644 = vsel %vm1376, 0.0, %v3585
      %v3645 = vsel %vm1376, 0.0, %v3593
      %v3646 = vsel %vm1376, 0.0, %v3601
      %v3647 = vsel %vm1376, 0.0, %v3609
      %v3648 = vmul.f32 %v439, %v3644
      %v3649 = vmul.f32 %v440, %v3616
      %v3650 = vmul.f32 %v441, %v3617
      %v3651 = vmul.f32 %v442, %v3618
      %v3652 = vmul.f32 %v439, %v3645
      %v3653 = vmul.f32 %v440, %v3619
      %v3654 = vmul.f32 %v441, %v3620
      %v3655 = vmul.f32 %v442, %v3621
      %v3656 = vmul.f32 %v439, %v3646
      %v3657 = vmul.f32 %v440, %v3622
      %v3658 = vmul.f32 %v441, %v3623
      %v3659 = vmul.f32 %v442, %v3624
      %v3660 = vmul.f32 %v439, %v3647
      %v3661 = vmul.f32 %v440, %v3625
      %v3662 = vmul.f32 %v441, %v3626
      %v3663 = vmul.f32 %v442, %v3627
      %3664 = vrot.lane.b32.xlu0 %v2992, 55
      %v3665 = vpop.permute.xlu0 %3664
      %3666 = vrot.lane.b32.xlu0 %v2993, 55
      %v3667 = vpop.permute.xlu0 %3666
      %3668 = vrot.lane.b32.xlu0 %v2994, 55
      %v3669 = vpop.permute.xlu0 %3668
      %3670 = vrot.lane.b32.xlu0 %v2995, 55
      %v3671 = vpop.permute.xlu0 %3670
      %3672 = vrot.lane.b32.xlu0 %v2996, 55
      %v3673 = vpop.permute.xlu0 %3672
      %3674 = vrot.lane.b32.xlu0 %v2997, 55
      %v3675 = vpop.permute.xlu0 %3674
      %3676 = vrot.lane.b32.xlu0 %v2998, 55
      %v3677 = vpop.permute.xlu0 %3676
      %3678 = vrot.lane.b32.xlu0 %v2999, 55
      %v3679 = vpop.permute.xlu0 %3678
      %3680 = vrot.lane.b32.xlu0 %v3000, 55
      %v3681 = vpop.permute.xlu0 %3680
      %3682 = vrot.lane.b32.xlu0 %v3001, 55
      %v3683 = vpop.permute.xlu0 %3682
      %3684 = vrot.lane.b32.xlu0 %v3002, 55
      %v3685 = vpop.permute.xlu0 %3684
      %3686 = vrot.lane.b32.xlu0 %v3003, 55
      %v3687 = vpop.permute.xlu0 %3686
      %3688 = vrot.lane.b32.xlu0 %v3004, 55
      %v3689 = vpop.permute.xlu0 %3688
      %3690 = vrot.lane.b32.xlu0 %v3005, 55
      %v3691 = vpop.permute.xlu0 %3690
      %3692 = vrot.lane.b32.xlu0 %v3006, 55
      %v3693 = vpop.permute.xlu0 %3692
      %3694 = vrot.lane.b32.xlu0 %v3007, 55
      %v3695 = vpop.permute.xlu0 %3694
      %v3696 = vsel %vm1461, %v3665, %v3667
      %v3697 = vsel %vm1461, %v3667, %v3669
      %v3698 = vsel %vm1461, %v3669, %v3671
      %v3699 = vsel %vm1461, %v3673, %v3675
      %v3700 = vsel %vm1461, %v3675, %v3677
      %v3701 = vsel %vm1461, %v3677, %v3679
      %v3702 = vsel %vm1461, %v3681, %v3683
      %v3703 = vsel %vm1461, %v3683, %v3685
      %v3704 = vsel %vm1461, %v3685, %v3687
      %v3705 = vsel %vm1461, %v3689, %v3691
      %v3706 = vsel %vm1461, %v3691, %v3693
      %v3707 = vsel %vm1461, %v3693, %v3695
      %v3724 = vsel %vm1461, 0.0, %v3665
      %v3725 = vsel %vm1461, 0.0, %v3673
      %v3726 = vsel %vm1461, 0.0, %v3681
      %v3727 = vsel %vm1461, 0.0, %v3689
      %v3728 = vmul.f32 %v451, %v3724
      %v3729 = vmul.f32 %v452, %v3696
      %v3730 = vmul.f32 %v453, %v3697
      %v3731 = vmul.f32 %v454, %v3698
      %v3732 = vmul.f32 %v451, %v3725
      %v3733 = vmul.f32 %v452, %v3699
      %v3734 = vmul.f32 %v453, %v3700
      %v3735 = vmul.f32 %v454, %v3701
      %v3736 = vmul.f32 %v451, %v3726
      %v3737 = vmul.f32 %v452, %v3702
      %v3738 = vmul.f32 %v453, %v3703
      %v3739 = vmul.f32 %v454, %v3704
      %v3740 = vmul.f32 %v451, %v3727
      %v3741 = vmul.f32 %v452, %v3705
      %v3742 = vmul.f32 %v453, %v3706
      %v3743 = vmul.f32 %v454, %v3707
      %3744 = vrot.lane.b32.xlu0 %v2992, 9
      %v3745 = vpop.permute.xlu0 %3744
      %3746 = vrot.lane.b32.xlu0 %v2993, 9
      %v3747 = vpop.permute.xlu0 %3746
      %3748 = vrot.lane.b32.xlu0 %v2994, 9
      %v3749 = vpop.permute.xlu0 %3748
      %3750 = vrot.lane.b32.xlu0 %v2995, 9
      %v3751 = vpop.permute.xlu0 %3750
      %3752 = vrot.lane.b32.xlu0 %v2996, 9
      %v3753 = vpop.permute.xlu0 %3752
      %3754 = vrot.lane.b32.xlu0 %v2997, 9
      %v3755 = vpop.permute.xlu0 %3754
      %3756 = vrot.lane.b32.xlu0 %v2998, 9
      %v3757 = vpop.permute.xlu0 %3756
      %3758 = vrot.lane.b32.xlu0 %v2999, 9
      %v3759 = vpop.permute.xlu0 %3758
      %3760 = vrot.lane.b32.xlu0 %v3000, 9
      %v3761 = vpop.permute.xlu0 %3760
      %3762 = vrot.lane.b32.xlu0 %v3001, 9
      %v3763 = vpop.permute.xlu0 %3762
      %3764 = vrot.lane.b32.xlu0 %v3002, 9
      %v3765 = vpop.permute.xlu0 %3764
      %3766 = vrot.lane.b32.xlu0 %v3003, 9
      %v3767 = vpop.permute.xlu0 %3766
      %3768 = vrot.lane.b32.xlu0 %v3004, 9
      %v3769 = vpop.permute.xlu0 %3768
      %3770 = vrot.lane.b32.xlu0 %v3005, 9
      %v3771 = vpop.permute.xlu0 %3770
      %3772 = vrot.lane.b32.xlu0 %v3006, 9
      %v3773 = vpop.permute.xlu0 %3772
      %3774 = vrot.lane.b32.xlu0 %v3007, 9
      %v3775 = vpop.permute.xlu0 %3774
      %v3776 = vsel %vm1546, %v3745, %v3747
      %v3777 = vsel %vm1546, %v3747, %v3749
      %v3778 = vsel %vm1546, %v3749, %v3751
      %v3779 = vsel %vm1546, %v3753, %v3755
      %v3780 = vsel %vm1546, %v3755, %v3757
      %v3781 = vsel %vm1546, %v3757, %v3759
      %v3782 = vsel %vm1546, %v3761, %v3763
      %v3783 = vsel %vm1546, %v3763, %v3765
      %v3784 = vsel %vm1546, %v3765, %v3767
      %v3785 = vsel %vm1546, %v3769, %v3771
      %v3786 = vsel %vm1546, %v3771, %v3773
      %v3787 = vsel %vm1546, %v3773, %v3775
      %v3804 = vsel %vm1546, 0.0, %v3745
      %v3805 = vsel %vm1546, 0.0, %v3753
      %v3806 = vsel %vm1546, 0.0, %v3761
      %v3807 = vsel %vm1546, 0.0, %v3769
      %v3808 = vmul.f32 %v483, %v3804
      %v3809 = vmul.f32 %v484, %v3776
      %v3810 = vmul.f32 %v485, %v3777
      %v3811 = vmul.f32 %v486, %v3778
      %v3812 = vmul.f32 %v483, %v3805
      %v3813 = vmul.f32 %v484, %v3779
      %v3814 = vmul.f32 %v485, %v3780
      %v3815 = vmul.f32 %v486, %v3781
      %v3816 = vmul.f32 %v483, %v3806
      %v3817 = vmul.f32 %v484, %v3782
      %v3818 = vmul.f32 %v485, %v3783
      %v3819 = vmul.f32 %v486, %v3784
      %v3820 = vmul.f32 %v483, %v3807
      %v3821 = vmul.f32 %v484, %v3785
      %v3822 = vmul.f32 %v485, %v3786
      %v3823 = vmul.f32 %v486, %v3787
      %3824 = vrot.lane.b32.xlu0 %v2992, 8
      %v3825 = vpop.permute.xlu0 %3824
      %3826 = vrot.lane.b32.xlu0 %v2993, 8
      %v3827 = vpop.permute.xlu0 %3826
      %3828 = vrot.lane.b32.xlu0 %v2994, 8
      %v3829 = vpop.permute.xlu0 %3828
      %3830 = vrot.lane.b32.xlu0 %v2995, 8
      %v3831 = vpop.permute.xlu0 %3830
      %3832 = vrot.lane.b32.xlu0 %v2996, 8
      %v3833 = vpop.permute.xlu0 %3832
      %3834 = vrot.lane.b32.xlu0 %v2997, 8
      %v3835 = vpop.permute.xlu0 %3834
      %3836 = vrot.lane.b32.xlu0 %v2998, 8
      %v3837 = vpop.permute.xlu0 %3836
      %3838 = vrot.lane.b32.xlu0 %v2999, 8
      %v3839 = vpop.permute.xlu0 %3838
      %3840 = vrot.lane.b32.xlu0 %v3000, 8
      %v3841 = vpop.permute.xlu0 %3840
      %3842 = vrot.lane.b32.xlu0 %v3001, 8
      %v3843 = vpop.permute.xlu0 %3842
      %3844 = vrot.lane.b32.xlu0 %v3002, 8
      %v3845 = vpop.permute.xlu0 %3844
      %3846 = vrot.lane.b32.xlu0 %v3003, 8
      %v3847 = vpop.permute.xlu0 %3846
      %3848 = vrot.lane.b32.xlu0 %v3004, 8
      %v3849 = vpop.permute.xlu0 %3848
      %3850 = vrot.lane.b32.xlu0 %v3005, 8
      %v3851 = vpop.permute.xlu0 %3850
      %3852 = vrot.lane.b32.xlu0 %v3006, 8
      %v3853 = vpop.permute.xlu0 %3852
      %3854 = vrot.lane.b32.xlu0 %v3007, 8
      %v3855 = vpop.permute.xlu0 %3854
      %v3856 = vsel %vm1631, %v3825, %v3827
      %v3857 = vsel %vm1631, %v3827, %v3829
      %v3858 = vsel %vm1631, %v3829, %v3831
      %v3859 = vsel %vm1631, %v3833, %v3835
      %v3860 = vsel %vm1631, %v3835, %v3837
      %v3861 = vsel %vm1631, %v3837, %v3839
      %v3862 = vsel %vm1631, %v3841, %v3843
      %v3863 = vsel %vm1631, %v3843, %v3845
      %v3864 = vsel %vm1631, %v3845, %v3847
      %v3865 = vsel %vm1631, %v3849, %v3851
      %v3866 = vsel %vm1631, %v3851, %v3853
      %v3867 = vsel %vm1631, %v3853, %v3855
      %v3884 = vsel %vm1631, 0.0, %v3825
      %v3885 = vsel %vm1631, 0.0, %v3833
      %v3886 = vsel %vm1631, 0.0, %v3841
      %v3887 = vsel %vm1631, 0.0, %v3849
      %v3888 = vmul.f32 %v495, %v3884
      %v3889 = vmul.f32 %v496, %v3856
      %v3890 = vmul.f32 %v497, %v3857
      %v3891 = vmul.f32 %v498, %v3858
      %v3892 = vmul.f32 %v495, %v3885
      %v3893 = vmul.f32 %v496, %v3859
      %v3894 = vmul.f32 %v497, %v3860
      %v3895 = vmul.f32 %v498, %v3861
      %v3896 = vmul.f32 %v495, %v3886
      %v3897 = vmul.f32 %v496, %v3862
      %v3898 = vmul.f32 %v497, %v3863
      %v3899 = vmul.f32 %v498, %v3864
      %v3900 = vmul.f32 %v495, %v3887
      %v3901 = vmul.f32 %v496, %v3865
      %v3902 = vmul.f32 %v497, %v3866
      %v3903 = vmul.f32 %v498, %v3867
      %3904 = vrot.lane.b32.xlu0 %v2992, 7
      %v3905 = vpop.permute.xlu0 %3904
      %3906 = vrot.lane.b32.xlu0 %v2993, 7
      %v3907 = vpop.permute.xlu0 %3906
      %3908 = vrot.lane.b32.xlu0 %v2994, 7
      %v3909 = vpop.permute.xlu0 %3908
      %3910 = vrot.lane.b32.xlu0 %v2995, 7
      %v3911 = vpop.permute.xlu0 %3910
      %3912 = vrot.lane.b32.xlu0 %v2996, 7
      %v3913 = vpop.permute.xlu0 %3912
      %3914 = vrot.lane.b32.xlu0 %v2997, 7
      %v3915 = vpop.permute.xlu0 %3914
      %3916 = vrot.lane.b32.xlu0 %v2998, 7
      %v3917 = vpop.permute.xlu0 %3916
      %3918 = vrot.lane.b32.xlu0 %v2999, 7
      %v3919 = vpop.permute.xlu0 %3918
      %3920 = vrot.lane.b32.xlu0 %v3000, 7
      %v3921 = vpop.permute.xlu0 %3920
      %3922 = vrot.lane.b32.xlu0 %v3001, 7
      %v3923 = vpop.permute.xlu0 %3922
      %3924 = vrot.lane.b32.xlu0 %v3002, 7
      %v3925 = vpop.permute.xlu0 %3924
      %3926 = vrot.lane.b32.xlu0 %v3003, 7
      %v3927 = vpop.permute.xlu0 %3926
      %3928 = vrot.lane.b32.xlu0 %v3004, 7
      %v3929 = vpop.permute.xlu0 %3928
      %3930 = vrot.lane.b32.xlu0 %v3005, 7
      %v3931 = vpop.permute.xlu0 %3930
      %3932 = vrot.lane.b32.xlu0 %v3006, 7
      %v3933 = vpop.permute.xlu0 %3932
      %3934 = vrot.lane.b32.xlu0 %v3007, 7
      %v3935 = vpop.permute.xlu0 %3934
      %v3936 = vsel %vm1716, %v3905, %v3907
      %v3937 = vsel %vm1716, %v3907, %v3909
      %v3938 = vsel %vm1716, %v3909, %v3911
      %v3939 = vsel %vm1716, %v3913, %v3915
      %v3940 = vsel %vm1716, %v3915, %v3917
      %v3941 = vsel %vm1716, %v3917, %v3919
      %v3942 = vsel %vm1716, %v3921, %v3923
      %v3943 = vsel %vm1716, %v3923, %v3925
      %v3944 = vsel %vm1716, %v3925, %v3927
      %v3945 = vsel %vm1716, %v3929, %v3931
      %v3946 = vsel %vm1716, %v3931, %v3933
      %v3947 = vsel %vm1716, %v3933, %v3935
      %v3964 = vsel %vm1716, 0.0, %v3905
      %v3965 = vsel %vm1716, 0.0, %v3913
      %v3966 = vsel %vm1716, 0.0, %v3921
      %v3967 = vsel %vm1716, 0.0, %v3929
      %v3968 = vmul.f32 %v507, %v3964
      %v3969 = vmul.f32 %v508, %v3936
      %v3970 = vmul.f32 %v509, %v3937
      %v3971 = vmul.f32 %v510, %v3938
      %v3972 = vmul.f32 %v507, %v3965
      %v3973 = vmul.f32 %v508, %v3939
      %v3974 = vmul.f32 %v509, %v3940
      %v3975 = vmul.f32 %v510, %v3941
      %v3976 = vmul.f32 %v507, %v3966
      %v3977 = vmul.f32 %v508, %v3942
      %v3978 = vmul.f32 %v509, %v3943
      %v3979 = vmul.f32 %v510, %v3944
      %v3980 = vmul.f32 %v507, %v3967
      %v3981 = vmul.f32 %v508, %v3945
      %v3982 = vmul.f32 %v509, %v3946
      %v3983 = vmul.f32 %v510, %v3947
      %3984 = vrot.lane.b32.xlu0 %v2992, 1
      %v3985 = vpop.permute.xlu0 %3984
      %3986 = vrot.lane.b32.xlu0 %v2993, 1
      %v3987 = vpop.permute.xlu0 %3986
      %3988 = vrot.lane.b32.xlu0 %v2994, 1
      %v3989 = vpop.permute.xlu0 %3988
      %3990 = vrot.lane.b32.xlu0 %v2995, 1
      %v3991 = vpop.permute.xlu0 %3990
      %3992 = vrot.lane.b32.xlu0 %v2996, 1
      %v3993 = vpop.permute.xlu0 %3992
      %3994 = vrot.lane.b32.xlu0 %v2997, 1
      %v3995 = vpop.permute.xlu0 %3994
      %3996 = vrot.lane.b32.xlu0 %v2998, 1
      %v3997 = vpop.permute.xlu0 %3996
      %3998 = vrot.lane.b32.xlu0 %v2999, 1
      %v3999 = vpop.permute.xlu0 %3998
      %4000 = vrot.lane.b32.xlu0 %v3000, 1
      %v4001 = vpop.permute.xlu0 %4000
      %4002 = vrot.lane.b32.xlu0 %v3001, 1
      %v4003 = vpop.permute.xlu0 %4002
      %4004 = vrot.lane.b32.xlu0 %v3002, 1
      %v4005 = vpop.permute.xlu0 %4004
      %4006 = vrot.lane.b32.xlu0 %v3003, 1
      %v4007 = vpop.permute.xlu0 %4006
      %4008 = vrot.lane.b32.xlu0 %v3004, 1
      %v4009 = vpop.permute.xlu0 %4008
      %4010 = vrot.lane.b32.xlu0 %v3005, 1
      %v4011 = vpop.permute.xlu0 %4010
      %4012 = vrot.lane.b32.xlu0 %v3006, 1
      %v4013 = vpop.permute.xlu0 %4012
      %4014 = vrot.lane.b32.xlu0 %v3007, 1
      %v4015 = vpop.permute.xlu0 %4014
      %v4016 = vsel %vm1801, %v3985, %v3987
      %v4017 = vsel %vm1801, %v3987, %v3989
      %v4018 = vsel %vm1801, %v3989, %v3991
      %v4019 = vsel %vm1801, %v3993, %v3995
      %v4020 = vsel %vm1801, %v3995, %v3997
      %v4021 = vsel %vm1801, %v3997, %v3999
      %v4022 = vsel %vm1801, %v4001, %v4003
      %v4023 = vsel %vm1801, %v4003, %v4005
      %v4024 = vsel %vm1801, %v4005, %v4007
      %v4025 = vsel %vm1801, %v4009, %v4011
      %v4026 = vsel %vm1801, %v4011, %v4013
      %v4027 = vsel %vm1801, %v4013, %v4015
      %v4044 = vsel %vm1801, 0.0, %v3985
      %v4045 = vsel %vm1801, 0.0, %v3993
      %v4046 = vsel %vm1801, 0.0, %v4001
      %v4047 = vsel %vm1801, 0.0, %v4009
      %v4048 = vmul.f32 %v527, %v4044
      %v4049 = vmul.f32 %v528, %v4016
      %v4050 = vmul.f32 %v529, %v4017
      %v4051 = vmul.f32 %v530, %v4018
      %v4052 = vmul.f32 %v527, %v4045
      %v4053 = vmul.f32 %v528, %v4019
      %v4054 = vmul.f32 %v529, %v4020
      %v4055 = vmul.f32 %v530, %v4021
      %v4056 = vmul.f32 %v527, %v4046
      %v4057 = vmul.f32 %v528, %v4022
      %v4058 = vmul.f32 %v529, %v4023
      %v4059 = vmul.f32 %v530, %v4024
      %v4060 = vmul.f32 %v527, %v4047
      %v4061 = vmul.f32 %v528, %v4025
      %v4062 = vmul.f32 %v529, %v4026
      %v4063 = vmul.f32 %v530, %v4027
      %v4064 = vmul.f32 %v539, %v2992
      %v4065 = vmul.f32 %v540, %v2993
      %v4066 = vmul.f32 %v541, %v2994
      %v4067 = vmul.f32 %v542, %v2995
      %v4068 = vmul.f32 %v539, %v2996
      %v4069 = vmul.f32 %v540, %v2997
      %v4070 = vmul.f32 %v541, %v2998
      %v4071 = vmul.f32 %v542, %v2999
      %v4072 = vmul.f32 %v539, %v3000
      %v4073 = vmul.f32 %v540, %v3001
      %v4074 = vmul.f32 %v541, %v3002
      %v4075 = vmul.f32 %v542, %v3003
      %v4076 = vmul.f32 %v539, %v3004
      %v4077 = vmul.f32 %v540, %v3005
      %v4078 = vmul.f32 %v541, %v3006
      %v4079 = vmul.f32 %v542, %v3007
      %4080 = vrot.lane.b32.xlu0 %v2992, 127
      %v4081 = vpop.permute.xlu0 %4080
      %4082 = vrot.lane.b32.xlu0 %v2993, 127
      %v4083 = vpop.permute.xlu0 %4082
      %4084 = vrot.lane.b32.xlu0 %v2994, 127
      %v4085 = vpop.permute.xlu0 %4084
      %4086 = vrot.lane.b32.xlu0 %v2995, 127
      %v4087 = vpop.permute.xlu0 %4086
      %4088 = vrot.lane.b32.xlu0 %v2996, 127
      %v4089 = vpop.permute.xlu0 %4088
      %4090 = vrot.lane.b32.xlu0 %v2997, 127
      %v4091 = vpop.permute.xlu0 %4090
      %4092 = vrot.lane.b32.xlu0 %v2998, 127
      %v4093 = vpop.permute.xlu0 %4092
      %4094 = vrot.lane.b32.xlu0 %v2999, 127
      %v4095 = vpop.permute.xlu0 %4094
      %4096 = vrot.lane.b32.xlu0 %v3000, 127
      %v4097 = vpop.permute.xlu0 %4096
      %4098 = vrot.lane.b32.xlu0 %v3001, 127
      %v4099 = vpop.permute.xlu0 %4098
      %4100 = vrot.lane.b32.xlu0 %v3002, 127
      %v4101 = vpop.permute.xlu0 %4100
      %4102 = vrot.lane.b32.xlu0 %v3003, 127
      %v4103 = vpop.permute.xlu0 %4102
      %4104 = vrot.lane.b32.xlu0 %v3004, 127
      %v4105 = vpop.permute.xlu0 %4104
      %4106 = vrot.lane.b32.xlu0 %v3005, 127
      %v4107 = vpop.permute.xlu0 %4106
      %4108 = vrot.lane.b32.xlu0 %v3006, 127
      %v4109 = vpop.permute.xlu0 %4108
      %4110 = vrot.lane.b32.xlu0 %v3007, 127
      %v4111 = vpop.permute.xlu0 %4110
      %v4112 = vsel %vm1958, %v4081, %v4083
      %v4113 = vsel %vm1958, %v4083, %v4085
      %v4114 = vsel %vm1958, %v4085, %v4087
      %v4115 = vsel %vm1958, %v4089, %v4091
      %v4116 = vsel %vm1958, %v4091, %v4093
      %v4117 = vsel %vm1958, %v4093, %v4095
      %v4118 = vsel %vm1958, %v4097, %v4099
      %v4119 = vsel %vm1958, %v4099, %v4101
      %v4120 = vsel %vm1958, %v4101, %v4103
      %v4121 = vsel %vm1958, %v4105, %v4107
      %v4122 = vsel %vm1958, %v4107, %v4109
      %v4123 = vsel %vm1958, %v4109, %v4111
      %v4140 = vsel %vm1958, %v4087, 0.0
      %v4141 = vsel %vm1958, %v4095, 0.0
      %v4142 = vsel %vm1958, %v4103, 0.0
      %v4143 = vsel %vm1958, %v4111, 0.0
      %v4144 = vmul.f32 %v551, %v4112
      %v4145 = vmul.f32 %v552, %v4113
      %v4146 = vmul.f32 %v553, %v4114
      %v4147 = vmul.f32 %v554, %v4140
      %v4148 = vmul.f32 %v551, %v4115
      %v4149 = vmul.f32 %v552, %v4116
      %v4150 = vmul.f32 %v553, %v4117
      %v4151 = vmul.f32 %v554, %v4141
      %v4152 = vmul.f32 %v551, %v4118
      %v4153 = vmul.f32 %v552, %v4119
      %v4154 = vmul.f32 %v553, %v4120
      %v4155 = vmul.f32 %v554, %v4142
      %v4156 = vmul.f32 %v551, %v4121
      %v4157 = vmul.f32 %v552, %v4122
      %v4158 = vmul.f32 %v553, %v4123
      %v4159 = vmul.f32 %v554, %v4143
      %4160 = vrot.lane.b32.xlu0 %v2992, 121
      %v4161 = vpop.permute.xlu0 %4160
      %4162 = vrot.lane.b32.xlu0 %v2993, 121
      %v4163 = vpop.permute.xlu0 %4162
      %4164 = vrot.lane.b32.xlu0 %v2994, 121
      %v4165 = vpop.permute.xlu0 %4164
      %4166 = vrot.lane.b32.xlu0 %v2995, 121
      %v4167 = vpop.permute.xlu0 %4166
      %4168 = vrot.lane.b32.xlu0 %v2996, 121
      %v4169 = vpop.permute.xlu0 %4168
      %4170 = vrot.lane.b32.xlu0 %v2997, 121
      %v4171 = vpop.permute.xlu0 %4170
      %4172 = vrot.lane.b32.xlu0 %v2998, 121
      %v4173 = vpop.permute.xlu0 %4172
      %4174 = vrot.lane.b32.xlu0 %v2999, 121
      %v4175 = vpop.permute.xlu0 %4174
      %4176 = vrot.lane.b32.xlu0 %v3000, 121
      %v4177 = vpop.permute.xlu0 %4176
      %4178 = vrot.lane.b32.xlu0 %v3001, 121
      %v4179 = vpop.permute.xlu0 %4178
      %4180 = vrot.lane.b32.xlu0 %v3002, 121
      %v4181 = vpop.permute.xlu0 %4180
      %4182 = vrot.lane.b32.xlu0 %v3003, 121
      %v4183 = vpop.permute.xlu0 %4182
      %4184 = vrot.lane.b32.xlu0 %v3004, 121
      %v4185 = vpop.permute.xlu0 %4184
      %4186 = vrot.lane.b32.xlu0 %v3005, 121
      %v4187 = vpop.permute.xlu0 %4186
      %4188 = vrot.lane.b32.xlu0 %v3006, 121
      %v4189 = vpop.permute.xlu0 %4188
      %4190 = vrot.lane.b32.xlu0 %v3007, 121
      %v4191 = vpop.permute.xlu0 %4190
      %v4192 = vsel %vm2043, %v4161, %v4163
      %v4193 = vsel %vm2043, %v4163, %v4165
      %v4194 = vsel %vm2043, %v4165, %v4167
      %v4195 = vsel %vm2043, %v4169, %v4171
      %v4196 = vsel %vm2043, %v4171, %v4173
      %v4197 = vsel %vm2043, %v4173, %v4175
      %v4198 = vsel %vm2043, %v4177, %v4179
      %v4199 = vsel %vm2043, %v4179, %v4181
      %v4200 = vsel %vm2043, %v4181, %v4183
      %v4201 = vsel %vm2043, %v4185, %v4187
      %v4202 = vsel %vm2043, %v4187, %v4189
      %v4203 = vsel %vm2043, %v4189, %v4191
      %v4220 = vsel %vm2043, %v4167, 0.0
      %v4221 = vsel %vm2043, %v4175, 0.0
      %v4222 = vsel %vm2043, %v4183, 0.0
      %v4223 = vsel %vm2043, %v4191, 0.0
      %v4224 = vmul.f32 %v571, %v4192
      %v4225 = vmul.f32 %v572, %v4193
      %v4226 = vmul.f32 %v573, %v4194
      %v4227 = vmul.f32 %v574, %v4220
      %v4228 = vmul.f32 %v571, %v4195
      %v4229 = vmul.f32 %v572, %v4196
      %v4230 = vmul.f32 %v573, %v4197
      %v4231 = vmul.f32 %v574, %v4221
      %v4232 = vmul.f32 %v571, %v4198
      %v4233 = vmul.f32 %v572, %v4199
      %v4234 = vmul.f32 %v573, %v4200
      %v4235 = vmul.f32 %v574, %v4222
      %v4236 = vmul.f32 %v571, %v4201
      %v4237 = vmul.f32 %v572, %v4202
      %v4238 = vmul.f32 %v573, %v4203
      %v4239 = vmul.f32 %v574, %v4223
      %4240 = vrot.lane.b32.xlu0 %v2992, 120
      %v4241 = vpop.permute.xlu0 %4240
      %4242 = vrot.lane.b32.xlu0 %v2993, 120
      %v4243 = vpop.permute.xlu0 %4242
      %4244 = vrot.lane.b32.xlu0 %v2994, 120
      %v4245 = vpop.permute.xlu0 %4244
      %4246 = vrot.lane.b32.xlu0 %v2995, 120
      %v4247 = vpop.permute.xlu0 %4246
      %4248 = vrot.lane.b32.xlu0 %v2996, 120
      %v4249 = vpop.permute.xlu0 %4248
      %4250 = vrot.lane.b32.xlu0 %v2997, 120
      %v4251 = vpop.permute.xlu0 %4250
      %4252 = vrot.lane.b32.xlu0 %v2998, 120
      %v4253 = vpop.permute.xlu0 %4252
      %4254 = vrot.lane.b32.xlu0 %v2999, 120
      %v4255 = vpop.permute.xlu0 %4254
      %4256 = vrot.lane.b32.xlu0 %v3000, 120
      %v4257 = vpop.permute.xlu0 %4256
      %4258 = vrot.lane.b32.xlu0 %v3001, 120
      %v4259 = vpop.permute.xlu0 %4258
      %4260 = vrot.lane.b32.xlu0 %v3002, 120
      %v4261 = vpop.permute.xlu0 %4260
      %4262 = vrot.lane.b32.xlu0 %v3003, 120
      %v4263 = vpop.permute.xlu0 %4262
      %4264 = vrot.lane.b32.xlu0 %v3004, 120
      %v4265 = vpop.permute.xlu0 %4264
      %4266 = vrot.lane.b32.xlu0 %v3005, 120
      %v4267 = vpop.permute.xlu0 %4266
      %4268 = vrot.lane.b32.xlu0 %v3006, 120
      %v4269 = vpop.permute.xlu0 %4268
      %4270 = vrot.lane.b32.xlu0 %v3007, 120
      %v4271 = vpop.permute.xlu0 %4270
      %v4272 = vsel %vm2128, %v4241, %v4243
      %v4273 = vsel %vm2128, %v4243, %v4245
      %v4274 = vsel %vm2128, %v4245, %v4247
      %v4275 = vsel %vm2128, %v4249, %v4251
      %v4276 = vsel %vm2128, %v4251, %v4253
      %v4277 = vsel %vm2128, %v4253, %v4255
      %v4278 = vsel %vm2128, %v4257, %v4259
      %v4279 = vsel %vm2128, %v4259, %v4261
      %v4280 = vsel %vm2128, %v4261, %v4263
      %v4281 = vsel %vm2128, %v4265, %v4267
      %v4282 = vsel %vm2128, %v4267, %v4269
      %v4283 = vsel %vm2128, %v4269, %v4271
      %v4300 = vsel %vm2128, %v4247, 0.0
      %v4301 = vsel %vm2128, %v4255, 0.0
      %v4302 = vsel %vm2128, %v4263, 0.0
      %v4303 = vsel %vm2128, %v4271, 0.0
      %v4304 = vmul.f32 %v583, %v4272
      %v4305 = vmul.f32 %v584, %v4273
      %v4306 = vmul.f32 %v585, %v4274
      %v4307 = vmul.f32 %v586, %v4300
      %v4308 = vmul.f32 %v583, %v4275
      %v4309 = vmul.f32 %v584, %v4276
      %v4310 = vmul.f32 %v585, %v4277
      %v4311 = vmul.f32 %v586, %v4301
      %v4312 = vmul.f32 %v583, %v4278
      %v4313 = vmul.f32 %v584, %v4279
      %v4314 = vmul.f32 %v585, %v4280
      %v4315 = vmul.f32 %v586, %v4302
      %v4316 = vmul.f32 %v583, %v4281
      %v4317 = vmul.f32 %v584, %v4282
      %v4318 = vmul.f32 %v585, %v4283
      %v4319 = vmul.f32 %v586, %v4303
      %4320 = vrot.lane.b32.xlu0 %v2992, 119
      %v4321 = vpop.permute.xlu0 %4320
      %4322 = vrot.lane.b32.xlu0 %v2993, 119
      %v4323 = vpop.permute.xlu0 %4322
      %4324 = vrot.lane.b32.xlu0 %v2994, 119
      %v4325 = vpop.permute.xlu0 %4324
      %4326 = vrot.lane.b32.xlu0 %v2995, 119
      %v4327 = vpop.permute.xlu0 %4326
      %4328 = vrot.lane.b32.xlu0 %v2996, 119
      %v4329 = vpop.permute.xlu0 %4328
      %4330 = vrot.lane.b32.xlu0 %v2997, 119
      %v4331 = vpop.permute.xlu0 %4330
      %4332 = vrot.lane.b32.xlu0 %v2998, 119
      %v4333 = vpop.permute.xlu0 %4332
      %4334 = vrot.lane.b32.xlu0 %v2999, 119
      %v4335 = vpop.permute.xlu0 %4334
      %4336 = vrot.lane.b32.xlu0 %v3000, 119
      %v4337 = vpop.permute.xlu0 %4336
      %4338 = vrot.lane.b32.xlu0 %v3001, 119
      %v4339 = vpop.permute.xlu0 %4338
      %4340 = vrot.lane.b32.xlu0 %v3002, 119
      %v4341 = vpop.permute.xlu0 %4340
      %4342 = vrot.lane.b32.xlu0 %v3003, 119
      %v4343 = vpop.permute.xlu0 %4342
      %4344 = vrot.lane.b32.xlu0 %v3004, 119
      %v4345 = vpop.permute.xlu0 %4344
      %4346 = vrot.lane.b32.xlu0 %v3005, 119
      %v4347 = vpop.permute.xlu0 %4346
      %4348 = vrot.lane.b32.xlu0 %v3006, 119
      %v4349 = vpop.permute.xlu0 %4348
      %4350 = vrot.lane.b32.xlu0 %v3007, 119
      %v4351 = vpop.permute.xlu0 %4350
      %v4352 = vsel %vm2213, %v4321, %v4323
      %v4353 = vsel %vm2213, %v4323, %v4325
      %v4354 = vsel %vm2213, %v4325, %v4327
      %v4355 = vsel %vm2213, %v4329, %v4331
      %v4356 = vsel %vm2213, %v4331, %v4333
      %v4357 = vsel %vm2213, %v4333, %v4335
      %v4358 = vsel %vm2213, %v4337, %v4339
      %v4359 = vsel %vm2213, %v4339, %v4341
      %v4360 = vsel %vm2213, %v4341, %v4343
      %v4361 = vsel %vm2213, %v4345, %v4347
      %v4362 = vsel %vm2213, %v4347, %v4349
      %v4363 = vsel %vm2213, %v4349, %v4351
      %v4380 = vsel %vm2213, %v4327, 0.0
      %v4381 = vsel %vm2213, %v4335, 0.0
      %v4382 = vsel %vm2213, %v4343, 0.0
      %v4383 = vsel %vm2213, %v4351, 0.0
      %v4384 = vmul.f32 %v595, %v4352
      %v4385 = vmul.f32 %v596, %v4353
      %v4386 = vmul.f32 %v597, %v4354
      %v4387 = vmul.f32 %v598, %v4380
      %v4388 = vmul.f32 %v595, %v4355
      %v4389 = vmul.f32 %v596, %v4356
      %v4390 = vmul.f32 %v597, %v4357
      %v4391 = vmul.f32 %v598, %v4381
      %v4392 = vmul.f32 %v595, %v4358
      %v4393 = vmul.f32 %v596, %v4359
      %v4394 = vmul.f32 %v597, %v4360
      %v4395 = vmul.f32 %v598, %v4382
      %v4396 = vmul.f32 %v595, %v4361
      %v4397 = vmul.f32 %v596, %v4362
      %v4398 = vmul.f32 %v597, %v4363
      %v4399 = vmul.f32 %v598, %v4383
      %v4404 = vsel %vm777, %v3031, 0.0
      %v4405 = vsel %vm777, %v3039, 0.0
      %v4406 = vsel %vm777, %v3047, 0.0
      %v4407 = vsel %vm777, %v3055, 0.0
      %v4408 = vmul.f32 %v631, %v3056
      %v4409 = vmul.f32 %v632, %v3057
      %v4410 = vmul.f32 %v633, %v3058
      %v4411 = vmul.f32 %v634, %v4404
      %v4412 = vmul.f32 %v631, %v3059
      %v4413 = vmul.f32 %v632, %v3060
      %v4414 = vmul.f32 %v633, %v3061
      %v4415 = vmul.f32 %v634, %v4405
      %v4416 = vmul.f32 %v631, %v3062
      %v4417 = vmul.f32 %v632, %v3063
      %v4418 = vmul.f32 %v633, %v3064
      %v4419 = vmul.f32 %v634, %v4406
      %v4420 = vmul.f32 %v631, %v3065
      %v4421 = vmul.f32 %v632, %v3066
      %v4422 = vmul.f32 %v633, %v3067
      %v4423 = vmul.f32 %v634, %v4407
      %v4428 = vsel %vm866, %v3111, 0.0
      %v4429 = vsel %vm866, %v3119, 0.0
      %v4430 = vsel %vm866, %v3127, 0.0
      %v4431 = vsel %vm866, %v3135, 0.0
      %v4432 = vmul.f32 %v643, %v3136
      %v4433 = vmul.f32 %v644, %v3137
      %v4434 = vmul.f32 %v645, %v3138
      %v4435 = vmul.f32 %v646, %v4428
      %v4436 = vmul.f32 %v643, %v3139
      %v4437 = vmul.f32 %v644, %v3140
      %v4438 = vmul.f32 %v645, %v3141
      %v4439 = vmul.f32 %v646, %v4429
      %v4440 = vmul.f32 %v643, %v3142
      %v4441 = vmul.f32 %v644, %v3143
      %v4442 = vmul.f32 %v645, %v3144
      %v4443 = vmul.f32 %v646, %v4430
      %v4444 = vmul.f32 %v643, %v3145
      %v4445 = vmul.f32 %v644, %v3146
      %v4446 = vmul.f32 %v645, %v3147
      %v4447 = vmul.f32 %v646, %v4431
      %v4452 = vsel %vm951, %v3191, 0.0
      %v4453 = vsel %vm951, %v3199, 0.0
      %v4454 = vsel %vm951, %v3207, 0.0
      %v4455 = vsel %vm951, %v3215, 0.0
      %v4456 = vmul.f32 %v655, %v3216
      %v4457 = vmul.f32 %v656, %v3217
      %v4458 = vmul.f32 %v657, %v3218
      %v4459 = vmul.f32 %v658, %v4452
      %v4460 = vmul.f32 %v655, %v3219
      %v4461 = vmul.f32 %v656, %v3220
      %v4462 = vmul.f32 %v657, %v3221
      %v4463 = vmul.f32 %v658, %v4453
      %v4464 = vmul.f32 %v655, %v3222
      %v4465 = vmul.f32 %v656, %v3223
      %v4466 = vmul.f32 %v657, %v3224
      %v4467 = vmul.f32 %v658, %v4454
      %v4468 = vmul.f32 %v655, %v3225
      %v4469 = vmul.f32 %v656, %v3226
      %v4470 = vmul.f32 %v657, %v3227
      %v4471 = vmul.f32 %v658, %v4455
      %v4476 = vsel %vm1036, %v3271, 0.0
      %v4477 = vsel %vm1036, %v3279, 0.0
      %v4478 = vsel %vm1036, %v3287, 0.0
      %v4479 = vsel %vm1036, %v3295, 0.0
      %v4480 = vmul.f32 %v675, %v3296
      %v4481 = vmul.f32 %v676, %v3297
      %v4482 = vmul.f32 %v677, %v3298
      %v4483 = vmul.f32 %v678, %v4476
      %v4484 = vmul.f32 %v675, %v3299
      %v4485 = vmul.f32 %v676, %v3300
      %v4486 = vmul.f32 %v677, %v3301
      %v4487 = vmul.f32 %v678, %v4477
      %v4488 = vmul.f32 %v675, %v3302
      %v4489 = vmul.f32 %v676, %v3303
      %v4490 = vmul.f32 %v677, %v3304
      %v4491 = vmul.f32 %v678, %v4478
      %v4492 = vmul.f32 %v675, %v3305
      %v4493 = vmul.f32 %v676, %v3306
      %v4494 = vmul.f32 %v677, %v3307
      %v4495 = vmul.f32 %v678, %v4479
      %v4500 = vsel %vm1121, %v3351, 0.0
      %v4501 = vsel %vm1121, %v3359, 0.0
      %v4502 = vsel %vm1121, %v3367, 0.0
      %v4503 = vsel %vm1121, %v3375, 0.0
      %v4504 = vmul.f32 %v687, %v3376
      %v4505 = vmul.f32 %v688, %v3377
      %v4506 = vmul.f32 %v689, %v3378
      %v4507 = vmul.f32 %v690, %v4500
      %v4508 = vmul.f32 %v687, %v3379
      %v4509 = vmul.f32 %v688, %v3380
      %v4510 = vmul.f32 %v689, %v3381
      %v4511 = vmul.f32 %v690, %v4501
      %v4512 = vmul.f32 %v687, %v3382
      %v4513 = vmul.f32 %v688, %v3383
      %v4514 = vmul.f32 %v689, %v3384
      %v4515 = vmul.f32 %v690, %v4502
      %v4516 = vmul.f32 %v687, %v3385
      %v4517 = vmul.f32 %v688, %v3386
      %v4518 = vmul.f32 %v689, %v3387
      %v4519 = vmul.f32 %v690, %v4503
      %v4524 = vsel %vm1206, %v3431, 0.0
      %v4525 = vsel %vm1206, %v3439, 0.0
      %v4526 = vsel %vm1206, %v3447, 0.0
      %v4527 = vsel %vm1206, %v3455, 0.0
      %v4528 = vmul.f32 %v699, %v3456
      %v4529 = vmul.f32 %v700, %v3457
      %v4530 = vmul.f32 %v701, %v3458
      %v4531 = vmul.f32 %v702, %v4524
      %v4532 = vmul.f32 %v699, %v3459
      %v4533 = vmul.f32 %v700, %v3460
      %v4534 = vmul.f32 %v701, %v3461
      %v4535 = vmul.f32 %v702, %v4525
      %v4536 = vmul.f32 %v699, %v3462
      %v4537 = vmul.f32 %v700, %v3463
      %v4538 = vmul.f32 %v701, %v3464
      %v4539 = vmul.f32 %v702, %v4526
      %v4540 = vmul.f32 %v699, %v3465
      %v4541 = vmul.f32 %v700, %v3466
      %v4542 = vmul.f32 %v701, %v3467
      %v4543 = vmul.f32 %v702, %v4527
      %v4548 = vsel %vm1291, %v3511, 0.0
      %v4549 = vsel %vm1291, %v3519, 0.0
      %v4550 = vsel %vm1291, %v3527, 0.0
      %v4551 = vsel %vm1291, %v3535, 0.0
      %v4552 = vmul.f32 %v719, %v3536
      %v4553 = vmul.f32 %v720, %v3537
      %v4554 = vmul.f32 %v721, %v3538
      %v4555 = vmul.f32 %v722, %v4548
      %v4556 = vmul.f32 %v719, %v3539
      %v4557 = vmul.f32 %v720, %v3540
      %v4558 = vmul.f32 %v721, %v3541
      %v4559 = vmul.f32 %v722, %v4549
      %v4560 = vmul.f32 %v719, %v3542
      %v4561 = vmul.f32 %v720, %v3543
      %v4562 = vmul.f32 %v721, %v3544
      %v4563 = vmul.f32 %v722, %v4550
      %v4564 = vmul.f32 %v719, %v3545
      %v4565 = vmul.f32 %v720, %v3546
      %v4566 = vmul.f32 %v721, %v3547
      %v4567 = vmul.f32 %v722, %v4551
      %v4572 = vsel %vm1376, %v3591, 0.0
      %v4573 = vsel %vm1376, %v3599, 0.0
      %v4574 = vsel %vm1376, %v3607, 0.0
      %v4575 = vsel %vm1376, %v3615, 0.0
      %v4576 = vmul.f32 %v731, %v3616
      %v4577 = vmul.f32 %v732, %v3617
      %v4578 = vmul.f32 %v733, %v3618
      %v4579 = vmul.f32 %v734, %v4572
      %v4580 = vmul.f32 %v731, %v3619
      %v4581 = vmul.f32 %v732, %v3620
      %v4582 = vmul.f32 %v733, %v3621
      %v4583 = vmul.f32 %v734, %v4573
      %v4584 = vmul.f32 %v731, %v3622
      %v4585 = vmul.f32 %v732, %v3623
      %v4586 = vmul.f32 %v733, %v3624
      %v4587 = vmul.f32 %v734, %v4574
      %v4588 = vmul.f32 %v731, %v3625
      %v4589 = vmul.f32 %v732, %v3626
      %v4590 = vmul.f32 %v733, %v3627
      %v4591 = vmul.f32 %v734, %v4575
      %v4596 = vsel %vm1461, %v3671, 0.0
      %v4597 = vsel %vm1461, %v3679, 0.0
      %v4598 = vsel %vm1461, %v3687, 0.0
      %v4599 = vsel %vm1461, %v3695, 0.0
      %v4600 = vmul.f32 %v743, %v3696
      %v4601 = vmul.f32 %v744, %v3697
      %v4602 = vmul.f32 %v745, %v3698
      %v4603 = vmul.f32 %v746, %v4596
      %v4604 = vmul.f32 %v743, %v3699
      %v4605 = vmul.f32 %v744, %v3700
      %v4606 = vmul.f32 %v745, %v3701
      %v4607 = vmul.f32 %v746, %v4597
      %v4608 = vmul.f32 %v743, %v3702
      %v4609 = vmul.f32 %v744, %v3703
      %v4610 = vmul.f32 %v745, %v3704
      %v4611 = vmul.f32 %v746, %v4598
      %v4612 = vmul.f32 %v743, %v3705
      %v4613 = vmul.f32 %v744, %v3706
      %v4614 = vmul.f32 %v745, %v3707
      %v4615 = vmul.f32 %v746, %v4599
      %v4616 = vld [vmem:[%s3] sm:$0x7f]
      %v4617 = vld [vmem:[#allocation2] sm:$0x1]
      %4619 = vset.pattern.permute.xlu0 0
      %4620 = vperm.xlu0 %4619, %v4617
      %v4621 = vpop.permute.xlu0 %4620
      %v4623 = vlaneseq
      %v4624 = vshrl.u32 %v4623, 7
      %v4625 = vsub.s32 0, %v4624
      %v4626 = vrot.slane %v4621, %v4625
      %v4628 = vlaneseq
      %v4629 = vshrl.u32 %v4628, 7
      %v4630 = vsub.s32 0, %v4629
      %v4631 = vrot.slane %v4616, %v4630
      %v4632 = vlaneseq
      %v4633 = vshrl.u32 %v4632, 7
      %v4634 = vsub.s32 1, %v4633
      %v4635 = vrot.slane %v4616, %v4634
      %v4636 = vlaneseq
      %v4637 = vshrl.u32 %v4636, 7
      %v4638 = vsub.s32 2, %v4637
      %v4639 = vrot.slane %v4616, %v4638
      %v4640 = vlaneseq
      %v4641 = vshrl.u32 %v4640, 7
      %v4642 = vsub.s32 3, %v4641
      %v4643 = vrot.slane %v4616, %v4642
      %v4644 = vlaneseq
      %v4645 = vshrl.u32 %v4644, 7
      %v4646 = vsub.s32 4, %v4645
      %v4647 = vrot.slane %v4616, %v4646
      %v4648 = vlaneseq
      %v4649 = vshrl.u32 %v4648, 7
      %v4650 = vsub.s32 5, %v4649
      %v4651 = vrot.slane %v4616, %v4650
      %v4652 = vlaneseq
      %v4653 = vshrl.u32 %v4652, 7
      %v4654 = vsub.s32 6, %v4653
      %v4655 = vrot.slane %v4616, %v4654
      %vm4662 = vcmask 785408
      %v4663 = vsel %vm4662, %v4655, 0
      %4665 = vmatprep.subr.mxu0 %v3089
      %4666 = vmatpush1.msra.mxu0 %v3088
      %4667 = vmatprep.subr.mxu0 %v3093
      %4668 = vmatpush1.msra.mxu0 %v3092
      %4669 = vmatprep.subr.mxu0 %v3097
      %4670 = vmatpush1.msra.mxu0 %v3096
      %4671 = vmatprep.subr.mxu0 %v3101
      %4672 = vmatpush1.msra.mxu0 %v3100
      %4673 = vmatprep.subr.mxu0 %v3169
      %4674 = vmatpush1.msra.mxu0 %v3168
      %4675 = vmatprep.subr.mxu0 %v3173
      %4676 = vmatpush1.msra.mxu0 %v3172
      %4677 = vmatprep.subr.mxu0 %v3177
      %4678 = vmatpush1.msra.mxu0 %v3176
      %4679 = vmatprep.subr.mxu0 %v3181
      %4680 = vmatpush1.msra.mxu0 %v3180
      %4681 = vmatprep.subr.mxu0 %v3249
      %4682 = vmatpush1.msra.mxu0 %v3248
      %4683 = vmatprep.subr.mxu0 %v3253
      %4684 = vmatpush1.msra.mxu0 %v3252
      %4685 = vmatprep.subr.mxu0 %v3257
      %4686 = vmatpush1.msra.mxu0 %v3256
      %4687 = vmatprep.subr.mxu0 %v3261
      %4688 = vmatpush1.msra.mxu0 %v3260
      %4689 = vmatprep.subr.mxu0 %v3329
      %4690 = vmatpush1.msra.mxu0 %v3328
      %4691 = vmatprep.subr.mxu0 %v3333
      %4692 = vmatpush1.msra.mxu0 %v3332
      %4693 = vmatprep.subr.mxu0 %v3337
      %4694 = vmatpush1.msra.mxu0 %v3336
      %4695 = vmatprep.subr.mxu0 %v3341
      %4696 = vmatpush1.msra.mxu0 %v3340
      %4697 = vmatprep.subr.mxu0 %v3409
      %4698 = vmatpush1.msra.mxu0 %v3408
      %4699 = vmatprep.subr.mxu0 %v3413
      %4700 = vmatpush1.msra.mxu0 %v3412
      %4701 = vmatprep.subr.mxu0 %v3417
      %4702 = vmatpush1.msra.mxu0 %v3416
      %4703 = vmatprep.subr.mxu0 %v3421
      %4704 = vmatpush1.msra.mxu0 %v3420
      %4705 = vmatprep.subr.mxu0 %v3489
      %4706 = vmatpush1.msra.mxu0 %v3488
      %4707 = vmatprep.subr.mxu0 %v3493
      %4708 = vmatpush1.msra.mxu0 %v3492
      %4709 = vmatprep.subr.mxu0 %v3497
      %4710 = vmatpush1.msra.mxu0 %v3496
      %4711 = vmatprep.subr.mxu0 %v3501
      %4712 = vmatpush1.msra.mxu0 %v3500
      %4713 = vmatprep.subr.mxu0 %v3569
      %4714 = vmatpush1.msra.mxu0 %v3568
      %4715 = vmatprep.subr.mxu0 %v3573
      %4716 = vmatpush1.msra.mxu0 %v3572
      %4717 = vmatprep.subr.mxu0 %v3577
      %4718 = vmatpush1.msra.mxu0 %v3576
      %4719 = vmatprep.subr.mxu0 %v3581
      %4720 = vmatpush1.msra.mxu0 %v3580
      %4721 = vmatprep.subr.mxu0 %v3649
      %4722 = vmatpush1.msra.mxu0 %v3648
      %4723 = vmatprep.subr.mxu0 %v3653
      %4724 = vmatpush1.msra.mxu0 %v3652
      %4725 = vmatprep.subr.mxu0 %v3657
      %4726 = vmatpush1.msra.mxu0 %v3656
      %4727 = vmatprep.subr.mxu0 %v3661
      %4728 = vmatpush1.msra.mxu0 %v3660
      %4729 = vmatprep.mubr.f32.mxu0 %v4635
      %4730 = vmatmul.mubr.f32.gmra.mrb[0].mxu0 %v4631
      %v4731 = vpop.f32.mrb[0].mxu0
      %v4732 = vadd.f32 %v4626, %v4731
      %v4733 = vpop.f32.mrb[0].mxu0
      %v4734 = vadd.f32 %v4626, %v4733
      %4735 = vdwg.mxu0
      %4736 = vmatprep.subr.mxu0 %v3729
      %4737 = vmatpush1.msra.mxu0 %v3728
      %4738 = vmatprep.subr.mxu0 %v3733
      %4739 = vmatpush1.msra.mxu0 %v3732
      %4740 = vmatprep.subr.mxu0 %v3737
      %4741 = vmatpush1.msra.mxu0 %v3736
      %4742 = vmatprep.subr.mxu0 %v3741
      %4743 = vmatpush1.msra.mxu0 %v3740
      %4744 = vmatprep.subr.mxu0 %v3809
      %4745 = vmatpush1.msra.mxu0 %v3808
      %4746 = vmatprep.subr.mxu0 %v3813
      %4747 = vmatpush1.msra.mxu0 %v3812
      %4748 = vmatprep.subr.mxu0 %v3817
      %4749 = vmatpush1.msra.mxu0 %v3816
      %4750 = vmatprep.subr.mxu0 %v3821
      %4751 = vmatpush1.msra.mxu0 %v3820
      %4752 = vmatprep.subr.mxu0 %v3889
      %4753 = vmatpush1.msra.mxu0 %v3888
      %4754 = vmatprep.subr.mxu0 %v3893
      %4755 = vmatpush1.msra.mxu0 %v3892
      %4756 = vmatprep.subr.mxu0 %v3897
      %4757 = vmatpush1.msra.mxu0 %v3896
      %4758 = vmatprep.subr.mxu0 %v3901
      %4759 = vmatpush1.msra.mxu0 %v3900
      %4760 = vmatprep.subr.mxu0 %v3969
      %4761 = vmatpush1.msra.mxu0 %v3968
      %4762 = vmatprep.subr.mxu0 %v3973
      %4763 = vmatpush1.msra.mxu0 %v3972
      %4764 = vmatprep.subr.mxu0 %v3977
      %4765 = vmatpush1.msra.mxu0 %v3976
      %4766 = vmatprep.subr.mxu0 %v3981
      %4767 = vmatpush1.msra.mxu0 %v3980
      %4768 = vmatprep.subr.mxu0 %v4049
      %4769 = vmatpush1.msra.mxu0 %v4048
      %4770 = vmatprep.subr.mxu0 %v4053
      %4771 = vmatpush1.msra.mxu0 %v4052
      %4772 = vmatprep.subr.mxu0 %v4057
      %4773 = vmatpush1.msra.mxu0 %v4056
      %4774 = vmatprep.subr.mxu0 %v4061
      %4775 = vmatpush1.msra.mxu0 %v4060
      %4776 = vmatprep.subr.mxu0 %v4065
      %4777 = vmatpush1.msra.mxu0 %v4064
      %4778 = vmatprep.subr.mxu0 %v4069
      %4779 = vmatpush1.msra.mxu0 %v4068
      %4780 = vmatprep.subr.mxu0 %v4073
      %4781 = vmatpush1.msra.mxu0 %v4072
      %4782 = vmatprep.subr.mxu0 %v4077
      %4783 = vmatpush1.msra.mxu0 %v4076
      %4784 = vmatprep.subr.mxu0 %v4145
      %4785 = vmatpush1.msra.mxu0 %v4144
      %4786 = vmatprep.subr.mxu0 %v4149
      %4787 = vmatpush1.msra.mxu0 %v4148
      %4788 = vmatprep.subr.mxu0 %v4153
      %4789 = vmatpush1.msra.mxu0 %v4152
      %4790 = vmatprep.subr.mxu0 %v4157
      %4791 = vmatpush1.msra.mxu0 %v4156
      %4792 = vmatprep.subr.mxu0 %v4225
      %4793 = vmatpush1.msra.mxu0 %v4224
      %4794 = vmatprep.subr.mxu0 %v4229
      %4795 = vmatpush1.msra.mxu0 %v4228
      %4796 = vmatprep.subr.mxu0 %v4233
      %4797 = vmatpush1.msra.mxu0 %v4232
      %4798 = vmatprep.subr.mxu0 %v4237
      %4799 = vmatpush1.msra.mxu0 %v4236
      %4800 = vmatprep.mubr.f32.mxu0 %v4643
      %4801 = vmatmul.mubr.f32.gmra.mrb[0].mxu0 %v4639
      %v4802 = vpop.f32.mrb[0].mxu0
      %v4803 = vadd.f32 %v4732, %v4802
      %v4804 = vpop.f32.mrb[0].mxu0
      %v4805 = vadd.f32 %v4734, %v4804
      %4806 = vdwg.mxu0
      %4807 = vmatprep.subr.mxu0 %v4305
      %4808 = vmatpush1.msra.mxu0 %v4304
      %4809 = vmatprep.subr.mxu0 %v4309
      %4810 = vmatpush1.msra.mxu0 %v4308
      %4811 = vmatprep.subr.mxu0 %v4313
      %4812 = vmatpush1.msra.mxu0 %v4312
      %4813 = vmatprep.subr.mxu0 %v4317
      %4814 = vmatpush1.msra.mxu0 %v4316
      %4815 = vmatprep.subr.mxu0 %v4385
      %4816 = vmatpush1.msra.mxu0 %v4384
      %4817 = vmatprep.subr.mxu0 %v4389
      %4818 = vmatpush1.msra.mxu0 %v4388
      %4819 = vmatprep.subr.mxu0 %v4393
      %4820 = vmatpush1.msra.mxu0 %v4392
      %4821 = vmatprep.subr.mxu0 %v4397
      %4822 = vmatpush1.msra.mxu0 %v4396
      %4823 = vmatprep.subr.mxu0 %v4409
      %4824 = vmatpush1.msra.mxu0 %v4408
      %4825 = vmatprep.subr.mxu0 %v4413
      %4826 = vmatpush1.msra.mxu0 %v4412
      %4827 = vmatprep.subr.mxu0 %v4417
      %4828 = vmatpush1.msra.mxu0 %v4416
      %4829 = vmatprep.subr.mxu0 %v4421
      %4830 = vmatpush1.msra.mxu0 %v4420
      %4831 = vmatprep.subr.mxu0 %v4433
      %4832 = vmatpush1.msra.mxu0 %v4432
      %4833 = vmatprep.subr.mxu0 %v4437
      %4834 = vmatpush1.msra.mxu0 %v4436
      %4835 = vmatprep.subr.mxu0 %v4441
      %4836 = vmatpush1.msra.mxu0 %v4440
      %4837 = vmatprep.subr.mxu0 %v4445
      %4838 = vmatpush1.msra.mxu0 %v4444
      %4839 = vmatprep.subr.mxu0 %v4457
      %4840 = vmatpush1.msra.mxu0 %v4456
      %4841 = vmatprep.subr.mxu0 %v4461
      %4842 = vmatpush1.msra.mxu0 %v4460
      %4843 = vmatprep.subr.mxu0 %v4465
      %4844 = vmatpush1.msra.mxu0 %v4464
      %4845 = vmatprep.subr.mxu0 %v4469
      %4846 = vmatpush1.msra.mxu0 %v4468
      %4847 = vmatprep.subr.mxu0 %v4481
      %4848 = vmatpush1.msra.mxu0 %v4480
      %4849 = vmatprep.subr.mxu0 %v4485
      %4850 = vmatpush1.msra.mxu0 %v4484
      %4851 = vmatprep.subr.mxu0 %v4489
      %4852 = vmatpush1.msra.mxu0 %v4488
      %4853 = vmatprep.subr.mxu0 %v4493
      %4854 = vmatpush1.msra.mxu0 %v4492
      %4855 = vmatprep.subr.mxu0 %v4505
      %4856 = vmatpush1.msra.mxu0 %v4504
      %4857 = vmatprep.subr.mxu0 %v4509
      %4858 = vmatpush1.msra.mxu0 %v4508
      %4859 = vmatprep.subr.mxu0 %v4513
      %4860 = vmatpush1.msra.mxu0 %v4512
      %4861 = vmatprep.subr.mxu0 %v4517
      %4862 = vmatpush1.msra.mxu0 %v4516
      %4863 = vmatprep.subr.mxu0 %v4529
      %4864 = vmatpush1.msra.mxu0 %v4528
      %4865 = vmatprep.subr.mxu0 %v4533
      %4866 = vmatpush1.msra.mxu0 %v4532
      %4867 = vmatprep.subr.mxu0 %v4537
      %4868 = vmatpush1.msra.mxu0 %v4536
      %4869 = vmatprep.subr.mxu0 %v4541
      %4870 = vmatpush1.msra.mxu0 %v4540
      %4871 = vmatprep.mubr.f32.mxu0 %v4651
      %4872 = vmatmul.mubr.f32.gmra.mrb[0].mxu0 %v4647
      %v4873 = vpop.f32.mrb[0].mxu0
      %v4874 = vadd.f32 %v4803, %v4873
      %v4875 = vpop.f32.mrb[0].mxu0
      %v4876 = vadd.f32 %v4805, %v4875
      %4877 = vdwg.mxu0
      %4878 = vmatprep.subr.mxu0 %v4553
      %4879 = vmatpush1.msra.mxu0 %v4552
      %4880 = vmatprep.subr.mxu0 %v4557
      %4881 = vmatpush1.msra.mxu0 %v4556
      %4882 = vmatprep.subr.mxu0 %v4561
      %4883 = vmatpush1.msra.mxu0 %v4560
      %4884 = vmatprep.subr.mxu0 %v4565
      %4885 = vmatpush1.msra.mxu0 %v4564
      %4886 = vmatprep.subr.mxu0 %v4577
      %4887 = vmatpush1.msra.mxu0 %v4576
      %4888 = vmatprep.subr.mxu0 %v4581
      %4889 = vmatpush1.msra.mxu0 %v4580
      %4890 = vmatprep.subr.mxu0 %v4585
      %4891 = vmatpush1.msra.mxu0 %v4584
      %4892 = vmatprep.subr.mxu0 %v4589
      %4893 = vmatpush1.msra.mxu0 %v4588
      %4894 = vmatprep.subr.mxu0 %v4601
      %4895 = vmatpush1.msra.mxu0 %v4600
      %4896 = vmatprep.subr.mxu0 %v4605
      %4897 = vmatpush1.msra.mxu0 %v4604
      %4898 = vmatprep.subr.mxu0 %v4609
      %4899 = vmatpush1.msra.mxu0 %v4608
      %4900 = vmatprep.subr.mxu0 %v4613
      %4901 = vmatpush1.msra.mxu0 %v4612
      %4902 = vmatprep.subr.mxu0 0.0
      %4903 = vmatpush1.msra.mxu0 0.0
      %4904 = vmatprep.subr.mxu0 0.0
      %4905 = vmatpush1.msra.mxu0 0.0
      %4906 = vmatprep.subr.mxu0 0.0
      %4907 = vmatpush1.msra.mxu0 0.0
      %4908 = vmatprep.subr.mxu0 0.0
      %4909 = vmatpush1.msra.mxu0 0.0
      %4910 = vmatprep.subr.mxu0 0.0
      %4911 = vmatpush1.msra.mxu0 0.0
      %4912 = vmatprep.subr.mxu0 0.0
      %4913 = vmatpush1.msra.mxu0 0.0
      %4914 = vmatprep.subr.mxu0 0.0
      %4915 = vmatpush1.msra.mxu0 0.0
      %4916 = vmatprep.subr.mxu0 0.0
      %4917 = vmatpush1.msra.mxu0 0.0
      %4918 = vmatprep.subr.mxu0 0.0
      %4919 = vmatpush1.msra.mxu0 0.0
      %4920 = vmatprep.subr.mxu0 0.0
      %4921 = vmatpush1.msra.mxu0 0.0
      %4922 = vmatprep.subr.mxu0 0.0
      %4923 = vmatpush1.msra.mxu0 0.0
      %4924 = vmatprep.subr.mxu0 0.0
      %4925 = vmatpush1.msra.mxu0 0.0
      %4926 = vmatprep.subr.mxu0 0.0
      %4927 = vmatpush1.msra.mxu0 0.0
      %4928 = vmatprep.subr.mxu0 0.0
      %4929 = vmatpush1.msra.mxu0 0.0
      %4930 = vmatprep.subr.mxu0 0.0
      %4931 = vmatpush1.msra.mxu0 0.0
      %4932 = vmatprep.subr.mxu0 0.0
      %4933 = vmatpush1.msra.mxu0 0.0
      %4934 = vmatprep.subr.mxu0 0.0
      %4935 = vmatpush1.msra.mxu0 0.0
      %4936 = vmatprep.subr.mxu0 0.0
      %4937 = vmatpush1.msra.mxu0 0.0
      %4938 = vmatprep.subr.mxu0 0.0
      %4939 = vmatpush1.msra.mxu0 0.0
      %4940 = vmatprep.subr.mxu0 0.0
      %4941 = vmatpush1.msra.mxu0 0.0
      %4942 = vmatprep.mubr.f32.mxu0 0.0
      %4943 = vmatmul.mubr.f32.gmra.mrb[0].mxu0 %v4663
      %v4944 = vpop.f32.mrb[0].mxu0
      %v4945 = vadd.f32 %v4874, %v4944
      %v4946 = vpop.f32.mrb[0].mxu0
      %v4947 = vadd.f32 %v4876, %v4946
      %4948 = vdwg.mxu0
      %4949 = vmatprep.subr.mxu0 %v3091
      %4950 = vmatpush1.msra.mxu0 %v3090
      %4951 = vmatprep.subr.mxu0 %v3095
      %4952 = vmatpush1.msra.mxu0 %v3094
      %4953 = vmatprep.subr.mxu0 %v3099
      %4954 = vmatpush1.msra.mxu0 %v3098
      %4955 = vmatprep.subr.mxu0 %v3103
      %4956 = vmatpush1.msra.mxu0 %v3102
      %4957 = vmatprep.subr.mxu0 %v3171
      %4958 = vmatpush1.msra.mxu0 %v3170
      %4959 = vmatprep.subr.mxu0 %v3175
      %4960 = vmatpush1.msra.mxu0 %v3174
      %4961 = vmatprep.subr.mxu0 %v3179
      %4962 = vmatpush1.msra.mxu0 %v3178
      %4963 = vmatprep.subr.mxu0 %v3183
      %4964 = vmatpush1.msra.mxu0 %v3182
      %4965 = vmatprep.subr.mxu0 %v3251
      %4966 = vmatpush1.msra.mxu0 %v3250
      %4967 = vmatprep.subr.mxu0 %v3255
      %4968 = vmatpush1.msra.mxu0 %v3254
      %4969 = vmatprep.subr.mxu0 %v3259
      %4970 = vmatpush1.msra.mxu0 %v3258
      %4971 = vmatprep.subr.mxu0 %v3263
      %4972 = vmatpush1.msra.mxu0 %v3262
      %4973 = vmatprep.subr.mxu0 %v3331
      %4974 = vmatpush1.msra.mxu0 %v3330
      %4975 = vmatprep.subr.mxu0 %v3335
      %4976 = vmatpush1.msra.mxu0 %v3334
      %4977 = vmatprep.subr.mxu0 %v3339
      %4978 = vmatpush1.msra.mxu0 %v3338
      %4979 = vmatprep.subr.mxu0 %v3343
      %4980 = vmatpush1.msra.mxu0 %v3342
      %4981 = vmatprep.subr.mxu0 %v3411
      %4982 = vmatpush1.msra.mxu0 %v3410
      %4983 = vmatprep.subr.mxu0 %v3415
      %4984 = vmatpush1.msra.mxu0 %v3414
      %4985 = vmatprep.subr.mxu0 %v3419
      %4986 = vmatpush1.msra.mxu0 %v3418
      %4987 = vmatprep.subr.mxu0 %v3423
      %4988 = vmatpush1.msra.mxu0 %v3422
      %4989 = vmatprep.subr.mxu0 %v3491
      %4990 = vmatpush1.msra.mxu0 %v3490
      %4991 = vmatprep.subr.mxu0 %v3495
      %4992 = vmatpush1.msra.mxu0 %v3494
      %4993 = vmatprep.subr.mxu0 %v3499
      %4994 = vmatpush1.msra.mxu0 %v3498
      %4995 = vmatprep.subr.mxu0 %v3503
      %4996 = vmatpush1.msra.mxu0 %v3502
      %4997 = vmatprep.subr.mxu0 %v3571
      %4998 = vmatpush1.msra.mxu0 %v3570
      %4999 = vmatprep.subr.mxu0 %v3575
      %5000 = vmatpush1.msra.mxu0 %v3574
      %5001 = vmatprep.subr.mxu0 %v3579
      %5002 = vmatpush1.msra.mxu0 %v3578
      %5003 = vmatprep.subr.mxu0 %v3583
      %5004 = vmatpush1.msra.mxu0 %v3582
      %5005 = vmatprep.subr.mxu0 %v3651
      %5006 = vmatpush1.msra.mxu0 %v3650
      %5007 = vmatprep.subr.mxu0 %v3655
      %5008 = vmatpush1.msra.mxu0 %v3654
      %5009 = vmatprep.subr.mxu0 %v3659
      %5010 = vmatpush1.msra.mxu0 %v3658
      %5011 = vmatprep.subr.mxu0 %v3663
      %5012 = vmatpush1.msra.mxu0 %v3662
      %5013 = vmatprep.mubr.f32.mxu0 %v4635
      %5014 = vmatmul.mubr.f32.gmra.mrb[0].mxu0 %v4631
      %v5015 = vpop.f32.mrb[0].mxu0
      %v5016 = vadd.f32 %v4626, %v5015
      %v5017 = vpop.f32.mrb[0].mxu0
      %v5018 = vadd.f32 %v4626, %v5017
      %5019 = vdwg.mxu0
      %5020 = vmatprep.subr.mxu0 %v3731
      %5021 = vmatpush1.msra.mxu0 %v3730
      %5022 = vmatprep.subr.mxu0 %v3735
      %5023 = vmatpush1.msra.mxu0 %v3734
      %5024 = vmatprep.subr.mxu0 %v3739
      %5025 = vmatpush1.msra.mxu0 %v3738
      %5026 = vmatprep.subr.mxu0 %v3743
      %5027 = vmatpush1.msra.mxu0 %v3742
      %5028 = vmatprep.subr.mxu0 %v3811
      %5029 = vmatpush1.msra.mxu0 %v3810
      %5030 = vmatprep.subr.mxu0 %v3815
      %5031 = vmatpush1.msra.mxu0 %v3814
      %5032 = vmatprep.subr.mxu0 %v3819
      %5033 = vmatpush1.msra.mxu0 %v3818
      %5034 = vmatprep.subr.mxu0 %v3823
      %5035 = vmatpush1.msra.mxu0 %v3822
      %5036 = vmatprep.subr.mxu0 %v3891
      %5037 = vmatpush1.msra.mxu0 %v3890
      %5038 = vmatprep.subr.mxu0 %v3895
      %5039 = vmatpush1.msra.mxu0 %v3894
      %5040 = vmatprep.subr.mxu0 %v3899
      %5041 = vmatpush1.msra.mxu0 %v3898
      %5042 = vmatprep.subr.mxu0 %v3903
      %5043 = vmatpush1.msra.mxu0 %v3902
      %5044 = vmatprep.subr.mxu0 %v3971
      %5045 = vmatpush1.msra.mxu0 %v3970
      %5046 = vmatprep.subr.mxu0 %v3975
      %5047 = vmatpush1.msra.mxu0 %v3974
      %5048 = vmatprep.subr.mxu0 %v3979
      %5049 = vmatpush1.msra.mxu0 %v3978
      %5050 = vmatprep.subr.mxu0 %v3983
      %5051 = vmatpush1.msra.mxu0 %v3982
      %5052 = vmatprep.subr.mxu0 %v4051
      %5053 = vmatpush1.msra.mxu0 %v4050
      %5054 = vmatprep.subr.mxu0 %v4055
      %5055 = vmatpush1.msra.mxu0 %v4054
      %5056 = vmatprep.subr.mxu0 %v4059
      %5057 = vmatpush1.msra.mxu0 %v4058
      %5058 = vmatprep.subr.mxu0 %v4063
      %5059 = vmatpush1.msra.mxu0 %v4062
      %5060 = vmatprep.subr.mxu0 %v4067
      %5061 = vmatpush1.msra.mxu0 %v4066
      %5062 = vmatprep.subr.mxu0 %v4071
      %5063 = vmatpush1.msra.mxu0 %v4070
      %5064 = vmatprep.subr.mxu0 %v4075
      %5065 = vmatpush1.msra.mxu0 %v4074
      %5066 = vmatprep.subr.mxu0 %v4079
      %5067 = vmatpush1.msra.mxu0 %v4078
      %5068 = vmatprep.subr.mxu0 %v4147
      %5069 = vmatpush1.msra.mxu0 %v4146
      %5070 = vmatprep.subr.mxu0 %v4151
      %5071 = vmatpush1.msra.mxu0 %v4150
      %5072 = vmatprep.subr.mxu0 %v4155
      %5073 = vmatpush1.msra.mxu0 %v4154
      %5074 = vmatprep.subr.mxu0 %v4159
      %5075 = vmatpush1.msra.mxu0 %v4158
      %5076 = vmatprep.subr.mxu0 %v4227
      %5077 = vmatpush1.msra.mxu0 %v4226
      %5078 = vmatprep.subr.mxu0 %v4231
      %5079 = vmatpush1.msra.mxu0 %v4230
      %5080 = vmatprep.subr.mxu0 %v4235
      %5081 = vmatpush1.msra.mxu0 %v4234
      %5082 = vmatprep.subr.mxu0 %v4239
      %5083 = vmatpush1.msra.mxu0 %v4238
      %5084 = vmatprep.mubr.f32.mxu0 %v4643
      %5085 = vmatmul.mubr.f32.gmra.mrb[0].mxu0 %v4639
      %v5086 = vpop.f32.mrb[0].mxu0
      %v5087 = vadd.f32 %v5016, %v5086
      %v5088 = vpop.f32.mrb[0].mxu0
      %v5089 = vadd.f32 %v5018, %v5088
      %5090 = vdwg.mxu0
      %5091 = vmatprep.subr.mxu0 %v4307
      %5092 = vmatpush1.msra.mxu0 %v4306
      %5093 = vmatprep.subr.mxu0 %v4311
      %5094 = vmatpush1.msra.mxu0 %v4310
      %5095 = vmatprep.subr.mxu0 %v4315
      %5096 = vmatpush1.msra.mxu0 %v4314
      %5097 = vmatprep.subr.mxu0 %v4319
      %5098 = vmatpush1.msra.mxu0 %v4318
      %5099 = vmatprep.subr.mxu0 %v4387
      %5100 = vmatpush1.msra.mxu0 %v4386
      %5101 = vmatprep.subr.mxu0 %v4391
      %5102 = vmatpush1.msra.mxu0 %v4390
      %5103 = vmatprep.subr.mxu0 %v4395
      %5104 = vmatpush1.msra.mxu0 %v4394
      %5105 = vmatprep.subr.mxu0 %v4399
      %5106 = vmatpush1.msra.mxu0 %v4398
      %5107 = vmatprep.subr.mxu0 %v4411
      %5108 = vmatpush1.msra.mxu0 %v4410
      %5109 = vmatprep.subr.mxu0 %v4415
      %5110 = vmatpush1.msra.mxu0 %v4414
      %5111 = vmatprep.subr.mxu0 %v4419
      %5112 = vmatpush1.msra.mxu0 %v4418
      %5113 = vmatprep.subr.mxu0 %v4423
      %5114 = vmatpush1.msra.mxu0 %v4422
      %5115 = vmatprep.subr.mxu0 %v4435
      %5116 = vmatpush1.msra.mxu0 %v4434
      %5117 = vmatprep.subr.mxu0 %v4439
      %5118 = vmatpush1.msra.mxu0 %v4438
      %5119 = vmatprep.subr.mxu0 %v4443
      %5120 = vmatpush1.msra.mxu0 %v4442
      %5121 = vmatprep.subr.mxu0 %v4447
      %5122 = vmatpush1.msra.mxu0 %v4446
      %5123 = vmatprep.subr.mxu0 %v4459
      %5124 = vmatpush1.msra.mxu0 %v4458
      %5125 = vmatprep.subr.mxu0 %v4463
      %5126 = vmatpush1.msra.mxu0 %v4462
      %5127 = vmatprep.subr.mxu0 %v4467
      %5128 = vmatpush1.msra.mxu0 %v4466
      %5129 = vmatprep.subr.mxu0 %v4471
      %5130 = vmatpush1.msra.mxu0 %v4470
      %5131 = vmatprep.subr.mxu0 %v4483
      %5132 = vmatpush1.msra.mxu0 %v4482
      %5133 = vmatprep.subr.mxu0 %v4487
      %5134 = vmatpush1.msra.mxu0 %v4486
      %5135 = vmatprep.subr.mxu0 %v4491
      %5136 = vmatpush1.msra.mxu0 %v4490
      %5137 = vmatprep.subr.mxu0 %v4495
      %5138 = vmatpush1.msra.mxu0 %v4494
      %5139 = vmatprep.subr.mxu0 %v4507
      %5140 = vmatpush1.msra.mxu0 %v4506
      %5141 = vmatprep.subr.mxu0 %v4511
      %5142 = vmatpush1.msra.mxu0 %v4510
      %5143 = vmatprep.subr.mxu0 %v4515
      %5144 = vmatpush1.msra.mxu0 %v4514
      %5145 = vmatprep.subr.mxu0 %v4519
      %5146 = vmatpush1.msra.mxu0 %v4518
      %5147 = vmatprep.subr.mxu0 %v4531
      %5148 = vmatpush1.msra.mxu0 %v4530
      %5149 = vmatprep.subr.mxu0 %v4535
      %5150 = vmatpush1.msra.mxu0 %v4534
      %5151 = vmatprep.subr.mxu0 %v4539
      %5152 = vmatpush1.msra.mxu0 %v4538
      %5153 = vmatprep.subr.mxu0 %v4543
      %5154 = vmatpush1.msra.mxu0 %v4542
      %5155 = vmatprep.mubr.f32.mxu0 %v4651
      %5156 = vmatmul.mubr.f32.gmra.mrb[0].mxu0 %v4647
      %v5157 = vpop.f32.mrb[0].mxu0
      %v5158 = vadd.f32 %v5087, %v5157
      %v5159 = vpop.f32.mrb[0].mxu0
      %v5160 = vadd.f32 %v5089, %v5159
      %5161 = vdwg.mxu0
      %5162 = vmatprep.subr.mxu0 %v4555
      %5163 = vmatpush1.msra.mxu0 %v4554
      %5164 = vmatprep.subr.mxu0 %v4559
      %5165 = vmatpush1.msra.mxu0 %v4558
      %5166 = vmatprep.subr.mxu0 %v4563
      %5167 = vmatpush1.msra.mxu0 %v4562
      %5168 = vmatprep.subr.mxu0 %v4567
      %5169 = vmatpush1.msra.mxu0 %v4566
      %5170 = vmatprep.subr.mxu0 %v4579
      %5171 = vmatpush1.msra.mxu0 %v4578
      %5172 = vmatprep.subr.mxu0 %v4583
      %5173 = vmatpush1.msra.mxu0 %v4582
      %5174 = vmatprep.subr.mxu0 %v4587
      %5175 = vmatpush1.msra.mxu0 %v4586
      %5176 = vmatprep.subr.mxu0 %v4591
      %5177 = vmatpush1.msra.mxu0 %v4590
      %5178 = vmatprep.subr.mxu0 %v4603
      %5179 = vmatpush1.msra.mxu0 %v4602
      %5180 = vmatprep.subr.mxu0 %v4607
      %5181 = vmatpush1.msra.mxu0 %v4606
      %5182 = vmatprep.subr.mxu0 %v4611
      %5183 = vmatpush1.msra.mxu0 %v4610
      %5184 = vmatprep.subr.mxu0 %v4615
      %5185 = vmatpush1.msra.mxu0 %v4614
      %5186 = vmatprep.subr.mxu0 0.0
      %5187 = vmatpush1.msra.mxu0 0.0
      %5188 = vmatprep.subr.mxu0 0.0
      %5189 = vmatpush1.msra.mxu0 0.0
      %5190 = vmatprep.subr.mxu0 0.0
      %5191 = vmatpush1.msra.mxu0 0.0
      %5192 = vmatprep.subr.mxu0 0.0
      %5193 = vmatpush1.msra.mxu0 0.0
      %5194 = vmatprep.subr.mxu0 0.0
      %5195 = vmatpush1.msra.mxu0 0.0
      %5196 = vmatprep.subr.mxu0 0.0
      %5197 = vmatpush1.msra.mxu0 0.0
      %5198 = vmatprep.subr.mxu0 0.0
      %5199 = vmatpush1.msra.mxu0 0.0
      %5200 = vmatprep.subr.mxu0 0.0
      %5201 = vmatpush1.msra.mxu0 0.0
      %5202 = vmatprep.subr.mxu0 0.0
      %5203 = vmatpush1.msra.mxu0 0.0
      %5204 = vmatprep.subr.mxu0 0.0
      %5205 = vmatpush1.msra.mxu0 0.0
      %5206 = vmatprep.subr.mxu0 0.0
      %5207 = vmatpush1.msra.mxu0 0.0
      %5208 = vmatprep.subr.mxu0 0.0
      %5209 = vmatpush1.msra.mxu0 0.0
      %5210 = vmatprep.subr.mxu0 0.0
      %5211 = vmatpush1.msra.mxu0 0.0
      %5212 = vmatprep.subr.mxu0 0.0
      %5213 = vmatpush1.msra.mxu0 0.0
      %5214 = vmatprep.subr.mxu0 0.0
      %5215 = vmatpush1.msra.mxu0 0.0
      %5216 = vmatprep.subr.mxu0 0.0
      %5217 = vmatpush1.msra.mxu0 0.0
      %5218 = vmatprep.subr.mxu0 0.0
      %5219 = vmatpush1.msra.mxu0 0.0
      %5220 = vmatprep.subr.mxu0 0.0
      %5221 = vmatpush1.msra.mxu0 0.0
      %5222 = vmatprep.subr.mxu0 0.0
      %5223 = vmatpush1.msra.mxu0 0.0
      %5224 = vmatprep.subr.mxu0 0.0
      %5225 = vmatpush1.msra.mxu0 0.0
      %5226 = vmatprep.mubr.f32.mxu0 0.0
      %5227 = vmatmul.mubr.f32.gmra.mrb[0].mxu0 %v4663
      %v5228 = vpop.f32.mrb[0].mxu0
      %v5229 = vadd.f32 %v5158, %v5228
      %v5230 = vpop.f32.mrb[0].mxu0
      %v5231 = vadd.f32 %v5160, %v5230
      %5232 = vdwg.mxu0
      %vm5233 = vcmp.ge.f32.partialorder %v4945, 0.0
      %vm5234 = vcmp.ge.f32.partialorder %v4947, 0.0
      %vm5235 = vcmp.ge.f32.partialorder %v5229, 0.0
      %vm5236 = vcmp.ge.f32.partialorder %v5231, 0.0
      %v5237 = vmul.f32 %v4945, 0.0001
      %v5238 = vmul.f32 %v4947, 0.0001
      %v5239 = vmul.f32 %v5229, 0.0001
      %v5240 = vmul.f32 %v5231, 0.0001
      %v5241 = vsel %vm5233, %v4945, %v5237
      %v5242 = vsel %vm5234, %v4947, %v5238
      %v5243 = vsel %vm5235, %v5229, %v5239
      %v5244 = vsel %vm5236, %v5231, %v5240
      %v5249 = vcombine.low %v5241, %v5242
      %v5250 = vcombine.low %v5243, %v5244
      %v5252 = vunpack.c.l.s4 1966171168
      %v5253 = vunpack.c.0.s8 %v5252
      %v5254 = vlaneseq
      %v5255 = vshrl.u32 %v5254, 7
      %v5256 = vsub.s32 %v5253, %v5255
      %v5257 = vrot.slane %v5249, %v5256
      %v5259 = vunpack.c.l.s4 1966171168
      %v5260 = vunpack.c.0.s8 %v5259
      %v5261 = vlaneseq
      %v5262 = vshrl.u32 %v5261, 7
      %v5263 = vsub.s32 %v5260, %v5262
      %v5264 = vrot.slane %v5250, %v5263
      %v5265 = vcombine.low %v5257, %v5264
      %v5267 = vunpack.c.l.s4 1966171168
      %v5268 = vunpack.c.0.s8 %v5267
      %v5269 = vlaneseq
      %v5270 = vshrl.u32 %v5269, 7
      %v5271 = vsub.s32 %v5268, %v5270
      %v5272 = vrot.slane %v5265, %v5271
      %v5274 = vlaneseq
      %vm5275 = vcmp.ge.s32.totalorder %v5274, 0
      %vm5276 = vcmp.lt.s32.totalorder %v5274, 512
      %vm5277 = vmand %vm5275, %vm5276
      %5278 = vst.msk [vmem:[%s221] sm:$0xf] %vm5277, %v5272
      %p5279 = scmp.lt.s32.totalorder %s18, 1
      %s5280 = scalar_select %p5279, %s18, 1
      %s5281 = smul.addr %s5280, 4
      %s5282 = scalar_lea.vmem %s5, %s5281
      // Predicated region
      $region41: #{cnn_model_forward.1} parent=39 // pred_check
        %p5283 = pneg %p146
      $region42: #{cnn_model_forward.1} parent=39 // pred_check_branch
        %5285 = sbr.rel (%p5283) target = $region44
      $region43: #{cnn_model_forward.1} parent=39 // pred_region
        _
      $region44: #{cnn_model_forward.1} parent=39 // pred_fallthru
        _
    $region40: #{cnn_model_forward.1} parent=5 // pred_fallthru
      _
    %p5286 = scmp.le.s32.totalorder 2, %s13
    // Predicated region
    $region45: #{cnn_model_forward.1} parent=5 // pred_check
      %p5287 = pneg %p5286
    $region46: #{cnn_model_forward.1} parent=5 // pred_check_branch
      %5289 = sbr.rel (%p5287) target = $region48
    $region47: #{cnn_model_forward.1} parent=5 // pred_region
      %s5290 = ssub.s32 %s13, 2
      // Predicated region
      $region49: #{cnn_model_forward.1} parent=47 // pred_check
        %p5291 = pneg %p152
      $region50: #{cnn_model_forward.1} parent=47 // pred_check_branch
        %5293 = sbr.rel (%p5291) target = $region52
      $region51: #{cnn_model_forward.1} parent=47 // pred_region
        %p5294 = scmp.lt.s32.totalorder %s19, 1
        %s5295 = scalar_select %p5294, %s19, 1
        %s5296 = smul.addr %s5295, 4
        %s5297 = scalar_lea.vmem %s5, %s5296
      $region52: #{cnn_model_forward.1} parent=47 // pred_fallthru
        _
    $region48: #{cnn_model_forward.1} parent=5 // pred_fallthru
      _
  $region6: #{cnn_model_forward.1} parent=0 // loop_footer
    %s17 = sadd.s32 1, %s13
  $region7: #{cnn_model_forward.1} parent=0 // loop_footer_branch
    %12 = sbr.rel target = $region3
  $region8: #{cnn_model_forward.1} parent=0 // loop_exit
    _

</llo_original>
